<compile_context>
chip_gen: v7x
topology: tpu7x:2x2x1
jax: 0.10.0
libtpu: 0.0.40
codegen_flags: <defaults>
</compile_context>

<pallas_src>
import functools

import jax
import jax.numpy as jnp
from jax.experimental import pallas as pl
from jax.experimental.pallas import tpu as pltpu


_CH_PAD = 16                      # channel pad for the 3->256 expansion operand
_VMEM_BUDGET = 12 * 1024 * 1024   # per-step working-set budget (v5e headroom)


# -----------------------------------------------------------------------------
# Fused tail kernel:
#   roi (nt, tl, 16) bf16  --(act_base 1x1x1 conv stand-in: MXU bf16 matmul on
#   v6e/v7x, VPU FMAs on v5e; + ReLU)--> (nt*tl, 256) bf16
#   --(act_top layer4 stand-in: bf16 MXU matmul + ReLU)--> (nt*tl, 512) f32
#   --(sum over L into f32 VMEM scratch, mean)--> (nt, 512)
#   --(one lane-dense (512,128) MXU pass: bbox + cls heads, masked softmax)-->
#   single (nt, 128) output slab.
# Grid = (Nt/nt_tile "parallel", L/tl "arbitrary"); init/finalize via pl.when.
# -----------------------------------------------------------------------------
def _fused_tail_kernel(roi_ref, w3_ref, b3_ref, wt_ref, bt_ref, wh_ref, bh_ref,
                       out_ref, acc_ref, *, inv_l, nb, ncls, c_real, expand_on_mxu):
    li = pl.program_id(1)

    @pl.when(li == 0)
    def _init():
        acc_ref[...] = jnp.zeros_like(acc_ref)

    x = roi_ref[...]                                  # (nt, tl, 16) bf16
    nt, tl, cpad = x.shape

    if expand_on_mxu:
        # v6e / v7x: the 256x256 MXU is nearly idle here, so the (zero-padded)
        # 16->256 expansion is a bf16 matmul instead of VPU broadcast FMAs.
        h = jnp.dot(x.reshape(nt * tl, cpad), w3_ref[...],
                    preferred_element_type=jnp.float32) + b3_ref[...]
    else:
        # v5e: the 128x128 MXU is the likely critical unit there -- keep the
        # expansion on the VPU, touching only the c_real live channels.
        w3 = w3_ref[...].astype(jnp.float32)          # (16, 256)
        h = x[..., 0:1].astype(jnp.float32) * w3[0]
        for c in range(1, c_real):
            h = h + x[..., c:c + 1].astype(jnp.float32) * w3[c]
        h = (h + b3_ref[...]).reshape(nt * tl, -1)
    h = jnp.maximum(h, 0.0).astype(jnp.bfloat16)      # (nt*tl, 256) bf16

    # act_top stand-in: bf16 x bf16 -> f32 MXU matmul (M = nt*tl rows per step).
    f = jnp.dot(h, wt_ref[...], preferred_element_type=jnp.float32) + bt_ref[...]
    f = jnp.maximum(f, 0.0)                           # (nt*tl, 512) f32
    # With tl == L (the default choice) this runs exactly once per roi block.
    acc_ref[...] += jnp.sum(f.reshape(nt, tl, -1), axis=1)

    @pl.when(li == pl.num_programs(1) - 1)
    def _finalize():
        feat = acc_ref[...] * inv_l                   # mean over T*7*7 -> (nt, 512)
        # Both Linear heads in one lane-dense (512, 128) f32 MXU pass; a single
        # padded output slab avoids masked vst.msk partial stores.
        out = jnp.dot(feat, wh_ref[...],
                      preferred_element_type=jnp.float32) + bh_ref[...]   # (nt, 128)
        lane = jax.lax.broadcasted_iota(jnp.int32, out.shape, 1)
        is_cls = (lane >= nb) & (lane < nb + ncls)
        cls = jnp.where(is_cls, out, -1e30)           # masked softmax over cls lanes
        m = jnp.max(cls, axis=-1, keepdims=True)
        e = jnp.where(is_cls, jnp.exp(cls - m), 0.0)
        prob = e / jnp.sum(e, axis=-1, keepdims=True)
        out_ref[...] = jnp.where(is_cls, prob, out)[None]


def _expand_on_mxu():
    """MXU expansion on v6e/v7x (and anything unknown); VPU path on v5e."""
    try:
        kind = jax.devices()[0].device_kind.lower()
    except Exception:
        return True
    return not any(tag in kind for tag in ("v5 lite", "v5lite", "v5e"))


def _choose_nt_tile(nt_total):
    """Largest divisor of Nt giving a 'parallel' grid extent >= 2 (v7x megacore)."""
    best = nt_total
    for d in range(1, nt_total):
        if nt_total % d == 0 and nt_total // d >= 2:
            best = d
    return best


def _choose_l_tile(L, nt_tile, c1, c2):
    """Prefer a single L step (tl == L); split only if the per-step working set
    would exceed the VMEM budget (keeps v5e's scoped VMEM comfortable)."""
    def per_step_bytes(tl):
        rows = nt_tile * tl
        roi_buf = 2 * nt_tile * tl * 128 * 2           # lane-padded bf16, 2 buffers
        inter = rows * c1 * (4 + 2) + 2 * rows * c2 * 4  # f32/bf16 intermediates
        return roi_buf + inter
    cands = sorted({t for t in range(8, L + 1, 8) if L % t == 0} | {L}, reverse=True)
    for t in cands:
        if per_step_bytes(t) <= _VMEM_BUDGET:
            return t
    return cands[-1]


def pallas_fused_tail(roi3, base_w, base_b, top_w, top_b, bbox_w, bbox_b, cls_w, cls_b):
    Nt, L, c_in = roi3.shape
    C1 = base_w.shape[1]          # 256
    C2 = top_w.shape[1]           # 512
    nb = bbox_w.shape[1]          # 4 * n_classes
    ncls = cls_w.shape[1]         # n_classes
    HP = ((nb + ncls + 127) // 128) * 128     # lane-padded fused head width

    # roi features in bf16 with the channel axis zero-padded to 16: native bf16
    # MXU operand, half the lane-padded VMEM block, exact math (zeros).
    cpad = max(_CH_PAD, c_in)
    roi_p = jnp.zeros((Nt, L, cpad), jnp.bfloat16)
    roi_p = roi_p.at[:, :, :c_in].set(roi3.astype(jnp.bfloat16))
    w3 = jnp.zeros((cpad, C1), jnp.bfloat16)
    w3 = w3.at[:c_in, :].set(base_w.astype(jnp.bfloat16))
    wt = top_w.astype(jnp.bfloat16)

    # Heads fused into one lane-padded weight (one MXU pass, lane-dense store).
    wh = jnp.zeros((C2, HP), jnp.float32)
    wh = wh.at[:, :nb].set(bbox_w).at[:, nb:nb + ncls].set(cls_w)
    bh = jnp.zeros((1, HP), jnp.float32)
    bh = bh.at[:, :nb].set(bbox_b).at[:, nb:nb + ncls].set(cls_b)

    nt_tile = _choose_nt_tile(Nt)             # parallel extent >= 2 for v7x megacore
    tl = _choose_l_tile(L, nt_tile, C1, C2)   # tl == L at the test shapes -> grid (2, 1)
    n_i = Nt // nt_tile

    kernel = functools.partial(
        _fused_tail_kernel, inv_l=1.0 / float(L), nb=nb, ncls=ncls,
        c_real=c_in, expand_on_mxu=_expand_on_mxu())

    out = pl.pallas_call(
        kernel,
        out_shape=jax.ShapeDtypeStruct((n_i, nt_tile, HP), jnp.float32),
        grid=(n_i, L // tl),
        in_specs=[
            pl.BlockSpec((nt_tile, tl, cpad), lambda i, l: (i, l, 0)),
            pl.BlockSpec((cpad, C1), lambda i, l: (0, 0)),
            pl.BlockSpec((1, C1), lambda i, l: (0, 0)),
            pl.BlockSpec((C1, C2), lambda i, l: (0, 0)),
            pl.BlockSpec((1, C2), lambda i, l: (0, 0)),
            pl.BlockSpec((C2, HP), lambda i, l: (0, 0)),
            pl.BlockSpec((1, HP), lambda i, l: (0, 0)),
        ],
        out_specs=pl.BlockSpec((1, nt_tile, HP), lambda i, l: (i, 0, 0)),
        scratch_shapes=[pltpu.VMEM((nt_tile, C2), jnp.float32)],
        compiler_params=pltpu.CompilerParams(
            dimension_semantics=("parallel", "arbitrary"),
            vmem_limit_bytes=32 * 1024 * 1024),
    )(roi_p, w3, base_b, wt, top_b, wh, bh)

    out = out.reshape(Nt, HP)
    return out[:, :nb], out[:, nb:nb + ncls]


# -----------------------------------------------------------------------------
# Glue (pure JAX): /16 pooling part of the act_base stand-in, the fixed-tube
# proposal stub, and the nearest-neighbour RoI bin-centre gather.
# -----------------------------------------------------------------------------
def _roi_align_avg(feat_cl, rois_flat, pool, scale):
    # feat_cl: (B, T, Hf, Wf, C); rois_flat: (N, 5) = (batch_idx, x1, y1, x2, y2)
    # TODO(synk): real RoIAlignAvg is bilinear; this is nearest-neighbour
    # bin-centre sampling (selection gather).
    # TODO(synk): longer-term, pull this gather into the kernel via
    # PrefetchScalarGridSpec + pl.Element / manual DMA gather.
    B, T, Hf, Wf, C = feat_cl.shape
    b = rois_flat[:, 0].astype(jnp.int32)
    x1, y1 = rois_flat[:, 1] * scale, rois_flat[:, 2] * scale
    x2, y2 = rois_flat[:, 3] * scale, rois_flat[:, 4] * scale
    bw = (x2 - x1 + 1.0) / pool
    bh_ = (y2 - y1 + 1.0) / pool
    cx = x1[:, None] + (jnp.arange(pool, dtype=jnp.float32) + 0.5) * bw[:, None]
    cy = y1[:, None] + (jnp.arange(pool, dtype=jnp.float32) + 0.5) * bh_[:, None]
    jx = jnp.clip(jnp.floor(cx).astype(jnp.int32), 0, Wf - 1)
    iy = jnp.clip(jnp.floor(cy).astype(jnp.int32), 0, Hf - 1)

    def sample_one(bn, iyn, jxn):
        fm = feat_cl[bn]                     # (T, Hf, Wf, C)
        fm = jnp.take(fm, iyn, axis=1)       # (T, pool, Wf, C)
        fm = jnp.take(fm, jxn, axis=2)       # (T, pool, pool, C)
        return fm

    return jax.vmap(sample_one)(b, iy, jx)   # (N, T, pool, pool, C)


def _act_net_glue(im_data):
    B, Cin, T, H, W = im_data.shape
    Hf, Wf = H // 16, W // 16

    # act_base stand-in, pooling half.
    # TODO(synk): real act_base is pretrained ResNet34-3D conv1..layer3 loaded
    # from resnet-34-kinetics.pth; stand-in = /16 spatial avg-pool followed by a
    # pointwise 3->256 conv + ReLU (the conv is fused into the tail kernel).
    pooled3 = im_data.reshape(B, Cin, T, Hf, 16, Wf, 16).mean(axis=(4, 6))
    pooled3 = jnp.transpose(pooled3, (0, 2, 3, 4, 1))        # (B, T, Hf, Wf, 3)

    # act_rpn: TODO(synk): anchor generation + proposal layer + NMS of _RPN are
    # external.  In eval the RPN conv / cls / bbox tensors feed only that
    # external layer, so their compute is elided and deterministic tube
    # proposals are emitted directly.
    n_rois = 4
    tubes = jnp.array(
        [[0.0, 0.0, 0.0, W - 1.0, H - 1.0, T - 1.0],
         [8.0, 8.0, 0.0, W - 9.0, H - 9.0, T - 1.0],
         [W / 2.0, 0.0, 0.0, W - 1.0, H / 2.0 - 1.0, T - 1.0],
         [0.0, H / 2.0, 0.0, W / 2.0 - 1.0, H - 1.0, T - 1.0]], dtype=jnp.float32)
    bidx = jnp.broadcast_to(jnp.arange(B, dtype=jnp.float32)[:, None, None],
                            (B, n_rois, 1))
    rois_all = jnp.concatenate(
        [bidx, jnp.broadcast_to(tubes[None], (B, n_rois, 6))], axis=-1)
    # Same column selection as the training branch: (b, x1, y1, x2, y2).
    rois = rois_all[:, :, jnp.array([0, 1, 2, 4, 5])]        # (B, n_rois, 5)

    # RoI align on the pooled 3-channel map.  The pointwise base conv (+ReLU)
    # commutes exactly with this selection gather, so it is applied inside the
    # fused tail kernel instead of materializing a (B,T,Hf,Wf,256) base_feat.
    roi3 = _roi_align_avg(pooled3, rois.reshape(-1, 5), pool=7, scale=1.0 / 16.0)
    Nt = B * n_rois
    roi3 = roi3.reshape(Nt, T * 7 * 7, 3)
    return rois, roi3


# -----------------------------------------------------------------------------
# ACT_net forward (eval mode) and a pure-JAX reference.
# -----------------------------------------------------------------------------
def act_net_forward(params, im_data, im_info, gt_tubes, gt_rois, num_boxes):
    del im_info, gt_tubes, gt_rois, num_boxes      # only consumed in training mode
    B = im_data.shape[0]
    rois, roi3 = _act_net_glue(im_data)
    bbox_pred, cls_prob = pallas_fused_tail(
        roi3,
        params["base_w"], params["base_b"],
        params["top_w"], params["top_b"],
        params["bbox_w"], params["bbox_b"],
        params["cls_w"], params["cls_b"])
    bbox_pred = bbox_pred.reshape(B, rois.shape[1], -1)
    return rois, bbox_pred, cls_prob


def act_net_forward_ref(params, im_data):
    """Pure-JAX reference of the eval forward (no Pallas) for numerical checks."""
    B = im_data.shape[0]
    rois, roi3 = _act_net_glue(im_data)
    Nt, L, _ = roi3.shape
    h = jnp.einsum("nlc,cd->nld", roi3, params["base_w"]) + params["base_b"]
    h = jnp.maximum(h, 0.0).astype(jnp.bfloat16)
    f = jnp.dot(h.reshape(Nt * L, -1), params["top_w"],
                preferred_element_type=jnp.float32) + params["top_b"]
    f = jnp.maximum(f, 0.0).reshape(Nt, L, -1)
    feat = jnp.mean(f, axis=1)
    bbox = feat @ params["bbox_w"] + params["bbox_b"]
    cls = feat @ params["cls_w"] + params["cls_b"]
    prob = jax.nn.softmax(cls, axis=-1)
    return rois, bbox.reshape(B, rois.shape[1], -1), prob


# -----------------------------------------------------------------------------
# Deterministic parameter init (matches normal_init stddevs; biases zero).
# RPN weights are omitted: the RPN compute path is elided in eval (see above).
# -----------------------------------------------------------------------------
def init_params(key, n_classes):
    ks = jax.random.split(key, 4)
    nrm = lambda k, shape, std: std * jax.random.normal(k, shape, jnp.float32)
    nb = 4 * n_classes
    return {
        # act_base stand-in 1x1x1 conv 3->256 (applied inside the fused kernel).
        "base_w": nrm(ks[0], (3, 256), 0.01),
        "base_b": jnp.zeros((1, 256), jnp.float32),
        # act_top (layer4) stand-in 1x1x1 conv 256->512, stored bf16 for the MXU.
        "top_w": nrm(ks[1], (256, 512), 0.01).astype(jnp.bfloat16),
        "top_b": jnp.zeros((1, 512), jnp.float32),
        # act_single_frame_pred / act_cls_score Linears.
        "bbox_w": nrm(ks[2], (512, nb), 0.001),
        "bbox_b": jnp.zeros((1, nb), jnp.float32),
        "cls_w": nrm(ks[3], (512, n_classes), 0.001),
        "cls_b": jnp.zeros((1, n_classes), jnp.float32),
    }


if __name__ == "__main__":
    actions = ("walk", "run", "jump", "sit")            # n_classes = 4
    n_classes = len(actions)

    key = jax.random.PRNGKey(0)
    kparam, kdata = jax.random.split(key)
    params = init_params(kparam, n_classes)

    B, T, H, W = 2, 8, 64, 64
    im_data = jax.random.normal(kdata, (B, 3, T, H, W), jnp.float32)
    im_info = jnp.tile(jnp.array([[float(H), float(W), 1.0]], jnp.float32), (B, 1))
    gt_tubes = jnp.zeros((B, 1, 7), jnp.float32)
    gt_rois = jnp.zeros((B, 1, T, 5), jnp.float32)
    num_boxes = jnp.zeros((B,), jnp.int32)

    fwd = jax.jit(functools.partial(act_net_forward, params))
    rois, bbox_pred, cls_prob = fwd(im_data, im_info, gt_tubes, gt_rois, num_boxes)
    jax.block_until_ready((rois, bbox_pred, cls_prob))

    assert rois.shape == (B, 4, 5)
    assert bbox_pred.shape == (B, 4, 4 * n_classes)
    assert cls_prob.shape == (B * 4, n_classes)
    assert bool(jnp.all(jnp.isfinite(bbox_pred))) and bool(jnp.all(jnp.isfinite(cls_prob)))
    assert bool(jnp.allclose(jnp.sum(cls_prob, axis=-1), 1.0, atol=1e-5))

    # Pure-JAX reference check (same glue, jnp math instead of the fused kernel).
    rois_r, bbox_r, prob_r = jax.jit(functools.partial(act_net_forward_ref, params))(im_data)
    jax.block_until_ready((rois_r, bbox_r, prob_r))
    assert bool(jnp.allclose(bbox_pred, bbox_r, rtol=2e-2, atol=1e-6))
    assert bool(jnp.allclose(cls_prob, prob_r, rtol=2e-2, atol=1e-5))

    print("KERNEL_OK")
</pallas_src>

<mosaic_0001>
module attributes {stable_mosaic.version = 11 : i64} {
  func.func @_fused_tail_kernel(%arg0: i32, %arg1: i32, %arg2: memref<4x392x16xbf16, #tpu.memory_space<vmem>>, %arg3: memref<16x256xbf16, #tpu.memory_space<vmem>>, %arg4: memref<1x256xf32, #tpu.memory_space<vmem>>, %arg5: memref<256x512xbf16, #tpu.memory_space<vmem>>, %arg6: memref<1x512xf32, #tpu.memory_space<vmem>>, %arg7: memref<512x128xf32, #tpu.memory_space<vmem>>, %arg8: memref<1x128xf32, #tpu.memory_space<vmem>>, %arg9: memref<1x4x128xf32, #tpu.memory_space<vmem>>, %arg10: memref<4x512xf32, #tpu.memory_space<vmem>>) attributes {dimension_semantics = [#tpu.dimension_semantics<parallel>, #tpu.dimension_semantics<arbitrary>], iteration_bounds = array<i64: 2, 1>, scalar_prefetch = 0 : i64, scratch_operands = 1 : i64, tpu.core_type = #tpu.core_type<tc>, window_params = [{transform_indices = @transform_0, window_bounds = array<i64: 4, 392, 16>}, {pipeline_mode = #tpu.pipeline_mode<synchronous>, transform_indices = @transform_1, window_bounds = array<i64: 16, 256>}, {pipeline_mode = #tpu.pipeline_mode<synchronous>, transform_indices = @transform_2, window_bounds = array<i64: 1, 256>}, {pipeline_mode = #tpu.pipeline_mode<synchronous>, transform_indices = @transform_3, window_bounds = array<i64: 256, 512>}, {pipeline_mode = #tpu.pipeline_mode<synchronous>, transform_indices = @transform_4, window_bounds = array<i64: 1, 512>}, {pipeline_mode = #tpu.pipeline_mode<synchronous>, transform_indices = @transform_5, window_bounds = array<i64: 512, 128>}, {pipeline_mode = #tpu.pipeline_mode<synchronous>, transform_indices = @transform_6, window_bounds = array<i64: 1, 128>}, {transform_indices = @transform_7, window_bounds = array<i64: 1, 4, 128>}]} {
    %c0_i32 = arith.constant 0 : i32
    %0 = arith.cmpi eq, %arg1, %c0_i32 : i32
    %1 = arith.extui %0 : i1 to i32
    %c0_i32_0 = arith.constant 0 : i32
    %2 = arith.cmpi ne, %1, %c0_i32_0 : i32
    scf.if %2 {
      %cst_21 = arith.constant 0.000000e+00 : f32
      %28 = vector.broadcast %cst_21 : f32 to vector<4x512xf32>
      %c0_22 = arith.constant 0 : index
      %c0_23 = arith.constant 0 : index
      %29 = vector.load %arg10[%c0_22, %c0_23] : memref<4x512xf32, #tpu.memory_space<vmem>>, vector<4x512xf32>
      tpu.vector_store %arg10[%c0_22, %c0_23], %28 {strides = array<i32>} : memref<4x512xf32, #tpu.memory_space<vmem>>, vector<4x512xf32>,
    } else {
    }
    %c0 = arith.constant 0 : index
    %c0_1 = arith.constant 0 : index
    %c0_2 = arith.constant 0 : index
    %3 = vector.load %arg2[%c0, %c0_1, %c0_2] : memref<4x392x16xbf16, #tpu.memory_space<vmem>>, vector<4x392x16xbf16>
    %4 = vector.shape_cast %3 : vector<4x392x16xbf16> to vector<1568x16xbf16>
    %c0_3 = arith.constant 0 : index
    %c0_4 = arith.constant 0 : index
    %5 = vector.load %arg3[%c0_3, %c0_4] : memref<16x256xbf16, #tpu.memory_space<vmem>>, vector<16x256xbf16>
    %cst = arith.constant dense<0.000000e+00> : vector<1568x256xf32>
    %6 = tpu.matmul %4, %5, %cst {dimension_numbers = #tpu.dot_dimension_numbers<[1], [0], [0], [1], [0, 0, 1, 1], [], []>} : vector<1568x16xbf16>, vector<16x256xbf16>, vector<1568x256xf32> -> vector<1568x256xf32>
    %c0_5 = arith.constant 0 : index
    %c0_6 = arith.constant 0 : index
    %7 = vector.load %arg4[%c0_5, %c0_6] : memref<1x256xf32, #tpu.memory_space<vmem>>, vector<1x256xf32>
    %8 = vector.broadcast %7 : vector<1x256xf32> to vector<1568x256xf32>
    %9 = arith.addf %6, %8 : vector<1568x256xf32>
    %cst_7 = arith.constant 0.000000e+00 : f32
    %10 = vector.broadcast %cst_7 : f32 to vector<1568x256xf32>
    %11 = arith.maximumf %9, %10 : vector<1568x256xf32>
    %12 = arith.truncf %11 : vector<1568x256xf32> to vector<1568x256xbf16>
    %c0_8 = arith.constant 0 : index
    %c0_9 = arith.constant 0 : index
    %13 = vector.load %arg5[%c0_8, %c0_9] : memref<256x512xbf16, #tpu.memory_space<vmem>>, vector<256x512xbf16>
    %cst_10 = arith.constant dense<0.000000e+00> : vector<1568x512xf32>
    %14 = tpu.matmul %12, %13, %cst_10 {dimension_numbers = #tpu.dot_dimension_numbers<[1], [0], [0], [1], [0, 0, 1, 1], [], []>} : vector<1568x256xbf16>, vector<256x512xbf16>, vector<1568x512xf32> -> vector<1568x512xf32>
    %c0_11 = arith.constant 0 : index
    %c0_12 = arith.constant 0 : index
    %15 = vector.load %arg6[%c0_11, %c0_12] : memref<1x512xf32, #tpu.memory_space<vmem>>, vector<1x512xf32>
    %16 = vector.broadcast %15 : vector<1x512xf32> to vector<1568x512xf32>
    %17 = arith.addf %14, %16 : vector<1568x512xf32>
    %cst_13 = arith.constant 0.000000e+00 : f32
    %18 = vector.broadcast %cst_13 : f32 to vector<1568x512xf32>
    %19 = arith.maximumf %17, %18 : vector<1568x512xf32>
    %c0_14 = arith.constant 0 : index
    %c0_15 = arith.constant 0 : index
    %20 = vector.load %arg10[%c0_14, %c0_15] : memref<4x512xf32, #tpu.memory_space<vmem>>, vector<4x512xf32>
    %21 = vector.shape_cast %19 : vector<1568x512xf32> to vector<4x392x512xf32>
    %cst_16 = arith.constant dense<0.000000e+00> : vector<4x512xf32>
    %22 = vector.multi_reduction <add>, %21, %cst_16 [1] : vector<4x392x512xf32> to vector<4x512xf32>
    %23 = arith.addf %20, %22 : vector<4x512xf32>
    %c0_17 = arith.constant 0 : index
    %c0_18 = arith.constant 0 : index
    %24 = vector.load %arg10[%c0_17, %c0_18] : memref<4x512xf32, #tpu.memory_space<vmem>>, vector<4x512xf32>
    tpu.vector_store %arg10[%c0_17, %c0_18], %23 {strides = array<i32>} : memref<4x512xf32, #tpu.memory_space<vmem>>, vector<4x512xf32>,
    %c0_i32_19 = arith.constant 0 : i32
    %25 = arith.cmpi eq, %arg1, %c0_i32_19 : i32
    %26 = arith.extui %25 : i1 to i32
    %c0_i32_20 = arith.constant 0 : i32
    %27 = arith.cmpi ne, %26, %c0_i32_20 : i32
    scf.if %27 {
      %c0_21 = arith.constant 0 : index
      %c0_22 = arith.constant 0 : index
      %28 = vector.load %arg10[%c0_21, %c0_22] : memref<4x512xf32, #tpu.memory_space<vmem>>, vector<4x512xf32>
      %cst_23 = arith.constant 0.00255102036 : f32
      %29 = vector.broadcast %cst_23 : f32 to vector<4x512xf32>
      %30 = arith.mulf %28, %29 : vector<4x512xf32>
      %c0_24 = arith.constant 0 : index
      %c0_25 = arith.constant 0 : index
      %31 = vector.load %arg7[%c0_24, %c0_25] : memref<512x128xf32, #tpu.memory_space<vmem>>, vector<512x128xf32>
      %cst_26 = arith.constant dense<0.000000e+00> : vector<4x128xf32>
      %32 = tpu.matmul %30, %31, %cst_26 {dimension_numbers = #tpu.dot_dimension_numbers<[1], [0], [0], [1], [0, 0, 1, 1], [], []>} : vector<4x512xf32>, vector<512x128xf32>, vector<4x128xf32> -> vector<4x128xf32>
      %c0_27 = arith.constant 0 : index
      %c0_28 = arith.constant 0 : index
      %33 = vector.load %arg8[%c0_27, %c0_28] : memref<1x128xf32, #tpu.memory_space<vmem>>, vector<1x128xf32>
      %34 = vector.broadcast %33 : vector<1x128xf32> to vector<4x128xf32>
      %35 = arith.addf %32, %34 : vector<4x128xf32>
      %36 = tpu.iota {dimensions = array<i32: 1>} : vector<4x128xi32>
      %c16_i32 = arith.constant 16 : i32
      %37 = vector.broadcast %c16_i32 : i32 to vector<4x128xi32>
      %38 = arith.cmpi sge, %36, %37 : vector<4x128xi32>
      %c20_i32 = arith.constant 20 : i32
      %39 = vector.broadcast %c20_i32 : i32 to vector<4x128xi32>
      %40 = arith.cmpi slt, %36, %39 : vector<4x128xi32>
      %41 = arith.andi %38, %40 : vector<4x128xi1>
      %cst_29 = arith.constant -1.000000e+30 : f32
      %42 = vector.broadcast %cst_29 : f32 to vector<4x128xf32>
      %43 = arith.select %41, %35, %42 : vector<4x128xi1>, vector<4x128xf32>
      %cst_30 = arith.constant dense<0xFF800000> : vector<4xf32>
      %44 = vector.multi_reduction <maximumf>, %43, %cst_30 [1] : vector<4x128xf32> to vector<4xf32>
      %45 = vector.shape_cast %44 : vector<4xf32> to vector<4x1xf32>
      %46 = vector.broadcast %45 : vector<4x1xf32> to vector<4x128xf32>
      %47 = arith.subf %43, %46 : vector<4x128xf32>
      %48 = math.exp %47 : vector<4x128xf32>
      %cst_31 = arith.constant 0.000000e+00 : f32
      %49 = vector.broadcast %cst_31 : f32 to vector<4x128xf32>
      %50 = arith.select %41, %48, %49 : vector<4x128xi1>, vector<4x128xf32>
      %cst_32 = arith.constant dense<0.000000e+00> : vector<4xf32>
      %51 = vector.multi_reduction <add>, %50, %cst_32 [1] : vector<4x128xf32> to vector<4xf32>
      %52 = vector.shape_cast %51 : vector<4xf32> to vector<4x1xf32>
      %53 = vector.broadcast %52 : vector<4x1xf32> to vector<4x128xf32>
      %54 = arith.divf %50, %53 : vector<4x128xf32>
      %55 = arith.select %41, %54, %35 : vector<4x128xi1>, vector<4x128xf32>
      %56 = vector.shape_cast %55 : vector<4x128xf32> to vector<1x4x128xf32>
      %c0_33 = arith.constant 0 : index
      %c0_34 = arith.constant 0 : index
      %c0_35 = arith.constant 0 : index
      %57 = vector.load %arg9[%c0_33, %c0_34, %c0_35] : memref<1x4x128xf32, #tpu.memory_space<vmem>>, vector<1x4x128xf32>
      tpu.vector_store %arg9[%c0_33, %c0_34, %c0_35], %56 {strides = array<i32>} : memref<1x4x128xf32, #tpu.memory_space<vmem>>, vector<1x4x128xf32>,
    } else {
    }
    return
  }
  func.func @transform_0(%arg0: i32, %arg1: i32) -> (i32, i32, i32) {
    %c0_i32 = arith.constant 0 : i32
    %c0_i32_0 = arith.constant 0 : i32
    return %arg0, %arg1, %c0_i32 : i32, i32, i32
  }
  func.func @transform_1(%arg0: i32, %arg1: i32) -> (i32, i32) {
    %c0_i32 = arith.constant 0 : i32
    %c0_i32_0 = arith.constant 0 : i32
    %c0_i32_1 = arith.constant 0 : i32
    return %c0_i32, %c0_i32_0 : i32, i32
  }
  func.func @transform_2(%arg0: i32, %arg1: i32) -> (i32, i32) {
    %c0_i32 = arith.constant 0 : i32
    %c0_i32_0 = arith.constant 0 : i32
    %c0_i32_1 = arith.constant 0 : i32
    return %c0_i32, %c0_i32_0 : i32, i32
  }
  func.func @transform_3(%arg0: i32, %arg1: i32) -> (i32, i32) {
    %c0_i32 = arith.constant 0 : i32
    %c0_i32_0 = arith.constant 0 : i32
    %c0_i32_1 = arith.constant 0 : i32
    return %c0_i32, %c0_i32_0 : i32, i32
  }
  func.func @transform_4(%arg0: i32, %arg1: i32) -> (i32, i32) {
    %c0_i32 = arith.constant 0 : i32
    %c0_i32_0 = arith.constant 0 : i32
    %c0_i32_1 = arith.constant 0 : i32
    return %c0_i32, %c0_i32_0 : i32, i32
  }
  func.func @transform_5(%arg0: i32, %arg1: i32) -> (i32, i32) {
    %c0_i32 = arith.constant 0 : i32
    %c0_i32_0 = arith.constant 0 : i32
    %c0_i32_1 = arith.constant 0 : i32
    return %c0_i32, %c0_i32_0 : i32, i32
  }
  func.func @transform_6(%arg0: i32, %arg1: i32) -> (i32, i32) {
    %c0_i32 = arith.constant 0 : i32
    %c0_i32_0 = arith.constant 0 : i32
    %c0_i32_1 = arith.constant 0 : i32
    return %c0_i32, %c0_i32_0 : i32, i32
  }
  func.func @transform_7(%arg0: i32, %arg1: i32) -> (i32, i32, i32) {
    %c0_i32 = arith.constant 0 : i32
    %c0_i32_0 = arith.constant 0 : i32
    %c0_i32_1 = arith.constant 0 : i32
    return %arg0, %c0_i32, %c0_i32_0 : i32, i32, i32
  }
}

</mosaic_0001>

<llo_original>
// kernel: act_net_forward.1
$region0: #{act_net_forward.1}
  #allocation0 [shape = 'u32[]', space=smem, size = 0x4, offset = 0x4, fixed_abs, tag = 'smem constant byte address 0x4 - core index']
  #allocation1 [shape = 'u32[144,128]{1,0:T(1,128)}', space=vmem, size = 0x12000, scoped, tag = 'internal scratch']
  #allocation2 [shape = 'f32[4,512]{1,0:T(4,128)}', space=vmem, size = 0x2000, scoped, tag = 'scratch operand']
  %s0 = inlined_call_operand.vmem [shape: bf16[8,392,16], index: 0, kind: input, shape index: {}]
  %s1 = inlined_call_operand.vmem [shape: bf16[16,256], index: 1, kind: input, shape index: {}]
  %s2 = inlined_call_operand.vmem [shape: f32[1,256], index: 2, kind: input, shape index: {}]
  %s3 = inlined_call_operand.vmem [shape: bf16[256,512], index: 3, kind: input, shape index: {}]
  %s4 = inlined_call_operand.vmem [shape: f32[1,512], index: 4, kind: input, shape index: {}]
  %s5 = inlined_call_operand.vmem [shape: f32[512,128], index: 5, kind: input, shape index: {}]
  %s6 = inlined_call_operand.vmem [shape: f32[1,128], index: 6, kind: input, shape index: {}]
  %s7 = inlined_call_operand.vmem [shape: f32[2,4,128], index: 7, kind: output, shape index: {}]
  %s8 = sld [smem:[#allocation0]]
  $region69: #{act_net_forward.1} parent=0
    _
  %s10 = ssub.s32 1, %s8
  %s11 = scalar_select 0, %s10, %s8
  loop: start=0, step=1, limit=4
  $region2: #{act_net_forward.1} parent=0 // loop_pre_header
    _
  $region3: #{act_net_forward.1} parent=0 // loop_header
    %s13 = sphi 0, %s17
    %p14 = scmp.ge.s32.totalorder %s13, 4
    %s20 = sphi 0, %s32
    %s21 = sphi 0, %s28
    %s22 = sphi 0, %s20
    %s23 = sphi 0, %s21
    %s24 = sphi 0, %s22
    %s25 = sphi 0, %s23
    %s37 = sphi 0, %s39
    %s40 = sphi 0, %s37
    %s41 = sphi 0, %s40
    %s57 = sphi 0, %s41
    %s61 = sphi 0, %s61
    %s63 = sphi 0, %s61
    %s64 = sphi 0, %s63
    %s78 = sphi 0, %s64
    %s82 = sphi 0, %s82
    %s84 = sphi 0, %s82
    %s85 = sphi 0, %s84
    %s99 = sphi 0, %s85
    %s103 = sphi 0, %s103
    %s105 = sphi 0, %s103
    %s106 = sphi 0, %s105
    %s120 = sphi 0, %s106
    %s124 = sphi 0, %s124
    %s126 = sphi 0, %s124
    %s127 = sphi 0, %s126
    %s141 = sphi 0, %s127
    %s145 = sphi 0, %s145
    %s147 = sphi 0, %s145
    %s148 = sphi 0, %s147
    %s162 = sphi 0, %s148
    %s166 = sphi 0, %s166
    %s168 = sphi 0, %s166
    %s169 = sphi 0, %s168
    %s183 = sphi 0, %s169
    %s189 = sphi 0, %s191
    %s192 = sphi 0, %s189
    %s193 = sphi 0, %s192
    %s209 = sphi 0, %s193
  $region4: #{act_net_forward.1} parent=0 // loop_header_branch
    %16 = sbr.rel (%p14) target = $region8
  $region5: #{act_net_forward.1} parent=0 // loop_body
    %s18 = ssub.s32 %s13, 1
    %s19 = ssub.s32 %s13, 2
    %s26 = sadd.s32 1, %s21
    %p27 = scmp.ge.s32.totalorder %s26, 1
    %s28 = scalar_select %p27, 0, %s26
    %s29 = sadd.s32 1, %s20
    %s30 = scalar_select %p27, %s29, %s20
    %p31 = scmp.ge.s32.totalorder %s30, 2
    %s32 = scalar_select %p31, 0, %s30
    %s33 = ssub.s32 %s20, %s32
    %s34 = ssub.s32 %s21, %s28
    %s35 = sor.u32 %s33, %s34
    %p36 = scmp.eq.s32.totalorder %s35, 0
    %s38 = sadd.s32 %s37, 1
    %s39 = scalar_select %p36, %s37, %s38
    %p42 = pneg %p36
    %p43 = scmp.eq.s32.totalorder %s13, 1
    %p44 = por %p42, %p43
    %p45 = scmp.ne.s32.totalorder %s37, %s40
    %p46 = scmp.eq.s32.totalorder %s13, 0
    %p47 = por %p45, %p46
    %p48 = scmp.ne.s32.totalorder %s37, %s40
    %p49 = scmp.eq.s32.totalorder %s18, 1
    %p50 = por %p48, %p49
    %p51 = scmp.ne.s32.totalorder %s40, %s41
    %p52 = scmp.eq.s32.totalorder %s18, 0
    %p53 = por %p51, %p52
    %p54 = scmp.ne.s32.totalorder %s40, %s41
    %p55 = scmp.eq.s32.totalorder %s19, 1
    %p56 = por %p54, %p55
    %p58 = scmp.ne.s32.totalorder %s41, %s57
    %p59 = scmp.eq.s32.totalorder %s19, 0
    %p60 = por %p58, %p59
    %s62 = sadd.s32 %s61, 1
    %p65 = scmp.eq.s32.totalorder %s13, 1
    %p66 = scmp.ne.s32.totalorder %s61, %s63
    %p67 = scmp.eq.s32.totalorder %s13, 0
    %p68 = por %p66, %p67
    %p69 = scmp.ne.s32.totalorder %s61, %s63
    %p70 = scmp.eq.s32.totalorder %s18, 1
    %p71 = por %p69, %p70
    %p72 = scmp.ne.s32.totalorder %s63, %s64
    %p73 = scmp.eq.s32.totalorder %s18, 0
    %p74 = por %p72, %p73
    %p75 = scmp.ne.s32.totalorder %s63, %s64
    %p76 = scmp.eq.s32.totalorder %s19, 1
    %p77 = por %p75, %p76
    %p79 = scmp.ne.s32.totalorder %s64, %s78
    %p80 = scmp.eq.s32.totalorder %s19, 0
    %p81 = por %p79, %p80
    %s83 = sadd.s32 %s82, 1
    %p86 = scmp.eq.s32.totalorder %s13, 1
    %p87 = scmp.ne.s32.totalorder %s82, %s84
    %p88 = scmp.eq.s32.totalorder %s13, 0
    %p89 = por %p87, %p88
    %p90 = scmp.ne.s32.totalorder %s82, %s84
    %p91 = scmp.eq.s32.totalorder %s18, 1
    %p92 = por %p90, %p91
    %p93 = scmp.ne.s32.totalorder %s84, %s85
    %p94 = scmp.eq.s32.totalorder %s18, 0
    %p95 = por %p93, %p94
    %p96 = scmp.ne.s32.totalorder %s84, %s85
    %p97 = scmp.eq.s32.totalorder %s19, 1
    %p98 = por %p96, %p97
    %p100 = scmp.ne.s32.totalorder %s85, %s99
    %p101 = scmp.eq.s32.totalorder %s19, 0
    %p102 = por %p100, %p101
    %s104 = sadd.s32 %s103, 1
    %p107 = scmp.eq.s32.totalorder %s13, 1
    %p108 = scmp.ne.s32.totalorder %s103, %s105
    %p109 = scmp.eq.s32.totalorder %s13, 0
    %p110 = por %p108, %p109
    %p111 = scmp.ne.s32.totalorder %s103, %s105
    %p112 = scmp.eq.s32.totalorder %s18, 1
    %p113 = por %p111, %p112
    %p114 = scmp.ne.s32.totalorder %s105, %s106
    %p115 = scmp.eq.s32.totalorder %s18, 0
    %p116 = por %p114, %p115
    %p117 = scmp.ne.s32.totalorder %s105, %s106
    %p118 = scmp.eq.s32.totalorder %s19, 1
    %p119 = por %p117, %p118
    %p121 = scmp.ne.s32.totalorder %s106, %s120
    %p122 = scmp.eq.s32.totalorder %s19, 0
    %p123 = por %p121, %p122
    %s125 = sadd.s32 %s124, 1
    %p128 = scmp.eq.s32.totalorder %s13, 1
    %p129 = scmp.ne.s32.totalorder %s124, %s126
    %p130 = scmp.eq.s32.totalorder %s13, 0
    %p131 = por %p129, %p130
    %p132 = scmp.ne.s32.totalorder %s124, %s126
    %p133 = scmp.eq.s32.totalorder %s18, 1
    %p134 = por %p132, %p133
    %p135 = scmp.ne.s32.totalorder %s126, %s127
    %p136 = scmp.eq.s32.totalorder %s18, 0
    %p137 = por %p135, %p136
    %p138 = scmp.ne.s32.totalorder %s126, %s127
    %p139 = scmp.eq.s32.totalorder %s19, 1
    %p140 = por %p138, %p139
    %p142 = scmp.ne.s32.totalorder %s127, %s141
    %p143 = scmp.eq.s32.totalorder %s19, 0
    %p144 = por %p142, %p143
    %s146 = sadd.s32 %s145, 1
    %p149 = scmp.eq.s32.totalorder %s13, 1
    %p150 = scmp.ne.s32.totalorder %s145, %s147
    %p151 = scmp.eq.s32.totalorder %s13, 0
    %p152 = por %p150, %p151
    %p153 = scmp.ne.s32.totalorder %s145, %s147
    %p154 = scmp.eq.s32.totalorder %s18, 1
    %p155 = por %p153, %p154
    %p156 = scmp.ne.s32.totalorder %s147, %s148
    %p157 = scmp.eq.s32.totalorder %s18, 0
    %p158 = por %p156, %p157
    %p159 = scmp.ne.s32.totalorder %s147, %s148
    %p160 = scmp.eq.s32.totalorder %s19, 1
    %p161 = por %p159, %p160
    %p163 = scmp.ne.s32.totalorder %s148, %s162
    %p164 = scmp.eq.s32.totalorder %s19, 0
    %p165 = por %p163, %p164
    %s167 = sadd.s32 %s166, 1
    %p170 = scmp.eq.s32.totalorder %s13, 1
    %p171 = scmp.ne.s32.totalorder %s166, %s168
    %p172 = scmp.eq.s32.totalorder %s13, 0
    %p173 = por %p171, %p172
    %p174 = scmp.ne.s32.totalorder %s166, %s168
    %p175 = scmp.eq.s32.totalorder %s18, 1
    %p176 = por %p174, %p175
    %p177 = scmp.ne.s32.totalorder %s168, %s169
    %p178 = scmp.eq.s32.totalorder %s18, 0
    %p179 = por %p177, %p178
    %p180 = scmp.ne.s32.totalorder %s168, %s169
    %p181 = scmp.eq.s32.totalorder %s19, 1
    %p182 = por %p180, %p181
    %p184 = scmp.ne.s32.totalorder %s169, %s183
    %p185 = scmp.eq.s32.totalorder %s19, 0
    %p186 = por %p184, %p185
    %s187 = ssub.s32 %s20, %s32
    %p188 = scmp.eq.s32.totalorder %s187, 0
    %s190 = sadd.s32 %s189, 1
    %s191 = scalar_select %p188, %s189, %s190
    %p194 = pneg %p188
    %p195 = scmp.eq.s32.totalorder %s13, 1
    %p196 = por %p194, %p195
    %p197 = scmp.ne.s32.totalorder %s189, %s192
    %p198 = scmp.eq.s32.totalorder %s13, 0
    %p199 = por %p197, %p198
    %p200 = scmp.ne.s32.totalorder %s189, %s192
    %p201 = scmp.eq.s32.totalorder %s18, 1
    %p202 = por %p200, %p201
    %p203 = scmp.ne.s32.totalorder %s192, %s193
    %p204 = scmp.eq.s32.totalorder %s18, 0
    %p205 = por %p203, %p204
    %p206 = scmp.ne.s32.totalorder %s192, %s193
    %p207 = scmp.eq.s32.totalorder %s19, 1
    %p208 = por %p206, %p207
    %p210 = scmp.ne.s32.totalorder %s193, %s209
    %p211 = scmp.eq.s32.totalorder %s19, 0
    %p212 = por %p210, %p211
    %p213 = scmp.le.s32.totalorder 1, %s13
    %p214 = scmp.lt.s32.totalorder %s13, 3
    %p215 = pnand %p213, %p214
    %p216 = pneg %p215
    // Predicated region
    $region9: #{act_net_forward.1} parent=5 // pred_check
      _
    $region10: #{act_net_forward.1} parent=5 // pred_check_branch
      %218 = sbr.rel (%p215) target = $region12
    $region11: #{act_net_forward.1} parent=5 // pred_region
      %s219 = ssub.s32 %s13, 1
      // Predicated region
      $region13: #{act_net_forward.1} parent=11 // pred_check
        %p220 = pneg %p74
      $region14: #{act_net_forward.1} parent=11 // pred_check_branch
        %222 = sbr.rel (%p220) target = $region16
      $region15: #{act_net_forward.1} parent=11 // pred_region
        _
      $region16: #{act_net_forward.1} parent=11 // pred_fallthru
        _
      // Predicated region
      $region17: #{act_net_forward.1} parent=11 // pred_check
        %p223 = pneg %p95
      $region18: #{act_net_forward.1} parent=11 // pred_check_branch
        %225 = sbr.rel (%p223) target = $region20
      $region19: #{act_net_forward.1} parent=11 // pred_region
        _
      $region20: #{act_net_forward.1} parent=11 // pred_fallthru
        _
      // Predicated region
      $region21: #{act_net_forward.1} parent=11 // pred_check
        %p226 = pneg %p116
      $region22: #{act_net_forward.1} parent=11 // pred_check_branch
        %228 = sbr.rel (%p226) target = $region24
      $region23: #{act_net_forward.1} parent=11 // pred_region
        _
      $region24: #{act_net_forward.1} parent=11 // pred_fallthru
        _
      // Predicated region
      $region25: #{act_net_forward.1} parent=11 // pred_check
        %p229 = pneg %p137
      $region26: #{act_net_forward.1} parent=11 // pred_check_branch
        %231 = sbr.rel (%p229) target = $region28
      $region27: #{act_net_forward.1} parent=11 // pred_region
        _
      $region28: #{act_net_forward.1} parent=11 // pred_fallthru
        _
      // Predicated region
      $region29: #{act_net_forward.1} parent=11 // pred_check
        %p232 = pneg %p158
      $region30: #{act_net_forward.1} parent=11 // pred_check_branch
        %234 = sbr.rel (%p232) target = $region32
      $region31: #{act_net_forward.1} parent=11 // pred_region
        _
      $region32: #{act_net_forward.1} parent=11 // pred_fallthru
        _
      // Predicated region
      $region33: #{act_net_forward.1} parent=11 // pred_check
        %p235 = pneg %p179
      $region34: #{act_net_forward.1} parent=11 // pred_check_branch
        %237 = sbr.rel (%p235) target = $region36
      $region35: #{act_net_forward.1} parent=11 // pred_region
        _
      $region36: #{act_net_forward.1} parent=11 // pred_fallthru
        _
    $region12: #{act_net_forward.1} parent=5 // pred_fallthru
      _
    %p238 = scmp.lt.s32.totalorder %s13, 2
    // Predicated region
    $region37: #{act_net_forward.1} parent=5 // pred_check
      %p239 = pneg %p238
    $region38: #{act_net_forward.1} parent=5 // pred_check_branch
      %241 = sbr.rel (%p239) target = $region40
    $region39: #{act_net_forward.1} parent=5 // pred_region
      // Predicated region
      $region41: #{act_net_forward.1} parent=39 // pred_check
        %p242 = pneg %p47
      $region42: #{act_net_forward.1} parent=39 // pred_check_branch
        %244 = sbr.rel (%p242) target = $region44
      $region43: #{act_net_forward.1} parent=39 // pred_region
        %s245 = smul.u32 4, %s20
        %s246 = smul.u32 49, %s21
        %p247 = scmp.lt.s32.totalorder %s245, 7
        %s248 = scalar_select %p247, %s245, 7
        %p249 = scmp.lt.s32.totalorder %s246, 48
        %s250 = scalar_select %p249, %s246, 48
        %s251 = smul.addr %s248, 49
        %s252 = sadd.s32 %s250, %s251
        %s253 = smul.addr %s252, 4
        %s254 = scalar_lea.vmem %s0, %s253
        %s255 = smul.u32 4, %s20
        %s256 = smul.u32 49, %s21
      $region44: #{act_net_forward.1} parent=39 // pred_fallthru
        _
    $region40: #{act_net_forward.1} parent=5 // pred_fallthru
      _
    %p257 = scmp.le.s32.totalorder 1, %s13
    %p258 = scmp.lt.s32.totalorder %s13, 3
    %p259 = pnand %p257, %p258
    %p260 = pneg %p259
    // Predicated region
    $region45: #{act_net_forward.1} parent=5 // pred_check
      _
    $region46: #{act_net_forward.1} parent=5 // pred_check_branch
      %262 = sbr.rel (%p259) target = $region48
    $region47: #{act_net_forward.1} parent=5 // pred_region
      %s263 = ssub.s32 %s13, 1
      %s264 = smul.u32 4, %s22
      %s265 = smul.u32 49, %s23
      %p266 = scmp.lt.s32.totalorder %s264, 7
      %s267 = scalar_select %p266, %s264, 7
      %p268 = scmp.lt.s32.totalorder %s265, 48
      %s269 = scalar_select %p268, %s265, 48
      %s270 = smul.addr %s267, 49
      %s271 = sadd.s32 %s269, %s270
      %s272 = smul.addr %s271, 4
      %s273 = scalar_lea.vmem %s0, %s272
      %p274 = pneg %p53
      %p275 = pneg %p50
      %p276 = pneg %p74
      %p277 = pneg %p71
      %p278 = pneg %p95
      %p279 = pneg %p92
      %p280 = pneg %p116
      %p281 = pneg %p113
      %p282 = pneg %p137
      %p283 = pneg %p134
      %p284 = pneg %p158
      %p285 = pneg %p155
      %p286 = pneg %p179
      %p287 = pneg %p176
      %p288 = pneg %p205
      %p289 = pneg %p202
      %p290 = scmp.lt.s32.totalorder %s22, 1
      %s291 = scalar_select %p290, %s22, 1
      %s292 = smul.addr %s291, 4
      %s293 = scalar_lea.vmem %s7, %s292
      %s294 = smul.u32 4, %s22
      %s295 = smul.u32 49, %s23
      %p296 = scmp.lt.s32.totalorder %s294, 7
      %s297 = scalar_select %p296, %s294, 7
      %p298 = scmp.lt.s32.totalorder %s295, 48
      %s299 = scalar_select %p298, %s295, 48
      %s300 = smul.addr %s297, 49
      %s301 = sadd.s32 %s299, %s300
      %s302 = smul.addr %s301, 4
      %s303 = scalar_lea.vmem %s0, %s302
      %s304 = smul.u32 4, %s22
      %s305 = smul.u32 49, %s23
      %p306 = scmp.lt.s32.totalorder %s22, 1
      %s307 = scalar_select %p306, %s22, 1
      %s308 = smul.addr %s307, 4
      %s309 = scalar_lea.vmem %s7, %s308
      %p311 = scmp.eq.s32.totalorder %s23, 0
      // Predicated region
      $region49: #{act_net_forward.1} parent=47 // pred_check
        %p312 = pneg %p311
      $region50: #{act_net_forward.1} parent=47 // pred_check_branch
        %314 = sbr.rel (%p312) target = $region52
      $region51: #{act_net_forward.1} parent=47 // pred_region
        %315 = vst [vmem:[#allocation2] sm:$0xff] 0.0
        %316 = vst [vmem:[#allocation2 + $0x8] sm:$0xff] 0.0
      $region52: #{act_net_forward.1} parent=47 // pred_fallthru
        _
      %v317 = vld [vmem:[%s303] sm:$0xf]
      %v318 = vld [vmem:[%s303 + $0x4] sm:$0xf]
      %v319 = vld [vmem:[%s303 + $0x8] sm:$0xf]
      %v320 = vld [vmem:[%s303 + $0xc] sm:$0xf]
      %v321 = vld [vmem:[%s303 + $0x10] sm:$0xf]
      %v322 = vld [vmem:[%s303 + $0x14] sm:$0xf]
      %v323 = vld [vmem:[%s303 + $0x18] sm:$0xf]
      %v324 = vld [vmem:[%s303 + $0x1c] sm:$0xf]
      %v325 = vld [vmem:[%s303 + $0x20] sm:$0xf]
      %v326 = vld [vmem:[%s303 + $0x24] sm:$0xf]
      %v327 = vld [vmem:[%s303 + $0x28] sm:$0xf]
      %v328 = vld [vmem:[%s303 + $0x2c] sm:$0xf]
      %v329 = vld [vmem:[%s303 + $0x30] sm:$0xf]
      %v330 = vld [vmem:[%s303 + $0x34] sm:$0xf]
      %v331 = vld [vmem:[%s303 + $0x38] sm:$0xf]
      %v332 = vld [vmem:[%s303 + $0x3c] sm:$0xf]
      %v333 = vld [vmem:[%s303 + $0x40] sm:$0xf]
      %v334 = vld [vmem:[%s303 + $0x44] sm:$0xf]
      %v335 = vld [vmem:[%s303 + $0x48] sm:$0xf]
      %v336 = vld [vmem:[%s303 + $0x4c] sm:$0xf]
      %v337 = vld [vmem:[%s303 + $0x50] sm:$0xf]
      %v338 = vld [vmem:[%s303 + $0x54] sm:$0xf]
      %v339 = vld [vmem:[%s303 + $0x58] sm:$0xf]
      %v340 = vld [vmem:[%s303 + $0x5c] sm:$0xf]
      %v341 = vld [vmem:[%s303 + $0x60] sm:$0xf]
      %v342 = vld [vmem:[%s303 + $0x64] sm:$0xf]
      %v343 = vld [vmem:[%s303 + $0x68] sm:$0xf]
      %v344 = vld [vmem:[%s303 + $0x6c] sm:$0xf]
      %v345 = vld [vmem:[%s303 + $0x70] sm:$0xf]
      %v346 = vld [vmem:[%s303 + $0x74] sm:$0xf]
      %v347 = vld [vmem:[%s303 + $0x78] sm:$0xf]
      %v348 = vld [vmem:[%s303 + $0x7c] sm:$0xf]
      %v349 = vld [vmem:[%s303 + $0x80] sm:$0xf]
      %v350 = vld [vmem:[%s303 + $0x84] sm:$0xf]
      %v351 = vld [vmem:[%s303 + $0x88] sm:$0xf]
      %v352 = vld [vmem:[%s303 + $0x8c] sm:$0xf]
      %v353 = vld [vmem:[%s303 + $0x90] sm:$0xf]
      %v354 = vld [vmem:[%s303 + $0x94] sm:$0xf]
      %v355 = vld [vmem:[%s303 + $0x98] sm:$0xf]
      %v356 = vld [vmem:[%s303 + $0x9c] sm:$0xf]
      %v357 = vld [vmem:[%s303 + $0xa0] sm:$0xf]
      %v358 = vld [vmem:[%s303 + $0xa4] sm:$0xf]
      %v359 = vld [vmem:[%s303 + $0xa8] sm:$0xf]
      %v360 = vld [vmem:[%s303 + $0xac] sm:$0xf]
      %v361 = vld [vmem:[%s303 + $0xb0] sm:$0xf]
      %v362 = vld [vmem:[%s303 + $0xb4] sm:$0xf]
      %v363 = vld [vmem:[%s303 + $0xb8] sm:$0xf]
      %v364 = vld [vmem:[%s303 + $0xbc] sm:$0xf]
      %v365 = vld [vmem:[%s303 + $0xc0] sm:$0xf]
      %v366 = vld [vmem:[%s303 + $0xc4] sm:$0xf]
      %v367 = vld [vmem:[%s303 + $0xc8] sm:$0xf]
      %v368 = vld [vmem:[%s303 + $0xcc] sm:$0xf]
      %v369 = vld [vmem:[%s303 + $0xd0] sm:$0xf]
      %v370 = vld [vmem:[%s303 + $0xd4] sm:$0xf]
      %v371 = vld [vmem:[%s303 + $0xd8] sm:$0xf]
      %v372 = vld [vmem:[%s303 + $0xdc] sm:$0xf]
      %v373 = vld [vmem:[%s303 + $0xe0] sm:$0xf]
      %v374 = vld [vmem:[%s303 + $0xe4] sm:$0xf]
      %v375 = vld [vmem:[%s303 + $0xe8] sm:$0xf]
      %v376 = vld [vmem:[%s303 + $0xec] sm:$0xf]
      %v377 = vld [vmem:[%s303 + $0xf0] sm:$0xf]
      %v378 = vld [vmem:[%s303 + $0xf4] sm:$0xf]
      %v379 = vld [vmem:[%s303 + $0xf8] sm:$0xf]
      %v380 = vld [vmem:[%s303 + $0xfc] sm:$0xf]
      %v381 = vld [vmem:[%s303 + $0x100] sm:$0xf]
      %v382 = vld [vmem:[%s303 + $0x104] sm:$0xf]
      %v383 = vld [vmem:[%s303 + $0x108] sm:$0xf]
      %v384 = vld [vmem:[%s303 + $0x10c] sm:$0xf]
      %v385 = vld [vmem:[%s303 + $0x110] sm:$0xf]
      %v386 = vld [vmem:[%s303 + $0x114] sm:$0xf]
      %v387 = vld [vmem:[%s303 + $0x118] sm:$0xf]
      %v388 = vld [vmem:[%s303 + $0x11c] sm:$0xf]
      %v389 = vld [vmem:[%s303 + $0x120] sm:$0xf]
      %v390 = vld [vmem:[%s303 + $0x124] sm:$0xf]
      %v391 = vld [vmem:[%s303 + $0x128] sm:$0xf]
      %v392 = vld [vmem:[%s303 + $0x12c] sm:$0xf]
      %v393 = vld [vmem:[%s303 + $0x130] sm:$0xf]
      %v394 = vld [vmem:[%s303 + $0x134] sm:$0xf]
      %v395 = vld [vmem:[%s303 + $0x138] sm:$0xf]
      %v396 = vld [vmem:[%s303 + $0x13c] sm:$0xf]
      %v397 = vld [vmem:[%s303 + $0x140] sm:$0xf]
      %v398 = vld [vmem:[%s303 + $0x144] sm:$0xf]
      %v399 = vld [vmem:[%s303 + $0x148] sm:$0xf]
      %v400 = vld [vmem:[%s303 + $0x14c] sm:$0xf]
      %v401 = vld [vmem:[%s303 + $0x150] sm:$0xf]
      %v402 = vld [vmem:[%s303 + $0x154] sm:$0xf]
      %v403 = vld [vmem:[%s303 + $0x158] sm:$0xf]
      %v404 = vld [vmem:[%s303 + $0x15c] sm:$0xf]
      %v405 = vld [vmem:[%s303 + $0x160] sm:$0xf]
      %v406 = vld [vmem:[%s303 + $0x164] sm:$0xf]
      %v407 = vld [vmem:[%s303 + $0x168] sm:$0xf]
      %v408 = vld [vmem:[%s303 + $0x16c] sm:$0xf]
      %v409 = vld [vmem:[%s303 + $0x170] sm:$0xf]
      %v410 = vld [vmem:[%s303 + $0x174] sm:$0xf]
      %v411 = vld [vmem:[%s303 + $0x178] sm:$0xf]
      %v412 = vld [vmem:[%s303 + $0x17c] sm:$0xf]
      %v413 = vld [vmem:[%s303 + $0x180] sm:$0xf]
      %v414 = vld [vmem:[%s303 + $0x184] sm:$0xf]
      %v415 = vld [vmem:[%s303 + $0x188] sm:$0xf]
      %v416 = vld [vmem:[%s303 + $0x18c] sm:$0xf]
      %v417 = vld [vmem:[%s303 + $0x190] sm:$0xf]
      %v418 = vld [vmem:[%s303 + $0x194] sm:$0xf]
      %v419 = vld [vmem:[%s303 + $0x198] sm:$0xf]
      %v420 = vld [vmem:[%s303 + $0x19c] sm:$0xf]
      %v421 = vld [vmem:[%s303 + $0x1a0] sm:$0xf]
      %v422 = vld [vmem:[%s303 + $0x1a4] sm:$0xf]
      %v423 = vld [vmem:[%s303 + $0x1a8] sm:$0xf]
      %v424 = vld [vmem:[%s303 + $0x1ac] sm:$0xf]
      %v425 = vld [vmem:[%s303 + $0x1b0] sm:$0xf]
      %v426 = vld [vmem:[%s303 + $0x1b4] sm:$0xf]
      %v427 = vld [vmem:[%s303 + $0x1b8] sm:$0xf]
      %v428 = vld [vmem:[%s303 + $0x1bc] sm:$0xf]
      %v429 = vld [vmem:[%s303 + $0x1c0] sm:$0xf]
      %v430 = vld [vmem:[%s303 + $0x1c4] sm:$0xf]
      %v431 = vld [vmem:[%s303 + $0x1c8] sm:$0xf]
      %v432 = vld [vmem:[%s303 + $0x1cc] sm:$0xf]
      %v433 = vld [vmem:[%s303 + $0x1d0] sm:$0xf]
      %v434 = vld [vmem:[%s303 + $0x1d4] sm:$0xf]
      %v435 = vld [vmem:[%s303 + $0x1d8] sm:$0xf]
      %v436 = vld [vmem:[%s303 + $0x1dc] sm:$0xf]
      %v437 = vld [vmem:[%s303 + $0x1e0] sm:$0xf]
      %v438 = vld [vmem:[%s303 + $0x1e4] sm:$0xf]
      %v439 = vld [vmem:[%s303 + $0x1e8] sm:$0xf]
      %v440 = vld [vmem:[%s303 + $0x1ec] sm:$0xf]
      %v441 = vld [vmem:[%s303 + $0x1f0] sm:$0xf]
      %v442 = vld [vmem:[%s303 + $0x1f4] sm:$0xf]
      %v443 = vld [vmem:[%s303 + $0x1f8] sm:$0xf]
      %v444 = vld [vmem:[%s303 + $0x1fc] sm:$0xf]
      %v445 = vld [vmem:[%s303 + $0x200] sm:$0xf]
      %v446 = vld [vmem:[%s303 + $0x204] sm:$0xf]
      %v447 = vld [vmem:[%s303 + $0x208] sm:$0xf]
      %v448 = vld [vmem:[%s303 + $0x20c] sm:$0xf]
      %v449 = vld [vmem:[%s303 + $0x210] sm:$0xf]
      %v450 = vld [vmem:[%s303 + $0x214] sm:$0xf]
      %v451 = vld [vmem:[%s303 + $0x218] sm:$0xf]
      %v452 = vld [vmem:[%s303 + $0x21c] sm:$0xf]
      %v453 = vld [vmem:[%s303 + $0x220] sm:$0xf]
      %v454 = vld [vmem:[%s303 + $0x224] sm:$0xf]
      %v455 = vld [vmem:[%s303 + $0x228] sm:$0xf]
      %v456 = vld [vmem:[%s303 + $0x22c] sm:$0xf]
      %v457 = vld [vmem:[%s303 + $0x230] sm:$0xf]
      %v458 = vld [vmem:[%s303 + $0x234] sm:$0xf]
      %v459 = vld [vmem:[%s303 + $0x238] sm:$0xf]
      %v460 = vld [vmem:[%s303 + $0x23c] sm:$0xf]
      %v461 = vld [vmem:[%s303 + $0x240] sm:$0xf]
      %v462 = vld [vmem:[%s303 + $0x244] sm:$0xf]
      %v463 = vld [vmem:[%s303 + $0x248] sm:$0xf]
      %v464 = vld [vmem:[%s303 + $0x24c] sm:$0xf]
      %v465 = vld [vmem:[%s303 + $0x250] sm:$0xf]
      %v466 = vld [vmem:[%s303 + $0x254] sm:$0xf]
      %v467 = vld [vmem:[%s303 + $0x258] sm:$0xf]
      %v468 = vld [vmem:[%s303 + $0x25c] sm:$0xf]
      %v469 = vld [vmem:[%s303 + $0x260] sm:$0xf]
      %v470 = vld [vmem:[%s303 + $0x264] sm:$0xf]
      %v471 = vld [vmem:[%s303 + $0x268] sm:$0xf]
      %v472 = vld [vmem:[%s303 + $0x26c] sm:$0xf]
      %v473 = vld [vmem:[%s303 + $0x270] sm:$0xf]
      %v474 = vld [vmem:[%s303 + $0x274] sm:$0xf]
      %v475 = vld [vmem:[%s303 + $0x278] sm:$0xf]
      %v476 = vld [vmem:[%s303 + $0x27c] sm:$0xf]
      %v477 = vld [vmem:[%s303 + $0x280] sm:$0xf]
      %v478 = vld [vmem:[%s303 + $0x284] sm:$0xf]
      %v479 = vld [vmem:[%s303 + $0x288] sm:$0xf]
      %v480 = vld [vmem:[%s303 + $0x28c] sm:$0xf]
      %v481 = vld [vmem:[%s303 + $0x290] sm:$0xf]
      %v482 = vld [vmem:[%s303 + $0x294] sm:$0xf]
      %v483 = vld [vmem:[%s303 + $0x298] sm:$0xf]
      %v484 = vld [vmem:[%s303 + $0x29c] sm:$0xf]
      %v485 = vld [vmem:[%s303 + $0x2a0] sm:$0xf]
      %v486 = vld [vmem:[%s303 + $0x2a4] sm:$0xf]
      %v487 = vld [vmem:[%s303 + $0x2a8] sm:$0xf]
      %v488 = vld [vmem:[%s303 + $0x2ac] sm:$0xf]
      %v489 = vld [vmem:[%s303 + $0x2b0] sm:$0xf]
      %v490 = vld [vmem:[%s303 + $0x2b4] sm:$0xf]
      %v491 = vld [vmem:[%s303 + $0x2b8] sm:$0xf]
      %v492 = vld [vmem:[%s303 + $0x2bc] sm:$0xf]
      %v493 = vld [vmem:[%s303 + $0x2c0] sm:$0xf]
      %v494 = vld [vmem:[%s303 + $0x2c4] sm:$0xf]
      %v495 = vld [vmem:[%s303 + $0x2c8] sm:$0xf]
      %v496 = vld [vmem:[%s303 + $0x2cc] sm:$0xf]
      %v497 = vld [vmem:[%s303 + $0x2d0] sm:$0xf]
      %v498 = vld [vmem:[%s303 + $0x2d4] sm:$0xf]
      %v499 = vld [vmem:[%s303 + $0x2d8] sm:$0xf]
      %v500 = vld [vmem:[%s303 + $0x2dc] sm:$0xf]
      %v501 = vld [vmem:[%s303 + $0x2e0] sm:$0xf]
      %v502 = vld [vmem:[%s303 + $0x2e4] sm:$0xf]
      %v503 = vld [vmem:[%s303 + $0x2e8] sm:$0xf]
      %v504 = vld [vmem:[%s303 + $0x2ec] sm:$0xf]
      %v505 = vld [vmem:[%s303 + $0x2f0] sm:$0xf]
      %v506 = vld [vmem:[%s303 + $0x2f4] sm:$0xf]
      %v507 = vld [vmem:[%s303 + $0x2f8] sm:$0xf]
      %v508 = vld [vmem:[%s303 + $0x2fc] sm:$0xf]
      %v509 = vld [vmem:[%s303 + $0x300] sm:$0xf]
      %v510 = vld [vmem:[%s303 + $0x304] sm:$0xf]
      %v511 = vld [vmem:[%s303 + $0x308] sm:$0xf]
      %v512 = vld [vmem:[%s303 + $0x30c] sm:$0xf]
      %v513 = vld [vmem:[%s1] sm:$0xff]
      %v514 = vld [vmem:[%s1 + $0x8] sm:$0xff]
      %v515 = vld [vmem:[%s2] sm:$0x3]
      %v517 = vlaneseq
      %v518 = vshrl.u32 %v517, 7
      %v519 = vsub.s32 0, %v518
      %v520 = vrot.slane %v515, %v519
      %v521 = vlaneseq
      %v522 = vshrl.u32 %v521, 7
      %v523 = vsub.s32 1, %v522
      %v524 = vrot.slane %v515, %v523
      %v723 = vunpack.c.l.b16 %v317
      %v724 = vunpack.c.l.b16 %v318
      %v725 = vunpack.c.l.b16 %v319
      %v726 = vunpack.c.l.b16 %v320
      %v727 = vunpack.c.l.b16 %v321
      %v728 = vunpack.c.l.b16 %v322
      %v729 = vunpack.c.l.b16 %v323
      %v730 = vunpack.c.l.b16 %v324
      %v731 = vunpack.c.l.b16 %v325
      %v732 = vunpack.c.l.b16 %v326
      %v733 = vunpack.c.l.b16 %v327
      %v734 = vunpack.c.l.b16 %v328
      %v735 = vunpack.c.l.b16 %v329
      %v736 = vunpack.c.l.b16 %v330
      %v737 = vunpack.c.l.b16 %v331
      %v738 = vunpack.c.l.b16 %v332
      %v739 = vunpack.c.l.b16 %v333
      %v740 = vunpack.c.l.b16 %v334
      %v741 = vunpack.c.l.b16 %v335
      %v742 = vunpack.c.l.b16 %v336
      %v743 = vunpack.c.l.b16 %v337
      %v744 = vunpack.c.l.b16 %v338
      %v745 = vunpack.c.l.b16 %v339
      %v746 = vunpack.c.l.b16 %v340
      %v747 = vunpack.c.l.b16 %v341
      %v748 = vunpack.c.l.b16 %v342
      %v749 = vunpack.c.l.b16 %v343
      %v750 = vunpack.c.l.b16 %v344
      %v751 = vunpack.c.l.b16 %v345
      %v752 = vunpack.c.l.b16 %v346
      %v753 = vunpack.c.l.b16 %v347
      %v754 = vunpack.c.l.b16 %v348
      %v755 = vunpack.c.l.b16 %v349
      %v756 = vunpack.c.l.b16 %v350
      %v757 = vunpack.c.l.b16 %v351
      %v758 = vunpack.c.l.b16 %v352
      %v759 = vunpack.c.l.b16 %v353
      %v760 = vunpack.c.l.b16 %v354
      %v761 = vunpack.c.l.b16 %v355
      %v762 = vunpack.c.l.b16 %v356
      %v763 = vunpack.c.l.b16 %v357
      %v764 = vunpack.c.l.b16 %v358
      %v765 = vunpack.c.l.b16 %v359
      %v766 = vunpack.c.l.b16 %v360
      %v767 = vunpack.c.l.b16 %v361
      %v768 = vunpack.c.l.b16 %v362
      %v769 = vunpack.c.l.b16 %v363
      %v770 = vunpack.c.l.b16 %v364
      %v771 = vunpack.c.l.b16 %v365
      %v772 = vunpack.c.l.b16 %v366
      %v773 = vunpack.c.l.b16 %v367
      %v774 = vunpack.c.l.b16 %v368
      %v775 = vunpack.c.l.b16 %v369
      %v776 = vunpack.c.l.b16 %v370
      %v777 = vunpack.c.l.b16 %v371
      %v778 = vunpack.c.l.b16 %v372
      %v779 = vunpack.c.l.b16 %v373
      %v780 = vunpack.c.l.b16 %v374
      %v781 = vunpack.c.l.b16 %v375
      %v782 = vunpack.c.l.b16 %v376
      %v783 = vunpack.c.l.b16 %v377
      %v784 = vunpack.c.l.b16 %v378
      %v785 = vunpack.c.l.b16 %v379
      %v786 = vunpack.c.l.b16 %v380
      %v787 = vunpack.c.l.b16 %v381
      %v788 = vunpack.c.l.b16 %v382
      %v789 = vunpack.c.l.b16 %v383
      %v790 = vunpack.c.l.b16 %v384
      %v791 = vunpack.c.l.b16 %v385
      %v792 = vunpack.c.l.b16 %v386
      %v793 = vunpack.c.l.b16 %v387
      %v794 = vunpack.c.l.b16 %v388
      %v795 = vunpack.c.l.b16 %v389
      %v796 = vunpack.c.l.b16 %v390
      %v797 = vunpack.c.l.b16 %v391
      %v798 = vunpack.c.l.b16 %v392
      %v799 = vunpack.c.l.b16 %v393
      %v800 = vunpack.c.l.b16 %v394
      %v801 = vunpack.c.l.b16 %v395
      %v802 = vunpack.c.l.b16 %v396
      %v803 = vunpack.c.l.b16 %v397
      %v804 = vunpack.c.l.b16 %v398
      %v805 = vunpack.c.l.b16 %v399
      %v806 = vunpack.c.l.b16 %v400
      %v807 = vunpack.c.l.b16 %v401
      %v808 = vunpack.c.l.b16 %v402
      %v809 = vunpack.c.l.b16 %v403
      %v810 = vunpack.c.l.b16 %v404
      %v811 = vunpack.c.l.b16 %v405
      %v812 = vunpack.c.l.b16 %v406
      %v813 = vunpack.c.l.b16 %v407
      %v814 = vunpack.c.l.b16 %v408
      %v815 = vunpack.c.l.b16 %v409
      %v816 = vunpack.c.l.b16 %v410
      %v817 = vunpack.c.l.b16 %v411
      %v818 = vunpack.c.l.b16 %v412
      %v819 = vunpack.c.l.b16 %v413
      %v820 = vunpack.c.l.b16 %v414
      %v821 = vunpack.c.l.b16 %v415
      %v822 = vunpack.c.l.b16 %v416
      %v823 = vunpack.c.l.b16 %v417
      %v824 = vunpack.c.l.b16 %v418
      %v825 = vunpack.c.l.b16 %v419
      %v826 = vunpack.c.l.b16 %v420
      %v827 = vunpack.c.l.b16 %v421
      %v828 = vunpack.c.l.b16 %v422
      %v829 = vunpack.c.l.b16 %v423
      %v830 = vunpack.c.l.b16 %v424
      %v831 = vunpack.c.l.b16 %v425
      %v832 = vunpack.c.l.b16 %v426
      %v833 = vunpack.c.l.b16 %v427
      %v834 = vunpack.c.l.b16 %v428
      %v835 = vunpack.c.l.b16 %v429
      %v836 = vunpack.c.l.b16 %v430
      %v837 = vunpack.c.l.b16 %v431
      %v838 = vunpack.c.l.b16 %v432
      %v839 = vunpack.c.l.b16 %v433
      %v840 = vunpack.c.l.b16 %v434
      %v841 = vunpack.c.l.b16 %v435
      %v842 = vunpack.c.l.b16 %v436
      %v843 = vunpack.c.l.b16 %v437
      %v844 = vunpack.c.l.b16 %v438
      %v845 = vunpack.c.l.b16 %v439
      %v846 = vunpack.c.l.b16 %v440
      %v847 = vunpack.c.l.b16 %v441
      %v848 = vunpack.c.l.b16 %v442
      %v849 = vunpack.c.l.b16 %v443
      %v850 = vunpack.c.l.b16 %v444
      %v851 = vunpack.c.l.b16 %v445
      %v852 = vunpack.c.l.b16 %v446
      %v853 = vunpack.c.l.b16 %v447
      %v854 = vunpack.c.l.b16 %v448
      %v855 = vunpack.c.l.b16 %v449
      %v856 = vunpack.c.l.b16 %v450
      %v857 = vunpack.c.l.b16 %v451
      %v858 = vunpack.c.l.b16 %v452
      %v859 = vunpack.c.l.b16 %v453
      %v860 = vunpack.c.l.b16 %v454
      %v861 = vunpack.c.l.b16 %v455
      %v862 = vunpack.c.l.b16 %v456
      %v863 = vunpack.c.l.b16 %v457
      %v864 = vunpack.c.l.b16 %v458
      %v865 = vunpack.c.l.b16 %v459
      %v866 = vunpack.c.l.b16 %v460
      %v867 = vunpack.c.l.b16 %v461
      %v868 = vunpack.c.l.b16 %v462
      %v869 = vunpack.c.l.b16 %v463
      %v870 = vunpack.c.l.b16 %v464
      %v871 = vunpack.c.l.b16 %v465
      %v872 = vunpack.c.l.b16 %v466
      %v873 = vunpack.c.l.b16 %v467
      %v874 = vunpack.c.l.b16 %v468
      %v875 = vunpack.c.l.b16 %v469
      %v876 = vunpack.c.l.b16 %v470
      %v877 = vunpack.c.l.b16 %v471
      %v878 = vunpack.c.l.b16 %v472
      %v879 = vunpack.c.l.b16 %v473
      %v880 = vunpack.c.l.b16 %v474
      %v881 = vunpack.c.l.b16 %v475
      %v882 = vunpack.c.l.b16 %v476
      %v883 = vunpack.c.l.b16 %v477
      %v884 = vunpack.c.l.b16 %v478
      %v885 = vunpack.c.l.b16 %v479
      %v886 = vunpack.c.l.b16 %v480
      %v887 = vunpack.c.l.b16 %v481
      %v888 = vunpack.c.l.b16 %v482
      %v889 = vunpack.c.l.b16 %v483
      %v890 = vunpack.c.l.b16 %v484
      %v891 = vunpack.c.l.b16 %v485
      %v892 = vunpack.c.l.b16 %v486
      %v893 = vunpack.c.l.b16 %v487
      %v894 = vunpack.c.l.b16 %v488
      %v895 = vunpack.c.l.b16 %v489
      %v896 = vunpack.c.l.b16 %v490
      %v897 = vunpack.c.l.b16 %v491
      %v898 = vunpack.c.l.b16 %v492
      %v899 = vunpack.c.l.b16 %v493
      %v900 = vunpack.c.l.b16 %v494
      %v901 = vunpack.c.l.b16 %v495
      %v902 = vunpack.c.l.b16 %v496
      %v903 = vunpack.c.l.b16 %v497
      %v904 = vunpack.c.l.b16 %v498
      %v905 = vunpack.c.l.b16 %v499
      %v906 = vunpack.c.l.b16 %v500
      %v907 = vunpack.c.l.b16 %v501
      %v908 = vunpack.c.l.b16 %v502
      %v909 = vunpack.c.l.b16 %v503
      %v910 = vunpack.c.l.b16 %v504
      %v911 = vunpack.c.l.b16 %v505
      %v912 = vunpack.c.l.b16 %v506
      %v913 = vunpack.c.l.b16 %v507
      %v914 = vunpack.c.l.b16 %v508
      %v915 = vunpack.c.l.b16 %v509
      %v916 = vunpack.c.l.b16 %v510
      %v917 = vunpack.c.l.b16 %v511
      %v918 = vunpack.c.l.b16 %v512
      %v919 = vpack.c.b16 %v724, %v723
      %v920 = vpack.c.b16 %v726, %v725
      %v921 = vpack.c.b16 %v728, %v727
      %v922 = vpack.c.b16 %v730, %v729
      %v923 = vpack.c.b16 %v732, %v731
      %v924 = vpack.c.b16 %v734, %v733
      %v925 = vpack.c.b16 %v736, %v735
      %v926 = vpack.c.b16 %v738, %v737
      %v927 = vpack.c.b16 %v740, %v739
      %v928 = vpack.c.b16 %v742, %v741
      %v929 = vpack.c.b16 %v744, %v743
      %v930 = vpack.c.b16 %v746, %v745
      %v931 = vpack.c.b16 %v748, %v747
      %v932 = vpack.c.b16 %v750, %v749
      %v933 = vpack.c.b16 %v752, %v751
      %v934 = vpack.c.b16 %v754, %v753
      %v935 = vpack.c.b16 %v756, %v755
      %v936 = vpack.c.b16 %v758, %v757
      %v937 = vpack.c.b16 %v760, %v759
      %v938 = vpack.c.b16 %v762, %v761
      %v939 = vpack.c.b16 %v764, %v763
      %v940 = vpack.c.b16 %v766, %v765
      %v941 = vpack.c.b16 %v768, %v767
      %v942 = vpack.c.b16 %v770, %v769
      %v943 = vpack.c.b16 %v772, %v771
      %v944 = vpack.c.b16 %v774, %v773
      %v945 = vpack.c.b16 %v776, %v775
      %v946 = vpack.c.b16 %v778, %v777
      %v947 = vpack.c.b16 %v780, %v779
      %v948 = vpack.c.b16 %v782, %v781
      %v949 = vpack.c.b16 %v784, %v783
      %v950 = vpack.c.b16 %v786, %v785
      %v951 = vpack.c.b16 %v788, %v787
      %v952 = vpack.c.b16 %v790, %v789
      %v953 = vpack.c.b16 %v792, %v791
      %v954 = vpack.c.b16 %v794, %v793
      %v955 = vpack.c.b16 %v796, %v795
      %v956 = vpack.c.b16 %v798, %v797
      %v957 = vpack.c.b16 %v800, %v799
      %v958 = vpack.c.b16 %v802, %v801
      %v959 = vpack.c.b16 %v804, %v803
      %v960 = vpack.c.b16 %v806, %v805
      %v961 = vpack.c.b16 %v808, %v807
      %v962 = vpack.c.b16 %v810, %v809
      %v963 = vpack.c.b16 %v812, %v811
      %v964 = vpack.c.b16 %v814, %v813
      %v965 = vpack.c.b16 %v816, %v815
      %v966 = vpack.c.b16 %v818, %v817
      %v967 = vpack.c.b16 %v820, %v819
      %v968 = vpack.c.b16 %v822, %v821
      %v969 = vpack.c.b16 %v824, %v823
      %v970 = vpack.c.b16 %v826, %v825
      %v971 = vpack.c.b16 %v828, %v827
      %v972 = vpack.c.b16 %v830, %v829
      %v973 = vpack.c.b16 %v832, %v831
      %v974 = vpack.c.b16 %v834, %v833
      %v975 = vpack.c.b16 %v836, %v835
      %v976 = vpack.c.b16 %v838, %v837
      %v977 = vpack.c.b16 %v840, %v839
      %v978 = vpack.c.b16 %v842, %v841
      %v979 = vpack.c.b16 %v844, %v843
      %v980 = vpack.c.b16 %v846, %v845
      %v981 = vpack.c.b16 %v848, %v847
      %v982 = vpack.c.b16 %v850, %v849
      %v983 = vpack.c.b16 %v852, %v851
      %v984 = vpack.c.b16 %v854, %v853
      %v985 = vpack.c.b16 %v856, %v855
      %v986 = vpack.c.b16 %v858, %v857
      %v987 = vpack.c.b16 %v860, %v859
      %v988 = vpack.c.b16 %v862, %v861
      %v989 = vpack.c.b16 %v864, %v863
      %v990 = vpack.c.b16 %v866, %v865
      %v991 = vpack.c.b16 %v868, %v867
      %v992 = vpack.c.b16 %v870, %v869
      %v993 = vpack.c.b16 %v872, %v871
      %v994 = vpack.c.b16 %v874, %v873
      %v995 = vpack.c.b16 %v876, %v875
      %v996 = vpack.c.b16 %v878, %v877
      %v997 = vpack.c.b16 %v880, %v879
      %v998 = vpack.c.b16 %v882, %v881
      %v999 = vpack.c.b16 %v884, %v883
      %v1000 = vpack.c.b16 %v886, %v885
      %v1001 = vpack.c.b16 %v888, %v887
      %v1002 = vpack.c.b16 %v890, %v889
      %v1003 = vpack.c.b16 %v892, %v891
      %v1004 = vpack.c.b16 %v894, %v893
      %v1005 = vpack.c.b16 %v896, %v895
      %v1006 = vpack.c.b16 %v898, %v897
      %v1007 = vpack.c.b16 %v900, %v899
      %v1008 = vpack.c.b16 %v902, %v901
      %v1009 = vpack.c.b16 %v904, %v903
      %v1010 = vpack.c.b16 %v906, %v905
      %v1011 = vpack.c.b16 %v908, %v907
      %v1012 = vpack.c.b16 %v910, %v909
      %v1013 = vpack.c.b16 %v912, %v911
      %v1014 = vpack.c.b16 %v914, %v913
      %v1015 = vpack.c.b16 %v916, %v915
      %v1016 = vpack.c.b16 %v918, %v917
      %v1019 = vunpack.c.l.b16 %v513
      %v1020 = vunpack.c.h.b16 %v513
      %v1021 = vunpack.c.l.b16 %v514
      %v1022 = vunpack.c.h.b16 %v514
      %v1023 = vpack.c.b16 %v1021, %v1019
      %v1024 = vpack.c.b16 %v1022, %v1020
      %vm1027 = vcmask 130048
      %v1029 = vsel %vm1027, %v919, 0
      %v1032 = vsel %vm1027, %v920, 0
      %v1035 = vsel %vm1027, %v921, 0
      %v1038 = vsel %vm1027, %v922, 0
      %v1041 = vsel %vm1027, %v923, 0
      %v1044 = vsel %vm1027, %v924, 0
      %v1047 = vsel %vm1027, %v925, 0
      %v1050 = vsel %vm1027, %v926, 0
      %v1053 = vsel %vm1027, %v927, 0
      %v1056 = vsel %vm1027, %v928, 0
      %v1059 = vsel %vm1027, %v929, 0
      %v1062 = vsel %vm1027, %v930, 0
      %v1065 = vsel %vm1027, %v931, 0
      %v1068 = vsel %vm1027, %v932, 0
      %v1071 = vsel %vm1027, %v933, 0
      %v1074 = vsel %vm1027, %v934, 0
      %v1077 = vsel %vm1027, %v935, 0
      %v1080 = vsel %vm1027, %v936, 0
      %v1083 = vsel %vm1027, %v937, 0
      %v1086 = vsel %vm1027, %v938, 0
      %v1089 = vsel %vm1027, %v939, 0
      %v1092 = vsel %vm1027, %v940, 0
      %v1095 = vsel %vm1027, %v941, 0
      %v1098 = vsel %vm1027, %v942, 0
      %v1101 = vsel %vm1027, %v943, 0
      %v1104 = vsel %vm1027, %v944, 0
      %v1107 = vsel %vm1027, %v945, 0
      %v1110 = vsel %vm1027, %v946, 0
      %v1113 = vsel %vm1027, %v947, 0
      %v1116 = vsel %vm1027, %v948, 0
      %v1119 = vsel %vm1027, %v949, 0
      %v1122 = vsel %vm1027, %v950, 0
      %v1125 = vsel %vm1027, %v951, 0
      %v1128 = vsel %vm1027, %v952, 0
      %v1131 = vsel %vm1027, %v953, 0
      %v1134 = vsel %vm1027, %v954, 0
      %v1137 = vsel %vm1027, %v955, 0
      %v1140 = vsel %vm1027, %v956, 0
      %v1143 = vsel %vm1027, %v957, 0
      %v1146 = vsel %vm1027, %v958, 0
      %v1149 = vsel %vm1027, %v959, 0
      %v1152 = vsel %vm1027, %v960, 0
      %v1155 = vsel %vm1027, %v961, 0
      %v1158 = vsel %vm1027, %v962, 0
      %v1161 = vsel %vm1027, %v963, 0
      %v1164 = vsel %vm1027, %v964, 0
      %v1167 = vsel %vm1027, %v965, 0
      %v1170 = vsel %vm1027, %v966, 0
      %v1173 = vsel %vm1027, %v967, 0
      %v1176 = vsel %vm1027, %v968, 0
      %v1179 = vsel %vm1027, %v969, 0
      %v1182 = vsel %vm1027, %v970, 0
      %v1185 = vsel %vm1027, %v971, 0
      %v1188 = vsel %vm1027, %v972, 0
      %v1191 = vsel %vm1027, %v973, 0
      %v1194 = vsel %vm1027, %v974, 0
      %v1197 = vsel %vm1027, %v975, 0
      %v1200 = vsel %vm1027, %v976, 0
      %v1203 = vsel %vm1027, %v977, 0
      %v1206 = vsel %vm1027, %v978, 0
      %v1209 = vsel %vm1027, %v979, 0
      %v1212 = vsel %vm1027, %v980, 0
      %v1215 = vsel %vm1027, %v981, 0
      %v1218 = vsel %vm1027, %v982, 0
      %v1221 = vsel %vm1027, %v983, 0
      %v1224 = vsel %vm1027, %v984, 0
      %v1227 = vsel %vm1027, %v985, 0
      %v1230 = vsel %vm1027, %v986, 0
      %v1233 = vsel %vm1027, %v987, 0
      %v1236 = vsel %vm1027, %v988, 0
      %v1239 = vsel %vm1027, %v989, 0
      %v1242 = vsel %vm1027, %v990, 0
      %v1245 = vsel %vm1027, %v991, 0
      %v1248 = vsel %vm1027, %v992, 0
      %v1251 = vsel %vm1027, %v993, 0
      %v1254 = vsel %vm1027, %v994, 0
      %v1257 = vsel %vm1027, %v995, 0
      %v1260 = vsel %vm1027, %v996, 0
      %v1263 = vsel %vm1027, %v997, 0
      %v1266 = vsel %vm1027, %v998, 0
      %v1269 = vsel %vm1027, %v999, 0
      %v1272 = vsel %vm1027, %v1000, 0
      %v1275 = vsel %vm1027, %v1001, 0
      %v1278 = vsel %vm1027, %v1002, 0
      %v1281 = vsel %vm1027, %v1003, 0
      %v1284 = vsel %vm1027, %v1004, 0
      %v1287 = vsel %vm1027, %v1005, 0
      %v1290 = vsel %vm1027, %v1006, 0
      %v1293 = vsel %vm1027, %v1007, 0
      %v1296 = vsel %vm1027, %v1008, 0
      %v1299 = vsel %vm1027, %v1009, 0
      %v1302 = vsel %vm1027, %v1010, 0
      %v1305 = vsel %vm1027, %v1011, 0
      %v1308 = vsel %vm1027, %v1012, 0
      %v1311 = vsel %vm1027, %v1013, 0
      %v1314 = vsel %vm1027, %v1014, 0
      %v1317 = vsel %vm1027, %v1015, 0
      %v1320 = vsel %vm1027, %v1016, 0
      %1322 = vmatprep.subr.bf16.mxu0 %v1024
      %1323 = vmatpush1.bf16.msra.mxu0 %v1023
      %1324 = vmatprep.subr.bf16.mxu0 0
      %1325 = vmatpush1.bf16.msra.mxu0 0
      %1326 = vmatprep.subr.bf16.mxu0 0
      %1327 = vmatpush1.bf16.msra.mxu0 0
      %1328 = vmatprep.subr.bf16.mxu0 0
      %1329 = vmatpush1.bf16.msra.mxu0 0
      %1330 = vmatprep.subr.bf16.mxu0 0
      %1331 = vmatpush1.bf16.msra.mxu0 0
      %1332 = vmatprep.subr.bf16.mxu0 0
      %1333 = vmatpush1.bf16.msra.mxu0 0
      %1334 = vmatprep.subr.bf16.mxu0 0
      %1335 = vmatpush1.bf16.msra.mxu0 0
      %1336 = vmatprep.subr.bf16.mxu0 0
      %1337 = vmatpush1.bf16.msra.mxu0 0
      %1338 = vmatprep.subr.bf16.mxu0 0
      %1339 = vmatpush1.bf16.msra.mxu0 0
      %1340 = vmatprep.subr.bf16.mxu0 0
      %1341 = vmatpush1.bf16.msra.mxu0 0
      %1342 = vmatprep.subr.bf16.mxu0 0
      %1343 = vmatpush1.bf16.msra.mxu0 0
      %1344 = vmatprep.subr.bf16.mxu0 0
      %1345 = vmatpush1.bf16.msra.mxu0 0
      %1346 = vmatprep.subr.bf16.mxu0 0
      %1347 = vmatpush1.bf16.msra.mxu0 0
      %1348 = vmatprep.subr.bf16.mxu0 0
      %1349 = vmatpush1.bf16.msra.mxu0 0
      %1350 = vmatprep.subr.bf16.mxu0 0
      %1351 = vmatpush1.bf16.msra.mxu0 0
      %1352 = vmatprep.subr.bf16.mxu0 0
      %1353 = vmatpush1.bf16.msra.mxu0 0
      %1354 = vmatprep.mubr.bf16.mxu0 0
      %1355 = vmatmul.mubr.bf16.gmra.mrb[0].mxu0 %v1029
      %v1356 = vpop.f32.mrb[0].mxu0
      %v1357 = vadd.f32 %v520, %v1356
      %v1358 = vpop.f32.mrb[0].mxu0
      %v1359 = vadd.f32 %v524, %v1358
      %v1360 = vpop.f32.mrb[0].mxu0
      %v1361 = vadd.f32 %v520, %v1360
      %v1362 = vpop.f32.mrb[0].mxu0
      %v1363 = vadd.f32 %v524, %v1362
      %1364 = vmatprep.mubr.bf16.mxu0 0
      %1365 = vmatmul.mubr.bf16.gmra.mrb[0].mxu0 %v1032
      %v1366 = vpop.f32.mrb[0].mxu0
      %v1367 = vadd.f32 %v520, %v1366
      %v1368 = vpop.f32.mrb[0].mxu0
      %v1369 = vadd.f32 %v524, %v1368
      %v1370 = vpop.f32.mrb[0].mxu0
      %v1371 = vadd.f32 %v520, %v1370
      %v1372 = vpop.f32.mrb[0].mxu0
      %v1373 = vadd.f32 %v524, %v1372
      %1374 = vmatprep.mubr.bf16.mxu0 0
      %1375 = vmatmul.mubr.bf16.gmra.mrb[0].mxu0 %v1035
      %v1376 = vpop.f32.mrb[0].mxu0
      %v1377 = vadd.f32 %v520, %v1376
      %v1378 = vpop.f32.mrb[0].mxu0
      %v1379 = vadd.f32 %v524, %v1378
      %v1380 = vpop.f32.mrb[0].mxu0
      %v1381 = vadd.f32 %v520, %v1380
      %v1382 = vpop.f32.mrb[0].mxu0
      %v1383 = vadd.f32 %v524, %v1382
      %1384 = vmatprep.mubr.bf16.mxu0 0
      %1385 = vmatmul.mubr.bf16.gmra.mrb[0].mxu0 %v1038
      %v1386 = vpop.f32.mrb[0].mxu0
      %v1387 = vadd.f32 %v520, %v1386
      %v1388 = vpop.f32.mrb[0].mxu0
      %v1389 = vadd.f32 %v524, %v1388
      %v1390 = vpop.f32.mrb[0].mxu0
      %v1391 = vadd.f32 %v520, %v1390
      %v1392 = vpop.f32.mrb[0].mxu0
      %v1393 = vadd.f32 %v524, %v1392
      %1394 = vmatprep.mubr.bf16.mxu0 0
      %1395 = vmatmul.mubr.bf16.gmra.mrb[0].mxu0 %v1041
      %v1396 = vpop.f32.mrb[0].mxu0
      %v1397 = vadd.f32 %v520, %v1396
      %v1398 = vpop.f32.mrb[0].mxu0
      %v1399 = vadd.f32 %v524, %v1398
      %v1400 = vpop.f32.mrb[0].mxu0
      %v1401 = vadd.f32 %v520, %v1400
      %v1402 = vpop.f32.mrb[0].mxu0
      %v1403 = vadd.f32 %v524, %v1402
      %1404 = vmatprep.mubr.bf16.mxu0 0
      %1405 = vmatmul.mubr.bf16.gmra.mrb[0].mxu0 %v1044
      %v1406 = vpop.f32.mrb[0].mxu0
      %v1407 = vadd.f32 %v520, %v1406
      %v1408 = vpop.f32.mrb[0].mxu0
      %v1409 = vadd.f32 %v524, %v1408
      %v1410 = vpop.f32.mrb[0].mxu0
      %v1411 = vadd.f32 %v520, %v1410
      %v1412 = vpop.f32.mrb[0].mxu0
      %v1413 = vadd.f32 %v524, %v1412
      %1414 = vmatprep.mubr.bf16.mxu0 0
      %1415 = vmatmul.mubr.bf16.gmra.mrb[0].mxu0 %v1047
      %v1416 = vpop.f32.mrb[0].mxu0
      %v1417 = vadd.f32 %v520, %v1416
      %v1418 = vpop.f32.mrb[0].mxu0
      %v1419 = vadd.f32 %v524, %v1418
      %v1420 = vpop.f32.mrb[0].mxu0
      %v1421 = vadd.f32 %v520, %v1420
      %v1422 = vpop.f32.mrb[0].mxu0
      %v1423 = vadd.f32 %v524, %v1422
      %1424 = vmatprep.mubr.bf16.mxu0 0
      %1425 = vmatmul.mubr.bf16.gmra.mrb[0].mxu0 %v1050
      %v1426 = vpop.f32.mrb[0].mxu0
      %v1427 = vadd.f32 %v520, %v1426
      %v1428 = vpop.f32.mrb[0].mxu0
      %v1429 = vadd.f32 %v524, %v1428
      %v1430 = vpop.f32.mrb[0].mxu0
      %v1431 = vadd.f32 %v520, %v1430
      %v1432 = vpop.f32.mrb[0].mxu0
      %v1433 = vadd.f32 %v524, %v1432
      %1434 = vmatprep.mubr.bf16.mxu0 0
      %1435 = vmatmul.mubr.bf16.gmra.mrb[0].mxu0 %v1053
      %v1436 = vpop.f32.mrb[0].mxu0
      %v1437 = vadd.f32 %v520, %v1436
      %v1438 = vpop.f32.mrb[0].mxu0
      %v1439 = vadd.f32 %v524, %v1438
      %v1440 = vpop.f32.mrb[0].mxu0
      %v1441 = vadd.f32 %v520, %v1440
      %v1442 = vpop.f32.mrb[0].mxu0
      %v1443 = vadd.f32 %v524, %v1442
      %1444 = vmatprep.mubr.bf16.mxu0 0
      %1445 = vmatmul.mubr.bf16.gmra.mrb[0].mxu0 %v1056
      %v1446 = vpop.f32.mrb[0].mxu0
      %v1447 = vadd.f32 %v520, %v1446
      %v1448 = vpop.f32.mrb[0].mxu0
      %v1449 = vadd.f32 %v524, %v1448
      %v1450 = vpop.f32.mrb[0].mxu0
      %v1451 = vadd.f32 %v520, %v1450
      %v1452 = vpop.f32.mrb[0].mxu0
      %v1453 = vadd.f32 %v524, %v1452
      %1454 = vmatprep.mubr.bf16.mxu0 0
      %1455 = vmatmul.mubr.bf16.gmra.mrb[0].mxu0 %v1059
      %v1456 = vpop.f32.mrb[0].mxu0
      %v1457 = vadd.f32 %v520, %v1456
      %v1458 = vpop.f32.mrb[0].mxu0
      %v1459 = vadd.f32 %v524, %v1458
      %v1460 = vpop.f32.mrb[0].mxu0
      %v1461 = vadd.f32 %v520, %v1460
      %v1462 = vpop.f32.mrb[0].mxu0
      %v1463 = vadd.f32 %v524, %v1462
      %1464 = vmatprep.mubr.bf16.mxu0 0
      %1465 = vmatmul.mubr.bf16.gmra.mrb[0].mxu0 %v1062
      %v1466 = vpop.f32.mrb[0].mxu0
      %v1467 = vadd.f32 %v520, %v1466
      %v1468 = vpop.f32.mrb[0].mxu0
      %v1469 = vadd.f32 %v524, %v1468
      %v1470 = vpop.f32.mrb[0].mxu0
      %v1471 = vadd.f32 %v520, %v1470
      %v1472 = vpop.f32.mrb[0].mxu0
      %v1473 = vadd.f32 %v524, %v1472
      %1474 = vmatprep.mubr.bf16.mxu0 0
      %1475 = vmatmul.mubr.bf16.gmra.mrb[0].mxu0 %v1065
      %v1476 = vpop.f32.mrb[0].mxu0
      %v1477 = vadd.f32 %v520, %v1476
      %v1478 = vpop.f32.mrb[0].mxu0
      %v1479 = vadd.f32 %v524, %v1478
      %v1480 = vpop.f32.mrb[0].mxu0
      %v1481 = vadd.f32 %v520, %v1480
      %v1482 = vpop.f32.mrb[0].mxu0
      %v1483 = vadd.f32 %v524, %v1482
      %1484 = vmatprep.mubr.bf16.mxu0 0
      %1485 = vmatmul.mubr.bf16.gmra.mrb[0].mxu0 %v1068
      %v1486 = vpop.f32.mrb[0].mxu0
      %v1487 = vadd.f32 %v520, %v1486
      %v1488 = vpop.f32.mrb[0].mxu0
      %v1489 = vadd.f32 %v524, %v1488
      %v1490 = vpop.f32.mrb[0].mxu0
      %v1491 = vadd.f32 %v520, %v1490
      %v1492 = vpop.f32.mrb[0].mxu0
      %v1493 = vadd.f32 %v524, %v1492
      %1494 = vmatprep.mubr.bf16.mxu0 0
      %1495 = vmatmul.mubr.bf16.gmra.mrb[0].mxu0 %v1071
      %v1496 = vpop.f32.mrb[0].mxu0
      %v1497 = vadd.f32 %v520, %v1496
      %v1498 = vpop.f32.mrb[0].mxu0
      %v1499 = vadd.f32 %v524, %v1498
      %v1500 = vpop.f32.mrb[0].mxu0
      %v1501 = vadd.f32 %v520, %v1500
      %v1502 = vpop.f32.mrb[0].mxu0
      %v1503 = vadd.f32 %v524, %v1502
      %1504 = vmatprep.mubr.bf16.mxu0 0
      %1505 = vmatmul.mubr.bf16.gmra.mrb[0].mxu0 %v1074
      %v1506 = vpop.f32.mrb[0].mxu0
      %v1507 = vadd.f32 %v520, %v1506
      %v1508 = vpop.f32.mrb[0].mxu0
      %v1509 = vadd.f32 %v524, %v1508
      %v1510 = vpop.f32.mrb[0].mxu0
      %v1511 = vadd.f32 %v520, %v1510
      %v1512 = vpop.f32.mrb[0].mxu0
      %v1513 = vadd.f32 %v524, %v1512
      %1514 = vmatprep.mubr.bf16.mxu0 0
      %1515 = vmatmul.mubr.bf16.gmra.mrb[0].mxu0 %v1077
      %v1516 = vpop.f32.mrb[0].mxu0
      %v1517 = vadd.f32 %v520, %v1516
      %v1518 = vpop.f32.mrb[0].mxu0
      %v1519 = vadd.f32 %v524, %v1518
      %v1520 = vpop.f32.mrb[0].mxu0
      %v1521 = vadd.f32 %v520, %v1520
      %v1522 = vpop.f32.mrb[0].mxu0
      %v1523 = vadd.f32 %v524, %v1522
      %1524 = vmatprep.mubr.bf16.mxu0 0
      %1525 = vmatmul.mubr.bf16.gmra.mrb[0].mxu0 %v1080
      %v1526 = vpop.f32.mrb[0].mxu0
      %v1527 = vadd.f32 %v520, %v1526
      %v1528 = vpop.f32.mrb[0].mxu0
      %v1529 = vadd.f32 %v524, %v1528
      %v1530 = vpop.f32.mrb[0].mxu0
      %v1531 = vadd.f32 %v520, %v1530
      %v1532 = vpop.f32.mrb[0].mxu0
      %v1533 = vadd.f32 %v524, %v1532
      %1534 = vmatprep.mubr.bf16.mxu0 0
      %1535 = vmatmul.mubr.bf16.gmra.mrb[0].mxu0 %v1083
      %v1536 = vpop.f32.mrb[0].mxu0
      %v1537 = vadd.f32 %v520, %v1536
      %v1538 = vpop.f32.mrb[0].mxu0
      %v1539 = vadd.f32 %v524, %v1538
      %v1540 = vpop.f32.mrb[0].mxu0
      %v1541 = vadd.f32 %v520, %v1540
      %v1542 = vpop.f32.mrb[0].mxu0
      %v1543 = vadd.f32 %v524, %v1542
      %1544 = vmatprep.mubr.bf16.mxu0 0
      %1545 = vmatmul.mubr.bf16.gmra.mrb[0].mxu0 %v1086
      %v1546 = vpop.f32.mrb[0].mxu0
      %v1547 = vadd.f32 %v520, %v1546
      %v1548 = vpop.f32.mrb[0].mxu0
      %v1549 = vadd.f32 %v524, %v1548
      %v1550 = vpop.f32.mrb[0].mxu0
      %v1551 = vadd.f32 %v520, %v1550
      %v1552 = vpop.f32.mrb[0].mxu0
      %v1553 = vadd.f32 %v524, %v1552
      %1554 = vmatprep.mubr.bf16.mxu0 0
      %1555 = vmatmul.mubr.bf16.gmra.mrb[0].mxu0 %v1089
      %v1556 = vpop.f32.mrb[0].mxu0
      %v1557 = vadd.f32 %v520, %v1556
      %v1558 = vpop.f32.mrb[0].mxu0
      %v1559 = vadd.f32 %v524, %v1558
      %v1560 = vpop.f32.mrb[0].mxu0
      %v1561 = vadd.f32 %v520, %v1560
      %v1562 = vpop.f32.mrb[0].mxu0
      %v1563 = vadd.f32 %v524, %v1562
      %1564 = vmatprep.mubr.bf16.mxu0 0
      %1565 = vmatmul.mubr.bf16.gmra.mrb[0].mxu0 %v1092
      %v1566 = vpop.f32.mrb[0].mxu0
      %v1567 = vadd.f32 %v520, %v1566
      %v1568 = vpop.f32.mrb[0].mxu0
      %v1569 = vadd.f32 %v524, %v1568
      %v1570 = vpop.f32.mrb[0].mxu0
      %v1571 = vadd.f32 %v520, %v1570
      %v1572 = vpop.f32.mrb[0].mxu0
      %v1573 = vadd.f32 %v524, %v1572
      %1574 = vmatprep.mubr.bf16.mxu0 0
      %1575 = vmatmul.mubr.bf16.gmra.mrb[0].mxu0 %v1095
      %v1576 = vpop.f32.mrb[0].mxu0
      %v1577 = vadd.f32 %v520, %v1576
      %v1578 = vpop.f32.mrb[0].mxu0
      %v1579 = vadd.f32 %v524, %v1578
      %v1580 = vpop.f32.mrb[0].mxu0
      %v1581 = vadd.f32 %v520, %v1580
      %v1582 = vpop.f32.mrb[0].mxu0
      %v1583 = vadd.f32 %v524, %v1582
      %1584 = vmatprep.mubr.bf16.mxu0 0
      %1585 = vmatmul.mubr.bf16.gmra.mrb[0].mxu0 %v1098
      %v1586 = vpop.f32.mrb[0].mxu0
      %v1587 = vadd.f32 %v520, %v1586
      %v1588 = vpop.f32.mrb[0].mxu0
      %v1589 = vadd.f32 %v524, %v1588
      %v1590 = vpop.f32.mrb[0].mxu0
      %v1591 = vadd.f32 %v520, %v1590
      %v1592 = vpop.f32.mrb[0].mxu0
      %v1593 = vadd.f32 %v524, %v1592
      %1594 = vmatprep.mubr.bf16.mxu0 0
      %1595 = vmatmul.mubr.bf16.gmra.mrb[0].mxu0 %v1101
      %v1596 = vpop.f32.mrb[0].mxu0
      %v1597 = vadd.f32 %v520, %v1596
      %v1598 = vpop.f32.mrb[0].mxu0
      %v1599 = vadd.f32 %v524, %v1598
      %v1600 = vpop.f32.mrb[0].mxu0
      %v1601 = vadd.f32 %v520, %v1600
      %v1602 = vpop.f32.mrb[0].mxu0
      %v1603 = vadd.f32 %v524, %v1602
      %1604 = vmatprep.mubr.bf16.mxu0 0
      %1605 = vmatmul.mubr.bf16.gmra.mrb[0].mxu0 %v1104
      %v1606 = vpop.f32.mrb[0].mxu0
      %v1607 = vadd.f32 %v520, %v1606
      %v1608 = vpop.f32.mrb[0].mxu0
      %v1609 = vadd.f32 %v524, %v1608
      %v1610 = vpop.f32.mrb[0].mxu0
      %v1611 = vadd.f32 %v520, %v1610
      %v1612 = vpop.f32.mrb[0].mxu0
      %v1613 = vadd.f32 %v524, %v1612
      %1614 = vmatprep.mubr.bf16.mxu0 0
      %1615 = vmatmul.mubr.bf16.gmra.mrb[0].mxu0 %v1107
      %v1616 = vpop.f32.mrb[0].mxu0
      %v1617 = vadd.f32 %v520, %v1616
      %v1618 = vpop.f32.mrb[0].mxu0
      %v1619 = vadd.f32 %v524, %v1618
      %v1620 = vpop.f32.mrb[0].mxu0
      %v1621 = vadd.f32 %v520, %v1620
      %v1622 = vpop.f32.mrb[0].mxu0
      %v1623 = vadd.f32 %v524, %v1622
      %1624 = vmatprep.mubr.bf16.mxu0 0
      %1625 = vmatmul.mubr.bf16.gmra.mrb[0].mxu0 %v1110
      %v1626 = vpop.f32.mrb[0].mxu0
      %v1627 = vadd.f32 %v520, %v1626
      %v1628 = vpop.f32.mrb[0].mxu0
      %v1629 = vadd.f32 %v524, %v1628
      %v1630 = vpop.f32.mrb[0].mxu0
      %v1631 = vadd.f32 %v520, %v1630
      %v1632 = vpop.f32.mrb[0].mxu0
      %v1633 = vadd.f32 %v524, %v1632
      %1634 = vmatprep.mubr.bf16.mxu0 0
      %1635 = vmatmul.mubr.bf16.gmra.mrb[0].mxu0 %v1113
      %v1636 = vpop.f32.mrb[0].mxu0
      %v1637 = vadd.f32 %v520, %v1636
      %v1638 = vpop.f32.mrb[0].mxu0
      %v1639 = vadd.f32 %v524, %v1638
      %v1640 = vpop.f32.mrb[0].mxu0
      %v1641 = vadd.f32 %v520, %v1640
      %v1642 = vpop.f32.mrb[0].mxu0
      %v1643 = vadd.f32 %v524, %v1642
      %1644 = vmatprep.mubr.bf16.mxu0 0
      %1645 = vmatmul.mubr.bf16.gmra.mrb[0].mxu0 %v1116
      %v1646 = vpop.f32.mrb[0].mxu0
      %v1647 = vadd.f32 %v520, %v1646
      %v1648 = vpop.f32.mrb[0].mxu0
      %v1649 = vadd.f32 %v524, %v1648
      %v1650 = vpop.f32.mrb[0].mxu0
      %v1651 = vadd.f32 %v520, %v1650
      %v1652 = vpop.f32.mrb[0].mxu0
      %v1653 = vadd.f32 %v524, %v1652
      %1654 = vmatprep.mubr.bf16.mxu0 0
      %1655 = vmatmul.mubr.bf16.gmra.mrb[0].mxu0 %v1119
      %v1656 = vpop.f32.mrb[0].mxu0
      %v1657 = vadd.f32 %v520, %v1656
      %v1658 = vpop.f32.mrb[0].mxu0
      %v1659 = vadd.f32 %v524, %v1658
      %v1660 = vpop.f32.mrb[0].mxu0
      %v1661 = vadd.f32 %v520, %v1660
      %v1662 = vpop.f32.mrb[0].mxu0
      %v1663 = vadd.f32 %v524, %v1662
      %1664 = vmatprep.mubr.bf16.mxu0 0
      %1665 = vmatmul.mubr.bf16.gmra.mrb[0].mxu0 %v1122
      %v1666 = vpop.f32.mrb[0].mxu0
      %v1667 = vadd.f32 %v520, %v1666
      %v1668 = vpop.f32.mrb[0].mxu0
      %v1669 = vadd.f32 %v524, %v1668
      %v1670 = vpop.f32.mrb[0].mxu0
      %v1671 = vadd.f32 %v520, %v1670
      %v1672 = vpop.f32.mrb[0].mxu0
      %v1673 = vadd.f32 %v524, %v1672
      %1674 = vmatprep.mubr.bf16.mxu0 0
      %1675 = vmatmul.mubr.bf16.gmra.mrb[0].mxu0 %v1125
      %v1676 = vpop.f32.mrb[0].mxu0
      %v1677 = vadd.f32 %v520, %v1676
      %v1678 = vpop.f32.mrb[0].mxu0
      %v1679 = vadd.f32 %v524, %v1678
      %v1680 = vpop.f32.mrb[0].mxu0
      %v1681 = vadd.f32 %v520, %v1680
      %v1682 = vpop.f32.mrb[0].mxu0
      %v1683 = vadd.f32 %v524, %v1682
      %1684 = vmatprep.mubr.bf16.mxu0 0
      %1685 = vmatmul.mubr.bf16.gmra.mrb[0].mxu0 %v1128
      %v1686 = vpop.f32.mrb[0].mxu0
      %v1687 = vadd.f32 %v520, %v1686
      %v1688 = vpop.f32.mrb[0].mxu0
      %v1689 = vadd.f32 %v524, %v1688
      %v1690 = vpop.f32.mrb[0].mxu0
      %v1691 = vadd.f32 %v520, %v1690
      %v1692 = vpop.f32.mrb[0].mxu0
      %v1693 = vadd.f32 %v524, %v1692
      %1694 = vmatprep.mubr.bf16.mxu0 0
      %1695 = vmatmul.mubr.bf16.gmra.mrb[0].mxu0 %v1131
      %v1696 = vpop.f32.mrb[0].mxu0
      %v1697 = vadd.f32 %v520, %v1696
      %v1698 = vpop.f32.mrb[0].mxu0
      %v1699 = vadd.f32 %v524, %v1698
      %v1700 = vpop.f32.mrb[0].mxu0
      %v1701 = vadd.f32 %v520, %v1700
      %v1702 = vpop.f32.mrb[0].mxu0
      %v1703 = vadd.f32 %v524, %v1702
      %1704 = vmatprep.mubr.bf16.mxu0 0
      %1705 = vmatmul.mubr.bf16.gmra.mrb[0].mxu0 %v1134
      %v1706 = vpop.f32.mrb[0].mxu0
      %v1707 = vadd.f32 %v520, %v1706
      %v1708 = vpop.f32.mrb[0].mxu0
      %v1709 = vadd.f32 %v524, %v1708
      %v1710 = vpop.f32.mrb[0].mxu0
      %v1711 = vadd.f32 %v520, %v1710
      %v1712 = vpop.f32.mrb[0].mxu0
      %v1713 = vadd.f32 %v524, %v1712
      %1714 = vmatprep.mubr.bf16.mxu0 0
      %1715 = vmatmul.mubr.bf16.gmra.mrb[0].mxu0 %v1137
      %v1716 = vpop.f32.mrb[0].mxu0
      %v1717 = vadd.f32 %v520, %v1716
      %v1718 = vpop.f32.mrb[0].mxu0
      %v1719 = vadd.f32 %v524, %v1718
      %v1720 = vpop.f32.mrb[0].mxu0
      %v1721 = vadd.f32 %v520, %v1720
      %v1722 = vpop.f32.mrb[0].mxu0
      %v1723 = vadd.f32 %v524, %v1722
      %1724 = vmatprep.mubr.bf16.mxu0 0
      %1725 = vmatmul.mubr.bf16.gmra.mrb[0].mxu0 %v1140
      %v1726 = vpop.f32.mrb[0].mxu0
      %v1727 = vadd.f32 %v520, %v1726
      %v1728 = vpop.f32.mrb[0].mxu0
      %v1729 = vadd.f32 %v524, %v1728
      %v1730 = vpop.f32.mrb[0].mxu0
      %v1731 = vadd.f32 %v520, %v1730
      %v1732 = vpop.f32.mrb[0].mxu0
      %v1733 = vadd.f32 %v524, %v1732
      %1734 = vmatprep.mubr.bf16.mxu0 0
      %1735 = vmatmul.mubr.bf16.gmra.mrb[0].mxu0 %v1143
      %v1736 = vpop.f32.mrb[0].mxu0
      %v1737 = vadd.f32 %v520, %v1736
      %v1738 = vpop.f32.mrb[0].mxu0
      %v1739 = vadd.f32 %v524, %v1738
      %v1740 = vpop.f32.mrb[0].mxu0
      %v1741 = vadd.f32 %v520, %v1740
      %v1742 = vpop.f32.mrb[0].mxu0
      %v1743 = vadd.f32 %v524, %v1742
      %1744 = vmatprep.mubr.bf16.mxu0 0
      %1745 = vmatmul.mubr.bf16.gmra.mrb[0].mxu0 %v1146
      %v1746 = vpop.f32.mrb[0].mxu0
      %v1747 = vadd.f32 %v520, %v1746
      %v1748 = vpop.f32.mrb[0].mxu0
      %v1749 = vadd.f32 %v524, %v1748
      %v1750 = vpop.f32.mrb[0].mxu0
      %v1751 = vadd.f32 %v520, %v1750
      %v1752 = vpop.f32.mrb[0].mxu0
      %v1753 = vadd.f32 %v524, %v1752
      %1754 = vmatprep.mubr.bf16.mxu0 0
      %1755 = vmatmul.mubr.bf16.gmra.mrb[0].mxu0 %v1149
      %v1756 = vpop.f32.mrb[0].mxu0
      %v1757 = vadd.f32 %v520, %v1756
      %v1758 = vpop.f32.mrb[0].mxu0
      %v1759 = vadd.f32 %v524, %v1758
      %v1760 = vpop.f32.mrb[0].mxu0
      %v1761 = vadd.f32 %v520, %v1760
      %v1762 = vpop.f32.mrb[0].mxu0
      %v1763 = vadd.f32 %v524, %v1762
      %1764 = vmatprep.mubr.bf16.mxu0 0
      %1765 = vmatmul.mubr.bf16.gmra.mrb[0].mxu0 %v1152
      %v1766 = vpop.f32.mrb[0].mxu0
      %v1767 = vadd.f32 %v520, %v1766
      %v1768 = vpop.f32.mrb[0].mxu0
      %v1769 = vadd.f32 %v524, %v1768
      %v1770 = vpop.f32.mrb[0].mxu0
      %v1771 = vadd.f32 %v520, %v1770
      %v1772 = vpop.f32.mrb[0].mxu0
      %v1773 = vadd.f32 %v524, %v1772
      %1774 = vmatprep.mubr.bf16.mxu0 0
      %1775 = vmatmul.mubr.bf16.gmra.mrb[0].mxu0 %v1155
      %v1776 = vpop.f32.mrb[0].mxu0
      %v1777 = vadd.f32 %v520, %v1776
      %v1778 = vpop.f32.mrb[0].mxu0
      %v1779 = vadd.f32 %v524, %v1778
      %v1780 = vpop.f32.mrb[0].mxu0
      %v1781 = vadd.f32 %v520, %v1780
      %v1782 = vpop.f32.mrb[0].mxu0
      %v1783 = vadd.f32 %v524, %v1782
      %1784 = vmatprep.mubr.bf16.mxu0 0
      %1785 = vmatmul.mubr.bf16.gmra.mrb[0].mxu0 %v1158
      %v1786 = vpop.f32.mrb[0].mxu0
      %v1787 = vadd.f32 %v520, %v1786
      %v1788 = vpop.f32.mrb[0].mxu0
      %v1789 = vadd.f32 %v524, %v1788
      %v1790 = vpop.f32.mrb[0].mxu0
      %v1791 = vadd.f32 %v520, %v1790
      %v1792 = vpop.f32.mrb[0].mxu0
      %v1793 = vadd.f32 %v524, %v1792
      %1794 = vmatprep.mubr.bf16.mxu0 0
      %1795 = vmatmul.mubr.bf16.gmra.mrb[0].mxu0 %v1161
      %v1796 = vpop.f32.mrb[0].mxu0
      %v1797 = vadd.f32 %v520, %v1796
      %v1798 = vpop.f32.mrb[0].mxu0
      %v1799 = vadd.f32 %v524, %v1798
      %v1800 = vpop.f32.mrb[0].mxu0
      %v1801 = vadd.f32 %v520, %v1800
      %v1802 = vpop.f32.mrb[0].mxu0
      %v1803 = vadd.f32 %v524, %v1802
      %1804 = vmatprep.mubr.bf16.mxu0 0
      %1805 = vmatmul.mubr.bf16.gmra.mrb[0].mxu0 %v1164
      %v1806 = vpop.f32.mrb[0].mxu0
      %v1807 = vadd.f32 %v520, %v1806
      %v1808 = vpop.f32.mrb[0].mxu0
      %v1809 = vadd.f32 %v524, %v1808
      %v1810 = vpop.f32.mrb[0].mxu0
      %v1811 = vadd.f32 %v520, %v1810
      %v1812 = vpop.f32.mrb[0].mxu0
      %v1813 = vadd.f32 %v524, %v1812
      %1814 = vmatprep.mubr.bf16.mxu0 0
      %1815 = vmatmul.mubr.bf16.gmra.mrb[0].mxu0 %v1167
      %v1816 = vpop.f32.mrb[0].mxu0
      %v1817 = vadd.f32 %v520, %v1816
      %v1818 = vpop.f32.mrb[0].mxu0
      %v1819 = vadd.f32 %v524, %v1818
      %v1820 = vpop.f32.mrb[0].mxu0
      %v1821 = vadd.f32 %v520, %v1820
      %v1822 = vpop.f32.mrb[0].mxu0
      %v1823 = vadd.f32 %v524, %v1822
      %1824 = vmatprep.mubr.bf16.mxu0 0
      %1825 = vmatmul.mubr.bf16.gmra.mrb[0].mxu0 %v1170
      %v1826 = vpop.f32.mrb[0].mxu0
      %v1827 = vadd.f32 %v520, %v1826
      %v1828 = vpop.f32.mrb[0].mxu0
      %v1829 = vadd.f32 %v524, %v1828
      %v1830 = vpop.f32.mrb[0].mxu0
      %v1831 = vadd.f32 %v520, %v1830
      %v1832 = vpop.f32.mrb[0].mxu0
      %v1833 = vadd.f32 %v524, %v1832
      %1834 = vmatprep.mubr.bf16.mxu0 0
      %1835 = vmatmul.mubr.bf16.gmra.mrb[0].mxu0 %v1173
      %v1836 = vpop.f32.mrb[0].mxu0
      %v1837 = vadd.f32 %v520, %v1836
      %v1838 = vpop.f32.mrb[0].mxu0
      %v1839 = vadd.f32 %v524, %v1838
      %v1840 = vpop.f32.mrb[0].mxu0
      %v1841 = vadd.f32 %v520, %v1840
      %v1842 = vpop.f32.mrb[0].mxu0
      %v1843 = vadd.f32 %v524, %v1842
      %1844 = vmatprep.mubr.bf16.mxu0 0
      %1845 = vmatmul.mubr.bf16.gmra.mrb[0].mxu0 %v1176
      %v1846 = vpop.f32.mrb[0].mxu0
      %v1847 = vadd.f32 %v520, %v1846
      %v1848 = vpop.f32.mrb[0].mxu0
      %v1849 = vadd.f32 %v524, %v1848
      %v1850 = vpop.f32.mrb[0].mxu0
      %v1851 = vadd.f32 %v520, %v1850
      %v1852 = vpop.f32.mrb[0].mxu0
      %v1853 = vadd.f32 %v524, %v1852
      %1854 = vmatprep.mubr.bf16.mxu0 0
      %1855 = vmatmul.mubr.bf16.gmra.mrb[0].mxu0 %v1179
      %v1856 = vpop.f32.mrb[0].mxu0
      %v1857 = vadd.f32 %v520, %v1856
      %v1858 = vpop.f32.mrb[0].mxu0
      %v1859 = vadd.f32 %v524, %v1858
      %v1860 = vpop.f32.mrb[0].mxu0
      %v1861 = vadd.f32 %v520, %v1860
      %v1862 = vpop.f32.mrb[0].mxu0
      %v1863 = vadd.f32 %v524, %v1862
      %1864 = vmatprep.mubr.bf16.mxu0 0
      %1865 = vmatmul.mubr.bf16.gmra.mrb[0].mxu0 %v1182
      %v1866 = vpop.f32.mrb[0].mxu0
      %v1867 = vadd.f32 %v520, %v1866
      %v1868 = vpop.f32.mrb[0].mxu0
      %v1869 = vadd.f32 %v524, %v1868
      %v1870 = vpop.f32.mrb[0].mxu0
      %v1871 = vadd.f32 %v520, %v1870
      %v1872 = vpop.f32.mrb[0].mxu0
      %v1873 = vadd.f32 %v524, %v1872
      %1874 = vmatprep.mubr.bf16.mxu0 0
      %1875 = vmatmul.mubr.bf16.gmra.mrb[0].mxu0 %v1185
      %v1876 = vpop.f32.mrb[0].mxu0
      %v1877 = vadd.f32 %v520, %v1876
      %v1878 = vpop.f32.mrb[0].mxu0
      %v1879 = vadd.f32 %v524, %v1878
      %v1880 = vpop.f32.mrb[0].mxu0
      %v1881 = vadd.f32 %v520, %v1880
      %v1882 = vpop.f32.mrb[0].mxu0
      %v1883 = vadd.f32 %v524, %v1882
      %1884 = vmatprep.mubr.bf16.mxu0 0
      %1885 = vmatmul.mubr.bf16.gmra.mrb[0].mxu0 %v1188
      %v1886 = vpop.f32.mrb[0].mxu0
      %v1887 = vadd.f32 %v520, %v1886
      %v1888 = vpop.f32.mrb[0].mxu0
      %v1889 = vadd.f32 %v524, %v1888
      %v1890 = vpop.f32.mrb[0].mxu0
      %v1891 = vadd.f32 %v520, %v1890
      %v1892 = vpop.f32.mrb[0].mxu0
      %v1893 = vadd.f32 %v524, %v1892
      %1894 = vmatprep.mubr.bf16.mxu0 0
      %1895 = vmatmul.mubr.bf16.gmra.mrb[0].mxu0 %v1191
      %v1896 = vpop.f32.mrb[0].mxu0
      %v1897 = vadd.f32 %v520, %v1896
      %v1898 = vpop.f32.mrb[0].mxu0
      %v1899 = vadd.f32 %v524, %v1898
      %v1900 = vpop.f32.mrb[0].mxu0
      %v1901 = vadd.f32 %v520, %v1900
      %v1902 = vpop.f32.mrb[0].mxu0
      %v1903 = vadd.f32 %v524, %v1902
      %1904 = vmatprep.mubr.bf16.mxu0 0
      %1905 = vmatmul.mubr.bf16.gmra.mrb[0].mxu0 %v1194
      %v1906 = vpop.f32.mrb[0].mxu0
      %v1907 = vadd.f32 %v520, %v1906
      %v1908 = vpop.f32.mrb[0].mxu0
      %v1909 = vadd.f32 %v524, %v1908
      %v1910 = vpop.f32.mrb[0].mxu0
      %v1911 = vadd.f32 %v520, %v1910
      %v1912 = vpop.f32.mrb[0].mxu0
      %v1913 = vadd.f32 %v524, %v1912
      %1914 = vmatprep.mubr.bf16.mxu0 0
      %1915 = vmatmul.mubr.bf16.gmra.mrb[0].mxu0 %v1197
      %v1916 = vpop.f32.mrb[0].mxu0
      %v1917 = vadd.f32 %v520, %v1916
      %v1918 = vpop.f32.mrb[0].mxu0
      %v1919 = vadd.f32 %v524, %v1918
      %v1920 = vpop.f32.mrb[0].mxu0
      %v1921 = vadd.f32 %v520, %v1920
      %v1922 = vpop.f32.mrb[0].mxu0
      %v1923 = vadd.f32 %v524, %v1922
      %1924 = vmatprep.mubr.bf16.mxu0 0
      %1925 = vmatmul.mubr.bf16.gmra.mrb[0].mxu0 %v1200
      %v1926 = vpop.f32.mrb[0].mxu0
      %v1927 = vadd.f32 %v520, %v1926
      %v1928 = vpop.f32.mrb[0].mxu0
      %v1929 = vadd.f32 %v524, %v1928
      %v1930 = vpop.f32.mrb[0].mxu0
      %v1931 = vadd.f32 %v520, %v1930
      %v1932 = vpop.f32.mrb[0].mxu0
      %v1933 = vadd.f32 %v524, %v1932
      %1934 = vmatprep.mubr.bf16.mxu0 0
      %1935 = vmatmul.mubr.bf16.gmra.mrb[0].mxu0 %v1203
      %v1936 = vpop.f32.mrb[0].mxu0
      %v1937 = vadd.f32 %v520, %v1936
      %v1938 = vpop.f32.mrb[0].mxu0
      %v1939 = vadd.f32 %v524, %v1938
      %v1940 = vpop.f32.mrb[0].mxu0
      %v1941 = vadd.f32 %v520, %v1940
      %v1942 = vpop.f32.mrb[0].mxu0
      %v1943 = vadd.f32 %v524, %v1942
      %1944 = vmatprep.mubr.bf16.mxu0 0
      %1945 = vmatmul.mubr.bf16.gmra.mrb[0].mxu0 %v1206
      %v1946 = vpop.f32.mrb[0].mxu0
      %v1947 = vadd.f32 %v520, %v1946
      %v1948 = vpop.f32.mrb[0].mxu0
      %v1949 = vadd.f32 %v524, %v1948
      %v1950 = vpop.f32.mrb[0].mxu0
      %v1951 = vadd.f32 %v520, %v1950
      %v1952 = vpop.f32.mrb[0].mxu0
      %v1953 = vadd.f32 %v524, %v1952
      %1954 = vmatprep.mubr.bf16.mxu0 0
      %1955 = vmatmul.mubr.bf16.gmra.mrb[0].mxu0 %v1209
      %v1956 = vpop.f32.mrb[0].mxu0
      %v1957 = vadd.f32 %v520, %v1956
      %v1958 = vpop.f32.mrb[0].mxu0
      %v1959 = vadd.f32 %v524, %v1958
      %v1960 = vpop.f32.mrb[0].mxu0
      %v1961 = vadd.f32 %v520, %v1960
      %v1962 = vpop.f32.mrb[0].mxu0
      %v1963 = vadd.f32 %v524, %v1962
      %1964 = vmatprep.mubr.bf16.mxu0 0
      %1965 = vmatmul.mubr.bf16.gmra.mrb[0].mxu0 %v1212
      %v1966 = vpop.f32.mrb[0].mxu0
      %v1967 = vadd.f32 %v520, %v1966
      %v1968 = vpop.f32.mrb[0].mxu0
      %v1969 = vadd.f32 %v524, %v1968
      %v1970 = vpop.f32.mrb[0].mxu0
      %v1971 = vadd.f32 %v520, %v1970
      %v1972 = vpop.f32.mrb[0].mxu0
      %v1973 = vadd.f32 %v524, %v1972
      %1974 = vmatprep.mubr.bf16.mxu0 0
      %1975 = vmatmul.mubr.bf16.gmra.mrb[0].mxu0 %v1215
      %v1976 = vpop.f32.mrb[0].mxu0
      %v1977 = vadd.f32 %v520, %v1976
      %v1978 = vpop.f32.mrb[0].mxu0
      %v1979 = vadd.f32 %v524, %v1978
      %v1980 = vpop.f32.mrb[0].mxu0
      %v1981 = vadd.f32 %v520, %v1980
      %v1982 = vpop.f32.mrb[0].mxu0
      %v1983 = vadd.f32 %v524, %v1982
      %1984 = vmatprep.mubr.bf16.mxu0 0
      %1985 = vmatmul.mubr.bf16.gmra.mrb[0].mxu0 %v1218
      %v1986 = vpop.f32.mrb[0].mxu0
      %v1987 = vadd.f32 %v520, %v1986
      %v1988 = vpop.f32.mrb[0].mxu0
      %v1989 = vadd.f32 %v524, %v1988
      %v1990 = vpop.f32.mrb[0].mxu0
      %v1991 = vadd.f32 %v520, %v1990
      %v1992 = vpop.f32.mrb[0].mxu0
      %v1993 = vadd.f32 %v524, %v1992
      %1994 = vmatprep.mubr.bf16.mxu0 0
      %1995 = vmatmul.mubr.bf16.gmra.mrb[0].mxu0 %v1221
      %v1996 = vpop.f32.mrb[0].mxu0
      %v1997 = vadd.f32 %v520, %v1996
      %v1998 = vpop.f32.mrb[0].mxu0
      %v1999 = vadd.f32 %v524, %v1998
      %v2000 = vpop.f32.mrb[0].mxu0
      %v2001 = vadd.f32 %v520, %v2000
      %v2002 = vpop.f32.mrb[0].mxu0
      %v2003 = vadd.f32 %v524, %v2002
      %2004 = vmatprep.mubr.bf16.mxu0 0
      %2005 = vmatmul.mubr.bf16.gmra.mrb[0].mxu0 %v1224
      %v2006 = vpop.f32.mrb[0].mxu0
      %v2007 = vadd.f32 %v520, %v2006
      %v2008 = vpop.f32.mrb[0].mxu0
      %v2009 = vadd.f32 %v524, %v2008
      %v2010 = vpop.f32.mrb[0].mxu0
      %v2011 = vadd.f32 %v520, %v2010
      %v2012 = vpop.f32.mrb[0].mxu0
      %v2013 = vadd.f32 %v524, %v2012
      %2014 = vmatprep.mubr.bf16.mxu0 0
      %2015 = vmatmul.mubr.bf16.gmra.mrb[0].mxu0 %v1227
      %v2016 = vpop.f32.mrb[0].mxu0
      %v2017 = vadd.f32 %v520, %v2016
      %v2018 = vpop.f32.mrb[0].mxu0
      %v2019 = vadd.f32 %v524, %v2018
      %v2020 = vpop.f32.mrb[0].mxu0
      %v2021 = vadd.f32 %v520, %v2020
      %v2022 = vpop.f32.mrb[0].mxu0
      %v2023 = vadd.f32 %v524, %v2022
      %2024 = vmatprep.mubr.bf16.mxu0 0
      %2025 = vmatmul.mubr.bf16.gmra.mrb[0].mxu0 %v1230
      %v2026 = vpop.f32.mrb[0].mxu0
      %v2027 = vadd.f32 %v520, %v2026
      %v2028 = vpop.f32.mrb[0].mxu0
      %v2029 = vadd.f32 %v524, %v2028
      %v2030 = vpop.f32.mrb[0].mxu0
      %v2031 = vadd.f32 %v520, %v2030
      %v2032 = vpop.f32.mrb[0].mxu0
      %v2033 = vadd.f32 %v524, %v2032
      %2034 = vmatprep.mubr.bf16.mxu0 0
      %2035 = vmatmul.mubr.bf16.gmra.mrb[0].mxu0 %v1233
      %v2036 = vpop.f32.mrb[0].mxu0
      %v2037 = vadd.f32 %v520, %v2036
      %v2038 = vpop.f32.mrb[0].mxu0
      %v2039 = vadd.f32 %v524, %v2038
      %v2040 = vpop.f32.mrb[0].mxu0
      %v2041 = vadd.f32 %v520, %v2040
      %v2042 = vpop.f32.mrb[0].mxu0
      %v2043 = vadd.f32 %v524, %v2042
      %2044 = vmatprep.mubr.bf16.mxu0 0
      %2045 = vmatmul.mubr.bf16.gmra.mrb[0].mxu0 %v1236
      %v2046 = vpop.f32.mrb[0].mxu0
      %v2047 = vadd.f32 %v520, %v2046
      %v2048 = vpop.f32.mrb[0].mxu0
      %v2049 = vadd.f32 %v524, %v2048
      %v2050 = vpop.f32.mrb[0].mxu0
      %v2051 = vadd.f32 %v520, %v2050
      %v2052 = vpop.f32.mrb[0].mxu0
      %v2053 = vadd.f32 %v524, %v2052
      %2054 = vmatprep.mubr.bf16.mxu0 0
      %2055 = vmatmul.mubr.bf16.gmra.mrb[0].mxu0 %v1239
      %v2056 = vpop.f32.mrb[0].mxu0
      %v2057 = vadd.f32 %v520, %v2056
      %v2058 = vpop.f32.mrb[0].mxu0
      %v2059 = vadd.f32 %v524, %v2058
      %v2060 = vpop.f32.mrb[0].mxu0
      %v2061 = vadd.f32 %v520, %v2060
      %v2062 = vpop.f32.mrb[0].mxu0
      %v2063 = vadd.f32 %v524, %v2062
      %2064 = vmatprep.mubr.bf16.mxu0 0
      %2065 = vmatmul.mubr.bf16.gmra.mrb[0].mxu0 %v1242
      %v2066 = vpop.f32.mrb[0].mxu0
      %v2067 = vadd.f32 %v520, %v2066
      %v2068 = vpop.f32.mrb[0].mxu0
      %v2069 = vadd.f32 %v524, %v2068
      %v2070 = vpop.f32.mrb[0].mxu0
      %v2071 = vadd.f32 %v520, %v2070
      %v2072 = vpop.f32.mrb[0].mxu0
      %v2073 = vadd.f32 %v524, %v2072
      %2074 = vmatprep.mubr.bf16.mxu0 0
      %2075 = vmatmul.mubr.bf16.gmra.mrb[0].mxu0 %v1245
      %v2076 = vpop.f32.mrb[0].mxu0
      %v2077 = vadd.f32 %v520, %v2076
      %v2078 = vpop.f32.mrb[0].mxu0
      %v2079 = vadd.f32 %v524, %v2078
      %v2080 = vpop.f32.mrb[0].mxu0
      %v2081 = vadd.f32 %v520, %v2080
      %v2082 = vpop.f32.mrb[0].mxu0
      %v2083 = vadd.f32 %v524, %v2082
      %2084 = vmatprep.mubr.bf16.mxu0 0
      %2085 = vmatmul.mubr.bf16.gmra.mrb[0].mxu0 %v1248
      %v2086 = vpop.f32.mrb[0].mxu0
      %v2087 = vadd.f32 %v520, %v2086
      %v2088 = vpop.f32.mrb[0].mxu0
      %v2089 = vadd.f32 %v524, %v2088
      %v2090 = vpop.f32.mrb[0].mxu0
      %v2091 = vadd.f32 %v520, %v2090
      %v2092 = vpop.f32.mrb[0].mxu0
      %v2093 = vadd.f32 %v524, %v2092
      %2094 = vmatprep.mubr.bf16.mxu0 0
      %2095 = vmatmul.mubr.bf16.gmra.mrb[0].mxu0 %v1251
      %v2096 = vpop.f32.mrb[0].mxu0
      %v2097 = vadd.f32 %v520, %v2096
      %v2098 = vpop.f32.mrb[0].mxu0
      %v2099 = vadd.f32 %v524, %v2098
      %v2100 = vpop.f32.mrb[0].mxu0
      %v2101 = vadd.f32 %v520, %v2100
      %v2102 = vpop.f32.mrb[0].mxu0
      %v2103 = vadd.f32 %v524, %v2102
      %2104 = vmatprep.mubr.bf16.mxu0 0
      %2105 = vmatmul.mubr.bf16.gmra.mrb[0].mxu0 %v1254
      %v2106 = vpop.f32.mrb[0].mxu0
      %v2107 = vadd.f32 %v520, %v2106
      %v2108 = vpop.f32.mrb[0].mxu0
      %v2109 = vadd.f32 %v524, %v2108
      %v2110 = vpop.f32.mrb[0].mxu0
      %v2111 = vadd.f32 %v520, %v2110
      %v2112 = vpop.f32.mrb[0].mxu0
      %v2113 = vadd.f32 %v524, %v2112
      %2114 = vmatprep.mubr.bf16.mxu0 0
      %2115 = vmatmul.mubr.bf16.gmra.mrb[0].mxu0 %v1257
      %v2116 = vpop.f32.mrb[0].mxu0
      %v2117 = vadd.f32 %v520, %v2116
      %v2118 = vpop.f32.mrb[0].mxu0
      %v2119 = vadd.f32 %v524, %v2118
      %v2120 = vpop.f32.mrb[0].mxu0
      %v2121 = vadd.f32 %v520, %v2120
      %v2122 = vpop.f32.mrb[0].mxu0
      %v2123 = vadd.f32 %v524, %v2122
      %2124 = vmatprep.mubr.bf16.mxu0 0
      %2125 = vmatmul.mubr.bf16.gmra.mrb[0].mxu0 %v1260
      %v2126 = vpop.f32.mrb[0].mxu0
      %v2127 = vadd.f32 %v520, %v2126
      %v2128 = vpop.f32.mrb[0].mxu0
      %v2129 = vadd.f32 %v524, %v2128
      %v2130 = vpop.f32.mrb[0].mxu0
      %v2131 = vadd.f32 %v520, %v2130
      %v2132 = vpop.f32.mrb[0].mxu0
      %v2133 = vadd.f32 %v524, %v2132
      %2134 = vmatprep.mubr.bf16.mxu0 0
      %2135 = vmatmul.mubr.bf16.gmra.mrb[0].mxu0 %v1263
      %v2136 = vpop.f32.mrb[0].mxu0
      %v2137 = vadd.f32 %v520, %v2136
      %v2138 = vpop.f32.mrb[0].mxu0
      %v2139 = vadd.f32 %v524, %v2138
      %v2140 = vpop.f32.mrb[0].mxu0
      %v2141 = vadd.f32 %v520, %v2140
      %v2142 = vpop.f32.mrb[0].mxu0
      %v2143 = vadd.f32 %v524, %v2142
      %2144 = vmatprep.mubr.bf16.mxu0 0
      %2145 = vmatmul.mubr.bf16.gmra.mrb[0].mxu0 %v1266
      %v2146 = vpop.f32.mrb[0].mxu0
      %v2147 = vadd.f32 %v520, %v2146
      %v2148 = vpop.f32.mrb[0].mxu0
      %v2149 = vadd.f32 %v524, %v2148
      %v2150 = vpop.f32.mrb[0].mxu0
      %v2151 = vadd.f32 %v520, %v2150
      %v2152 = vpop.f32.mrb[0].mxu0
      %v2153 = vadd.f32 %v524, %v2152
      %2154 = vmatprep.mubr.bf16.mxu0 0
      %2155 = vmatmul.mubr.bf16.gmra.mrb[0].mxu0 %v1269
      %v2156 = vpop.f32.mrb[0].mxu0
      %v2157 = vadd.f32 %v520, %v2156
      %v2158 = vpop.f32.mrb[0].mxu0
      %v2159 = vadd.f32 %v524, %v2158
      %v2160 = vpop.f32.mrb[0].mxu0
      %v2161 = vadd.f32 %v520, %v2160
      %v2162 = vpop.f32.mrb[0].mxu0
      %v2163 = vadd.f32 %v524, %v2162
      %2164 = vmatprep.mubr.bf16.mxu0 0
      %2165 = vmatmul.mubr.bf16.gmra.mrb[0].mxu0 %v1272
      %v2166 = vpop.f32.mrb[0].mxu0
      %v2167 = vadd.f32 %v520, %v2166
      %v2168 = vpop.f32.mrb[0].mxu0
      %v2169 = vadd.f32 %v524, %v2168
      %v2170 = vpop.f32.mrb[0].mxu0
      %v2171 = vadd.f32 %v520, %v2170
      %v2172 = vpop.f32.mrb[0].mxu0
      %v2173 = vadd.f32 %v524, %v2172
      %2174 = vmatprep.mubr.bf16.mxu0 0
      %2175 = vmatmul.mubr.bf16.gmra.mrb[0].mxu0 %v1275
      %v2176 = vpop.f32.mrb[0].mxu0
      %v2177 = vadd.f32 %v520, %v2176
      %v2178 = vpop.f32.mrb[0].mxu0
      %v2179 = vadd.f32 %v524, %v2178
      %v2180 = vpop.f32.mrb[0].mxu0
      %v2181 = vadd.f32 %v520, %v2180
      %v2182 = vpop.f32.mrb[0].mxu0
      %v2183 = vadd.f32 %v524, %v2182
      %2184 = vmatprep.mubr.bf16.mxu0 0
      %2185 = vmatmul.mubr.bf16.gmra.mrb[0].mxu0 %v1278
      %v2186 = vpop.f32.mrb[0].mxu0
      %v2187 = vadd.f32 %v520, %v2186
      %v2188 = vpop.f32.mrb[0].mxu0
      %v2189 = vadd.f32 %v524, %v2188
      %v2190 = vpop.f32.mrb[0].mxu0
      %v2191 = vadd.f32 %v520, %v2190
      %v2192 = vpop.f32.mrb[0].mxu0
      %v2193 = vadd.f32 %v524, %v2192
      %2194 = vmatprep.mubr.bf16.mxu0 0
      %2195 = vmatmul.mubr.bf16.gmra.mrb[0].mxu0 %v1281
      %v2196 = vpop.f32.mrb[0].mxu0
      %v2197 = vadd.f32 %v520, %v2196
      %v2198 = vpop.f32.mrb[0].mxu0
      %v2199 = vadd.f32 %v524, %v2198
      %v2200 = vpop.f32.mrb[0].mxu0
      %v2201 = vadd.f32 %v520, %v2200
      %v2202 = vpop.f32.mrb[0].mxu0
      %v2203 = vadd.f32 %v524, %v2202
      %2204 = vmatprep.mubr.bf16.mxu0 0
      %2205 = vmatmul.mubr.bf16.gmra.mrb[0].mxu0 %v1284
      %v2206 = vpop.f32.mrb[0].mxu0
      %v2207 = vadd.f32 %v520, %v2206
      %v2208 = vpop.f32.mrb[0].mxu0
      %v2209 = vadd.f32 %v524, %v2208
      %v2210 = vpop.f32.mrb[0].mxu0
      %v2211 = vadd.f32 %v520, %v2210
      %v2212 = vpop.f32.mrb[0].mxu0
      %v2213 = vadd.f32 %v524, %v2212
      %2214 = vmatprep.mubr.bf16.mxu0 0
      %2215 = vmatmul.mubr.bf16.gmra.mrb[0].mxu0 %v1287
      %v2216 = vpop.f32.mrb[0].mxu0
      %v2217 = vadd.f32 %v520, %v2216
      %v2218 = vpop.f32.mrb[0].mxu0
      %v2219 = vadd.f32 %v524, %v2218
      %v2220 = vpop.f32.mrb[0].mxu0
      %v2221 = vadd.f32 %v520, %v2220
      %v2222 = vpop.f32.mrb[0].mxu0
      %v2223 = vadd.f32 %v524, %v2222
      %2224 = vmatprep.mubr.bf16.mxu0 0
      %2225 = vmatmul.mubr.bf16.gmra.mrb[0].mxu0 %v1290
      %v2226 = vpop.f32.mrb[0].mxu0
      %v2227 = vadd.f32 %v520, %v2226
      %v2228 = vpop.f32.mrb[0].mxu0
      %v2229 = vadd.f32 %v524, %v2228
      %v2230 = vpop.f32.mrb[0].mxu0
      %v2231 = vadd.f32 %v520, %v2230
      %v2232 = vpop.f32.mrb[0].mxu0
      %v2233 = vadd.f32 %v524, %v2232
      %2234 = vmatprep.mubr.bf16.mxu0 0
      %2235 = vmatmul.mubr.bf16.gmra.mrb[0].mxu0 %v1293
      %v2236 = vpop.f32.mrb[0].mxu0
      %v2237 = vadd.f32 %v520, %v2236
      %v2238 = vpop.f32.mrb[0].mxu0
      %v2239 = vadd.f32 %v524, %v2238
      %v2240 = vpop.f32.mrb[0].mxu0
      %v2241 = vadd.f32 %v520, %v2240
      %v2242 = vpop.f32.mrb[0].mxu0
      %v2243 = vadd.f32 %v524, %v2242
      %2244 = vmatprep.mubr.bf16.mxu0 0
      %2245 = vmatmul.mubr.bf16.gmra.mrb[0].mxu0 %v1296
      %v2246 = vpop.f32.mrb[0].mxu0
      %v2247 = vadd.f32 %v520, %v2246
      %v2248 = vpop.f32.mrb[0].mxu0
      %v2249 = vadd.f32 %v524, %v2248
      %v2250 = vpop.f32.mrb[0].mxu0
      %v2251 = vadd.f32 %v520, %v2250
      %v2252 = vpop.f32.mrb[0].mxu0
      %v2253 = vadd.f32 %v524, %v2252
      %2254 = vmatprep.mubr.bf16.mxu0 0
      %2255 = vmatmul.mubr.bf16.gmra.mrb[0].mxu0 %v1299
      %v2256 = vpop.f32.mrb[0].mxu0
      %v2257 = vadd.f32 %v520, %v2256
      %v2258 = vpop.f32.mrb[0].mxu0
      %v2259 = vadd.f32 %v524, %v2258
      %v2260 = vpop.f32.mrb[0].mxu0
      %v2261 = vadd.f32 %v520, %v2260
      %v2262 = vpop.f32.mrb[0].mxu0
      %v2263 = vadd.f32 %v524, %v2262
      %2264 = vmatprep.mubr.bf16.mxu0 0
      %2265 = vmatmul.mubr.bf16.gmra.mrb[0].mxu0 %v1302
      %v2266 = vpop.f32.mrb[0].mxu0
      %v2267 = vadd.f32 %v520, %v2266
      %v2268 = vpop.f32.mrb[0].mxu0
      %v2269 = vadd.f32 %v524, %v2268
      %v2270 = vpop.f32.mrb[0].mxu0
      %v2271 = vadd.f32 %v520, %v2270
      %v2272 = vpop.f32.mrb[0].mxu0
      %v2273 = vadd.f32 %v524, %v2272
      %2274 = vmatprep.mubr.bf16.mxu0 0
      %2275 = vmatmul.mubr.bf16.gmra.mrb[0].mxu0 %v1305
      %v2276 = vpop.f32.mrb[0].mxu0
      %v2277 = vadd.f32 %v520, %v2276
      %v2278 = vpop.f32.mrb[0].mxu0
      %v2279 = vadd.f32 %v524, %v2278
      %v2280 = vpop.f32.mrb[0].mxu0
      %v2281 = vadd.f32 %v520, %v2280
      %v2282 = vpop.f32.mrb[0].mxu0
      %v2283 = vadd.f32 %v524, %v2282
      %2284 = vmatprep.mubr.bf16.mxu0 0
      %2285 = vmatmul.mubr.bf16.gmra.mrb[0].mxu0 %v1308
      %v2286 = vpop.f32.mrb[0].mxu0
      %v2287 = vadd.f32 %v520, %v2286
      %v2288 = vpop.f32.mrb[0].mxu0
      %v2289 = vadd.f32 %v524, %v2288
      %v2290 = vpop.f32.mrb[0].mxu0
      %v2291 = vadd.f32 %v520, %v2290
      %v2292 = vpop.f32.mrb[0].mxu0
      %v2293 = vadd.f32 %v524, %v2292
      %2294 = vmatprep.mubr.bf16.mxu0 0
      %2295 = vmatmul.mubr.bf16.gmra.mrb[0].mxu0 %v1311
      %v2296 = vpop.f32.mrb[0].mxu0
      %v2297 = vadd.f32 %v520, %v2296
      %v2298 = vpop.f32.mrb[0].mxu0
      %v2299 = vadd.f32 %v524, %v2298
      %v2300 = vpop.f32.mrb[0].mxu0
      %v2301 = vadd.f32 %v520, %v2300
      %v2302 = vpop.f32.mrb[0].mxu0
      %v2303 = vadd.f32 %v524, %v2302
      %2304 = vmatprep.mubr.bf16.mxu0 0
      %2305 = vmatmul.mubr.bf16.gmra.mrb[0].mxu0 %v1314
      %v2306 = vpop.f32.mrb[0].mxu0
      %v2307 = vadd.f32 %v520, %v2306
      %v2308 = vpop.f32.mrb[0].mxu0
      %v2309 = vadd.f32 %v524, %v2308
      %v2310 = vpop.f32.mrb[0].mxu0
      %v2311 = vadd.f32 %v520, %v2310
      %v2312 = vpop.f32.mrb[0].mxu0
      %v2313 = vadd.f32 %v524, %v2312
      %2314 = vmatprep.mubr.bf16.mxu0 0
      %2315 = vmatmul.mubr.bf16.gmra.mrb[0].mxu0 %v1317
      %v2316 = vpop.f32.mrb[0].mxu0
      %v2317 = vadd.f32 %v520, %v2316
      %v2318 = vpop.f32.mrb[0].mxu0
      %v2319 = vadd.f32 %v524, %v2318
      %v2320 = vpop.f32.mrb[0].mxu0
      %v2321 = vadd.f32 %v520, %v2320
      %v2322 = vpop.f32.mrb[0].mxu0
      %v2323 = vadd.f32 %v524, %v2322
      %2324 = vmatprep.mubr.bf16.mxu0 0
      %2325 = vmatmul.mubr.bf16.gmra.mrb[0].mxu0 %v1320
      %v2326 = vpop.f32.mrb[0].mxu0
      %v2327 = vadd.f32 %v520, %v2326
      %v2328 = vpop.f32.mrb[0].mxu0
      %v2329 = vadd.f32 %v524, %v2328
      %v2330 = vpop.f32.mrb[0].mxu0
      %v2331 = vadd.f32 %v520, %v2330
      %v2332 = vpop.f32.mrb[0].mxu0
      %v2333 = vadd.f32 %v524, %v2332
      %2334 = vdwg.mxu0
      %v2335 = vmax.f32 %v1357, 0.0
      %v2336 = vmax.f32 %v1359, 0.0
      %v2337 = vmax.f32 %v1361, 0.0
      %v2338 = vmax.f32 %v1363, 0.0
      %v2339 = vmax.f32 %v1367, 0.0
      %v2340 = vmax.f32 %v1369, 0.0
      %v2341 = vmax.f32 %v1371, 0.0
      %v2342 = vmax.f32 %v1373, 0.0
      %v2343 = vmax.f32 %v1377, 0.0
      %v2344 = vmax.f32 %v1379, 0.0
      %v2345 = vmax.f32 %v1381, 0.0
      %v2346 = vmax.f32 %v1383, 0.0
      %v2347 = vmax.f32 %v1387, 0.0
      %v2348 = vmax.f32 %v1389, 0.0
      %v2349 = vmax.f32 %v1391, 0.0
      %v2350 = vmax.f32 %v1393, 0.0
      %v2351 = vmax.f32 %v1397, 0.0
      %v2352 = vmax.f32 %v1399, 0.0
      %v2353 = vmax.f32 %v1401, 0.0
      %v2354 = vmax.f32 %v1403, 0.0
      %v2355 = vmax.f32 %v1407, 0.0
      %v2356 = vmax.f32 %v1409, 0.0
      %v2357 = vmax.f32 %v1411, 0.0
      %v2358 = vmax.f32 %v1413, 0.0
      %v2359 = vmax.f32 %v1417, 0.0
      %v2360 = vmax.f32 %v1419, 0.0
      %v2361 = vmax.f32 %v1421, 0.0
      %v2362 = vmax.f32 %v1423, 0.0
      %v2363 = vmax.f32 %v1427, 0.0
      %v2364 = vmax.f32 %v1429, 0.0
      %v2365 = vmax.f32 %v1431, 0.0
      %v2366 = vmax.f32 %v1433, 0.0
      %v2367 = vmax.f32 %v1437, 0.0
      %v2368 = vmax.f32 %v1439, 0.0
      %v2369 = vmax.f32 %v1441, 0.0
      %v2370 = vmax.f32 %v1443, 0.0
      %v2371 = vmax.f32 %v1447, 0.0
      %v2372 = vmax.f32 %v1449, 0.0
      %v2373 = vmax.f32 %v1451, 0.0
      %v2374 = vmax.f32 %v1453, 0.0
      %v2375 = vmax.f32 %v1457, 0.0
      %v2376 = vmax.f32 %v1459, 0.0
      %v2377 = vmax.f32 %v1461, 0.0
      %v2378 = vmax.f32 %v1463, 0.0
      %v2379 = vmax.f32 %v1467, 0.0
      %v2380 = vmax.f32 %v1469, 0.0
      %v2381 = vmax.f32 %v1471, 0.0
      %v2382 = vmax.f32 %v1473, 0.0
      %v2383 = vmax.f32 %v1477, 0.0
      %v2384 = vmax.f32 %v1479, 0.0
      %v2385 = vmax.f32 %v1481, 0.0
      %v2386 = vmax.f32 %v1483, 0.0
      %v2387 = vmax.f32 %v1487, 0.0
      %v2388 = vmax.f32 %v1489, 0.0
      %v2389 = vmax.f32 %v1491, 0.0
      %v2390 = vmax.f32 %v1493, 0.0
      %v2391 = vmax.f32 %v1497, 0.0
      %v2392 = vmax.f32 %v1499, 0.0
      %v2393 = vmax.f32 %v1501, 0.0
      %v2394 = vmax.f32 %v1503, 0.0
      %v2395 = vmax.f32 %v1507, 0.0
      %v2396 = vmax.f32 %v1509, 0.0
      %v2397 = vmax.f32 %v1511, 0.0
      %v2398 = vmax.f32 %v1513, 0.0
      %v2399 = vmax.f32 %v1517, 0.0
      %v2400 = vmax.f32 %v1519, 0.0
      %v2401 = vmax.f32 %v1521, 0.0
      %v2402 = vmax.f32 %v1523, 0.0
      %v2403 = vmax.f32 %v1527, 0.0
      %v2404 = vmax.f32 %v1529, 0.0
      %v2405 = vmax.f32 %v1531, 0.0
      %v2406 = vmax.f32 %v1533, 0.0
      %v2407 = vmax.f32 %v1537, 0.0
      %v2408 = vmax.f32 %v1539, 0.0
      %v2409 = vmax.f32 %v1541, 0.0
      %v2410 = vmax.f32 %v1543, 0.0
      %v2411 = vmax.f32 %v1547, 0.0
      %v2412 = vmax.f32 %v1549, 0.0
      %v2413 = vmax.f32 %v1551, 0.0
      %v2414 = vmax.f32 %v1553, 0.0
      %v2415 = vmax.f32 %v1557, 0.0
      %v2416 = vmax.f32 %v1559, 0.0
      %v2417 = vmax.f32 %v1561, 0.0
      %v2418 = vmax.f32 %v1563, 0.0
      %v2419 = vmax.f32 %v1567, 0.0
      %v2420 = vmax.f32 %v1569, 0.0
      %v2421 = vmax.f32 %v1571, 0.0
      %v2422 = vmax.f32 %v1573, 0.0
      %v2423 = vmax.f32 %v1577, 0.0
      %v2424 = vmax.f32 %v1579, 0.0
      %v2425 = vmax.f32 %v1581, 0.0
      %v2426 = vmax.f32 %v1583, 0.0
      %v2427 = vmax.f32 %v1587, 0.0
      %v2428 = vmax.f32 %v1589, 0.0
      %v2429 = vmax.f32 %v1591, 0.0
      %v2430 = vmax.f32 %v1593, 0.0
      %v2431 = vmax.f32 %v1597, 0.0
      %v2432 = vmax.f32 %v1599, 0.0
      %v2433 = vmax.f32 %v1601, 0.0
      %v2434 = vmax.f32 %v1603, 0.0
      %v2435 = vmax.f32 %v1607, 0.0
      %v2436 = vmax.f32 %v1609, 0.0
      %v2437 = vmax.f32 %v1611, 0.0
      %v2438 = vmax.f32 %v1613, 0.0
      %v2439 = vmax.f32 %v1617, 0.0
      %v2440 = vmax.f32 %v1619, 0.0
      %v2441 = vmax.f32 %v1621, 0.0
      %v2442 = vmax.f32 %v1623, 0.0
      %v2443 = vmax.f32 %v1627, 0.0
      %v2444 = vmax.f32 %v1629, 0.0
      %v2445 = vmax.f32 %v1631, 0.0
      %v2446 = vmax.f32 %v1633, 0.0
      %v2447 = vmax.f32 %v1637, 0.0
      %v2448 = vmax.f32 %v1639, 0.0
      %v2449 = vmax.f32 %v1641, 0.0
      %v2450 = vmax.f32 %v1643, 0.0
      %v2451 = vmax.f32 %v1647, 0.0
      %v2452 = vmax.f32 %v1649, 0.0
      %v2453 = vmax.f32 %v1651, 0.0
      %v2454 = vmax.f32 %v1653, 0.0
      %v2455 = vmax.f32 %v1657, 0.0
      %v2456 = vmax.f32 %v1659, 0.0
      %v2457 = vmax.f32 %v1661, 0.0
      %v2458 = vmax.f32 %v1663, 0.0
      %v2459 = vmax.f32 %v1667, 0.0
      %v2460 = vmax.f32 %v1669, 0.0
      %v2461 = vmax.f32 %v1671, 0.0
      %v2462 = vmax.f32 %v1673, 0.0
      %v2463 = vmax.f32 %v1677, 0.0
      %v2464 = vmax.f32 %v1679, 0.0
      %v2465 = vmax.f32 %v1681, 0.0
      %v2466 = vmax.f32 %v1683, 0.0
      %v2467 = vmax.f32 %v1687, 0.0
      %v2468 = vmax.f32 %v1689, 0.0
      %v2469 = vmax.f32 %v1691, 0.0
      %v2470 = vmax.f32 %v1693, 0.0
      %v2471 = vmax.f32 %v1697, 0.0
      %v2472 = vmax.f32 %v1699, 0.0
      %v2473 = vmax.f32 %v1701, 0.0
      %v2474 = vmax.f32 %v1703, 0.0
      %v2475 = vmax.f32 %v1707, 0.0
      %v2476 = vmax.f32 %v1709, 0.0
      %v2477 = vmax.f32 %v1711, 0.0
      %v2478 = vmax.f32 %v1713, 0.0
      %v2479 = vmax.f32 %v1717, 0.0
      %v2480 = vmax.f32 %v1719, 0.0
      %v2481 = vmax.f32 %v1721, 0.0
      %v2482 = vmax.f32 %v1723, 0.0
      %v2483 = vmax.f32 %v1727, 0.0
      %v2484 = vmax.f32 %v1729, 0.0
      %v2485 = vmax.f32 %v1731, 0.0
      %v2486 = vmax.f32 %v1733, 0.0
      %v2487 = vmax.f32 %v1737, 0.0
      %v2488 = vmax.f32 %v1739, 0.0
      %v2489 = vmax.f32 %v1741, 0.0
      %v2490 = vmax.f32 %v1743, 0.0
      %v2491 = vmax.f32 %v1747, 0.0
      %v2492 = vmax.f32 %v1749, 0.0
      %v2493 = vmax.f32 %v1751, 0.0
      %v2494 = vmax.f32 %v1753, 0.0
      %v2495 = vmax.f32 %v1757, 0.0
      %v2496 = vmax.f32 %v1759, 0.0
      %v2497 = vmax.f32 %v1761, 0.0
      %v2498 = vmax.f32 %v1763, 0.0
      %v2499 = vmax.f32 %v1767, 0.0
      %v2500 = vmax.f32 %v1769, 0.0
      %v2501 = vmax.f32 %v1771, 0.0
      %v2502 = vmax.f32 %v1773, 0.0
      %v2503 = vmax.f32 %v1777, 0.0
      %v2504 = vmax.f32 %v1779, 0.0
      %v2505 = vmax.f32 %v1781, 0.0
      %v2506 = vmax.f32 %v1783, 0.0
      %v2507 = vmax.f32 %v1787, 0.0
      %v2508 = vmax.f32 %v1789, 0.0
      %v2509 = vmax.f32 %v1791, 0.0
      %v2510 = vmax.f32 %v1793, 0.0
      %v2511 = vmax.f32 %v1797, 0.0
      %v2512 = vmax.f32 %v1799, 0.0
      %v2513 = vmax.f32 %v1801, 0.0
      %v2514 = vmax.f32 %v1803, 0.0
      %v2515 = vmax.f32 %v1807, 0.0
      %v2516 = vmax.f32 %v1809, 0.0
      %v2517 = vmax.f32 %v1811, 0.0
      %v2518 = vmax.f32 %v1813, 0.0
      %v2519 = vmax.f32 %v1817, 0.0
      %v2520 = vmax.f32 %v1819, 0.0
      %v2521 = vmax.f32 %v1821, 0.0
      %v2522 = vmax.f32 %v1823, 0.0
      %v2523 = vmax.f32 %v1827, 0.0
      %v2524 = vmax.f32 %v1829, 0.0
      %v2525 = vmax.f32 %v1831, 0.0
      %v2526 = vmax.f32 %v1833, 0.0
      %v2527 = vmax.f32 %v1837, 0.0
      %v2528 = vmax.f32 %v1839, 0.0
      %v2529 = vmax.f32 %v1841, 0.0
      %v2530 = vmax.f32 %v1843, 0.0
      %v2531 = vmax.f32 %v1847, 0.0
      %v2532 = vmax.f32 %v1849, 0.0
      %v2533 = vmax.f32 %v1851, 0.0
      %v2534 = vmax.f32 %v1853, 0.0
      %v2535 = vmax.f32 %v1857, 0.0
      %v2536 = vmax.f32 %v1859, 0.0
      %v2537 = vmax.f32 %v1861, 0.0
      %v2538 = vmax.f32 %v1863, 0.0
      %v2539 = vmax.f32 %v1867, 0.0
      %v2540 = vmax.f32 %v1869, 0.0
      %v2541 = vmax.f32 %v1871, 0.0
      %v2542 = vmax.f32 %v1873, 0.0
      %v2543 = vmax.f32 %v1877, 0.0
      %v2544 = vmax.f32 %v1879, 0.0
      %v2545 = vmax.f32 %v1881, 0.0
      %v2546 = vmax.f32 %v1883, 0.0
      %v2547 = vmax.f32 %v1887, 0.0
      %v2548 = vmax.f32 %v1889, 0.0
      %v2549 = vmax.f32 %v1891, 0.0
      %v2550 = vmax.f32 %v1893, 0.0
      %v2551 = vmax.f32 %v1897, 0.0
      %v2552 = vmax.f32 %v1899, 0.0
      %v2553 = vmax.f32 %v1901, 0.0
      %v2554 = vmax.f32 %v1903, 0.0
      %v2555 = vmax.f32 %v1907, 0.0
      %v2556 = vmax.f32 %v1909, 0.0
      %v2557 = vmax.f32 %v1911, 0.0
      %v2558 = vmax.f32 %v1913, 0.0
      %v2559 = vmax.f32 %v1917, 0.0
      %v2560 = vmax.f32 %v1919, 0.0
      %v2561 = vmax.f32 %v1921, 0.0
      %v2562 = vmax.f32 %v1923, 0.0
      %v2563 = vmax.f32 %v1927, 0.0
      %v2564 = vmax.f32 %v1929, 0.0
      %v2565 = vmax.f32 %v1931, 0.0
      %v2566 = vmax.f32 %v1933, 0.0
      %v2567 = vmax.f32 %v1937, 0.0
      %v2568 = vmax.f32 %v1939, 0.0
      %v2569 = vmax.f32 %v1941, 0.0
      %v2570 = vmax.f32 %v1943, 0.0
      %v2571 = vmax.f32 %v1947, 0.0
      %v2572 = vmax.f32 %v1949, 0.0
      %v2573 = vmax.f32 %v1951, 0.0
      %v2574 = vmax.f32 %v1953, 0.0
      %v2575 = vmax.f32 %v1957, 0.0
      %v2576 = vmax.f32 %v1959, 0.0
      %v2577 = vmax.f32 %v1961, 0.0
      %v2578 = vmax.f32 %v1963, 0.0
      %v2579 = vmax.f32 %v1967, 0.0
      %v2580 = vmax.f32 %v1969, 0.0
      %v2581 = vmax.f32 %v1971, 0.0
      %v2582 = vmax.f32 %v1973, 0.0
      %v2583 = vmax.f32 %v1977, 0.0
      %v2584 = vmax.f32 %v1979, 0.0
      %v2585 = vmax.f32 %v1981, 0.0
      %v2586 = vmax.f32 %v1983, 0.0
      %v2587 = vmax.f32 %v1987, 0.0
      %v2588 = vmax.f32 %v1989, 0.0
      %v2589 = vmax.f32 %v1991, 0.0
      %v2590 = vmax.f32 %v1993, 0.0
      %v2591 = vmax.f32 %v1997, 0.0
      %v2592 = vmax.f32 %v1999, 0.0
      %v2593 = vmax.f32 %v2001, 0.0
      %v2594 = vmax.f32 %v2003, 0.0
      %v2595 = vmax.f32 %v2007, 0.0
      %v2596 = vmax.f32 %v2009, 0.0
      %v2597 = vmax.f32 %v2011, 0.0
      %v2598 = vmax.f32 %v2013, 0.0
      %v2599 = vmax.f32 %v2017, 0.0
      %v2600 = vmax.f32 %v2019, 0.0
      %v2601 = vmax.f32 %v2021, 0.0
      %v2602 = vmax.f32 %v2023, 0.0
      %v2603 = vmax.f32 %v2027, 0.0
      %v2604 = vmax.f32 %v2029, 0.0
      %v2605 = vmax.f32 %v2031, 0.0
      %v2606 = vmax.f32 %v2033, 0.0
      %v2607 = vmax.f32 %v2037, 0.0
      %v2608 = vmax.f32 %v2039, 0.0
      %v2609 = vmax.f32 %v2041, 0.0
      %v2610 = vmax.f32 %v2043, 0.0
      %v2611 = vmax.f32 %v2047, 0.0
      %v2612 = vmax.f32 %v2049, 0.0
      %v2613 = vmax.f32 %v2051, 0.0
      %v2614 = vmax.f32 %v2053, 0.0
      %v2615 = vmax.f32 %v2057, 0.0
      %v2616 = vmax.f32 %v2059, 0.0
      %v2617 = vmax.f32 %v2061, 0.0
      %v2618 = vmax.f32 %v2063, 0.0
      %v2619 = vmax.f32 %v2067, 0.0
      %v2620 = vmax.f32 %v2069, 0.0
      %v2621 = vmax.f32 %v2071, 0.0
      %v2622 = vmax.f32 %v2073, 0.0
      %v2623 = vmax.f32 %v2077, 0.0
      %v2624 = vmax.f32 %v2079, 0.0
      %v2625 = vmax.f32 %v2081, 0.0
      %v2626 = vmax.f32 %v2083, 0.0
      %v2627 = vmax.f32 %v2087, 0.0
      %v2628 = vmax.f32 %v2089, 0.0
      %v2629 = vmax.f32 %v2091, 0.0
      %v2630 = vmax.f32 %v2093, 0.0
      %v2631 = vmax.f32 %v2097, 0.0
      %v2632 = vmax.f32 %v2099, 0.0
      %v2633 = vmax.f32 %v2101, 0.0
      %v2634 = vmax.f32 %v2103, 0.0
      %v2635 = vmax.f32 %v2107, 0.0
      %v2636 = vmax.f32 %v2109, 0.0
      %v2637 = vmax.f32 %v2111, 0.0
      %v2638 = vmax.f32 %v2113, 0.0
      %v2639 = vmax.f32 %v2117, 0.0
      %v2640 = vmax.f32 %v2119, 0.0
      %v2641 = vmax.f32 %v2121, 0.0
      %v2642 = vmax.f32 %v2123, 0.0
      %v2643 = vmax.f32 %v2127, 0.0
      %v2644 = vmax.f32 %v2129, 0.0
      %v2645 = vmax.f32 %v2131, 0.0
      %v2646 = vmax.f32 %v2133, 0.0
      %v2647 = vmax.f32 %v2137, 0.0
      %v2648 = vmax.f32 %v2139, 0.0
      %v2649 = vmax.f32 %v2141, 0.0
      %v2650 = vmax.f32 %v2143, 0.0
      %v2651 = vmax.f32 %v2147, 0.0
      %v2652 = vmax.f32 %v2149, 0.0
      %v2653 = vmax.f32 %v2151, 0.0
      %v2654 = vmax.f32 %v2153, 0.0
      %v2655 = vmax.f32 %v2157, 0.0
      %v2656 = vmax.f32 %v2159, 0.0
      %v2657 = vmax.f32 %v2161, 0.0
      %v2658 = vmax.f32 %v2163, 0.0
      %v2659 = vmax.f32 %v2167, 0.0
      %v2660 = vmax.f32 %v2169, 0.0
      %v2661 = vmax.f32 %v2171, 0.0
      %v2662 = vmax.f32 %v2173, 0.0
      %v2663 = vmax.f32 %v2177, 0.0
      %v2664 = vmax.f32 %v2179, 0.0
      %v2665 = vmax.f32 %v2181, 0.0
      %v2666 = vmax.f32 %v2183, 0.0
      %v2667 = vmax.f32 %v2187, 0.0
      %v2668 = vmax.f32 %v2189, 0.0
      %v2669 = vmax.f32 %v2191, 0.0
      %v2670 = vmax.f32 %v2193, 0.0
      %v2671 = vmax.f32 %v2197, 0.0
      %v2672 = vmax.f32 %v2199, 0.0
      %v2673 = vmax.f32 %v2201, 0.0
      %v2674 = vmax.f32 %v2203, 0.0
      %v2675 = vmax.f32 %v2207, 0.0
      %v2676 = vmax.f32 %v2209, 0.0
      %v2677 = vmax.f32 %v2211, 0.0
      %v2678 = vmax.f32 %v2213, 0.0
      %v2679 = vmax.f32 %v2217, 0.0
      %v2680 = vmax.f32 %v2219, 0.0
      %v2681 = vmax.f32 %v2221, 0.0
      %v2682 = vmax.f32 %v2223, 0.0
      %v2683 = vmax.f32 %v2227, 0.0
      %v2684 = vmax.f32 %v2229, 0.0
      %v2685 = vmax.f32 %v2231, 0.0
      %v2686 = vmax.f32 %v2233, 0.0
      %v2687 = vmax.f32 %v2237, 0.0
      %v2688 = vmax.f32 %v2239, 0.0
      %v2689 = vmax.f32 %v2241, 0.0
      %v2690 = vmax.f32 %v2243, 0.0
      %v2691 = vmax.f32 %v2247, 0.0
      %v2692 = vmax.f32 %v2249, 0.0
      %v2693 = vmax.f32 %v2251, 0.0
      %v2694 = vmax.f32 %v2253, 0.0
      %v2695 = vmax.f32 %v2257, 0.0
      %v2696 = vmax.f32 %v2259, 0.0
      %v2697 = vmax.f32 %v2261, 0.0
      %v2698 = vmax.f32 %v2263, 0.0
      %v2699 = vmax.f32 %v2267, 0.0
      %v2700 = vmax.f32 %v2269, 0.0
      %v2701 = vmax.f32 %v2271, 0.0
      %v2702 = vmax.f32 %v2273, 0.0
      %v2703 = vmax.f32 %v2277, 0.0
      %v2704 = vmax.f32 %v2279, 0.0
      %v2705 = vmax.f32 %v2281, 0.0
      %v2706 = vmax.f32 %v2283, 0.0
      %v2707 = vmax.f32 %v2287, 0.0
      %v2708 = vmax.f32 %v2289, 0.0
      %v2709 = vmax.f32 %v2291, 0.0
      %v2710 = vmax.f32 %v2293, 0.0
      %v2711 = vmax.f32 %v2297, 0.0
      %v2712 = vmax.f32 %v2299, 0.0
      %v2713 = vmax.f32 %v2301, 0.0
      %v2714 = vmax.f32 %v2303, 0.0
      %v2715 = vmax.f32 %v2307, 0.0
      %v2716 = vmax.f32 %v2309, 0.0
      %v2717 = vmax.f32 %v2311, 0.0
      %v2718 = vmax.f32 %v2313, 0.0
      %v2719 = vmax.f32 %v2317, 0.0
      %v2720 = vmax.f32 %v2319, 0.0
      %v2721 = vmax.f32 %v2321, 0.0
      %v2722 = vmax.f32 %v2323, 0.0
      %v2723 = vmax.f32 %v2327, 0.0
      %v2724 = vmax.f32 %v2329, 0.0
      %v2725 = vmax.f32 %v2331, 0.0
      %v2726 = vmax.f32 %v2333, 0.0
      %v2727 = vpack.c.bf16 %v2337, %v2335
      %v2728 = vpack.c.bf16 %v2338, %v2336
      %v2729 = vpack.c.bf16 %v2341, %v2339
      %v2730 = vpack.c.bf16 %v2342, %v2340
      %v2731 = vpack.c.bf16 %v2345, %v2343
      %v2732 = vpack.c.bf16 %v2346, %v2344
      %v2733 = vpack.c.bf16 %v2349, %v2347
      %v2734 = vpack.c.bf16 %v2350, %v2348
      %v2735 = vpack.c.bf16 %v2353, %v2351
      %v2736 = vpack.c.bf16 %v2354, %v2352
      %v2737 = vpack.c.bf16 %v2357, %v2355
      %v2738 = vpack.c.bf16 %v2358, %v2356
      %v2739 = vpack.c.bf16 %v2361, %v2359
      %v2740 = vpack.c.bf16 %v2362, %v2360
      %v2741 = vpack.c.bf16 %v2365, %v2363
      %v2742 = vpack.c.bf16 %v2366, %v2364
      %v2743 = vpack.c.bf16 %v2369, %v2367
      %v2744 = vpack.c.bf16 %v2370, %v2368
      %v2745 = vpack.c.bf16 %v2373, %v2371
      %v2746 = vpack.c.bf16 %v2374, %v2372
      %v2747 = vpack.c.bf16 %v2377, %v2375
      %v2748 = vpack.c.bf16 %v2378, %v2376
      %v2749 = vpack.c.bf16 %v2381, %v2379
      %v2750 = vpack.c.bf16 %v2382, %v2380
      %v2751 = vpack.c.bf16 %v2385, %v2383
      %v2752 = vpack.c.bf16 %v2386, %v2384
      %v2753 = vpack.c.bf16 %v2389, %v2387
      %v2754 = vpack.c.bf16 %v2390, %v2388
      %v2755 = vpack.c.bf16 %v2393, %v2391
      %v2756 = vpack.c.bf16 %v2394, %v2392
      %v2757 = vpack.c.bf16 %v2397, %v2395
      %v2758 = vpack.c.bf16 %v2398, %v2396
      %v2759 = vpack.c.bf16 %v2401, %v2399
      %v2760 = vpack.c.bf16 %v2402, %v2400
      %v2761 = vpack.c.bf16 %v2405, %v2403
      %v2762 = vpack.c.bf16 %v2406, %v2404
      %v2763 = vpack.c.bf16 %v2409, %v2407
      %v2764 = vpack.c.bf16 %v2410, %v2408
      %v2765 = vpack.c.bf16 %v2413, %v2411
      %v2766 = vpack.c.bf16 %v2414, %v2412
      %v2767 = vpack.c.bf16 %v2417, %v2415
      %v2768 = vpack.c.bf16 %v2418, %v2416
      %v2769 = vpack.c.bf16 %v2421, %v2419
      %v2770 = vpack.c.bf16 %v2422, %v2420
      %v2771 = vpack.c.bf16 %v2425, %v2423
      %v2772 = vpack.c.bf16 %v2426, %v2424
      %v2773 = vpack.c.bf16 %v2429, %v2427
      %v2774 = vpack.c.bf16 %v2430, %v2428
      %v2775 = vpack.c.bf16 %v2433, %v2431
      %v2776 = vpack.c.bf16 %v2434, %v2432
      %v2777 = vpack.c.bf16 %v2437, %v2435
      %v2778 = vpack.c.bf16 %v2438, %v2436
      %v2779 = vpack.c.bf16 %v2441, %v2439
      %v2780 = vpack.c.bf16 %v2442, %v2440
      %v2781 = vpack.c.bf16 %v2445, %v2443
      %v2782 = vpack.c.bf16 %v2446, %v2444
      %v2783 = vpack.c.bf16 %v2449, %v2447
      %v2784 = vpack.c.bf16 %v2450, %v2448
      %v2785 = vpack.c.bf16 %v2453, %v2451
      %v2786 = vpack.c.bf16 %v2454, %v2452
      %v2787 = vpack.c.bf16 %v2457, %v2455
      %v2788 = vpack.c.bf16 %v2458, %v2456
      %v2789 = vpack.c.bf16 %v2461, %v2459
      %v2790 = vpack.c.bf16 %v2462, %v2460
      %v2791 = vpack.c.bf16 %v2465, %v2463
      %v2792 = vpack.c.bf16 %v2466, %v2464
      %v2793 = vpack.c.bf16 %v2469, %v2467
      %v2794 = vpack.c.bf16 %v2470, %v2468
      %v2795 = vpack.c.bf16 %v2473, %v2471
      %v2796 = vpack.c.bf16 %v2474, %v2472
      %v2797 = vpack.c.bf16 %v2477, %v2475
      %v2798 = vpack.c.bf16 %v2478, %v2476
      %v2799 = vpack.c.bf16 %v2481, %v2479
      %v2800 = vpack.c.bf16 %v2482, %v2480
      %v2801 = vpack.c.bf16 %v2485, %v2483
      %v2802 = vpack.c.bf16 %v2486, %v2484
      %v2803 = vpack.c.bf16 %v2489, %v2487
      %v2804 = vpack.c.bf16 %v2490, %v2488
      %v2805 = vpack.c.bf16 %v2493, %v2491
      %v2806 = vpack.c.bf16 %v2494, %v2492
      %v2807 = vpack.c.bf16 %v2497, %v2495
      %v2808 = vpack.c.bf16 %v2498, %v2496
      %v2809 = vpack.c.bf16 %v2501, %v2499
      %v2810 = vpack.c.bf16 %v2502, %v2500
      %v2811 = vpack.c.bf16 %v2505, %v2503
      %v2812 = vpack.c.bf16 %v2506, %v2504
      %v2813 = vpack.c.bf16 %v2509, %v2507
      %v2814 = vpack.c.bf16 %v2510, %v2508
      %v2815 = vpack.c.bf16 %v2513, %v2511
      %v2816 = vpack.c.bf16 %v2514, %v2512
      %v2817 = vpack.c.bf16 %v2517, %v2515
      %v2818 = vpack.c.bf16 %v2518, %v2516
      %v2819 = vpack.c.bf16 %v2521, %v2519
      %v2820 = vpack.c.bf16 %v2522, %v2520
      %v2821 = vpack.c.bf16 %v2525, %v2523
      %v2822 = vpack.c.bf16 %v2526, %v2524
      %v2823 = vpack.c.bf16 %v2529, %v2527
      %v2824 = vpack.c.bf16 %v2530, %v2528
      %v2825 = vpack.c.bf16 %v2533, %v2531
      %v2826 = vpack.c.bf16 %v2534, %v2532
      %v2827 = vpack.c.bf16 %v2537, %v2535
      %v2828 = vpack.c.bf16 %v2538, %v2536
      %v2829 = vpack.c.bf16 %v2541, %v2539
      %v2830 = vpack.c.bf16 %v2542, %v2540
      %v2831 = vpack.c.bf16 %v2545, %v2543
      %v2832 = vpack.c.bf16 %v2546, %v2544
      %v2833 = vpack.c.bf16 %v2549, %v2547
      %v2834 = vpack.c.bf16 %v2550, %v2548
      %v2835 = vpack.c.bf16 %v2553, %v2551
      %v2836 = vpack.c.bf16 %v2554, %v2552
      %v2837 = vpack.c.bf16 %v2557, %v2555
      %v2838 = vpack.c.bf16 %v2558, %v2556
      %v2839 = vpack.c.bf16 %v2561, %v2559
      %v2840 = vpack.c.bf16 %v2562, %v2560
      %v2841 = vpack.c.bf16 %v2565, %v2563
      %v2842 = vpack.c.bf16 %v2566, %v2564
      %v2843 = vpack.c.bf16 %v2569, %v2567
      %v2844 = vpack.c.bf16 %v2570, %v2568
      %v2845 = vpack.c.bf16 %v2573, %v2571
      %v2846 = vpack.c.bf16 %v2574, %v2572
      %v2847 = vpack.c.bf16 %v2577, %v2575
      %v2848 = vpack.c.bf16 %v2578, %v2576
      %v2849 = vpack.c.bf16 %v2581, %v2579
      %v2850 = vpack.c.bf16 %v2582, %v2580
      %v2851 = vpack.c.bf16 %v2585, %v2583
      %v2852 = vpack.c.bf16 %v2586, %v2584
      %v2853 = vpack.c.bf16 %v2589, %v2587
      %v2854 = vpack.c.bf16 %v2590, %v2588
      %v2855 = vpack.c.bf16 %v2593, %v2591
      %v2856 = vpack.c.bf16 %v2594, %v2592
      %v2857 = vpack.c.bf16 %v2597, %v2595
      %v2858 = vpack.c.bf16 %v2598, %v2596
      %v2859 = vpack.c.bf16 %v2601, %v2599
      %v2860 = vpack.c.bf16 %v2602, %v2600
      %v2861 = vpack.c.bf16 %v2605, %v2603
      %v2862 = vpack.c.bf16 %v2606, %v2604
      %v2863 = vpack.c.bf16 %v2609, %v2607
      %v2864 = vpack.c.bf16 %v2610, %v2608
      %v2865 = vpack.c.bf16 %v2613, %v2611
      %v2866 = vpack.c.bf16 %v2614, %v2612
      %v2867 = vpack.c.bf16 %v2617, %v2615
      %v2868 = vpack.c.bf16 %v2618, %v2616
      %v2869 = vpack.c.bf16 %v2621, %v2619
      %v2870 = vpack.c.bf16 %v2622, %v2620
      %v2871 = vpack.c.bf16 %v2625, %v2623
      %v2872 = vpack.c.bf16 %v2626, %v2624
      %v2873 = vpack.c.bf16 %v2629, %v2627
      %v2874 = vpack.c.bf16 %v2630, %v2628
      %v2875 = vpack.c.bf16 %v2633, %v2631
      %v2876 = vpack.c.bf16 %v2634, %v2632
      %v2877 = vpack.c.bf16 %v2637, %v2635
      %v2878 = vpack.c.bf16 %v2638, %v2636
      %v2879 = vpack.c.bf16 %v2641, %v2639
      %v2880 = vpack.c.bf16 %v2642, %v2640
      %v2881 = vpack.c.bf16 %v2645, %v2643
      %v2882 = vpack.c.bf16 %v2646, %v2644
      %v2883 = vpack.c.bf16 %v2649, %v2647
      %v2884 = vpack.c.bf16 %v2650, %v2648
      %v2885 = vpack.c.bf16 %v2653, %v2651
      %v2886 = vpack.c.bf16 %v2654, %v2652
      %v2887 = vpack.c.bf16 %v2657, %v2655
      %v2888 = vpack.c.bf16 %v2658, %v2656
      %v2889 = vpack.c.bf16 %v2661, %v2659
      %v2890 = vpack.c.bf16 %v2662, %v2660
      %v2891 = vpack.c.bf16 %v2665, %v2663
      %v2892 = vpack.c.bf16 %v2666, %v2664
      %v2893 = vpack.c.bf16 %v2669, %v2667
      %v2894 = vpack.c.bf16 %v2670, %v2668
      %v2895 = vpack.c.bf16 %v2673, %v2671
      %v2896 = vpack.c.bf16 %v2674, %v2672
      %v2897 = vpack.c.bf16 %v2677, %v2675
      %v2898 = vpack.c.bf16 %v2678, %v2676
      %v2899 = vpack.c.bf16 %v2681, %v2679
      %v2900 = vpack.c.bf16 %v2682, %v2680
      %v2901 = vpack.c.bf16 %v2685, %v2683
      %v2902 = vpack.c.bf16 %v2686, %v2684
      %v2903 = vpack.c.bf16 %v2689, %v2687
      %v2904 = vpack.c.bf16 %v2690, %v2688
      %v2905 = vpack.c.bf16 %v2693, %v2691
      %v2906 = vpack.c.bf16 %v2694, %v2692
      %v2907 = vpack.c.bf16 %v2697, %v2695
      %v2908 = vpack.c.bf16 %v2698, %v2696
      %v2909 = vpack.c.bf16 %v2701, %v2699
      %v2910 = vpack.c.bf16 %v2702, %v2700
      %v2911 = vpack.c.bf16 %v2705, %v2703
      %v2912 = vpack.c.bf16 %v2706, %v2704
      %v2913 = vpack.c.bf16 %v2709, %v2707
      %v2914 = vpack.c.bf16 %v2710, %v2708
      %v2915 = vpack.c.bf16 %v2713, %v2711
      %v2916 = vpack.c.bf16 %v2714, %v2712
      %v2917 = vpack.c.bf16 %v2717, %v2715
      %v2918 = vpack.c.bf16 %v2718, %v2716
      %v2919 = vpack.c.bf16 %v2721, %v2719
      %v2920 = vpack.c.bf16 %v2722, %v2720
      %v2921 = vpack.c.bf16 %v2725, %v2723
      %v2922 = vpack.c.bf16 %v2726, %v2724
      %v2923 = vld [vmem:[%s3] sm:$0xff]
      %v2924 = vld [vmem:[%s3 + $0x8] sm:$0xff]
      %v2925 = vld [vmem:[%s3 + $0x10] sm:$0xff]
      %v2926 = vld [vmem:[%s3 + $0x18] sm:$0xff]
      %v2927 = vld [vmem:[%s3 + $0x20] sm:$0xff]
      %v2928 = vld [vmem:[%s3 + $0x28] sm:$0xff]
      %v2929 = vld [vmem:[%s3 + $0x30] sm:$0xff]
      %v2930 = vld [vmem:[%s3 + $0x38] sm:$0xff]
      %v2931 = vld [vmem:[%s3 + $0x40] sm:$0xff]
      %v2932 = vld [vmem:[%s3 + $0x48] sm:$0xff]
      %v2933 = vld [vmem:[%s3 + $0x50] sm:$0xff]
      %v2934 = vld [vmem:[%s3 + $0x58] sm:$0xff]
      %v2935 = vld [vmem:[%s3 + $0x60] sm:$0xff]
      %v2936 = vld [vmem:[%s3 + $0x68] sm:$0xff]
      %v2937 = vld [vmem:[%s3 + $0x70] sm:$0xff]
      %v2938 = vld [vmem:[%s3 + $0x78] sm:$0xff]
      %v2939 = vld [vmem:[%s3 + $0x80] sm:$0xff]
      %v2940 = vld [vmem:[%s3 + $0x88] sm:$0xff]
      %v2941 = vld [vmem:[%s3 + $0x90] sm:$0xff]
      %v2942 = vld [vmem:[%s3 + $0x98] sm:$0xff]
      %v2943 = vld [vmem:[%s3 + $0xa0] sm:$0xff]
      %v2944 = vld [vmem:[%s3 + $0xa8] sm:$0xff]
      %v2945 = vld [vmem:[%s3 + $0xb0] sm:$0xff]
      %v2946 = vld [vmem:[%s3 + $0xb8] sm:$0xff]
      %v2947 = vld [vmem:[%s3 + $0xc0] sm:$0xff]
      %v2948 = vld [vmem:[%s3 + $0xc8] sm:$0xff]
      %v2949 = vld [vmem:[%s3 + $0xd0] sm:$0xff]
      %v2950 = vld [vmem:[%s3 + $0xd8] sm:$0xff]
      %v2951 = vld [vmem:[%s3 + $0xe0] sm:$0xff]
      %v2952 = vld [vmem:[%s3 + $0xe8] sm:$0xff]
      %v2953 = vld [vmem:[%s3 + $0xf0] sm:$0xff]
      %v2954 = vld [vmem:[%s3 + $0xf8] sm:$0xff]
      %v2955 = vld [vmem:[%s3 + $0x100] sm:$0xff]
      %v2956 = vld [vmem:[%s3 + $0x108] sm:$0xff]
      %v2957 = vld [vmem:[%s3 + $0x110] sm:$0xff]
      %v2958 = vld [vmem:[%s3 + $0x118] sm:$0xff]
      %v2959 = vld [vmem:[%s3 + $0x120] sm:$0xff]
      %v2960 = vld [vmem:[%s3 + $0x128] sm:$0xff]
      %v2961 = vld [vmem:[%s3 + $0x130] sm:$0xff]
      %v2962 = vld [vmem:[%s3 + $0x138] sm:$0xff]
      %v2963 = vld [vmem:[%s3 + $0x140] sm:$0xff]
      %v2964 = vld [vmem:[%s3 + $0x148] sm:$0xff]
      %v2965 = vld [vmem:[%s3 + $0x150] sm:$0xff]
      %v2966 = vld [vmem:[%s3 + $0x158] sm:$0xff]
      %v2967 = vld [vmem:[%s3 + $0x160] sm:$0xff]
      %v2968 = vld [vmem:[%s3 + $0x168] sm:$0xff]
      %v2969 = vld [vmem:[%s3 + $0x170] sm:$0xff]
      %v2970 = vld [vmem:[%s3 + $0x178] sm:$0xff]
      %v2971 = vld [vmem:[%s3 + $0x180] sm:$0xff]
      %v2972 = vld [vmem:[%s3 + $0x188] sm:$0xff]
      %v2973 = vld [vmem:[%s3 + $0x190] sm:$0xff]
      %v2974 = vld [vmem:[%s3 + $0x198] sm:$0xff]
      %v2975 = vld [vmem:[%s3 + $0x1a0] sm:$0xff]
      %v2976 = vld [vmem:[%s3 + $0x1a8] sm:$0xff]
      %v2977 = vld [vmem:[%s3 + $0x1b0] sm:$0xff]
      %v2978 = vld [vmem:[%s3 + $0x1b8] sm:$0xff]
      %v2979 = vld [vmem:[%s3 + $0x1c0] sm:$0xff]
      %v2980 = vld [vmem:[%s3 + $0x1c8] sm:$0xff]
      %v2981 = vld [vmem:[%s3 + $0x1d0] sm:$0xff]
      %v2982 = vld [vmem:[%s3 + $0x1d8] sm:$0xff]
      %v2983 = vld [vmem:[%s3 + $0x1e0] sm:$0xff]
      %v2984 = vld [vmem:[%s3 + $0x1e8] sm:$0xff]
      %v2985 = vld [vmem:[%s3 + $0x1f0] sm:$0xff]
      %v2986 = vld [vmem:[%s3 + $0x1f8] sm:$0xff]
      %v2987 = vld [vmem:[%s4] sm:$0xf]
      %v2989 = vlaneseq
      %v2990 = vshrl.u32 %v2989, 7
      %v2991 = vsub.s32 0, %v2990
      %v2992 = vrot.slane %v2987, %v2991
      %v2993 = vlaneseq
      %v2994 = vshrl.u32 %v2993, 7
      %v2995 = vsub.s32 1, %v2994
      %v2996 = vrot.slane %v2987, %v2995
      %v2997 = vlaneseq
      %v2998 = vshrl.u32 %v2997, 7
      %v2999 = vsub.s32 2, %v2998
      %v3000 = vrot.slane %v2987, %v2999
      %v3001 = vlaneseq
      %v3002 = vshrl.u32 %v3001, 7
      %v3003 = vsub.s32 3, %v3002
      %v3004 = vrot.slane %v2987, %v3003
      %v3073 = vunpack.c.l.b16 %v2923
      %v3074 = vunpack.c.h.b16 %v2923
      %v3075 = vunpack.c.l.b16 %v2924
      %v3076 = vunpack.c.h.b16 %v2924
      %v3077 = vunpack.c.l.b16 %v2925
      %v3078 = vunpack.c.h.b16 %v2925
      %v3079 = vunpack.c.l.b16 %v2926
      %v3080 = vunpack.c.h.b16 %v2926
      %v3081 = vunpack.c.l.b16 %v2927
      %v3082 = vunpack.c.h.b16 %v2927
      %v3083 = vunpack.c.l.b16 %v2928
      %v3084 = vunpack.c.h.b16 %v2928
      %v3085 = vunpack.c.l.b16 %v2929
      %v3086 = vunpack.c.h.b16 %v2929
      %v3087 = vunpack.c.l.b16 %v2930
      %v3088 = vunpack.c.h.b16 %v2930
      %v3089 = vunpack.c.l.b16 %v2931
      %v3090 = vunpack.c.h.b16 %v2931
      %v3091 = vunpack.c.l.b16 %v2932
      %v3092 = vunpack.c.h.b16 %v2932
      %v3093 = vunpack.c.l.b16 %v2933
      %v3094 = vunpack.c.h.b16 %v2933
      %v3095 = vunpack.c.l.b16 %v2934
      %v3096 = vunpack.c.h.b16 %v2934
      %v3097 = vunpack.c.l.b16 %v2935
      %v3098 = vunpack.c.h.b16 %v2935
      %v3099 = vunpack.c.l.b16 %v2936
      %v3100 = vunpack.c.h.b16 %v2936
      %v3101 = vunpack.c.l.b16 %v2937
      %v3102 = vunpack.c.h.b16 %v2937
      %v3103 = vunpack.c.l.b16 %v2938
      %v3104 = vunpack.c.h.b16 %v2938
      %v3105 = vunpack.c.l.b16 %v2939
      %v3106 = vunpack.c.h.b16 %v2939
      %v3107 = vunpack.c.l.b16 %v2940
      %v3108 = vunpack.c.h.b16 %v2940
      %v3109 = vunpack.c.l.b16 %v2941
      %v3110 = vunpack.c.h.b16 %v2941
      %v3111 = vunpack.c.l.b16 %v2942
      %v3112 = vunpack.c.h.b16 %v2942
      %v3113 = vunpack.c.l.b16 %v2943
      %v3114 = vunpack.c.h.b16 %v2943
      %v3115 = vunpack.c.l.b16 %v2944
      %v3116 = vunpack.c.h.b16 %v2944
      %v3117 = vunpack.c.l.b16 %v2945
      %v3118 = vunpack.c.h.b16 %v2945
      %v3119 = vunpack.c.l.b16 %v2946
      %v3120 = vunpack.c.h.b16 %v2946
      %v3121 = vunpack.c.l.b16 %v2947
      %v3122 = vunpack.c.h.b16 %v2947
      %v3123 = vunpack.c.l.b16 %v2948
      %v3124 = vunpack.c.h.b16 %v2948
      %v3125 = vunpack.c.l.b16 %v2949
      %v3126 = vunpack.c.h.b16 %v2949
      %v3127 = vunpack.c.l.b16 %v2950
      %v3128 = vunpack.c.h.b16 %v2950
      %v3129 = vunpack.c.l.b16 %v2951
      %v3130 = vunpack.c.h.b16 %v2951
      %v3131 = vunpack.c.l.b16 %v2952
      %v3132 = vunpack.c.h.b16 %v2952
      %v3133 = vunpack.c.l.b16 %v2953
      %v3134 = vunpack.c.h.b16 %v2953
      %v3135 = vunpack.c.l.b16 %v2954
      %v3136 = vunpack.c.h.b16 %v2954
      %v3137 = vunpack.c.l.b16 %v2955
      %v3138 = vunpack.c.h.b16 %v2955
      %v3139 = vunpack.c.l.b16 %v2956
      %v3140 = vunpack.c.h.b16 %v2956
      %v3141 = vunpack.c.l.b16 %v2957
      %v3142 = vunpack.c.h.b16 %v2957
      %v3143 = vunpack.c.l.b16 %v2958
      %v3144 = vunpack.c.h.b16 %v2958
      %v3145 = vunpack.c.l.b16 %v2959
      %v3146 = vunpack.c.h.b16 %v2959
      %v3147 = vunpack.c.l.b16 %v2960
      %v3148 = vunpack.c.h.b16 %v2960
      %v3149 = vunpack.c.l.b16 %v2961
      %v3150 = vunpack.c.h.b16 %v2961
      %v3151 = vunpack.c.l.b16 %v2962
      %v3152 = vunpack.c.h.b16 %v2962
      %v3153 = vunpack.c.l.b16 %v2963
      %v3154 = vunpack.c.h.b16 %v2963
      %v3155 = vunpack.c.l.b16 %v2964
      %v3156 = vunpack.c.h.b16 %v2964
      %v3157 = vunpack.c.l.b16 %v2965
      %v3158 = vunpack.c.h.b16 %v2965
      %v3159 = vunpack.c.l.b16 %v2966
      %v3160 = vunpack.c.h.b16 %v2966
      %v3161 = vunpack.c.l.b16 %v2967
      %v3162 = vunpack.c.h.b16 %v2967
      %v3163 = vunpack.c.l.b16 %v2968
      %v3164 = vunpack.c.h.b16 %v2968
      %v3165 = vunpack.c.l.b16 %v2969
      %v3166 = vunpack.c.h.b16 %v2969
      %v3167 = vunpack.c.l.b16 %v2970
      %v3168 = vunpack.c.h.b16 %v2970
      %v3169 = vunpack.c.l.b16 %v2971
      %v3170 = vunpack.c.h.b16 %v2971
      %v3171 = vunpack.c.l.b16 %v2972
      %v3172 = vunpack.c.h.b16 %v2972
      %v3173 = vunpack.c.l.b16 %v2973
      %v3174 = vunpack.c.h.b16 %v2973
      %v3175 = vunpack.c.l.b16 %v2974
      %v3176 = vunpack.c.h.b16 %v2974
      %v3177 = vunpack.c.l.b16 %v2975
      %v3178 = vunpack.c.h.b16 %v2975
      %v3179 = vunpack.c.l.b16 %v2976
      %v3180 = vunpack.c.h.b16 %v2976
      %v3181 = vunpack.c.l.b16 %v2977
      %v3182 = vunpack.c.h.b16 %v2977
      %v3183 = vunpack.c.l.b16 %v2978
      %v3184 = vunpack.c.h.b16 %v2978
      %v3185 = vunpack.c.l.b16 %v2979
      %v3186 = vunpack.c.h.b16 %v2979
      %v3187 = vunpack.c.l.b16 %v2980
      %v3188 = vunpack.c.h.b16 %v2980
      %v3189 = vunpack.c.l.b16 %v2981
      %v3190 = vunpack.c.h.b16 %v2981
      %v3191 = vunpack.c.l.b16 %v2982
      %v3192 = vunpack.c.h.b16 %v2982
      %v3193 = vunpack.c.l.b16 %v2983
      %v3194 = vunpack.c.h.b16 %v2983
      %v3195 = vunpack.c.l.b16 %v2984
      %v3196 = vunpack.c.h.b16 %v2984
      %v3197 = vunpack.c.l.b16 %v2985
      %v3198 = vunpack.c.h.b16 %v2985
      %v3199 = vunpack.c.l.b16 %v2986
      %v3200 = vunpack.c.h.b16 %v2986
      %v3201 = vpack.c.b16 %v3077, %v3073
      %v3202 = vpack.c.b16 %v3078, %v3074
      %v3203 = vpack.c.b16 %v3079, %v3075
      %v3204 = vpack.c.b16 %v3080, %v3076
      %v3205 = vpack.c.b16 %v3085, %v3081
      %v3206 = vpack.c.b16 %v3086, %v3082
      %v3207 = vpack.c.b16 %v3087, %v3083
      %v3208 = vpack.c.b16 %v3088, %v3084
      %v3209 = vpack.c.b16 %v3093, %v3089
      %v3210 = vpack.c.b16 %v3094, %v3090
      %v3211 = vpack.c.b16 %v3095, %v3091
      %v3212 = vpack.c.b16 %v3096, %v3092
      %v3213 = vpack.c.b16 %v3101, %v3097
      %v3214 = vpack.c.b16 %v3102, %v3098
      %v3215 = vpack.c.b16 %v3103, %v3099
      %v3216 = vpack.c.b16 %v3104, %v3100
      %v3217 = vpack.c.b16 %v3109, %v3105
      %v3218 = vpack.c.b16 %v3110, %v3106
      %v3219 = vpack.c.b16 %v3111, %v3107
      %v3220 = vpack.c.b16 %v3112, %v3108
      %v3221 = vpack.c.b16 %v3117, %v3113
      %v3222 = vpack.c.b16 %v3118, %v3114
      %v3223 = vpack.c.b16 %v3119, %v3115
      %v3224 = vpack.c.b16 %v3120, %v3116
      %v3225 = vpack.c.b16 %v3125, %v3121
      %v3226 = vpack.c.b16 %v3126, %v3122
      %v3227 = vpack.c.b16 %v3127, %v3123
      %v3228 = vpack.c.b16 %v3128, %v3124
      %v3229 = vpack.c.b16 %v3133, %v3129
      %v3230 = vpack.c.b16 %v3134, %v3130
      %v3231 = vpack.c.b16 %v3135, %v3131
      %v3232 = vpack.c.b16 %v3136, %v3132
      %v3233 = vpack.c.b16 %v3141, %v3137
      %v3234 = vpack.c.b16 %v3142, %v3138
      %v3235 = vpack.c.b16 %v3143, %v3139
      %v3236 = vpack.c.b16 %v3144, %v3140
      %v3237 = vpack.c.b16 %v3149, %v3145
      %v3238 = vpack.c.b16 %v3150, %v3146
      %v3239 = vpack.c.b16 %v3151, %v3147
      %v3240 = vpack.c.b16 %v3152, %v3148
      %v3241 = vpack.c.b16 %v3157, %v3153
      %v3242 = vpack.c.b16 %v3158, %v3154
      %v3243 = vpack.c.b16 %v3159, %v3155
      %v3244 = vpack.c.b16 %v3160, %v3156
      %v3245 = vpack.c.b16 %v3165, %v3161
      %v3246 = vpack.c.b16 %v3166, %v3162
      %v3247 = vpack.c.b16 %v3167, %v3163
      %v3248 = vpack.c.b16 %v3168, %v3164
      %v3249 = vpack.c.b16 %v3173, %v3169
      %v3250 = vpack.c.b16 %v3174, %v3170
      %v3251 = vpack.c.b16 %v3175, %v3171
      %v3252 = vpack.c.b16 %v3176, %v3172
      %v3253 = vpack.c.b16 %v3181, %v3177
      %v3254 = vpack.c.b16 %v3182, %v3178
      %v3255 = vpack.c.b16 %v3183, %v3179
      %v3256 = vpack.c.b16 %v3184, %v3180
      %v3257 = vpack.c.b16 %v3189, %v3185
      %v3258 = vpack.c.b16 %v3190, %v3186
      %v3259 = vpack.c.b16 %v3191, %v3187
      %v3260 = vpack.c.b16 %v3192, %v3188
      %v3261 = vpack.c.b16 %v3197, %v3193
      %v3262 = vpack.c.b16 %v3198, %v3194
      %v3263 = vpack.c.b16 %v3199, %v3195
      %v3264 = vpack.c.b16 %v3200, %v3196
      %3329 = vmatprep.subr.bf16.mxu0 %v3202
      %3330 = vmatpush1.bf16.msra.mxu0 %v3201
      %3331 = vmatprep.subr.bf16.mxu0 %v3206
      %3332 = vmatpush1.bf16.msra.mxu0 %v3205
      %3333 = vmatprep.subr.bf16.mxu0 %v3210
      %3334 = vmatpush1.bf16.msra.mxu0 %v3209
      %3335 = vmatprep.subr.bf16.mxu0 %v3214
      %3336 = vmatpush1.bf16.msra.mxu0 %v3213
      %3337 = vmatprep.subr.bf16.mxu0 %v3218
      %3338 = vmatpush1.bf16.msra.mxu0 %v3217
      %3339 = vmatprep.subr.bf16.mxu0 %v3222
      %3340 = vmatpush1.bf16.msra.mxu0 %v3221
      %3341 = vmatprep.subr.bf16.mxu0 %v3226
      %3342 = vmatpush1.bf16.msra.mxu0 %v3225
      %3343 = vmatprep.subr.bf16.mxu0 %v3230
      %3344 = vmatpush1.bf16.msra.mxu0 %v3229
      %3345 = vmatprep.subr.bf16.mxu0 %v3234
      %3346 = vmatpush1.bf16.msra.mxu0 %v3233
      %3347 = vmatprep.subr.bf16.mxu0 %v3238
      %3348 = vmatpush1.bf16.msra.mxu0 %v3237
      %3349 = vmatprep.subr.bf16.mxu0 %v3242
      %3350 = vmatpush1.bf16.msra.mxu0 %v3241
      %3351 = vmatprep.subr.bf16.mxu0 %v3246
      %3352 = vmatpush1.bf16.msra.mxu0 %v3245
      %3353 = vmatprep.subr.bf16.mxu0 %v3250
      %3354 = vmatpush1.bf16.msra.mxu0 %v3249
      %3355 = vmatprep.subr.bf16.mxu0 %v3254
      %3356 = vmatpush1.bf16.msra.mxu0 %v3253
      %3357 = vmatprep.subr.bf16.mxu0 %v3258
      %3358 = vmatpush1.bf16.msra.mxu0 %v3257
      %3359 = vmatprep.subr.bf16.mxu0 %v3262
      %3360 = vmatpush1.bf16.msra.mxu0 %v3261
      %3361 = vmatprep.mubr.bf16.mxu0 %v2728
      %3362 = vmatmul.mubr.bf16.gmra.mrb[0].mxu0 %v2727
      %v3363 = vpop.f32.mrb[0].mxu0
      %v3364 = vadd.f32 %v2992, %v3363
      %v3365 = vpop.f32.mrb[0].mxu0
      %v3366 = vadd.f32 %v2996, %v3365
      %v3367 = vpop.f32.mrb[0].mxu0
      %v3368 = vadd.f32 %v2992, %v3367
      %v3369 = vpop.f32.mrb[0].mxu0
      %v3370 = vadd.f32 %v2996, %v3369
      %3371 = vmatprep.mubr.bf16.mxu0 %v2730
      %3372 = vmatmul.mubr.bf16.gmra.mrb[0].mxu0 %v2729
      %v3373 = vpop.f32.mrb[0].mxu0
      %v3374 = vadd.f32 %v2992, %v3373
      %v3375 = vpop.f32.mrb[0].mxu0
      %v3376 = vadd.f32 %v2996, %v3375
      %v3377 = vpop.f32.mrb[0].mxu0
      %v3378 = vadd.f32 %v2992, %v3377
      %v3379 = vpop.f32.mrb[0].mxu0
      %v3380 = vadd.f32 %v2996, %v3379
      %3381 = vmatprep.mubr.bf16.mxu0 %v2732
      %3382 = vmatmul.mubr.bf16.gmra.mrb[0].mxu0 %v2731
      %v3383 = vpop.f32.mrb[0].mxu0
      %v3384 = vadd.f32 %v2992, %v3383
      %v3385 = vpop.f32.mrb[0].mxu0
      %v3386 = vadd.f32 %v2996, %v3385
      %v3387 = vpop.f32.mrb[0].mxu0
      %v3388 = vadd.f32 %v2992, %v3387
      %v3389 = vpop.f32.mrb[0].mxu0
      %v3390 = vadd.f32 %v2996, %v3389
      %3391 = vmatprep.mubr.bf16.mxu0 %v2734
      %3392 = vmatmul.mubr.bf16.gmra.mrb[0].mxu0 %v2733
      %v3393 = vpop.f32.mrb[0].mxu0
      %v3394 = vadd.f32 %v2992, %v3393
      %v3395 = vpop.f32.mrb[0].mxu0
      %v3396 = vadd.f32 %v2996, %v3395
      %v3397 = vpop.f32.mrb[0].mxu0
      %v3398 = vadd.f32 %v2992, %v3397
      %v3399 = vpop.f32.mrb[0].mxu0
      %v3400 = vadd.f32 %v2996, %v3399
      %3401 = vmatprep.mubr.bf16.mxu0 %v2736
      %3402 = vmatmul.mubr.bf16.gmra.mrb[0].mxu0 %v2735
      %v3403 = vpop.f32.mrb[0].mxu0
      %v3404 = vadd.f32 %v2992, %v3403
      %v3405 = vpop.f32.mrb[0].mxu0
      %v3406 = vadd.f32 %v2996, %v3405
      %v3407 = vpop.f32.mrb[0].mxu0
      %v3408 = vadd.f32 %v2992, %v3407
      %v3409 = vpop.f32.mrb[0].mxu0
      %v3410 = vadd.f32 %v2996, %v3409
      %3411 = vmatprep.mubr.bf16.mxu0 %v2738
      %3412 = vmatmul.mubr.bf16.gmra.mrb[0].mxu0 %v2737
      %v3413 = vpop.f32.mrb[0].mxu0
      %v3414 = vadd.f32 %v2992, %v3413
      %v3415 = vpop.f32.mrb[0].mxu0
      %v3416 = vadd.f32 %v2996, %v3415
      %v3417 = vpop.f32.mrb[0].mxu0
      %v3418 = vadd.f32 %v2992, %v3417
      %v3419 = vpop.f32.mrb[0].mxu0
      %v3420 = vadd.f32 %v2996, %v3419
      %3421 = vmatprep.mubr.bf16.mxu0 %v2740
      %3422 = vmatmul.mubr.bf16.gmra.mrb[0].mxu0 %v2739
      %v3423 = vpop.f32.mrb[0].mxu0
      %v3424 = vadd.f32 %v2992, %v3423
      %v3425 = vpop.f32.mrb[0].mxu0
      %v3426 = vadd.f32 %v2996, %v3425
      %v3427 = vpop.f32.mrb[0].mxu0
      %v3428 = vadd.f32 %v2992, %v3427
      %v3429 = vpop.f32.mrb[0].mxu0
      %v3430 = vadd.f32 %v2996, %v3429
      %3431 = vmatprep.mubr.bf16.mxu0 %v2742
      %3432 = vmatmul.mubr.bf16.gmra.mrb[0].mxu0 %v2741
      %v3433 = vpop.f32.mrb[0].mxu0
      %v3434 = vadd.f32 %v2992, %v3433
      %v3435 = vpop.f32.mrb[0].mxu0
      %v3436 = vadd.f32 %v2996, %v3435
      %v3437 = vpop.f32.mrb[0].mxu0
      %v3438 = vadd.f32 %v2992, %v3437
      %v3439 = vpop.f32.mrb[0].mxu0
      %v3440 = vadd.f32 %v2996, %v3439
      %3441 = vmatprep.mubr.bf16.mxu0 %v2744
      %3442 = vmatmul.mubr.bf16.gmra.mrb[0].mxu0 %v2743
      %v3443 = vpop.f32.mrb[0].mxu0
      %v3444 = vadd.f32 %v2992, %v3443
      %v3445 = vpop.f32.mrb[0].mxu0
      %v3446 = vadd.f32 %v2996, %v3445
      %v3447 = vpop.f32.mrb[0].mxu0
      %v3448 = vadd.f32 %v2992, %v3447
      %v3449 = vpop.f32.mrb[0].mxu0
      %v3450 = vadd.f32 %v2996, %v3449
      %3451 = vmatprep.mubr.bf16.mxu0 %v2746
      %3452 = vmatmul.mubr.bf16.gmra.mrb[0].mxu0 %v2745
      %v3453 = vpop.f32.mrb[0].mxu0
      %v3454 = vadd.f32 %v2992, %v3453
      %v3455 = vpop.f32.mrb[0].mxu0
      %v3456 = vadd.f32 %v2996, %v3455
      %v3457 = vpop.f32.mrb[0].mxu0
      %v3458 = vadd.f32 %v2992, %v3457
      %v3459 = vpop.f32.mrb[0].mxu0
      %v3460 = vadd.f32 %v2996, %v3459
      %3461 = vmatprep.mubr.bf16.mxu0 %v2748
      %3462 = vmatmul.mubr.bf16.gmra.mrb[0].mxu0 %v2747
      %v3463 = vpop.f32.mrb[0].mxu0
      %v3464 = vadd.f32 %v2992, %v3463
      %v3465 = vpop.f32.mrb[0].mxu0
      %v3466 = vadd.f32 %v2996, %v3465
      %v3467 = vpop.f32.mrb[0].mxu0
      %v3468 = vadd.f32 %v2992, %v3467
      %v3469 = vpop.f32.mrb[0].mxu0
      %v3470 = vadd.f32 %v2996, %v3469
      %3471 = vmatprep.mubr.bf16.mxu0 %v2750
      %3472 = vmatmul.mubr.bf16.gmra.mrb[0].mxu0 %v2749
      %v3473 = vpop.f32.mrb[0].mxu0
      %v3474 = vadd.f32 %v2992, %v3473
      %v3475 = vpop.f32.mrb[0].mxu0
      %v3476 = vadd.f32 %v2996, %v3475
      %v3477 = vpop.f32.mrb[0].mxu0
      %v3478 = vadd.f32 %v2992, %v3477
      %v3479 = vpop.f32.mrb[0].mxu0
      %v3480 = vadd.f32 %v2996, %v3479
      %3481 = vmatprep.mubr.bf16.mxu0 %v2752
      %3482 = vmatmul.mubr.bf16.gmra.mrb[0].mxu0 %v2751
      %v3483 = vpop.f32.mrb[0].mxu0
      %v3484 = vadd.f32 %v2992, %v3483
      %v3485 = vpop.f32.mrb[0].mxu0
      %v3486 = vadd.f32 %v2996, %v3485
      %v3487 = vpop.f32.mrb[0].mxu0
      %v3488 = vadd.f32 %v2992, %v3487
      %v3489 = vpop.f32.mrb[0].mxu0
      %v3490 = vadd.f32 %v2996, %v3489
      %3491 = vmatprep.mubr.bf16.mxu0 %v2754
      %3492 = vmatmul.mubr.bf16.gmra.mrb[0].mxu0 %v2753
      %v3493 = vpop.f32.mrb[0].mxu0
      %v3494 = vadd.f32 %v2992, %v3493
      %v3495 = vpop.f32.mrb[0].mxu0
      %v3496 = vadd.f32 %v2996, %v3495
      %v3497 = vpop.f32.mrb[0].mxu0
      %v3498 = vadd.f32 %v2992, %v3497
      %v3499 = vpop.f32.mrb[0].mxu0
      %v3500 = vadd.f32 %v2996, %v3499
      %3501 = vmatprep.mubr.bf16.mxu0 %v2756
      %3502 = vmatmul.mubr.bf16.gmra.mrb[0].mxu0 %v2755
      %v3503 = vpop.f32.mrb[0].mxu0
      %v3504 = vadd.f32 %v2992, %v3503
      %v3505 = vpop.f32.mrb[0].mxu0
      %v3506 = vadd.f32 %v2996, %v3505
      %v3507 = vpop.f32.mrb[0].mxu0
      %v3508 = vadd.f32 %v2992, %v3507
      %v3509 = vpop.f32.mrb[0].mxu0
      %v3510 = vadd.f32 %v2996, %v3509
      %3511 = vmatprep.mubr.bf16.mxu0 %v2758
      %3512 = vmatmul.mubr.bf16.gmra.mrb[0].mxu0 %v2757
      %v3513 = vpop.f32.mrb[0].mxu0
      %v3514 = vadd.f32 %v2992, %v3513
      %v3515 = vpop.f32.mrb[0].mxu0
      %v3516 = vadd.f32 %v2996, %v3515
      %v3517 = vpop.f32.mrb[0].mxu0
      %v3518 = vadd.f32 %v2992, %v3517
      %v3519 = vpop.f32.mrb[0].mxu0
      %v3520 = vadd.f32 %v2996, %v3519
      %3521 = vmatprep.mubr.bf16.mxu0 %v2760
      %3522 = vmatmul.mubr.bf16.gmra.mrb[0].mxu0 %v2759
      %v3523 = vpop.f32.mrb[0].mxu0
      %v3524 = vadd.f32 %v2992, %v3523
      %v3525 = vpop.f32.mrb[0].mxu0
      %v3526 = vadd.f32 %v2996, %v3525
      %v3527 = vpop.f32.mrb[0].mxu0
      %v3528 = vadd.f32 %v2992, %v3527
      %v3529 = vpop.f32.mrb[0].mxu0
      %v3530 = vadd.f32 %v2996, %v3529
      %3531 = vmatprep.mubr.bf16.mxu0 %v2762
      %3532 = vmatmul.mubr.bf16.gmra.mrb[0].mxu0 %v2761
      %v3533 = vpop.f32.mrb[0].mxu0
      %v3534 = vadd.f32 %v2992, %v3533
      %v3535 = vpop.f32.mrb[0].mxu0
      %v3536 = vadd.f32 %v2996, %v3535
      %v3537 = vpop.f32.mrb[0].mxu0
      %v3538 = vadd.f32 %v2992, %v3537
      %v3539 = vpop.f32.mrb[0].mxu0
      %v3540 = vadd.f32 %v2996, %v3539
      %3541 = vmatprep.mubr.bf16.mxu0 %v2764
      %3542 = vmatmul.mubr.bf16.gmra.mrb[0].mxu0 %v2763
      %v3543 = vpop.f32.mrb[0].mxu0
      %v3544 = vadd.f32 %v2992, %v3543
      %v3545 = vpop.f32.mrb[0].mxu0
      %v3546 = vadd.f32 %v2996, %v3545
      %v3547 = vpop.f32.mrb[0].mxu0
      %v3548 = vadd.f32 %v2992, %v3547
      %v3549 = vpop.f32.mrb[0].mxu0
      %v3550 = vadd.f32 %v2996, %v3549
      %3551 = vmatprep.mubr.bf16.mxu0 %v2766
      %3552 = vmatmul.mubr.bf16.gmra.mrb[0].mxu0 %v2765
      %v3553 = vpop.f32.mrb[0].mxu0
      %v3554 = vadd.f32 %v2992, %v3553
      %v3555 = vpop.f32.mrb[0].mxu0
      %v3556 = vadd.f32 %v2996, %v3555
      %v3557 = vpop.f32.mrb[0].mxu0
      %v3558 = vadd.f32 %v2992, %v3557
      %v3559 = vpop.f32.mrb[0].mxu0
      %v3560 = vadd.f32 %v2996, %v3559
      %3561 = vmatprep.mubr.bf16.mxu0 %v2768
      %3562 = vmatmul.mubr.bf16.gmra.mrb[0].mxu0 %v2767
      %v3563 = vpop.f32.mrb[0].mxu0
      %v3564 = vadd.f32 %v2992, %v3563
      %v3565 = vpop.f32.mrb[0].mxu0
      %v3566 = vadd.f32 %v2996, %v3565
      %v3567 = vpop.f32.mrb[0].mxu0
      %v3568 = vadd.f32 %v2992, %v3567
      %v3569 = vpop.f32.mrb[0].mxu0
      %v3570 = vadd.f32 %v2996, %v3569
      %3571 = vmatprep.mubr.bf16.mxu0 %v2770
      %3572 = vmatmul.mubr.bf16.gmra.mrb[0].mxu0 %v2769
      %v3573 = vpop.f32.mrb[0].mxu0
      %v3574 = vadd.f32 %v2992, %v3573
      %v3575 = vpop.f32.mrb[0].mxu0
      %v3576 = vadd.f32 %v2996, %v3575
      %v3577 = vpop.f32.mrb[0].mxu0
      %v3578 = vadd.f32 %v2992, %v3577
      %v3579 = vpop.f32.mrb[0].mxu0
      %v3580 = vadd.f32 %v2996, %v3579
      %3581 = vmatprep.mubr.bf16.mxu0 %v2772
      %3582 = vmatmul.mubr.bf16.gmra.mrb[0].mxu0 %v2771
      %v3583 = vpop.f32.mrb[0].mxu0
      %v3584 = vadd.f32 %v2992, %v3583
      %v3585 = vpop.f32.mrb[0].mxu0
      %v3586 = vadd.f32 %v2996, %v3585
      %v3587 = vpop.f32.mrb[0].mxu0
      %v3588 = vadd.f32 %v2992, %v3587
      %v3589 = vpop.f32.mrb[0].mxu0
      %v3590 = vadd.f32 %v2996, %v3589
      %3591 = vmatprep.mubr.bf16.mxu0 %v2774
      %3592 = vmatmul.mubr.bf16.gmra.mrb[0].mxu0 %v2773
      %v3593 = vpop.f32.mrb[0].mxu0
      %v3594 = vadd.f32 %v2992, %v3593
      %v3595 = vpop.f32.mrb[0].mxu0
      %v3596 = vadd.f32 %v2996, %v3595
      %v3597 = vpop.f32.mrb[0].mxu0
      %v3598 = vadd.f32 %v2992, %v3597
      %v3599 = vpop.f32.mrb[0].mxu0
      %v3600 = vadd.f32 %v2996, %v3599
      %3601 = vmatprep.mubr.bf16.mxu0 %v2776
      %3602 = vmatmul.mubr.bf16.gmra.mrb[0].mxu0 %v2775
      %v3603 = vpop.f32.mrb[0].mxu0
      %v3604 = vadd.f32 %v2992, %v3603
      %v3605 = vpop.f32.mrb[0].mxu0
      %v3606 = vadd.f32 %v2996, %v3605
      %v3607 = vpop.f32.mrb[0].mxu0
      %v3608 = vadd.f32 %v2992, %v3607
      %v3609 = vpop.f32.mrb[0].mxu0
      %v3610 = vadd.f32 %v2996, %v3609
      %3611 = vmatprep.mubr.bf16.mxu0 %v2778
      %3612 = vmatmul.mubr.bf16.gmra.mrb[0].mxu0 %v2777
      %v3613 = vpop.f32.mrb[0].mxu0
      %v3614 = vadd.f32 %v2992, %v3613
      %v3615 = vpop.f32.mrb[0].mxu0
      %v3616 = vadd.f32 %v2996, %v3615
      %v3617 = vpop.f32.mrb[0].mxu0
      %v3618 = vadd.f32 %v2992, %v3617
      %v3619 = vpop.f32.mrb[0].mxu0
      %v3620 = vadd.f32 %v2996, %v3619
      %3621 = vmatprep.mubr.bf16.mxu0 %v2780
      %3622 = vmatmul.mubr.bf16.gmra.mrb[0].mxu0 %v2779
      %v3623 = vpop.f32.mrb[0].mxu0
      %v3624 = vadd.f32 %v2992, %v3623
      %v3625 = vpop.f32.mrb[0].mxu0
      %v3626 = vadd.f32 %v2996, %v3625
      %v3627 = vpop.f32.mrb[0].mxu0
      %v3628 = vadd.f32 %v2992, %v3627
      %v3629 = vpop.f32.mrb[0].mxu0
      %v3630 = vadd.f32 %v2996, %v3629
      %3631 = vmatprep.mubr.bf16.mxu0 %v2782
      %3632 = vmatmul.mubr.bf16.gmra.mrb[0].mxu0 %v2781
      %v3633 = vpop.f32.mrb[0].mxu0
      %v3634 = vadd.f32 %v2992, %v3633
      %v3635 = vpop.f32.mrb[0].mxu0
      %v3636 = vadd.f32 %v2996, %v3635
      %v3637 = vpop.f32.mrb[0].mxu0
      %v3638 = vadd.f32 %v2992, %v3637
      %v3639 = vpop.f32.mrb[0].mxu0
      %v3640 = vadd.f32 %v2996, %v3639
      %3641 = vmatprep.mubr.bf16.mxu0 %v2784
      %3642 = vmatmul.mubr.bf16.gmra.mrb[0].mxu0 %v2783
      %v3643 = vpop.f32.mrb[0].mxu0
      %v3644 = vadd.f32 %v2992, %v3643
      %v3645 = vpop.f32.mrb[0].mxu0
      %v3646 = vadd.f32 %v2996, %v3645
      %v3647 = vpop.f32.mrb[0].mxu0
      %v3648 = vadd.f32 %v2992, %v3647
      %v3649 = vpop.f32.mrb[0].mxu0
      %v3650 = vadd.f32 %v2996, %v3649
      %3651 = vmatprep.mubr.bf16.mxu0 %v2786
      %3652 = vmatmul.mubr.bf16.gmra.mrb[0].mxu0 %v2785
      %v3653 = vpop.f32.mrb[0].mxu0
      %v3654 = vadd.f32 %v2992, %v3653
      %v3655 = vpop.f32.mrb[0].mxu0
      %v3656 = vadd.f32 %v2996, %v3655
      %v3657 = vpop.f32.mrb[0].mxu0
      %v3658 = vadd.f32 %v2992, %v3657
      %v3659 = vpop.f32.mrb[0].mxu0
      %v3660 = vadd.f32 %v2996, %v3659
      %3661 = vmatprep.mubr.bf16.mxu0 %v2788
      %3662 = vmatmul.mubr.bf16.gmra.mrb[0].mxu0 %v2787
      %v3663 = vpop.f32.mrb[0].mxu0
      %v3664 = vadd.f32 %v2992, %v3663
      %v3665 = vpop.f32.mrb[0].mxu0
      %v3666 = vadd.f32 %v2996, %v3665
      %v3667 = vpop.f32.mrb[0].mxu0
      %v3668 = vadd.f32 %v2992, %v3667
      %v3669 = vpop.f32.mrb[0].mxu0
      %v3670 = vadd.f32 %v2996, %v3669
      %3671 = vmatprep.mubr.bf16.mxu0 %v2790
      %3672 = vmatmul.mubr.bf16.gmra.mrb[0].mxu0 %v2789
      %v3673 = vpop.f32.mrb[0].mxu0
      %v3674 = vadd.f32 %v2992, %v3673
      %v3675 = vpop.f32.mrb[0].mxu0
      %v3676 = vadd.f32 %v2996, %v3675
      %v3677 = vpop.f32.mrb[0].mxu0
      %v3678 = vadd.f32 %v2992, %v3677
      %v3679 = vpop.f32.mrb[0].mxu0
      %v3680 = vadd.f32 %v2996, %v3679
      %3681 = vmatprep.mubr.bf16.mxu0 %v2792
      %3682 = vmatmul.mubr.bf16.gmra.mrb[0].mxu0 %v2791
      %v3683 = vpop.f32.mrb[0].mxu0
      %v3684 = vadd.f32 %v2992, %v3683
      %v3685 = vpop.f32.mrb[0].mxu0
      %v3686 = vadd.f32 %v2996, %v3685
      %v3687 = vpop.f32.mrb[0].mxu0
      %v3688 = vadd.f32 %v2992, %v3687
      %v3689 = vpop.f32.mrb[0].mxu0
      %v3690 = vadd.f32 %v2996, %v3689
      %3691 = vmatprep.mubr.bf16.mxu0 %v2794
      %3692 = vmatmul.mubr.bf16.gmra.mrb[0].mxu0 %v2793
      %v3693 = vpop.f32.mrb[0].mxu0
      %v3694 = vadd.f32 %v2992, %v3693
      %v3695 = vpop.f32.mrb[0].mxu0
      %v3696 = vadd.f32 %v2996, %v3695
      %v3697 = vpop.f32.mrb[0].mxu0
      %v3698 = vadd.f32 %v2992, %v3697
      %v3699 = vpop.f32.mrb[0].mxu0
      %v3700 = vadd.f32 %v2996, %v3699
      %3701 = vmatprep.mubr.bf16.mxu0 %v2796
      %3702 = vmatmul.mubr.bf16.gmra.mrb[0].mxu0 %v2795
      %v3703 = vpop.f32.mrb[0].mxu0
      %v3704 = vadd.f32 %v2992, %v3703
      %v3705 = vpop.f32.mrb[0].mxu0
      %v3706 = vadd.f32 %v2996, %v3705
      %v3707 = vpop.f32.mrb[0].mxu0
      %v3708 = vadd.f32 %v2992, %v3707
      %v3709 = vpop.f32.mrb[0].mxu0
      %v3710 = vadd.f32 %v2996, %v3709
      %3711 = vmatprep.mubr.bf16.mxu0 %v2798
      %3712 = vmatmul.mubr.bf16.gmra.mrb[0].mxu0 %v2797
      %v3713 = vpop.f32.mrb[0].mxu0
      %v3714 = vadd.f32 %v2992, %v3713
      %v3715 = vpop.f32.mrb[0].mxu0
      %v3716 = vadd.f32 %v2996, %v3715
      %v3717 = vpop.f32.mrb[0].mxu0
      %v3718 = vadd.f32 %v2992, %v3717
      %v3719 = vpop.f32.mrb[0].mxu0
      %v3720 = vadd.f32 %v2996, %v3719
      %3721 = vmatprep.mubr.bf16.mxu0 %v2800
      %3722 = vmatmul.mubr.bf16.gmra.mrb[0].mxu0 %v2799
      %v3723 = vpop.f32.mrb[0].mxu0
      %v3724 = vadd.f32 %v2992, %v3723
      %v3725 = vpop.f32.mrb[0].mxu0
      %v3726 = vadd.f32 %v2996, %v3725
      %v3727 = vpop.f32.mrb[0].mxu0
      %v3728 = vadd.f32 %v2992, %v3727
      %v3729 = vpop.f32.mrb[0].mxu0
      %v3730 = vadd.f32 %v2996, %v3729
      %3731 = vmatprep.mubr.bf16.mxu0 %v2802
      %3732 = vmatmul.mubr.bf16.gmra.mrb[0].mxu0 %v2801
      %v3733 = vpop.f32.mrb[0].mxu0
      %v3734 = vadd.f32 %v2992, %v3733
      %v3735 = vpop.f32.mrb[0].mxu0
      %v3736 = vadd.f32 %v2996, %v3735
      %v3737 = vpop.f32.mrb[0].mxu0
      %v3738 = vadd.f32 %v2992, %v3737
      %v3739 = vpop.f32.mrb[0].mxu0
      %v3740 = vadd.f32 %v2996, %v3739
      %3741 = vmatprep.mubr.bf16.mxu0 %v2804
      %3742 = vmatmul.mubr.bf16.gmra.mrb[0].mxu0 %v2803
      %v3743 = vpop.f32.mrb[0].mxu0
      %v3744 = vadd.f32 %v2992, %v3743
      %v3745 = vpop.f32.mrb[0].mxu0
      %v3746 = vadd.f32 %v2996, %v3745
      %v3747 = vpop.f32.mrb[0].mxu0
      %v3748 = vadd.f32 %v2992, %v3747
      %v3749 = vpop.f32.mrb[0].mxu0
      %v3750 = vadd.f32 %v2996, %v3749
      %3751 = vmatprep.mubr.bf16.mxu0 %v2806
      %3752 = vmatmul.mubr.bf16.gmra.mrb[0].mxu0 %v2805
      %v3753 = vpop.f32.mrb[0].mxu0
      %v3754 = vadd.f32 %v2992, %v3753
      %v3755 = vpop.f32.mrb[0].mxu0
      %v3756 = vadd.f32 %v2996, %v3755
      %v3757 = vpop.f32.mrb[0].mxu0
      %v3758 = vadd.f32 %v2992, %v3757
      %v3759 = vpop.f32.mrb[0].mxu0
      %v3760 = vadd.f32 %v2996, %v3759
      %3761 = vmatprep.mubr.bf16.mxu0 %v2808
      %3762 = vmatmul.mubr.bf16.gmra.mrb[0].mxu0 %v2807
      %v3763 = vpop.f32.mrb[0].mxu0
      %v3764 = vadd.f32 %v2992, %v3763
      %v3765 = vpop.f32.mrb[0].mxu0
      %v3766 = vadd.f32 %v2996, %v3765
      %v3767 = vpop.f32.mrb[0].mxu0
      %v3768 = vadd.f32 %v2992, %v3767
      %v3769 = vpop.f32.mrb[0].mxu0
      %v3770 = vadd.f32 %v2996, %v3769
      %3771 = vmatprep.mubr.bf16.mxu0 %v2810
      %3772 = vmatmul.mubr.bf16.gmra.mrb[0].mxu0 %v2809
      %v3773 = vpop.f32.mrb[0].mxu0
      %v3774 = vadd.f32 %v2992, %v3773
      %v3775 = vpop.f32.mrb[0].mxu0
      %v3776 = vadd.f32 %v2996, %v3775
      %v3777 = vpop.f32.mrb[0].mxu0
      %v3778 = vadd.f32 %v2992, %v3777
      %v3779 = vpop.f32.mrb[0].mxu0
      %v3780 = vadd.f32 %v2996, %v3779
      %3781 = vmatprep.mubr.bf16.mxu0 %v2812
      %3782 = vmatmul.mubr.bf16.gmra.mrb[0].mxu0 %v2811
      %v3783 = vpop.f32.mrb[0].mxu0
      %v3784 = vadd.f32 %v2992, %v3783
      %v3785 = vpop.f32.mrb[0].mxu0
      %v3786 = vadd.f32 %v2996, %v3785
      %v3787 = vpop.f32.mrb[0].mxu0
      %v3788 = vadd.f32 %v2992, %v3787
      %v3789 = vpop.f32.mrb[0].mxu0
      %v3790 = vadd.f32 %v2996, %v3789
      %3791 = vmatprep.mubr.bf16.mxu0 %v2814
      %3792 = vmatmul.mubr.bf16.gmra.mrb[0].mxu0 %v2813
      %v3793 = vpop.f32.mrb[0].mxu0
      %v3794 = vadd.f32 %v2992, %v3793
      %v3795 = vpop.f32.mrb[0].mxu0
      %v3796 = vadd.f32 %v2996, %v3795
      %v3797 = vpop.f32.mrb[0].mxu0
      %v3798 = vadd.f32 %v2992, %v3797
      %v3799 = vpop.f32.mrb[0].mxu0
      %v3800 = vadd.f32 %v2996, %v3799
      %3801 = vmatprep.mubr.bf16.mxu0 %v2816
      %3802 = vmatmul.mubr.bf16.gmra.mrb[0].mxu0 %v2815
      %v3803 = vpop.f32.mrb[0].mxu0
      %v3804 = vadd.f32 %v2992, %v3803
      %v3805 = vpop.f32.mrb[0].mxu0
      %v3806 = vadd.f32 %v2996, %v3805
      %v3807 = vpop.f32.mrb[0].mxu0
      %v3808 = vadd.f32 %v2992, %v3807
      %v3809 = vpop.f32.mrb[0].mxu0
      %v3810 = vadd.f32 %v2996, %v3809
      %3811 = vmatprep.mubr.bf16.mxu0 %v2818
      %3812 = vmatmul.mubr.bf16.gmra.mrb[0].mxu0 %v2817
      %v3813 = vpop.f32.mrb[0].mxu0
      %v3814 = vadd.f32 %v2992, %v3813
      %v3815 = vpop.f32.mrb[0].mxu0
      %v3816 = vadd.f32 %v2996, %v3815
      %v3817 = vpop.f32.mrb[0].mxu0
      %v3818 = vadd.f32 %v2992, %v3817
      %v3819 = vpop.f32.mrb[0].mxu0
      %v3820 = vadd.f32 %v2996, %v3819
      %3821 = vmatprep.mubr.bf16.mxu0 %v2820
      %3822 = vmatmul.mubr.bf16.gmra.mrb[0].mxu0 %v2819
      %v3823 = vpop.f32.mrb[0].mxu0
      %v3824 = vadd.f32 %v2992, %v3823
      %v3825 = vpop.f32.mrb[0].mxu0
      %v3826 = vadd.f32 %v2996, %v3825
      %v3827 = vpop.f32.mrb[0].mxu0
      %v3828 = vadd.f32 %v2992, %v3827
      %v3829 = vpop.f32.mrb[0].mxu0
      %v3830 = vadd.f32 %v2996, %v3829
      %3831 = vmatprep.mubr.bf16.mxu0 %v2822
      %3832 = vmatmul.mubr.bf16.gmra.mrb[0].mxu0 %v2821
      %v3833 = vpop.f32.mrb[0].mxu0
      %v3834 = vadd.f32 %v2992, %v3833
      %v3835 = vpop.f32.mrb[0].mxu0
      %v3836 = vadd.f32 %v2996, %v3835
      %v3837 = vpop.f32.mrb[0].mxu0
      %v3838 = vadd.f32 %v2992, %v3837
      %v3839 = vpop.f32.mrb[0].mxu0
      %v3840 = vadd.f32 %v2996, %v3839
      %3841 = vmatprep.mubr.bf16.mxu0 %v2824
      %3842 = vmatmul.mubr.bf16.gmra.mrb[0].mxu0 %v2823
      %v3843 = vpop.f32.mrb[0].mxu0
      %v3844 = vadd.f32 %v2992, %v3843
      %v3845 = vpop.f32.mrb[0].mxu0
      %v3846 = vadd.f32 %v2996, %v3845
      %v3847 = vpop.f32.mrb[0].mxu0
      %v3848 = vadd.f32 %v2992, %v3847
      %v3849 = vpop.f32.mrb[0].mxu0
      %v3850 = vadd.f32 %v2996, %v3849
      %3851 = vmatprep.mubr.bf16.mxu0 %v2826
      %3852 = vmatmul.mubr.bf16.gmra.mrb[0].mxu0 %v2825
      %v3853 = vpop.f32.mrb[0].mxu0
      %v3854 = vadd.f32 %v2992, %v3853
      %v3855 = vpop.f32.mrb[0].mxu0
      %v3856 = vadd.f32 %v2996, %v3855
      %v3857 = vpop.f32.mrb[0].mxu0
      %v3858 = vadd.f32 %v2992, %v3857
      %v3859 = vpop.f32.mrb[0].mxu0
      %v3860 = vadd.f32 %v2996, %v3859
      %3861 = vmatprep.mubr.bf16.mxu0 %v2828
      %3862 = vmatmul.mubr.bf16.gmra.mrb[0].mxu0 %v2827
      %v3863 = vpop.f32.mrb[0].mxu0
      %v3864 = vadd.f32 %v2992, %v3863
      %v3865 = vpop.f32.mrb[0].mxu0
      %v3866 = vadd.f32 %v2996, %v3865
      %v3867 = vpop.f32.mrb[0].mxu0
      %v3868 = vadd.f32 %v2992, %v3867
      %v3869 = vpop.f32.mrb[0].mxu0
      %v3870 = vadd.f32 %v2996, %v3869
      %3871 = vmatprep.mubr.bf16.mxu0 %v2830
      %3872 = vmatmul.mubr.bf16.gmra.mrb[0].mxu0 %v2829
      %v3873 = vpop.f32.mrb[0].mxu0
      %v3874 = vadd.f32 %v2992, %v3873
      %v3875 = vpop.f32.mrb[0].mxu0
      %v3876 = vadd.f32 %v2996, %v3875
      %v3877 = vpop.f32.mrb[0].mxu0
      %v3878 = vadd.f32 %v2992, %v3877
      %v3879 = vpop.f32.mrb[0].mxu0
      %v3880 = vadd.f32 %v2996, %v3879
      %3881 = vmatprep.mubr.bf16.mxu0 %v2832
      %3882 = vmatmul.mubr.bf16.gmra.mrb[0].mxu0 %v2831
      %v3883 = vpop.f32.mrb[0].mxu0
      %v3884 = vadd.f32 %v2992, %v3883
      %v3885 = vpop.f32.mrb[0].mxu0
      %v3886 = vadd.f32 %v2996, %v3885
      %v3887 = vpop.f32.mrb[0].mxu0
      %v3888 = vadd.f32 %v2992, %v3887
      %v3889 = vpop.f32.mrb[0].mxu0
      %v3890 = vadd.f32 %v2996, %v3889
      %3891 = vmatprep.mubr.bf16.mxu0 %v2834
      %3892 = vmatmul.mubr.bf16.gmra.mrb[0].mxu0 %v2833
      %v3893 = vpop.f32.mrb[0].mxu0
      %v3894 = vadd.f32 %v2992, %v3893
      %v3895 = vpop.f32.mrb[0].mxu0
      %v3896 = vadd.f32 %v2996, %v3895
      %v3897 = vpop.f32.mrb[0].mxu0
      %v3898 = vadd.f32 %v2992, %v3897
      %v3899 = vpop.f32.mrb[0].mxu0
      %v3900 = vadd.f32 %v2996, %v3899
      %3901 = vmatprep.mubr.bf16.mxu0 %v2836
      %3902 = vmatmul.mubr.bf16.gmra.mrb[0].mxu0 %v2835
      %v3903 = vpop.f32.mrb[0].mxu0
      %v3904 = vadd.f32 %v2992, %v3903
      %v3905 = vpop.f32.mrb[0].mxu0
      %v3906 = vadd.f32 %v2996, %v3905
      %v3907 = vpop.f32.mrb[0].mxu0
      %v3908 = vadd.f32 %v2992, %v3907
      %v3909 = vpop.f32.mrb[0].mxu0
      %v3910 = vadd.f32 %v2996, %v3909
      %3911 = vmatprep.mubr.bf16.mxu0 %v2838
      %3912 = vmatmul.mubr.bf16.gmra.mrb[0].mxu0 %v2837
      %v3913 = vpop.f32.mrb[0].mxu0
      %v3914 = vadd.f32 %v2992, %v3913
      %v3915 = vpop.f32.mrb[0].mxu0
      %v3916 = vadd.f32 %v2996, %v3915
      %v3917 = vpop.f32.mrb[0].mxu0
      %v3918 = vadd.f32 %v2992, %v3917
      %v3919 = vpop.f32.mrb[0].mxu0
      %v3920 = vadd.f32 %v2996, %v3919
      %3921 = vmatprep.mubr.bf16.mxu0 %v2840
      %3922 = vmatmul.mubr.bf16.gmra.mrb[0].mxu0 %v2839
      %v3923 = vpop.f32.mrb[0].mxu0
      %v3924 = vadd.f32 %v2992, %v3923
      %v3925 = vpop.f32.mrb[0].mxu0
      %v3926 = vadd.f32 %v2996, %v3925
      %v3927 = vpop.f32.mrb[0].mxu0
      %v3928 = vadd.f32 %v2992, %v3927
      %v3929 = vpop.f32.mrb[0].mxu0
      %v3930 = vadd.f32 %v2996, %v3929
      %3931 = vmatprep.mubr.bf16.mxu0 %v2842
      %3932 = vmatmul.mubr.bf16.gmra.mrb[0].mxu0 %v2841
      %v3933 = vpop.f32.mrb[0].mxu0
      %v3934 = vadd.f32 %v2992, %v3933
      %v3935 = vpop.f32.mrb[0].mxu0
      %v3936 = vadd.f32 %v2996, %v3935
      %v3937 = vpop.f32.mrb[0].mxu0
      %v3938 = vadd.f32 %v2992, %v3937
      %v3939 = vpop.f32.mrb[0].mxu0
      %v3940 = vadd.f32 %v2996, %v3939
      %3941 = vmatprep.mubr.bf16.mxu0 %v2844
      %3942 = vmatmul.mubr.bf16.gmra.mrb[0].mxu0 %v2843
      %v3943 = vpop.f32.mrb[0].mxu0
      %v3944 = vadd.f32 %v2992, %v3943
      %v3945 = vpop.f32.mrb[0].mxu0
      %v3946 = vadd.f32 %v2996, %v3945
      %v3947 = vpop.f32.mrb[0].mxu0
      %v3948 = vadd.f32 %v2992, %v3947
      %v3949 = vpop.f32.mrb[0].mxu0
      %v3950 = vadd.f32 %v2996, %v3949
      %3951 = vmatprep.mubr.bf16.mxu0 %v2846
      %3952 = vmatmul.mubr.bf16.gmra.mrb[0].mxu0 %v2845
      %v3953 = vpop.f32.mrb[0].mxu0
      %v3954 = vadd.f32 %v2992, %v3953
      %v3955 = vpop.f32.mrb[0].mxu0
      %v3956 = vadd.f32 %v2996, %v3955
      %v3957 = vpop.f32.mrb[0].mxu0
      %v3958 = vadd.f32 %v2992, %v3957
      %v3959 = vpop.f32.mrb[0].mxu0
      %v3960 = vadd.f32 %v2996, %v3959
      %3961 = vmatprep.mubr.bf16.mxu0 %v2848
      %3962 = vmatmul.mubr.bf16.gmra.mrb[0].mxu0 %v2847
      %v3963 = vpop.f32.mrb[0].mxu0
      %v3964 = vadd.f32 %v2992, %v3963
      %v3965 = vpop.f32.mrb[0].mxu0
      %v3966 = vadd.f32 %v2996, %v3965
      %v3967 = vpop.f32.mrb[0].mxu0
      %v3968 = vadd.f32 %v2992, %v3967
      %v3969 = vpop.f32.mrb[0].mxu0
      %v3970 = vadd.f32 %v2996, %v3969
      %3971 = vmatprep.mubr.bf16.mxu0 %v2850
      %3972 = vmatmul.mubr.bf16.gmra.mrb[0].mxu0 %v2849
      %v3973 = vpop.f32.mrb[0].mxu0
      %v3974 = vadd.f32 %v2992, %v3973
      %v3975 = vpop.f32.mrb[0].mxu0
      %v3976 = vadd.f32 %v2996, %v3975
      %v3977 = vpop.f32.mrb[0].mxu0
      %v3978 = vadd.f32 %v2992, %v3977
      %v3979 = vpop.f32.mrb[0].mxu0
      %v3980 = vadd.f32 %v2996, %v3979
      %3981 = vmatprep.mubr.bf16.mxu0 %v2852
      %3982 = vmatmul.mubr.bf16.gmra.mrb[0].mxu0 %v2851
      %v3983 = vpop.f32.mrb[0].mxu0
      %v3984 = vadd.f32 %v2992, %v3983
      %v3985 = vpop.f32.mrb[0].mxu0
      %v3986 = vadd.f32 %v2996, %v3985
      %v3987 = vpop.f32.mrb[0].mxu0
      %v3988 = vadd.f32 %v2992, %v3987
      %v3989 = vpop.f32.mrb[0].mxu0
      %v3990 = vadd.f32 %v2996, %v3989
      %3991 = vmatprep.mubr.bf16.mxu0 %v2854
      %3992 = vmatmul.mubr.bf16.gmra.mrb[0].mxu0 %v2853
      %v3993 = vpop.f32.mrb[0].mxu0
      %v3994 = vadd.f32 %v2992, %v3993
      %v3995 = vpop.f32.mrb[0].mxu0
      %v3996 = vadd.f32 %v2996, %v3995
      %v3997 = vpop.f32.mrb[0].mxu0
      %v3998 = vadd.f32 %v2992, %v3997
      %v3999 = vpop.f32.mrb[0].mxu0
      %v4000 = vadd.f32 %v2996, %v3999
      %4001 = vmatprep.mubr.bf16.mxu0 %v2856
      %4002 = vmatmul.mubr.bf16.gmra.mrb[0].mxu0 %v2855
      %v4003 = vpop.f32.mrb[0].mxu0
      %v4004 = vadd.f32 %v2992, %v4003
      %v4005 = vpop.f32.mrb[0].mxu0
      %v4006 = vadd.f32 %v2996, %v4005
      %v4007 = vpop.f32.mrb[0].mxu0
      %v4008 = vadd.f32 %v2992, %v4007
      %v4009 = vpop.f32.mrb[0].mxu0
      %v4010 = vadd.f32 %v2996, %v4009
      %4011 = vmatprep.mubr.bf16.mxu0 %v2858
      %4012 = vmatmul.mubr.bf16.gmra.mrb[0].mxu0 %v2857
      %v4013 = vpop.f32.mrb[0].mxu0
      %v4014 = vadd.f32 %v2992, %v4013
      %v4015 = vpop.f32.mrb[0].mxu0
      %v4016 = vadd.f32 %v2996, %v4015
      %v4017 = vpop.f32.mrb[0].mxu0
      %v4018 = vadd.f32 %v2992, %v4017
      %v4019 = vpop.f32.mrb[0].mxu0
      %v4020 = vadd.f32 %v2996, %v4019
      %4021 = vmatprep.mubr.bf16.mxu0 %v2860
      %4022 = vmatmul.mubr.bf16.gmra.mrb[0].mxu0 %v2859
      %v4023 = vpop.f32.mrb[0].mxu0
      %v4024 = vadd.f32 %v2992, %v4023
      %v4025 = vpop.f32.mrb[0].mxu0
      %v4026 = vadd.f32 %v2996, %v4025
      %v4027 = vpop.f32.mrb[0].mxu0
      %v4028 = vadd.f32 %v2992, %v4027
      %v4029 = vpop.f32.mrb[0].mxu0
      %v4030 = vadd.f32 %v2996, %v4029
      %4031 = vmatprep.mubr.bf16.mxu0 %v2862
      %4032 = vmatmul.mubr.bf16.gmra.mrb[0].mxu0 %v2861
      %v4033 = vpop.f32.mrb[0].mxu0
      %v4034 = vadd.f32 %v2992, %v4033
      %v4035 = vpop.f32.mrb[0].mxu0
      %v4036 = vadd.f32 %v2996, %v4035
      %v4037 = vpop.f32.mrb[0].mxu0
      %v4038 = vadd.f32 %v2992, %v4037
      %v4039 = vpop.f32.mrb[0].mxu0
      %v4040 = vadd.f32 %v2996, %v4039
      %4041 = vmatprep.mubr.bf16.mxu0 %v2864
      %4042 = vmatmul.mubr.bf16.gmra.mrb[0].mxu0 %v2863
      %v4043 = vpop.f32.mrb[0].mxu0
      %v4044 = vadd.f32 %v2992, %v4043
      %v4045 = vpop.f32.mrb[0].mxu0
      %v4046 = vadd.f32 %v2996, %v4045
      %v4047 = vpop.f32.mrb[0].mxu0
      %v4048 = vadd.f32 %v2992, %v4047
      %v4049 = vpop.f32.mrb[0].mxu0
      %v4050 = vadd.f32 %v2996, %v4049
      %4051 = vmatprep.mubr.bf16.mxu0 %v2866
      %4052 = vmatmul.mubr.bf16.gmra.mrb[0].mxu0 %v2865
      %v4053 = vpop.f32.mrb[0].mxu0
      %v4054 = vadd.f32 %v2992, %v4053
      %v4055 = vpop.f32.mrb[0].mxu0
      %v4056 = vadd.f32 %v2996, %v4055
      %v4057 = vpop.f32.mrb[0].mxu0
      %v4058 = vadd.f32 %v2992, %v4057
      %v4059 = vpop.f32.mrb[0].mxu0
      %v4060 = vadd.f32 %v2996, %v4059
      %4061 = vmatprep.mubr.bf16.mxu0 %v2868
      %4062 = vmatmul.mubr.bf16.gmra.mrb[0].mxu0 %v2867
      %v4063 = vpop.f32.mrb[0].mxu0
      %v4064 = vadd.f32 %v2992, %v4063
      %v4065 = vpop.f32.mrb[0].mxu0
      %v4066 = vadd.f32 %v2996, %v4065
      %v4067 = vpop.f32.mrb[0].mxu0
      %v4068 = vadd.f32 %v2992, %v4067
      %v4069 = vpop.f32.mrb[0].mxu0
      %v4070 = vadd.f32 %v2996, %v4069
      %4071 = vmatprep.mubr.bf16.mxu0 %v2870
      %4072 = vmatmul.mubr.bf16.gmra.mrb[0].mxu0 %v2869
      %v4073 = vpop.f32.mrb[0].mxu0
      %v4074 = vadd.f32 %v2992, %v4073
      %v4075 = vpop.f32.mrb[0].mxu0
      %v4076 = vadd.f32 %v2996, %v4075
      %v4077 = vpop.f32.mrb[0].mxu0
      %v4078 = vadd.f32 %v2992, %v4077
      %v4079 = vpop.f32.mrb[0].mxu0
      %v4080 = vadd.f32 %v2996, %v4079
      %4081 = vmatprep.mubr.bf16.mxu0 %v2872
      %4082 = vmatmul.mubr.bf16.gmra.mrb[0].mxu0 %v2871
      %v4083 = vpop.f32.mrb[0].mxu0
      %v4084 = vadd.f32 %v2992, %v4083
      %v4085 = vpop.f32.mrb[0].mxu0
      %v4086 = vadd.f32 %v2996, %v4085
      %v4087 = vpop.f32.mrb[0].mxu0
      %v4088 = vadd.f32 %v2992, %v4087
      %v4089 = vpop.f32.mrb[0].mxu0
      %v4090 = vadd.f32 %v2996, %v4089
      %4091 = vmatprep.mubr.bf16.mxu0 %v2874
      %4092 = vmatmul.mubr.bf16.gmra.mrb[0].mxu0 %v2873
      %v4093 = vpop.f32.mrb[0].mxu0
      %v4094 = vadd.f32 %v2992, %v4093
      %v4095 = vpop.f32.mrb[0].mxu0
      %v4096 = vadd.f32 %v2996, %v4095
      %v4097 = vpop.f32.mrb[0].mxu0
      %v4098 = vadd.f32 %v2992, %v4097
      %v4099 = vpop.f32.mrb[0].mxu0
      %v4100 = vadd.f32 %v2996, %v4099
      %4101 = vmatprep.mubr.bf16.mxu0 %v2876
      %4102 = vmatmul.mubr.bf16.gmra.mrb[0].mxu0 %v2875
      %v4103 = vpop.f32.mrb[0].mxu0
      %v4104 = vadd.f32 %v2992, %v4103
      %v4105 = vpop.f32.mrb[0].mxu0
      %v4106 = vadd.f32 %v2996, %v4105
      %v4107 = vpop.f32.mrb[0].mxu0
      %v4108 = vadd.f32 %v2992, %v4107
      %v4109 = vpop.f32.mrb[0].mxu0
      %v4110 = vadd.f32 %v2996, %v4109
      %4111 = vmatprep.mubr.bf16.mxu0 %v2878
      %4112 = vmatmul.mubr.bf16.gmra.mrb[0].mxu0 %v2877
      %v4113 = vpop.f32.mrb[0].mxu0
      %v4114 = vadd.f32 %v2992, %v4113
      %v4115 = vpop.f32.mrb[0].mxu0
      %v4116 = vadd.f32 %v2996, %v4115
      %v4117 = vpop.f32.mrb[0].mxu0
      %v4118 = vadd.f32 %v2992, %v4117
      %v4119 = vpop.f32.mrb[0].mxu0
      %v4120 = vadd.f32 %v2996, %v4119
      %4121 = vmatprep.mubr.bf16.mxu0 %v2880
      %4122 = vmatmul.mubr.bf16.gmra.mrb[0].mxu0 %v2879
      %v4123 = vpop.f32.mrb[0].mxu0
      %v4124 = vadd.f32 %v2992, %v4123
      %v4125 = vpop.f32.mrb[0].mxu0
      %v4126 = vadd.f32 %v2996, %v4125
      %v4127 = vpop.f32.mrb[0].mxu0
      %v4128 = vadd.f32 %v2992, %v4127
      %v4129 = vpop.f32.mrb[0].mxu0
      %v4130 = vadd.f32 %v2996, %v4129
      %4131 = vmatprep.mubr.bf16.mxu0 %v2882
      %4132 = vmatmul.mubr.bf16.gmra.mrb[0].mxu0 %v2881
      %v4133 = vpop.f32.mrb[0].mxu0
      %v4134 = vadd.f32 %v2992, %v4133
      %v4135 = vpop.f32.mrb[0].mxu0
      %v4136 = vadd.f32 %v2996, %v4135
      %v4137 = vpop.f32.mrb[0].mxu0
      %v4138 = vadd.f32 %v2992, %v4137
      %v4139 = vpop.f32.mrb[0].mxu0
      %v4140 = vadd.f32 %v2996, %v4139
      %4141 = vmatprep.mubr.bf16.mxu0 %v2884
      %4142 = vmatmul.mubr.bf16.gmra.mrb[0].mxu0 %v2883
      %v4143 = vpop.f32.mrb[0].mxu0
      %v4144 = vadd.f32 %v2992, %v4143
      %v4145 = vpop.f32.mrb[0].mxu0
      %v4146 = vadd.f32 %v2996, %v4145
      %v4147 = vpop.f32.mrb[0].mxu0
      %v4148 = vadd.f32 %v2992, %v4147
      %v4149 = vpop.f32.mrb[0].mxu0
      %v4150 = vadd.f32 %v2996, %v4149
      %4151 = vmatprep.mubr.bf16.mxu0 %v2886
      %4152 = vmatmul.mubr.bf16.gmra.mrb[0].mxu0 %v2885
      %v4153 = vpop.f32.mrb[0].mxu0
      %v4154 = vadd.f32 %v2992, %v4153
      %v4155 = vpop.f32.mrb[0].mxu0
      %v4156 = vadd.f32 %v2996, %v4155
      %v4157 = vpop.f32.mrb[0].mxu0
      %v4158 = vadd.f32 %v2992, %v4157
      %v4159 = vpop.f32.mrb[0].mxu0
      %v4160 = vadd.f32 %v2996, %v4159
      %4161 = vmatprep.mubr.bf16.mxu0 %v2888
      %4162 = vmatmul.mubr.bf16.gmra.mrb[0].mxu0 %v2887
      %v4163 = vpop.f32.mrb[0].mxu0
      %v4164 = vadd.f32 %v2992, %v4163
      %v4165 = vpop.f32.mrb[0].mxu0
      %v4166 = vadd.f32 %v2996, %v4165
      %v4167 = vpop.f32.mrb[0].mxu0
      %v4168 = vadd.f32 %v2992, %v4167
      %v4169 = vpop.f32.mrb[0].mxu0
      %v4170 = vadd.f32 %v2996, %v4169
      %4171 = vmatprep.mubr.bf16.mxu0 %v2890
      %4172 = vmatmul.mubr.bf16.gmra.mrb[0].mxu0 %v2889
      %v4173 = vpop.f32.mrb[0].mxu0
      %v4174 = vadd.f32 %v2992, %v4173
      %v4175 = vpop.f32.mrb[0].mxu0
      %v4176 = vadd.f32 %v2996, %v4175
      %v4177 = vpop.f32.mrb[0].mxu0
      %v4178 = vadd.f32 %v2992, %v4177
      %v4179 = vpop.f32.mrb[0].mxu0
      %v4180 = vadd.f32 %v2996, %v4179
      %4181 = vmatprep.mubr.bf16.mxu0 %v2892
      %4182 = vmatmul.mubr.bf16.gmra.mrb[0].mxu0 %v2891
      %v4183 = vpop.f32.mrb[0].mxu0
      %v4184 = vadd.f32 %v2992, %v4183
      %v4185 = vpop.f32.mrb[0].mxu0
      %v4186 = vadd.f32 %v2996, %v4185
      %v4187 = vpop.f32.mrb[0].mxu0
      %v4188 = vadd.f32 %v2992, %v4187
      %v4189 = vpop.f32.mrb[0].mxu0
      %v4190 = vadd.f32 %v2996, %v4189
      %4191 = vmatprep.mubr.bf16.mxu0 %v2894
      %4192 = vmatmul.mubr.bf16.gmra.mrb[0].mxu0 %v2893
      %v4193 = vpop.f32.mrb[0].mxu0
      %v4194 = vadd.f32 %v2992, %v4193
      %v4195 = vpop.f32.mrb[0].mxu0
      %v4196 = vadd.f32 %v2996, %v4195
      %v4197 = vpop.f32.mrb[0].mxu0
      %v4198 = vadd.f32 %v2992, %v4197
      %v4199 = vpop.f32.mrb[0].mxu0
      %v4200 = vadd.f32 %v2996, %v4199
      %4201 = vmatprep.mubr.bf16.mxu0 %v2896
      %4202 = vmatmul.mubr.bf16.gmra.mrb[0].mxu0 %v2895
      %v4203 = vpop.f32.mrb[0].mxu0
      %v4204 = vadd.f32 %v2992, %v4203
      %v4205 = vpop.f32.mrb[0].mxu0
      %v4206 = vadd.f32 %v2996, %v4205
      %v4207 = vpop.f32.mrb[0].mxu0
      %v4208 = vadd.f32 %v2992, %v4207
      %v4209 = vpop.f32.mrb[0].mxu0
      %v4210 = vadd.f32 %v2996, %v4209
      %4211 = vmatprep.mubr.bf16.mxu0 %v2898
      %4212 = vmatmul.mubr.bf16.gmra.mrb[0].mxu0 %v2897
      %v4213 = vpop.f32.mrb[0].mxu0
      %v4214 = vadd.f32 %v2992, %v4213
      %v4215 = vpop.f32.mrb[0].mxu0
      %v4216 = vadd.f32 %v2996, %v4215
      %v4217 = vpop.f32.mrb[0].mxu0
      %v4218 = vadd.f32 %v2992, %v4217
      %v4219 = vpop.f32.mrb[0].mxu0
      %v4220 = vadd.f32 %v2996, %v4219
      %4221 = vmatprep.mubr.bf16.mxu0 %v2900
      %4222 = vmatmul.mubr.bf16.gmra.mrb[0].mxu0 %v2899
      %v4223 = vpop.f32.mrb[0].mxu0
      %v4224 = vadd.f32 %v2992, %v4223
      %v4225 = vpop.f32.mrb[0].mxu0
      %v4226 = vadd.f32 %v2996, %v4225
      %v4227 = vpop.f32.mrb[0].mxu0
      %v4228 = vadd.f32 %v2992, %v4227
      %v4229 = vpop.f32.mrb[0].mxu0
      %v4230 = vadd.f32 %v2996, %v4229
      %4231 = vmatprep.mubr.bf16.mxu0 %v2902
      %4232 = vmatmul.mubr.bf16.gmra.mrb[0].mxu0 %v2901
      %v4233 = vpop.f32.mrb[0].mxu0
      %v4234 = vadd.f32 %v2992, %v4233
      %v4235 = vpop.f32.mrb[0].mxu0
      %v4236 = vadd.f32 %v2996, %v4235
      %v4237 = vpop.f32.mrb[0].mxu0
      %v4238 = vadd.f32 %v2992, %v4237
      %v4239 = vpop.f32.mrb[0].mxu0
      %v4240 = vadd.f32 %v2996, %v4239
      %4241 = vmatprep.mubr.bf16.mxu0 %v2904
      %4242 = vmatmul.mubr.bf16.gmra.mrb[0].mxu0 %v2903
      %v4243 = vpop.f32.mrb[0].mxu0
      %v4244 = vadd.f32 %v2992, %v4243
      %v4245 = vpop.f32.mrb[0].mxu0
      %v4246 = vadd.f32 %v2996, %v4245
      %v4247 = vpop.f32.mrb[0].mxu0
      %v4248 = vadd.f32 %v2992, %v4247
      %v4249 = vpop.f32.mrb[0].mxu0
      %v4250 = vadd.f32 %v2996, %v4249
      %4251 = vmatprep.mubr.bf16.mxu0 %v2906
      %4252 = vmatmul.mubr.bf16.gmra.mrb[0].mxu0 %v2905
      %v4253 = vpop.f32.mrb[0].mxu0
      %v4254 = vadd.f32 %v2992, %v4253
      %v4255 = vpop.f32.mrb[0].mxu0
      %v4256 = vadd.f32 %v2996, %v4255
      %v4257 = vpop.f32.mrb[0].mxu0
      %v4258 = vadd.f32 %v2992, %v4257
      %v4259 = vpop.f32.mrb[0].mxu0
      %v4260 = vadd.f32 %v2996, %v4259
      %4261 = vmatprep.mubr.bf16.mxu0 %v2908
      %4262 = vmatmul.mubr.bf16.gmra.mrb[0].mxu0 %v2907
      %v4263 = vpop.f32.mrb[0].mxu0
      %v4264 = vadd.f32 %v2992, %v4263
      %v4265 = vpop.f32.mrb[0].mxu0
      %v4266 = vadd.f32 %v2996, %v4265
      %v4267 = vpop.f32.mrb[0].mxu0
      %v4268 = vadd.f32 %v2992, %v4267
      %v4269 = vpop.f32.mrb[0].mxu0
      %v4270 = vadd.f32 %v2996, %v4269
      %4271 = vmatprep.mubr.bf16.mxu0 %v2910
      %4272 = vmatmul.mubr.bf16.gmra.mrb[0].mxu0 %v2909
      %v4273 = vpop.f32.mrb[0].mxu0
      %v4274 = vadd.f32 %v2992, %v4273
      %v4275 = vpop.f32.mrb[0].mxu0
      %v4276 = vadd.f32 %v2996, %v4275
      %v4277 = vpop.f32.mrb[0].mxu0
      %v4278 = vadd.f32 %v2992, %v4277
      %v4279 = vpop.f32.mrb[0].mxu0
      %v4280 = vadd.f32 %v2996, %v4279
      %4281 = vmatprep.mubr.bf16.mxu0 %v2912
      %4282 = vmatmul.mubr.bf16.gmra.mrb[0].mxu0 %v2911
      %v4283 = vpop.f32.mrb[0].mxu0
      %v4284 = vadd.f32 %v2992, %v4283
      %v4285 = vpop.f32.mrb[0].mxu0
      %v4286 = vadd.f32 %v2996, %v4285
      %v4287 = vpop.f32.mrb[0].mxu0
      %v4288 = vadd.f32 %v2992, %v4287
      %v4289 = vpop.f32.mrb[0].mxu0
      %v4290 = vadd.f32 %v2996, %v4289
      %4291 = vmatprep.mubr.bf16.mxu0 %v2914
      %4292 = vmatmul.mubr.bf16.gmra.mrb[0].mxu0 %v2913
      %v4293 = vpop.f32.mrb[0].mxu0
      %v4294 = vadd.f32 %v2992, %v4293
      %v4295 = vpop.f32.mrb[0].mxu0
      %v4296 = vadd.f32 %v2996, %v4295
      %v4297 = vpop.f32.mrb[0].mxu0
      %v4298 = vadd.f32 %v2992, %v4297
      %v4299 = vpop.f32.mrb[0].mxu0
      %v4300 = vadd.f32 %v2996, %v4299
      %4301 = vmatprep.mubr.bf16.mxu0 %v2916
      %4302 = vmatmul.mubr.bf16.gmra.mrb[0].mxu0 %v2915
      %v4303 = vpop.f32.mrb[0].mxu0
      %v4304 = vadd.f32 %v2992, %v4303
      %v4305 = vpop.f32.mrb[0].mxu0
      %v4306 = vadd.f32 %v2996, %v4305
      %v4307 = vpop.f32.mrb[0].mxu0
      %v4308 = vadd.f32 %v2992, %v4307
      %v4309 = vpop.f32.mrb[0].mxu0
      %v4310 = vadd.f32 %v2996, %v4309
      %4311 = vmatprep.mubr.bf16.mxu0 %v2918
      %4312 = vmatmul.mubr.bf16.gmra.mrb[0].mxu0 %v2917
      %v4313 = vpop.f32.mrb[0].mxu0
      %v4314 = vadd.f32 %v2992, %v4313
      %v4315 = vpop.f32.mrb[0].mxu0
      %v4316 = vadd.f32 %v2996, %v4315
      %v4317 = vpop.f32.mrb[0].mxu0
      %v4318 = vadd.f32 %v2992, %v4317
      %v4319 = vpop.f32.mrb[0].mxu0
      %v4320 = vadd.f32 %v2996, %v4319
      %4321 = vmatprep.mubr.bf16.mxu0 %v2920
      %4322 = vmatmul.mubr.bf16.gmra.mrb[0].mxu0 %v2919
      %v4323 = vpop.f32.mrb[0].mxu0
      %v4324 = vadd.f32 %v2992, %v4323
      %v4325 = vpop.f32.mrb[0].mxu0
      %v4326 = vadd.f32 %v2996, %v4325
      %v4327 = vpop.f32.mrb[0].mxu0
      %v4328 = vadd.f32 %v2992, %v4327
      %v4329 = vpop.f32.mrb[0].mxu0
      %v4330 = vadd.f32 %v2996, %v4329
      %4331 = vmatprep.mubr.bf16.mxu0 %v2922
      %4332 = vmatmul.mubr.bf16.gmra.mrb[0].mxu0 %v2921
      %v4333 = vpop.f32.mrb[0].mxu0
      %v4334 = vadd.f32 %v2992, %v4333
      %v4335 = vpop.f32.mrb[0].mxu0
      %v4336 = vadd.f32 %v2996, %v4335
      %v4337 = vpop.f32.mrb[0].mxu0
      %v4338 = vadd.f32 %v2992, %v4337
      %v4339 = vpop.f32.mrb[0].mxu0
      %v4340 = vadd.f32 %v2996, %v4339
      %4341 = vdwg.mxu0
      %4342 = vmatprep.subr.bf16.mxu0 %v3204
      %4343 = vmatpush1.bf16.msra.mxu0 %v3203
      %4344 = vmatprep.subr.bf16.mxu0 %v3208
      %4345 = vmatpush1.bf16.msra.mxu0 %v3207
      %4346 = vmatprep.subr.bf16.mxu0 %v3212
      %4347 = vmatpush1.bf16.msra.mxu0 %v3211
      %4348 = vmatprep.subr.bf16.mxu0 %v3216
      %4349 = vmatpush1.bf16.msra.mxu0 %v3215
      %4350 = vmatprep.subr.bf16.mxu0 %v3220
      %4351 = vmatpush1.bf16.msra.mxu0 %v3219
      %4352 = vmatprep.subr.bf16.mxu0 %v3224
      %4353 = vmatpush1.bf16.msra.mxu0 %v3223
      %4354 = vmatprep.subr.bf16.mxu0 %v3228
      %4355 = vmatpush1.bf16.msra.mxu0 %v3227
      %4356 = vmatprep.subr.bf16.mxu0 %v3232
      %4357 = vmatpush1.bf16.msra.mxu0 %v3231
      %4358 = vmatprep.subr.bf16.mxu0 %v3236
      %4359 = vmatpush1.bf16.msra.mxu0 %v3235
      %4360 = vmatprep.subr.bf16.mxu0 %v3240
      %4361 = vmatpush1.bf16.msra.mxu0 %v3239
      %4362 = vmatprep.subr.bf16.mxu0 %v3244
      %4363 = vmatpush1.bf16.msra.mxu0 %v3243
      %4364 = vmatprep.subr.bf16.mxu0 %v3248
      %4365 = vmatpush1.bf16.msra.mxu0 %v3247
      %4366 = vmatprep.subr.bf16.mxu0 %v3252
      %4367 = vmatpush1.bf16.msra.mxu0 %v3251
      %4368 = vmatprep.subr.bf16.mxu0 %v3256
      %4369 = vmatpush1.bf16.msra.mxu0 %v3255
      %4370 = vmatprep.subr.bf16.mxu0 %v3260
      %4371 = vmatpush1.bf16.msra.mxu0 %v3259
      %4372 = vmatprep.subr.bf16.mxu0 %v3264
      %4373 = vmatpush1.bf16.msra.mxu0 %v3263
      %4374 = vmatprep.mubr.bf16.mxu0 %v2728
      %4375 = vmatmul.mubr.bf16.gmra.mrb[0].mxu0 %v2727
      %v4376 = vpop.f32.mrb[0].mxu0
      %v4377 = vadd.f32 %v3000, %v4376
      %v4378 = vpop.f32.mrb[0].mxu0
      %v4379 = vadd.f32 %v3004, %v4378
      %v4380 = vpop.f32.mrb[0].mxu0
      %v4381 = vadd.f32 %v3000, %v4380
      %v4382 = vpop.f32.mrb[0].mxu0
      %v4383 = vadd.f32 %v3004, %v4382
      %4384 = vmatprep.mubr.bf16.mxu0 %v2730
      %4385 = vmatmul.mubr.bf16.gmra.mrb[0].mxu0 %v2729
      %v4386 = vpop.f32.mrb[0].mxu0
      %v4387 = vadd.f32 %v3000, %v4386
      %v4388 = vpop.f32.mrb[0].mxu0
      %v4389 = vadd.f32 %v3004, %v4388
      %v4390 = vpop.f32.mrb[0].mxu0
      %v4391 = vadd.f32 %v3000, %v4390
      %v4392 = vpop.f32.mrb[0].mxu0
      %v4393 = vadd.f32 %v3004, %v4392
      %4394 = vmatprep.mubr.bf16.mxu0 %v2732
      %4395 = vmatmul.mubr.bf16.gmra.mrb[0].mxu0 %v2731
      %v4396 = vpop.f32.mrb[0].mxu0
      %v4397 = vadd.f32 %v3000, %v4396
      %v4398 = vpop.f32.mrb[0].mxu0
      %v4399 = vadd.f32 %v3004, %v4398
      %v4400 = vpop.f32.mrb[0].mxu0
      %v4401 = vadd.f32 %v3000, %v4400
      %v4402 = vpop.f32.mrb[0].mxu0
      %v4403 = vadd.f32 %v3004, %v4402
      %4404 = vmatprep.mubr.bf16.mxu0 %v2734
      %4405 = vmatmul.mubr.bf16.gmra.mrb[0].mxu0 %v2733
      %v4406 = vpop.f32.mrb[0].mxu0
      %v4407 = vadd.f32 %v3000, %v4406
      %v4408 = vpop.f32.mrb[0].mxu0
      %v4409 = vadd.f32 %v3004, %v4408
      %v4410 = vpop.f32.mrb[0].mxu0
      %v4411 = vadd.f32 %v3000, %v4410
      %v4412 = vpop.f32.mrb[0].mxu0
      %v4413 = vadd.f32 %v3004, %v4412
      %4414 = vmatprep.mubr.bf16.mxu0 %v2736
      %4415 = vmatmul.mubr.bf16.gmra.mrb[0].mxu0 %v2735
      %v4416 = vpop.f32.mrb[0].mxu0
      %v4417 = vadd.f32 %v3000, %v4416
      %v4418 = vpop.f32.mrb[0].mxu0
      %v4419 = vadd.f32 %v3004, %v4418
      %v4420 = vpop.f32.mrb[0].mxu0
      %v4421 = vadd.f32 %v3000, %v4420
      %v4422 = vpop.f32.mrb[0].mxu0
      %v4423 = vadd.f32 %v3004, %v4422
      %4424 = vmatprep.mubr.bf16.mxu0 %v2738
      %4425 = vmatmul.mubr.bf16.gmra.mrb[0].mxu0 %v2737
      %v4426 = vpop.f32.mrb[0].mxu0
      %v4427 = vadd.f32 %v3000, %v4426
      %v4428 = vpop.f32.mrb[0].mxu0
      %v4429 = vadd.f32 %v3004, %v4428
      %v4430 = vpop.f32.mrb[0].mxu0
      %v4431 = vadd.f32 %v3000, %v4430
      %v4432 = vpop.f32.mrb[0].mxu0
      %v4433 = vadd.f32 %v3004, %v4432
      %4434 = vmatprep.mubr.bf16.mxu0 %v2740
      %4435 = vmatmul.mubr.bf16.gmra.mrb[0].mxu0 %v2739
      %v4436 = vpop.f32.mrb[0].mxu0
      %v4437 = vadd.f32 %v3000, %v4436
      %v4438 = vpop.f32.mrb[0].mxu0
      %v4439 = vadd.f32 %v3004, %v4438
      %v4440 = vpop.f32.mrb[0].mxu0
      %v4441 = vadd.f32 %v3000, %v4440
      %v4442 = vpop.f32.mrb[0].mxu0
      %v4443 = vadd.f32 %v3004, %v4442
      %4444 = vmatprep.mubr.bf16.mxu0 %v2742
      %4445 = vmatmul.mubr.bf16.gmra.mrb[0].mxu0 %v2741
      %v4446 = vpop.f32.mrb[0].mxu0
      %v4447 = vadd.f32 %v3000, %v4446
      %v4448 = vpop.f32.mrb[0].mxu0
      %v4449 = vadd.f32 %v3004, %v4448
      %v4450 = vpop.f32.mrb[0].mxu0
      %v4451 = vadd.f32 %v3000, %v4450
      %v4452 = vpop.f32.mrb[0].mxu0
      %v4453 = vadd.f32 %v3004, %v4452
      %4454 = vmatprep.mubr.bf16.mxu0 %v2744
      %4455 = vmatmul.mubr.bf16.gmra.mrb[0].mxu0 %v2743
      %v4456 = vpop.f32.mrb[0].mxu0
      %v4457 = vadd.f32 %v3000, %v4456
      %v4458 = vpop.f32.mrb[0].mxu0
      %v4459 = vadd.f32 %v3004, %v4458
      %v4460 = vpop.f32.mrb[0].mxu0
      %v4461 = vadd.f32 %v3000, %v4460
      %v4462 = vpop.f32.mrb[0].mxu0
      %v4463 = vadd.f32 %v3004, %v4462
      %4464 = vmatprep.mubr.bf16.mxu0 %v2746
      %4465 = vmatmul.mubr.bf16.gmra.mrb[0].mxu0 %v2745
      %v4466 = vpop.f32.mrb[0].mxu0
      %v4467 = vadd.f32 %v3000, %v4466
      %v4468 = vpop.f32.mrb[0].mxu0
      %v4469 = vadd.f32 %v3004, %v4468
      %v4470 = vpop.f32.mrb[0].mxu0
      %v4471 = vadd.f32 %v3000, %v4470
      %v4472 = vpop.f32.mrb[0].mxu0
      %v4473 = vadd.f32 %v3004, %v4472
      %4474 = vmatprep.mubr.bf16.mxu0 %v2748
      %4475 = vmatmul.mubr.bf16.gmra.mrb[0].mxu0 %v2747
      %v4476 = vpop.f32.mrb[0].mxu0
      %v4477 = vadd.f32 %v3000, %v4476
      %v4478 = vpop.f32.mrb[0].mxu0
      %v4479 = vadd.f32 %v3004, %v4478
      %v4480 = vpop.f32.mrb[0].mxu0
      %v4481 = vadd.f32 %v3000, %v4480
      %v4482 = vpop.f32.mrb[0].mxu0
      %v4483 = vadd.f32 %v3004, %v4482
      %4484 = vmatprep.mubr.bf16.mxu0 %v2750
      %4485 = vmatmul.mubr.bf16.gmra.mrb[0].mxu0 %v2749
      %v4486 = vpop.f32.mrb[0].mxu0
      %v4487 = vadd.f32 %v3000, %v4486
      %v4488 = vpop.f32.mrb[0].mxu0
      %v4489 = vadd.f32 %v3004, %v4488
      %v4490 = vpop.f32.mrb[0].mxu0
      %v4491 = vadd.f32 %v3000, %v4490
      %v4492 = vpop.f32.mrb[0].mxu0
      %v4493 = vadd.f32 %v3004, %v4492
      %4494 = vmatprep.mubr.bf16.mxu0 %v2752
      %4495 = vmatmul.mubr.bf16.gmra.mrb[0].mxu0 %v2751
      %v4496 = vpop.f32.mrb[0].mxu0
      %v4497 = vadd.f32 %v3000, %v4496
      %v4498 = vpop.f32.mrb[0].mxu0
      %v4499 = vadd.f32 %v3004, %v4498
      %v4500 = vpop.f32.mrb[0].mxu0
      %v4501 = vadd.f32 %v3000, %v4500
      %v4502 = vpop.f32.mrb[0].mxu0
      %v4503 = vadd.f32 %v3004, %v4502
      %4504 = vmatprep.mubr.bf16.mxu0 %v2754
      %4505 = vmatmul.mubr.bf16.gmra.mrb[0].mxu0 %v2753
      %v4506 = vpop.f32.mrb[0].mxu0
      %v4507 = vadd.f32 %v3000, %v4506
      %v4508 = vpop.f32.mrb[0].mxu0
      %v4509 = vadd.f32 %v3004, %v4508
      %v4510 = vpop.f32.mrb[0].mxu0
      %v4511 = vadd.f32 %v3000, %v4510
      %v4512 = vpop.f32.mrb[0].mxu0
      %v4513 = vadd.f32 %v3004, %v4512
      %4514 = vmatprep.mubr.bf16.mxu0 %v2756
      %4515 = vmatmul.mubr.bf16.gmra.mrb[0].mxu0 %v2755
      %v4516 = vpop.f32.mrb[0].mxu0
      %v4517 = vadd.f32 %v3000, %v4516
      %v4518 = vpop.f32.mrb[0].mxu0
      %v4519 = vadd.f32 %v3004, %v4518
      %v4520 = vpop.f32.mrb[0].mxu0
      %v4521 = vadd.f32 %v3000, %v4520
      %v4522 = vpop.f32.mrb[0].mxu0
      %v4523 = vadd.f32 %v3004, %v4522
      %4524 = vmatprep.mubr.bf16.mxu0 %v2758
      %4525 = vmatmul.mubr.bf16.gmra.mrb[0].mxu0 %v2757
      %v4526 = vpop.f32.mrb[0].mxu0
      %v4527 = vadd.f32 %v3000, %v4526
      %v4528 = vpop.f32.mrb[0].mxu0
      %v4529 = vadd.f32 %v3004, %v4528
      %v4530 = vpop.f32.mrb[0].mxu0
      %v4531 = vadd.f32 %v3000, %v4530
      %v4532 = vpop.f32.mrb[0].mxu0
      %v4533 = vadd.f32 %v3004, %v4532
      %4534 = vmatprep.mubr.bf16.mxu0 %v2760
      %4535 = vmatmul.mubr.bf16.gmra.mrb[0].mxu0 %v2759
      %v4536 = vpop.f32.mrb[0].mxu0
      %v4537 = vadd.f32 %v3000, %v4536
      %v4538 = vpop.f32.mrb[0].mxu0
      %v4539 = vadd.f32 %v3004, %v4538
      %v4540 = vpop.f32.mrb[0].mxu0
      %v4541 = vadd.f32 %v3000, %v4540
      %v4542 = vpop.f32.mrb[0].mxu0
      %v4543 = vadd.f32 %v3004, %v4542
      %4544 = vmatprep.mubr.bf16.mxu0 %v2762
      %4545 = vmatmul.mubr.bf16.gmra.mrb[0].mxu0 %v2761
      %v4546 = vpop.f32.mrb[0].mxu0
      %v4547 = vadd.f32 %v3000, %v4546
      %v4548 = vpop.f32.mrb[0].mxu0
      %v4549 = vadd.f32 %v3004, %v4548
      %v4550 = vpop.f32.mrb[0].mxu0
      %v4551 = vadd.f32 %v3000, %v4550
      %v4552 = vpop.f32.mrb[0].mxu0
      %v4553 = vadd.f32 %v3004, %v4552
      %4554 = vmatprep.mubr.bf16.mxu0 %v2764
      %4555 = vmatmul.mubr.bf16.gmra.mrb[0].mxu0 %v2763
      %v4556 = vpop.f32.mrb[0].mxu0
      %v4557 = vadd.f32 %v3000, %v4556
      %v4558 = vpop.f32.mrb[0].mxu0
      %v4559 = vadd.f32 %v3004, %v4558
      %v4560 = vpop.f32.mrb[0].mxu0
      %v4561 = vadd.f32 %v3000, %v4560
      %v4562 = vpop.f32.mrb[0].mxu0
      %v4563 = vadd.f32 %v3004, %v4562
      %4564 = vmatprep.mubr.bf16.mxu0 %v2766
      %4565 = vmatmul.mubr.bf16.gmra.mrb[0].mxu0 %v2765
      %v4566 = vpop.f32.mrb[0].mxu0
      %v4567 = vadd.f32 %v3000, %v4566
      %v4568 = vpop.f32.mrb[0].mxu0
      %v4569 = vadd.f32 %v3004, %v4568
      %v4570 = vpop.f32.mrb[0].mxu0
      %v4571 = vadd.f32 %v3000, %v4570
      %v4572 = vpop.f32.mrb[0].mxu0
      %v4573 = vadd.f32 %v3004, %v4572
      %4574 = vmatprep.mubr.bf16.mxu0 %v2768
      %4575 = vmatmul.mubr.bf16.gmra.mrb[0].mxu0 %v2767
      %v4576 = vpop.f32.mrb[0].mxu0
      %v4577 = vadd.f32 %v3000, %v4576
      %v4578 = vpop.f32.mrb[0].mxu0
      %v4579 = vadd.f32 %v3004, %v4578
      %v4580 = vpop.f32.mrb[0].mxu0
      %v4581 = vadd.f32 %v3000, %v4580
      %v4582 = vpop.f32.mrb[0].mxu0
      %v4583 = vadd.f32 %v3004, %v4582
      %4584 = vmatprep.mubr.bf16.mxu0 %v2770
      %4585 = vmatmul.mubr.bf16.gmra.mrb[0].mxu0 %v2769
      %v4586 = vpop.f32.mrb[0].mxu0
      %v4587 = vadd.f32 %v3000, %v4586
      %v4588 = vpop.f32.mrb[0].mxu0
      %v4589 = vadd.f32 %v3004, %v4588
      %v4590 = vpop.f32.mrb[0].mxu0
      %v4591 = vadd.f32 %v3000, %v4590
      %v4592 = vpop.f32.mrb[0].mxu0
      %v4593 = vadd.f32 %v3004, %v4592
      %4594 = vmatprep.mubr.bf16.mxu0 %v2772
      %4595 = vmatmul.mubr.bf16.gmra.mrb[0].mxu0 %v2771
      %v4596 = vpop.f32.mrb[0].mxu0
      %v4597 = vadd.f32 %v3000, %v4596
      %v4598 = vpop.f32.mrb[0].mxu0
      %v4599 = vadd.f32 %v3004, %v4598
      %v4600 = vpop.f32.mrb[0].mxu0
      %v4601 = vadd.f32 %v3000, %v4600
      %v4602 = vpop.f32.mrb[0].mxu0
      %v4603 = vadd.f32 %v3004, %v4602
      %4604 = vmatprep.mubr.bf16.mxu0 %v2774
      %4605 = vmatmul.mubr.bf16.gmra.mrb[0].mxu0 %v2773
      %v4606 = vpop.f32.mrb[0].mxu0
      %v4607 = vadd.f32 %v3000, %v4606
      %v4608 = vpop.f32.mrb[0].mxu0
      %v4609 = vadd.f32 %v3004, %v4608
      %v4610 = vpop.f32.mrb[0].mxu0
      %v4611 = vadd.f32 %v3000, %v4610
      %v4612 = vpop.f32.mrb[0].mxu0
      %v4613 = vadd.f32 %v3004, %v4612
      %4614 = vmatprep.mubr.bf16.mxu0 %v2776
      %4615 = vmatmul.mubr.bf16.gmra.mrb[0].mxu0 %v2775
      %v4616 = vpop.f32.mrb[0].mxu0
      %v4617 = vadd.f32 %v3000, %v4616
      %v4618 = vpop.f32.mrb[0].mxu0
      %v4619 = vadd.f32 %v3004, %v4618
      %v4620 = vpop.f32.mrb[0].mxu0
      %v4621 = vadd.f32 %v3000, %v4620
      %v4622 = vpop.f32.mrb[0].mxu0
      %v4623 = vadd.f32 %v3004, %v4622
      %4624 = vmatprep.mubr.bf16.mxu0 %v2778
      %4625 = vmatmul.mubr.bf16.gmra.mrb[0].mxu0 %v2777
      %v4626 = vpop.f32.mrb[0].mxu0
      %v4627 = vadd.f32 %v3000, %v4626
      %v4628 = vpop.f32.mrb[0].mxu0
      %v4629 = vadd.f32 %v3004, %v4628
      %v4630 = vpop.f32.mrb[0].mxu0
      %v4631 = vadd.f32 %v3000, %v4630
      %v4632 = vpop.f32.mrb[0].mxu0
      %v4633 = vadd.f32 %v3004, %v4632
      %4634 = vmatprep.mubr.bf16.mxu0 %v2780
      %4635 = vmatmul.mubr.bf16.gmra.mrb[0].mxu0 %v2779
      %v4636 = vpop.f32.mrb[0].mxu0
      %v4637 = vadd.f32 %v3000, %v4636
      %v4638 = vpop.f32.mrb[0].mxu0
      %v4639 = vadd.f32 %v3004, %v4638
      %v4640 = vpop.f32.mrb[0].mxu0
      %v4641 = vadd.f32 %v3000, %v4640
      %v4642 = vpop.f32.mrb[0].mxu0
      %v4643 = vadd.f32 %v3004, %v4642
      %4644 = vmatprep.mubr.bf16.mxu0 %v2782
      %4645 = vmatmul.mubr.bf16.gmra.mrb[0].mxu0 %v2781
      %v4646 = vpop.f32.mrb[0].mxu0
      %v4647 = vadd.f32 %v3000, %v4646
      %v4648 = vpop.f32.mrb[0].mxu0
      %v4649 = vadd.f32 %v3004, %v4648
      %v4650 = vpop.f32.mrb[0].mxu0
      %v4651 = vadd.f32 %v3000, %v4650
      %v4652 = vpop.f32.mrb[0].mxu0
      %v4653 = vadd.f32 %v3004, %v4652
      %4654 = vmatprep.mubr.bf16.mxu0 %v2784
      %4655 = vmatmul.mubr.bf16.gmra.mrb[0].mxu0 %v2783
      %v4656 = vpop.f32.mrb[0].mxu0
      %v4657 = vadd.f32 %v3000, %v4656
      %v4658 = vpop.f32.mrb[0].mxu0
      %v4659 = vadd.f32 %v3004, %v4658
      %v4660 = vpop.f32.mrb[0].mxu0
      %v4661 = vadd.f32 %v3000, %v4660
      %v4662 = vpop.f32.mrb[0].mxu0
      %v4663 = vadd.f32 %v3004, %v4662
      %4664 = vmatprep.mubr.bf16.mxu0 %v2786
      %4665 = vmatmul.mubr.bf16.gmra.mrb[0].mxu0 %v2785
      %v4666 = vpop.f32.mrb[0].mxu0
      %v4667 = vadd.f32 %v3000, %v4666
      %v4668 = vpop.f32.mrb[0].mxu0
      %v4669 = vadd.f32 %v3004, %v4668
      %v4670 = vpop.f32.mrb[0].mxu0
      %v4671 = vadd.f32 %v3000, %v4670
      %v4672 = vpop.f32.mrb[0].mxu0
      %v4673 = vadd.f32 %v3004, %v4672
      %4674 = vmatprep.mubr.bf16.mxu0 %v2788
      %4675 = vmatmul.mubr.bf16.gmra.mrb[0].mxu0 %v2787
      %v4676 = vpop.f32.mrb[0].mxu0
      %v4677 = vadd.f32 %v3000, %v4676
      %v4678 = vpop.f32.mrb[0].mxu0
      %v4679 = vadd.f32 %v3004, %v4678
      %v4680 = vpop.f32.mrb[0].mxu0
      %v4681 = vadd.f32 %v3000, %v4680
      %v4682 = vpop.f32.mrb[0].mxu0
      %v4683 = vadd.f32 %v3004, %v4682
      %4684 = vmatprep.mubr.bf16.mxu0 %v2790
      %4685 = vmatmul.mubr.bf16.gmra.mrb[0].mxu0 %v2789
      %v4686 = vpop.f32.mrb[0].mxu0
      %v4687 = vadd.f32 %v3000, %v4686
      %v4688 = vpop.f32.mrb[0].mxu0
      %v4689 = vadd.f32 %v3004, %v4688
      %v4690 = vpop.f32.mrb[0].mxu0
      %v4691 = vadd.f32 %v3000, %v4690
      %v4692 = vpop.f32.mrb[0].mxu0
      %v4693 = vadd.f32 %v3004, %v4692
      %4694 = vmatprep.mubr.bf16.mxu0 %v2792
      %4695 = vmatmul.mubr.bf16.gmra.mrb[0].mxu0 %v2791
      %v4696 = vpop.f32.mrb[0].mxu0
      %v4697 = vadd.f32 %v3000, %v4696
      %v4698 = vpop.f32.mrb[0].mxu0
      %v4699 = vadd.f32 %v3004, %v4698
      %v4700 = vpop.f32.mrb[0].mxu0
      %v4701 = vadd.f32 %v3000, %v4700
      %v4702 = vpop.f32.mrb[0].mxu0
      %v4703 = vadd.f32 %v3004, %v4702
      %4704 = vmatprep.mubr.bf16.mxu0 %v2794
      %4705 = vmatmul.mubr.bf16.gmra.mrb[0].mxu0 %v2793
      %v4706 = vpop.f32.mrb[0].mxu0
      %v4707 = vadd.f32 %v3000, %v4706
      %v4708 = vpop.f32.mrb[0].mxu0
      %v4709 = vadd.f32 %v3004, %v4708
      %v4710 = vpop.f32.mrb[0].mxu0
      %v4711 = vadd.f32 %v3000, %v4710
      %v4712 = vpop.f32.mrb[0].mxu0
      %v4713 = vadd.f32 %v3004, %v4712
      %4714 = vmatprep.mubr.bf16.mxu0 %v2796
      %4715 = vmatmul.mubr.bf16.gmra.mrb[0].mxu0 %v2795
      %v4716 = vpop.f32.mrb[0].mxu0
      %v4717 = vadd.f32 %v3000, %v4716
      %v4718 = vpop.f32.mrb[0].mxu0
      %v4719 = vadd.f32 %v3004, %v4718
      %v4720 = vpop.f32.mrb[0].mxu0
      %v4721 = vadd.f32 %v3000, %v4720
      %v4722 = vpop.f32.mrb[0].mxu0
      %v4723 = vadd.f32 %v3004, %v4722
      %4724 = vmatprep.mubr.bf16.mxu0 %v2798
      %4725 = vmatmul.mubr.bf16.gmra.mrb[0].mxu0 %v2797
      %v4726 = vpop.f32.mrb[0].mxu0
      %v4727 = vadd.f32 %v3000, %v4726
      %v4728 = vpop.f32.mrb[0].mxu0
      %v4729 = vadd.f32 %v3004, %v4728
      %v4730 = vpop.f32.mrb[0].mxu0
      %v4731 = vadd.f32 %v3000, %v4730
      %v4732 = vpop.f32.mrb[0].mxu0
      %v4733 = vadd.f32 %v3004, %v4732
      %4734 = vmatprep.mubr.bf16.mxu0 %v2800
      %4735 = vmatmul.mubr.bf16.gmra.mrb[0].mxu0 %v2799
      %v4736 = vpop.f32.mrb[0].mxu0
      %v4737 = vadd.f32 %v3000, %v4736
      %v4738 = vpop.f32.mrb[0].mxu0
      %v4739 = vadd.f32 %v3004, %v4738
      %v4740 = vpop.f32.mrb[0].mxu0
      %v4741 = vadd.f32 %v3000, %v4740
      %v4742 = vpop.f32.mrb[0].mxu0
      %v4743 = vadd.f32 %v3004, %v4742
      %4744 = vmatprep.mubr.bf16.mxu0 %v2802
      %4745 = vmatmul.mubr.bf16.gmra.mrb[0].mxu0 %v2801
      %v4746 = vpop.f32.mrb[0].mxu0
      %v4747 = vadd.f32 %v3000, %v4746
      %v4748 = vpop.f32.mrb[0].mxu0
      %v4749 = vadd.f32 %v3004, %v4748
      %v4750 = vpop.f32.mrb[0].mxu0
      %v4751 = vadd.f32 %v3000, %v4750
      %v4752 = vpop.f32.mrb[0].mxu0
      %v4753 = vadd.f32 %v3004, %v4752
      %4754 = vmatprep.mubr.bf16.mxu0 %v2804
      %4755 = vmatmul.mubr.bf16.gmra.mrb[0].mxu0 %v2803
      %v4756 = vpop.f32.mrb[0].mxu0
      %v4757 = vadd.f32 %v3000, %v4756
      %v4758 = vpop.f32.mrb[0].mxu0
      %v4759 = vadd.f32 %v3004, %v4758
      %v4760 = vpop.f32.mrb[0].mxu0
      %v4761 = vadd.f32 %v3000, %v4760
      %v4762 = vpop.f32.mrb[0].mxu0
      %v4763 = vadd.f32 %v3004, %v4762
      %4764 = vmatprep.mubr.bf16.mxu0 %v2806
      %4765 = vmatmul.mubr.bf16.gmra.mrb[0].mxu0 %v2805
      %v4766 = vpop.f32.mrb[0].mxu0
      %v4767 = vadd.f32 %v3000, %v4766
      %v4768 = vpop.f32.mrb[0].mxu0
      %v4769 = vadd.f32 %v3004, %v4768
      %v4770 = vpop.f32.mrb[0].mxu0
      %v4771 = vadd.f32 %v3000, %v4770
      %v4772 = vpop.f32.mrb[0].mxu0
      %v4773 = vadd.f32 %v3004, %v4772
      %4774 = vmatprep.mubr.bf16.mxu0 %v2808
      %4775 = vmatmul.mubr.bf16.gmra.mrb[0].mxu0 %v2807
      %v4776 = vpop.f32.mrb[0].mxu0
      %v4777 = vadd.f32 %v3000, %v4776
      %v4778 = vpop.f32.mrb[0].mxu0
      %v4779 = vadd.f32 %v3004, %v4778
      %v4780 = vpop.f32.mrb[0].mxu0
      %v4781 = vadd.f32 %v3000, %v4780
      %v4782 = vpop.f32.mrb[0].mxu0
      %v4783 = vadd.f32 %v3004, %v4782
      %4784 = vmatprep.mubr.bf16.mxu0 %v2810
      %4785 = vmatmul.mubr.bf16.gmra.mrb[0].mxu0 %v2809
      %v4786 = vpop.f32.mrb[0].mxu0
      %v4787 = vadd.f32 %v3000, %v4786
      %v4788 = vpop.f32.mrb[0].mxu0
      %v4789 = vadd.f32 %v3004, %v4788
      %v4790 = vpop.f32.mrb[0].mxu0
      %v4791 = vadd.f32 %v3000, %v4790
      %v4792 = vpop.f32.mrb[0].mxu0
      %v4793 = vadd.f32 %v3004, %v4792
      %4794 = vmatprep.mubr.bf16.mxu0 %v2812
      %4795 = vmatmul.mubr.bf16.gmra.mrb[0].mxu0 %v2811
      %v4796 = vpop.f32.mrb[0].mxu0
      %v4797 = vadd.f32 %v3000, %v4796
      %v4798 = vpop.f32.mrb[0].mxu0
      %v4799 = vadd.f32 %v3004, %v4798
      %v4800 = vpop.f32.mrb[0].mxu0
      %v4801 = vadd.f32 %v3000, %v4800
      %v4802 = vpop.f32.mrb[0].mxu0
      %v4803 = vadd.f32 %v3004, %v4802
      %4804 = vmatprep.mubr.bf16.mxu0 %v2814
      %4805 = vmatmul.mubr.bf16.gmra.mrb[0].mxu0 %v2813
      %v4806 = vpop.f32.mrb[0].mxu0
      %v4807 = vadd.f32 %v3000, %v4806
      %v4808 = vpop.f32.mrb[0].mxu0
      %v4809 = vadd.f32 %v3004, %v4808
      %v4810 = vpop.f32.mrb[0].mxu0
      %v4811 = vadd.f32 %v3000, %v4810
      %v4812 = vpop.f32.mrb[0].mxu0
      %v4813 = vadd.f32 %v3004, %v4812
      %4814 = vmatprep.mubr.bf16.mxu0 %v2816
      %4815 = vmatmul.mubr.bf16.gmra.mrb[0].mxu0 %v2815
      %v4816 = vpop.f32.mrb[0].mxu0
      %v4817 = vadd.f32 %v3000, %v4816
      %v4818 = vpop.f32.mrb[0].mxu0
      %v4819 = vadd.f32 %v3004, %v4818
      %v4820 = vpop.f32.mrb[0].mxu0
      %v4821 = vadd.f32 %v3000, %v4820
      %v4822 = vpop.f32.mrb[0].mxu0
      %v4823 = vadd.f32 %v3004, %v4822
      %4824 = vmatprep.mubr.bf16.mxu0 %v2818
      %4825 = vmatmul.mubr.bf16.gmra.mrb[0].mxu0 %v2817
      %v4826 = vpop.f32.mrb[0].mxu0
      %v4827 = vadd.f32 %v3000, %v4826
      %v4828 = vpop.f32.mrb[0].mxu0
      %v4829 = vadd.f32 %v3004, %v4828
      %v4830 = vpop.f32.mrb[0].mxu0
      %v4831 = vadd.f32 %v3000, %v4830
      %v4832 = vpop.f32.mrb[0].mxu0
      %v4833 = vadd.f32 %v3004, %v4832
      %4834 = vmatprep.mubr.bf16.mxu0 %v2820
      %4835 = vmatmul.mubr.bf16.gmra.mrb[0].mxu0 %v2819
      %v4836 = vpop.f32.mrb[0].mxu0
      %v4837 = vadd.f32 %v3000, %v4836
      %v4838 = vpop.f32.mrb[0].mxu0
      %v4839 = vadd.f32 %v3004, %v4838
      %v4840 = vpop.f32.mrb[0].mxu0
      %v4841 = vadd.f32 %v3000, %v4840
      %v4842 = vpop.f32.mrb[0].mxu0
      %v4843 = vadd.f32 %v3004, %v4842
      %4844 = vmatprep.mubr.bf16.mxu0 %v2822
      %4845 = vmatmul.mubr.bf16.gmra.mrb[0].mxu0 %v2821
      %v4846 = vpop.f32.mrb[0].mxu0
      %v4847 = vadd.f32 %v3000, %v4846
      %v4848 = vpop.f32.mrb[0].mxu0
      %v4849 = vadd.f32 %v3004, %v4848
      %v4850 = vpop.f32.mrb[0].mxu0
      %v4851 = vadd.f32 %v3000, %v4850
      %v4852 = vpop.f32.mrb[0].mxu0
      %v4853 = vadd.f32 %v3004, %v4852
      %4854 = vmatprep.mubr.bf16.mxu0 %v2824
      %4855 = vmatmul.mubr.bf16.gmra.mrb[0].mxu0 %v2823
      %v4856 = vpop.f32.mrb[0].mxu0
      %v4857 = vadd.f32 %v3000, %v4856
      %v4858 = vpop.f32.mrb[0].mxu0
      %v4859 = vadd.f32 %v3004, %v4858
      %v4860 = vpop.f32.mrb[0].mxu0
      %v4861 = vadd.f32 %v3000, %v4860
      %v4862 = vpop.f32.mrb[0].mxu0
      %v4863 = vadd.f32 %v3004, %v4862
      %4864 = vmatprep.mubr.bf16.mxu0 %v2826
      %4865 = vmatmul.mubr.bf16.gmra.mrb[0].mxu0 %v2825
      %v4866 = vpop.f32.mrb[0].mxu0
      %v4867 = vadd.f32 %v3000, %v4866
      %v4868 = vpop.f32.mrb[0].mxu0
      %v4869 = vadd.f32 %v3004, %v4868
      %v4870 = vpop.f32.mrb[0].mxu0
      %v4871 = vadd.f32 %v3000, %v4870
      %v4872 = vpop.f32.mrb[0].mxu0
      %v4873 = vadd.f32 %v3004, %v4872
      %4874 = vmatprep.mubr.bf16.mxu0 %v2828
      %4875 = vmatmul.mubr.bf16.gmra.mrb[0].mxu0 %v2827
      %v4876 = vpop.f32.mrb[0].mxu0
      %v4877 = vadd.f32 %v3000, %v4876
      %v4878 = vpop.f32.mrb[0].mxu0
      %v4879 = vadd.f32 %v3004, %v4878
      %v4880 = vpop.f32.mrb[0].mxu0
      %v4881 = vadd.f32 %v3000, %v4880
      %v4882 = vpop.f32.mrb[0].mxu0
      %v4883 = vadd.f32 %v3004, %v4882
      %4884 = vmatprep.mubr.bf16.mxu0 %v2830
      %4885 = vmatmul.mubr.bf16.gmra.mrb[0].mxu0 %v2829
      %v4886 = vpop.f32.mrb[0].mxu0
      %v4887 = vadd.f32 %v3000, %v4886
      %v4888 = vpop.f32.mrb[0].mxu0
      %v4889 = vadd.f32 %v3004, %v4888
      %v4890 = vpop.f32.mrb[0].mxu0
      %v4891 = vadd.f32 %v3000, %v4890
      %v4892 = vpop.f32.mrb[0].mxu0
      %v4893 = vadd.f32 %v3004, %v4892
      %4894 = vmatprep.mubr.bf16.mxu0 %v2832
      %4895 = vmatmul.mubr.bf16.gmra.mrb[0].mxu0 %v2831
      %v4896 = vpop.f32.mrb[0].mxu0
      %v4897 = vadd.f32 %v3000, %v4896
      %v4898 = vpop.f32.mrb[0].mxu0
      %v4899 = vadd.f32 %v3004, %v4898
      %v4900 = vpop.f32.mrb[0].mxu0
      %v4901 = vadd.f32 %v3000, %v4900
      %v4902 = vpop.f32.mrb[0].mxu0
      %v4903 = vadd.f32 %v3004, %v4902
      %4904 = vmatprep.mubr.bf16.mxu0 %v2834
      %4905 = vmatmul.mubr.bf16.gmra.mrb[0].mxu0 %v2833
      %v4906 = vpop.f32.mrb[0].mxu0
      %v4907 = vadd.f32 %v3000, %v4906
      %v4908 = vpop.f32.mrb[0].mxu0
      %v4909 = vadd.f32 %v3004, %v4908
      %v4910 = vpop.f32.mrb[0].mxu0
      %v4911 = vadd.f32 %v3000, %v4910
      %v4912 = vpop.f32.mrb[0].mxu0
      %v4913 = vadd.f32 %v3004, %v4912
      %4914 = vmatprep.mubr.bf16.mxu0 %v2836
      %4915 = vmatmul.mubr.bf16.gmra.mrb[0].mxu0 %v2835
      %v4916 = vpop.f32.mrb[0].mxu0
      %v4917 = vadd.f32 %v3000, %v4916
      %v4918 = vpop.f32.mrb[0].mxu0
      %v4919 = vadd.f32 %v3004, %v4918
      %v4920 = vpop.f32.mrb[0].mxu0
      %v4921 = vadd.f32 %v3000, %v4920
      %v4922 = vpop.f32.mrb[0].mxu0
      %v4923 = vadd.f32 %v3004, %v4922
      %4924 = vmatprep.mubr.bf16.mxu0 %v2838
      %4925 = vmatmul.mubr.bf16.gmra.mrb[0].mxu0 %v2837
      %v4926 = vpop.f32.mrb[0].mxu0
      %v4927 = vadd.f32 %v3000, %v4926
      %v4928 = vpop.f32.mrb[0].mxu0
      %v4929 = vadd.f32 %v3004, %v4928
      %v4930 = vpop.f32.mrb[0].mxu0
      %v4931 = vadd.f32 %v3000, %v4930
      %v4932 = vpop.f32.mrb[0].mxu0
      %v4933 = vadd.f32 %v3004, %v4932
      %4934 = vmatprep.mubr.bf16.mxu0 %v2840
      %4935 = vmatmul.mubr.bf16.gmra.mrb[0].mxu0 %v2839
      %v4936 = vpop.f32.mrb[0].mxu0
      %v4937 = vadd.f32 %v3000, %v4936
      %v4938 = vpop.f32.mrb[0].mxu0
      %v4939 = vadd.f32 %v3004, %v4938
      %v4940 = vpop.f32.mrb[0].mxu0
      %v4941 = vadd.f32 %v3000, %v4940
      %v4942 = vpop.f32.mrb[0].mxu0
      %v4943 = vadd.f32 %v3004, %v4942
      %4944 = vmatprep.mubr.bf16.mxu0 %v2842
      %4945 = vmatmul.mubr.bf16.gmra.mrb[0].mxu0 %v2841
      %v4946 = vpop.f32.mrb[0].mxu0
      %v4947 = vadd.f32 %v3000, %v4946
      %v4948 = vpop.f32.mrb[0].mxu0
      %v4949 = vadd.f32 %v3004, %v4948
      %v4950 = vpop.f32.mrb[0].mxu0
      %v4951 = vadd.f32 %v3000, %v4950
      %v4952 = vpop.f32.mrb[0].mxu0
      %v4953 = vadd.f32 %v3004, %v4952
      %4954 = vmatprep.mubr.bf16.mxu0 %v2844
      %4955 = vmatmul.mubr.bf16.gmra.mrb[0].mxu0 %v2843
      %v4956 = vpop.f32.mrb[0].mxu0
      %v4957 = vadd.f32 %v3000, %v4956
      %v4958 = vpop.f32.mrb[0].mxu0
      %v4959 = vadd.f32 %v3004, %v4958
      %v4960 = vpop.f32.mrb[0].mxu0
      %v4961 = vadd.f32 %v3000, %v4960
      %v4962 = vpop.f32.mrb[0].mxu0
      %v4963 = vadd.f32 %v3004, %v4962
      %4964 = vmatprep.mubr.bf16.mxu0 %v2846
      %4965 = vmatmul.mubr.bf16.gmra.mrb[0].mxu0 %v2845
      %v4966 = vpop.f32.mrb[0].mxu0
      %v4967 = vadd.f32 %v3000, %v4966
      %v4968 = vpop.f32.mrb[0].mxu0
      %v4969 = vadd.f32 %v3004, %v4968
      %v4970 = vpop.f32.mrb[0].mxu0
      %v4971 = vadd.f32 %v3000, %v4970
      %v4972 = vpop.f32.mrb[0].mxu0
      %v4973 = vadd.f32 %v3004, %v4972
      %4974 = vmatprep.mubr.bf16.mxu0 %v2848
      %4975 = vmatmul.mubr.bf16.gmra.mrb[0].mxu0 %v2847
      %v4976 = vpop.f32.mrb[0].mxu0
      %v4977 = vadd.f32 %v3000, %v4976
      %v4978 = vpop.f32.mrb[0].mxu0
      %v4979 = vadd.f32 %v3004, %v4978
      %v4980 = vpop.f32.mrb[0].mxu0
      %v4981 = vadd.f32 %v3000, %v4980
      %v4982 = vpop.f32.mrb[0].mxu0
      %v4983 = vadd.f32 %v3004, %v4982
      %4984 = vmatprep.mubr.bf16.mxu0 %v2850
      %4985 = vmatmul.mubr.bf16.gmra.mrb[0].mxu0 %v2849
      %v4986 = vpop.f32.mrb[0].mxu0
      %v4987 = vadd.f32 %v3000, %v4986
      %v4988 = vpop.f32.mrb[0].mxu0
      %v4989 = vadd.f32 %v3004, %v4988
      %v4990 = vpop.f32.mrb[0].mxu0
      %v4991 = vadd.f32 %v3000, %v4990
      %v4992 = vpop.f32.mrb[0].mxu0
      %v4993 = vadd.f32 %v3004, %v4992
      %4994 = vmatprep.mubr.bf16.mxu0 %v2852
      %4995 = vmatmul.mubr.bf16.gmra.mrb[0].mxu0 %v2851
      %v4996 = vpop.f32.mrb[0].mxu0
      %v4997 = vadd.f32 %v3000, %v4996
      %v4998 = vpop.f32.mrb[0].mxu0
      %v4999 = vadd.f32 %v3004, %v4998
      %v5000 = vpop.f32.mrb[0].mxu0
      %v5001 = vadd.f32 %v3000, %v5000
      %v5002 = vpop.f32.mrb[0].mxu0
      %v5003 = vadd.f32 %v3004, %v5002
      %5004 = vmatprep.mubr.bf16.mxu0 %v2854
      %5005 = vmatmul.mubr.bf16.gmra.mrb[0].mxu0 %v2853
      %v5006 = vpop.f32.mrb[0].mxu0
      %v5007 = vadd.f32 %v3000, %v5006
      %v5008 = vpop.f32.mrb[0].mxu0
      %v5009 = vadd.f32 %v3004, %v5008
      %v5010 = vpop.f32.mrb[0].mxu0
      %v5011 = vadd.f32 %v3000, %v5010
      %v5012 = vpop.f32.mrb[0].mxu0
      %v5013 = vadd.f32 %v3004, %v5012
      %5014 = vmatprep.mubr.bf16.mxu0 %v2856
      %5015 = vmatmul.mubr.bf16.gmra.mrb[0].mxu0 %v2855
      %v5016 = vpop.f32.mrb[0].mxu0
      %v5017 = vadd.f32 %v3000, %v5016
      %v5018 = vpop.f32.mrb[0].mxu0
      %v5019 = vadd.f32 %v3004, %v5018
      %v5020 = vpop.f32.mrb[0].mxu0
      %v5021 = vadd.f32 %v3000, %v5020
      %v5022 = vpop.f32.mrb[0].mxu0
      %v5023 = vadd.f32 %v3004, %v5022
      %5024 = vmatprep.mubr.bf16.mxu0 %v2858
      %5025 = vmatmul.mubr.bf16.gmra.mrb[0].mxu0 %v2857
      %v5026 = vpop.f32.mrb[0].mxu0
      %v5027 = vadd.f32 %v3000, %v5026
      %v5028 = vpop.f32.mrb[0].mxu0
      %v5029 = vadd.f32 %v3004, %v5028
      %v5030 = vpop.f32.mrb[0].mxu0
      %v5031 = vadd.f32 %v3000, %v5030
      %v5032 = vpop.f32.mrb[0].mxu0
      %v5033 = vadd.f32 %v3004, %v5032
      %5034 = vmatprep.mubr.bf16.mxu0 %v2860
      %5035 = vmatmul.mubr.bf16.gmra.mrb[0].mxu0 %v2859
      %v5036 = vpop.f32.mrb[0].mxu0
      %v5037 = vadd.f32 %v3000, %v5036
      %v5038 = vpop.f32.mrb[0].mxu0
      %v5039 = vadd.f32 %v3004, %v5038
      %v5040 = vpop.f32.mrb[0].mxu0
      %v5041 = vadd.f32 %v3000, %v5040
      %v5042 = vpop.f32.mrb[0].mxu0
      %v5043 = vadd.f32 %v3004, %v5042
      %5044 = vmatprep.mubr.bf16.mxu0 %v2862
      %5045 = vmatmul.mubr.bf16.gmra.mrb[0].mxu0 %v2861
      %v5046 = vpop.f32.mrb[0].mxu0
      %v5047 = vadd.f32 %v3000, %v5046
      %v5048 = vpop.f32.mrb[0].mxu0
      %v5049 = vadd.f32 %v3004, %v5048
      %v5050 = vpop.f32.mrb[0].mxu0
      %v5051 = vadd.f32 %v3000, %v5050
      %v5052 = vpop.f32.mrb[0].mxu0
      %v5053 = vadd.f32 %v3004, %v5052
      %5054 = vmatprep.mubr.bf16.mxu0 %v2864
      %5055 = vmatmul.mubr.bf16.gmra.mrb[0].mxu0 %v2863
      %v5056 = vpop.f32.mrb[0].mxu0
      %v5057 = vadd.f32 %v3000, %v5056
      %v5058 = vpop.f32.mrb[0].mxu0
      %v5059 = vadd.f32 %v3004, %v5058
      %v5060 = vpop.f32.mrb[0].mxu0
      %v5061 = vadd.f32 %v3000, %v5060
      %v5062 = vpop.f32.mrb[0].mxu0
      %v5063 = vadd.f32 %v3004, %v5062
      %5064 = vmatprep.mubr.bf16.mxu0 %v2866
      %5065 = vmatmul.mubr.bf16.gmra.mrb[0].mxu0 %v2865
      %v5066 = vpop.f32.mrb[0].mxu0
      %v5067 = vadd.f32 %v3000, %v5066
      %v5068 = vpop.f32.mrb[0].mxu0
      %v5069 = vadd.f32 %v3004, %v5068
      %v5070 = vpop.f32.mrb[0].mxu0
      %v5071 = vadd.f32 %v3000, %v5070
      %v5072 = vpop.f32.mrb[0].mxu0
      %v5073 = vadd.f32 %v3004, %v5072
      %5074 = vmatprep.mubr.bf16.mxu0 %v2868
      %5075 = vmatmul.mubr.bf16.gmra.mrb[0].mxu0 %v2867
      %v5076 = vpop.f32.mrb[0].mxu0
      %v5077 = vadd.f32 %v3000, %v5076
      %v5078 = vpop.f32.mrb[0].mxu0
      %v5079 = vadd.f32 %v3004, %v5078
      %v5080 = vpop.f32.mrb[0].mxu0
      %v5081 = vadd.f32 %v3000, %v5080
      %v5082 = vpop.f32.mrb[0].mxu0
      %v5083 = vadd.f32 %v3004, %v5082
      %5084 = vmatprep.mubr.bf16.mxu0 %v2870
      %5085 = vmatmul.mubr.bf16.gmra.mrb[0].mxu0 %v2869
      %v5086 = vpop.f32.mrb[0].mxu0
      %v5087 = vadd.f32 %v3000, %v5086
      %v5088 = vpop.f32.mrb[0].mxu0
      %v5089 = vadd.f32 %v3004, %v5088
      %v5090 = vpop.f32.mrb[0].mxu0
      %v5091 = vadd.f32 %v3000, %v5090
      %v5092 = vpop.f32.mrb[0].mxu0
      %v5093 = vadd.f32 %v3004, %v5092
      %5094 = vmatprep.mubr.bf16.mxu0 %v2872
      %5095 = vmatmul.mubr.bf16.gmra.mrb[0].mxu0 %v2871
      %v5096 = vpop.f32.mrb[0].mxu0
      %v5097 = vadd.f32 %v3000, %v5096
      %v5098 = vpop.f32.mrb[0].mxu0
      %v5099 = vadd.f32 %v3004, %v5098
      %v5100 = vpop.f32.mrb[0].mxu0
      %v5101 = vadd.f32 %v3000, %v5100
      %v5102 = vpop.f32.mrb[0].mxu0
      %v5103 = vadd.f32 %v3004, %v5102
      %5104 = vmatprep.mubr.bf16.mxu0 %v2874
      %5105 = vmatmul.mubr.bf16.gmra.mrb[0].mxu0 %v2873
      %v5106 = vpop.f32.mrb[0].mxu0
      %v5107 = vadd.f32 %v3000, %v5106
      %v5108 = vpop.f32.mrb[0].mxu0
      %v5109 = vadd.f32 %v3004, %v5108
      %v5110 = vpop.f32.mrb[0].mxu0
      %v5111 = vadd.f32 %v3000, %v5110
      %v5112 = vpop.f32.mrb[0].mxu0
      %v5113 = vadd.f32 %v3004, %v5112
      %5114 = vmatprep.mubr.bf16.mxu0 %v2876
      %5115 = vmatmul.mubr.bf16.gmra.mrb[0].mxu0 %v2875
      %v5116 = vpop.f32.mrb[0].mxu0
      %v5117 = vadd.f32 %v3000, %v5116
      %v5118 = vpop.f32.mrb[0].mxu0
      %v5119 = vadd.f32 %v3004, %v5118
      %v5120 = vpop.f32.mrb[0].mxu0
      %v5121 = vadd.f32 %v3000, %v5120
      %v5122 = vpop.f32.mrb[0].mxu0
      %v5123 = vadd.f32 %v3004, %v5122
      %5124 = vmatprep.mubr.bf16.mxu0 %v2878
      %5125 = vmatmul.mubr.bf16.gmra.mrb[0].mxu0 %v2877
      %v5126 = vpop.f32.mrb[0].mxu0
      %v5127 = vadd.f32 %v3000, %v5126
      %v5128 = vpop.f32.mrb[0].mxu0
      %v5129 = vadd.f32 %v3004, %v5128
      %v5130 = vpop.f32.mrb[0].mxu0
      %v5131 = vadd.f32 %v3000, %v5130
      %v5132 = vpop.f32.mrb[0].mxu0
      %v5133 = vadd.f32 %v3004, %v5132
      %5134 = vmatprep.mubr.bf16.mxu0 %v2880
      %5135 = vmatmul.mubr.bf16.gmra.mrb[0].mxu0 %v2879
      %v5136 = vpop.f32.mrb[0].mxu0
      %v5137 = vadd.f32 %v3000, %v5136
      %v5138 = vpop.f32.mrb[0].mxu0
      %v5139 = vadd.f32 %v3004, %v5138
      %v5140 = vpop.f32.mrb[0].mxu0
      %v5141 = vadd.f32 %v3000, %v5140
      %v5142 = vpop.f32.mrb[0].mxu0
      %v5143 = vadd.f32 %v3004, %v5142
      %5144 = vmatprep.mubr.bf16.mxu0 %v2882
      %5145 = vmatmul.mubr.bf16.gmra.mrb[0].mxu0 %v2881
      %v5146 = vpop.f32.mrb[0].mxu0
      %v5147 = vadd.f32 %v3000, %v5146
      %v5148 = vpop.f32.mrb[0].mxu0
      %v5149 = vadd.f32 %v3004, %v5148
      %v5150 = vpop.f32.mrb[0].mxu0
      %v5151 = vadd.f32 %v3000, %v5150
      %v5152 = vpop.f32.mrb[0].mxu0
      %v5153 = vadd.f32 %v3004, %v5152
      %5154 = vmatprep.mubr.bf16.mxu0 %v2884
      %5155 = vmatmul.mubr.bf16.gmra.mrb[0].mxu0 %v2883
      %v5156 = vpop.f32.mrb[0].mxu0
      %v5157 = vadd.f32 %v3000, %v5156
      %v5158 = vpop.f32.mrb[0].mxu0
      %v5159 = vadd.f32 %v3004, %v5158
      %v5160 = vpop.f32.mrb[0].mxu0
      %v5161 = vadd.f32 %v3000, %v5160
      %v5162 = vpop.f32.mrb[0].mxu0
      %v5163 = vadd.f32 %v3004, %v5162
      %5164 = vmatprep.mubr.bf16.mxu0 %v2886
      %5165 = vmatmul.mubr.bf16.gmra.mrb[0].mxu0 %v2885
      %v5166 = vpop.f32.mrb[0].mxu0
      %v5167 = vadd.f32 %v3000, %v5166
      %v5168 = vpop.f32.mrb[0].mxu0
      %v5169 = vadd.f32 %v3004, %v5168
      %v5170 = vpop.f32.mrb[0].mxu0
      %v5171 = vadd.f32 %v3000, %v5170
      %v5172 = vpop.f32.mrb[0].mxu0
      %v5173 = vadd.f32 %v3004, %v5172
      %5174 = vmatprep.mubr.bf16.mxu0 %v2888
      %5175 = vmatmul.mubr.bf16.gmra.mrb[0].mxu0 %v2887
      %v5176 = vpop.f32.mrb[0].mxu0
      %v5177 = vadd.f32 %v3000, %v5176
      %v5178 = vpop.f32.mrb[0].mxu0
      %v5179 = vadd.f32 %v3004, %v5178
      %v5180 = vpop.f32.mrb[0].mxu0
      %v5181 = vadd.f32 %v3000, %v5180
      %v5182 = vpop.f32.mrb[0].mxu0
      %v5183 = vadd.f32 %v3004, %v5182
      %5184 = vmatprep.mubr.bf16.mxu0 %v2890
      %5185 = vmatmul.mubr.bf16.gmra.mrb[0].mxu0 %v2889
      %v5186 = vpop.f32.mrb[0].mxu0
      %v5187 = vadd.f32 %v3000, %v5186
      %v5188 = vpop.f32.mrb[0].mxu0
      %v5189 = vadd.f32 %v3004, %v5188
      %v5190 = vpop.f32.mrb[0].mxu0
      %v5191 = vadd.f32 %v3000, %v5190
      %v5192 = vpop.f32.mrb[0].mxu0
      %v5193 = vadd.f32 %v3004, %v5192
      %5194 = vmatprep.mubr.bf16.mxu0 %v2892
      %5195 = vmatmul.mubr.bf16.gmra.mrb[0].mxu0 %v2891
      %v5196 = vpop.f32.mrb[0].mxu0
      %v5197 = vadd.f32 %v3000, %v5196
      %v5198 = vpop.f32.mrb[0].mxu0
      %v5199 = vadd.f32 %v3004, %v5198
      %v5200 = vpop.f32.mrb[0].mxu0
      %v5201 = vadd.f32 %v3000, %v5200
      %v5202 = vpop.f32.mrb[0].mxu0
      %v5203 = vadd.f32 %v3004, %v5202
      %5204 = vmatprep.mubr.bf16.mxu0 %v2894
      %5205 = vmatmul.mubr.bf16.gmra.mrb[0].mxu0 %v2893
      %v5206 = vpop.f32.mrb[0].mxu0
      %v5207 = vadd.f32 %v3000, %v5206
      %v5208 = vpop.f32.mrb[0].mxu0
      %v5209 = vadd.f32 %v3004, %v5208
      %v5210 = vpop.f32.mrb[0].mxu0
      %v5211 = vadd.f32 %v3000, %v5210
      %v5212 = vpop.f32.mrb[0].mxu0
      %v5213 = vadd.f32 %v3004, %v5212
      %5214 = vmatprep.mubr.bf16.mxu0 %v2896
      %5215 = vmatmul.mubr.bf16.gmra.mrb[0].mxu0 %v2895
      %v5216 = vpop.f32.mrb[0].mxu0
      %v5217 = vadd.f32 %v3000, %v5216
      %v5218 = vpop.f32.mrb[0].mxu0
      %v5219 = vadd.f32 %v3004, %v5218
      %v5220 = vpop.f32.mrb[0].mxu0
      %v5221 = vadd.f32 %v3000, %v5220
      %v5222 = vpop.f32.mrb[0].mxu0
      %v5223 = vadd.f32 %v3004, %v5222
      %5224 = vmatprep.mubr.bf16.mxu0 %v2898
      %5225 = vmatmul.mubr.bf16.gmra.mrb[0].mxu0 %v2897
      %v5226 = vpop.f32.mrb[0].mxu0
      %v5227 = vadd.f32 %v3000, %v5226
      %v5228 = vpop.f32.mrb[0].mxu0
      %v5229 = vadd.f32 %v3004, %v5228
      %v5230 = vpop.f32.mrb[0].mxu0
      %v5231 = vadd.f32 %v3000, %v5230
      %v5232 = vpop.f32.mrb[0].mxu0
      %v5233 = vadd.f32 %v3004, %v5232
      %5234 = vmatprep.mubr.bf16.mxu0 %v2900
      %5235 = vmatmul.mubr.bf16.gmra.mrb[0].mxu0 %v2899
      %v5236 = vpop.f32.mrb[0].mxu0
      %v5237 = vadd.f32 %v3000, %v5236
      %v5238 = vpop.f32.mrb[0].mxu0
      %v5239 = vadd.f32 %v3004, %v5238
      %v5240 = vpop.f32.mrb[0].mxu0
      %v5241 = vadd.f32 %v3000, %v5240
      %v5242 = vpop.f32.mrb[0].mxu0
      %v5243 = vadd.f32 %v3004, %v5242
      %5244 = vmatprep.mubr.bf16.mxu0 %v2902
      %5245 = vmatmul.mubr.bf16.gmra.mrb[0].mxu0 %v2901
      %v5246 = vpop.f32.mrb[0].mxu0
      %v5247 = vadd.f32 %v3000, %v5246
      %v5248 = vpop.f32.mrb[0].mxu0
      %v5249 = vadd.f32 %v3004, %v5248
      %v5250 = vpop.f32.mrb[0].mxu0
      %v5251 = vadd.f32 %v3000, %v5250
      %v5252 = vpop.f32.mrb[0].mxu0
      %v5253 = vadd.f32 %v3004, %v5252
      %5254 = vmatprep.mubr.bf16.mxu0 %v2904
      %5255 = vmatmul.mubr.bf16.gmra.mrb[0].mxu0 %v2903
      %v5256 = vpop.f32.mrb[0].mxu0
      %v5257 = vadd.f32 %v3000, %v5256
      %v5258 = vpop.f32.mrb[0].mxu0
      %v5259 = vadd.f32 %v3004, %v5258
      %v5260 = vpop.f32.mrb[0].mxu0
      %v5261 = vadd.f32 %v3000, %v5260
      %v5262 = vpop.f32.mrb[0].mxu0
      %v5263 = vadd.f32 %v3004, %v5262
      %5264 = vmatprep.mubr.bf16.mxu0 %v2906
      %5265 = vmatmul.mubr.bf16.gmra.mrb[0].mxu0 %v2905
      %v5266 = vpop.f32.mrb[0].mxu0
      %v5267 = vadd.f32 %v3000, %v5266
      %v5268 = vpop.f32.mrb[0].mxu0
      %v5269 = vadd.f32 %v3004, %v5268
      %v5270 = vpop.f32.mrb[0].mxu0
      %v5271 = vadd.f32 %v3000, %v5270
      %v5272 = vpop.f32.mrb[0].mxu0
      %v5273 = vadd.f32 %v3004, %v5272
      %5274 = vmatprep.mubr.bf16.mxu0 %v2908
      %5275 = vmatmul.mubr.bf16.gmra.mrb[0].mxu0 %v2907
      %v5276 = vpop.f32.mrb[0].mxu0
      %v5277 = vadd.f32 %v3000, %v5276
      %v5278 = vpop.f32.mrb[0].mxu0
      %v5279 = vadd.f32 %v3004, %v5278
      %v5280 = vpop.f32.mrb[0].mxu0
      %v5281 = vadd.f32 %v3000, %v5280
      %v5282 = vpop.f32.mrb[0].mxu0
      %v5283 = vadd.f32 %v3004, %v5282
      %5284 = vmatprep.mubr.bf16.mxu0 %v2910
      %5285 = vmatmul.mubr.bf16.gmra.mrb[0].mxu0 %v2909
      %v5286 = vpop.f32.mrb[0].mxu0
      %v5287 = vadd.f32 %v3000, %v5286
      %v5288 = vpop.f32.mrb[0].mxu0
      %v5289 = vadd.f32 %v3004, %v5288
      %v5290 = vpop.f32.mrb[0].mxu0
      %v5291 = vadd.f32 %v3000, %v5290
      %v5292 = vpop.f32.mrb[0].mxu0
      %v5293 = vadd.f32 %v3004, %v5292
      %5294 = vmatprep.mubr.bf16.mxu0 %v2912
      %5295 = vmatmul.mubr.bf16.gmra.mrb[0].mxu0 %v2911
      %v5296 = vpop.f32.mrb[0].mxu0
      %v5297 = vadd.f32 %v3000, %v5296
      %v5298 = vpop.f32.mrb[0].mxu0
      %v5299 = vadd.f32 %v3004, %v5298
      %v5300 = vpop.f32.mrb[0].mxu0
      %v5301 = vadd.f32 %v3000, %v5300
      %v5302 = vpop.f32.mrb[0].mxu0
      %v5303 = vadd.f32 %v3004, %v5302
      %5304 = vmatprep.mubr.bf16.mxu0 %v2914
      %5305 = vmatmul.mubr.bf16.gmra.mrb[0].mxu0 %v2913
      %v5306 = vpop.f32.mrb[0].mxu0
      %v5307 = vadd.f32 %v3000, %v5306
      %v5308 = vpop.f32.mrb[0].mxu0
      %v5309 = vadd.f32 %v3004, %v5308
      %v5310 = vpop.f32.mrb[0].mxu0
      %v5311 = vadd.f32 %v3000, %v5310
      %v5312 = vpop.f32.mrb[0].mxu0
      %v5313 = vadd.f32 %v3004, %v5312
      %5314 = vmatprep.mubr.bf16.mxu0 %v2916
      %5315 = vmatmul.mubr.bf16.gmra.mrb[0].mxu0 %v2915
      %v5316 = vpop.f32.mrb[0].mxu0
      %v5317 = vadd.f32 %v3000, %v5316
      %v5318 = vpop.f32.mrb[0].mxu0
      %v5319 = vadd.f32 %v3004, %v5318
      %v5320 = vpop.f32.mrb[0].mxu0
      %v5321 = vadd.f32 %v3000, %v5320
      %v5322 = vpop.f32.mrb[0].mxu0
      %v5323 = vadd.f32 %v3004, %v5322
      %5324 = vmatprep.mubr.bf16.mxu0 %v2918
      %5325 = vmatmul.mubr.bf16.gmra.mrb[0].mxu0 %v2917
      %v5326 = vpop.f32.mrb[0].mxu0
      %v5327 = vadd.f32 %v3000, %v5326
      %v5328 = vpop.f32.mrb[0].mxu0
      %v5329 = vadd.f32 %v3004, %v5328
      %v5330 = vpop.f32.mrb[0].mxu0
      %v5331 = vadd.f32 %v3000, %v5330
      %v5332 = vpop.f32.mrb[0].mxu0
      %v5333 = vadd.f32 %v3004, %v5332
      %5334 = vmatprep.mubr.bf16.mxu0 %v2920
      %5335 = vmatmul.mubr.bf16.gmra.mrb[0].mxu0 %v2919
      %v5336 = vpop.f32.mrb[0].mxu0
      %v5337 = vadd.f32 %v3000, %v5336
      %v5338 = vpop.f32.mrb[0].mxu0
      %v5339 = vadd.f32 %v3004, %v5338
      %v5340 = vpop.f32.mrb[0].mxu0
      %v5341 = vadd.f32 %v3000, %v5340
      %v5342 = vpop.f32.mrb[0].mxu0
      %v5343 = vadd.f32 %v3004, %v5342
      %5344 = vmatprep.mubr.bf16.mxu0 %v2922
      %5345 = vmatmul.mubr.bf16.gmra.mrb[0].mxu0 %v2921
      %v5346 = vpop.f32.mrb[0].mxu0
      %v5347 = vadd.f32 %v3000, %v5346
      %v5348 = vpop.f32.mrb[0].mxu0
      %v5349 = vadd.f32 %v3004, %v5348
      %v5350 = vpop.f32.mrb[0].mxu0
      %v5351 = vadd.f32 %v3000, %v5350
      %v5352 = vpop.f32.mrb[0].mxu0
      %v5353 = vadd.f32 %v3004, %v5352
      %5354 = vdwg.mxu0
      %v5355 = vmax.f32 %v3364, 0.0
      %v5356 = vmax.f32 %v3366, 0.0
      %v5357 = vmax.f32 %v4377, 0.0
      %v5358 = vmax.f32 %v4379, 0.0
      %v5359 = vmax.f32 %v3368, 0.0
      %v5360 = vmax.f32 %v3370, 0.0
      %v5361 = vmax.f32 %v4381, 0.0
      %v5362 = vmax.f32 %v4383, 0.0
      %v5363 = vmax.f32 %v3374, 0.0
      %v5364 = vmax.f32 %v3376, 0.0
      %v5365 = vmax.f32 %v4387, 0.0
      %v5366 = vmax.f32 %v4389, 0.0
      %v5367 = vmax.f32 %v3378, 0.0
      %v5368 = vmax.f32 %v3380, 0.0
      %v5369 = vmax.f32 %v4391, 0.0
      %v5370 = vmax.f32 %v4393, 0.0
      %v5371 = vmax.f32 %v3384, 0.0
      %v5372 = vmax.f32 %v3386, 0.0
      %v5373 = vmax.f32 %v4397, 0.0
      %v5374 = vmax.f32 %v4399, 0.0
      %v5375 = vmax.f32 %v3388, 0.0
      %v5376 = vmax.f32 %v3390, 0.0
      %v5377 = vmax.f32 %v4401, 0.0
      %v5378 = vmax.f32 %v4403, 0.0
      %v5379 = vmax.f32 %v3394, 0.0
      %v5380 = vmax.f32 %v3396, 0.0
      %v5381 = vmax.f32 %v4407, 0.0
      %v5382 = vmax.f32 %v4409, 0.0
      %v5383 = vmax.f32 %v3398, 0.0
      %v5384 = vmax.f32 %v3400, 0.0
      %v5385 = vmax.f32 %v4411, 0.0
      %v5386 = vmax.f32 %v4413, 0.0
      %v5387 = vmax.f32 %v3404, 0.0
      %v5388 = vmax.f32 %v3406, 0.0
      %v5389 = vmax.f32 %v4417, 0.0
      %v5390 = vmax.f32 %v4419, 0.0
      %v5391 = vmax.f32 %v3408, 0.0
      %v5392 = vmax.f32 %v3410, 0.0
      %v5393 = vmax.f32 %v4421, 0.0
      %v5394 = vmax.f32 %v4423, 0.0
      %v5395 = vmax.f32 %v3414, 0.0
      %v5396 = vmax.f32 %v3416, 0.0
      %v5397 = vmax.f32 %v4427, 0.0
      %v5398 = vmax.f32 %v4429, 0.0
      %v5399 = vmax.f32 %v3418, 0.0
      %v5400 = vmax.f32 %v3420, 0.0
      %v5401 = vmax.f32 %v4431, 0.0
      %v5402 = vmax.f32 %v4433, 0.0
      %v5403 = vmax.f32 %v3424, 0.0
      %v5404 = vmax.f32 %v3426, 0.0
      %v5405 = vmax.f32 %v4437, 0.0
      %v5406 = vmax.f32 %v4439, 0.0
      %v5407 = vmax.f32 %v3428, 0.0
      %v5408 = vmax.f32 %v3430, 0.0
      %v5409 = vmax.f32 %v4441, 0.0
      %v5410 = vmax.f32 %v4443, 0.0
      %v5411 = vmax.f32 %v3434, 0.0
      %v5412 = vmax.f32 %v3436, 0.0
      %v5413 = vmax.f32 %v4447, 0.0
      %v5414 = vmax.f32 %v4449, 0.0
      %v5415 = vmax.f32 %v3438, 0.0
      %v5416 = vmax.f32 %v3440, 0.0
      %v5417 = vmax.f32 %v4451, 0.0
      %v5418 = vmax.f32 %v4453, 0.0
      %v5419 = vmax.f32 %v3444, 0.0
      %v5420 = vmax.f32 %v3446, 0.0
      %v5421 = vmax.f32 %v4457, 0.0
      %v5422 = vmax.f32 %v4459, 0.0
      %v5423 = vmax.f32 %v3448, 0.0
      %v5424 = vmax.f32 %v3450, 0.0
      %v5425 = vmax.f32 %v4461, 0.0
      %v5426 = vmax.f32 %v4463, 0.0
      %v5427 = vmax.f32 %v3454, 0.0
      %v5428 = vmax.f32 %v3456, 0.0
      %v5429 = vmax.f32 %v4467, 0.0
      %v5430 = vmax.f32 %v4469, 0.0
      %v5431 = vmax.f32 %v3458, 0.0
      %v5432 = vmax.f32 %v3460, 0.0
      %v5433 = vmax.f32 %v4471, 0.0
      %v5434 = vmax.f32 %v4473, 0.0
      %v5435 = vmax.f32 %v3464, 0.0
      %v5436 = vmax.f32 %v3466, 0.0
      %v5437 = vmax.f32 %v4477, 0.0
      %v5438 = vmax.f32 %v4479, 0.0
      %v5439 = vmax.f32 %v3468, 0.0
      %v5440 = vmax.f32 %v3470, 0.0
      %v5441 = vmax.f32 %v4481, 0.0
      %v5442 = vmax.f32 %v4483, 0.0
      %v5443 = vmax.f32 %v3474, 0.0
      %v5444 = vmax.f32 %v3476, 0.0
      %v5445 = vmax.f32 %v4487, 0.0
      %v5446 = vmax.f32 %v4489, 0.0
      %v5447 = vmax.f32 %v3478, 0.0
      %v5448 = vmax.f32 %v3480, 0.0
      %v5449 = vmax.f32 %v4491, 0.0
      %v5450 = vmax.f32 %v4493, 0.0
      %v5451 = vmax.f32 %v3484, 0.0
      %v5452 = vmax.f32 %v3486, 0.0
      %v5453 = vmax.f32 %v4497, 0.0
      %v5454 = vmax.f32 %v4499, 0.0
      %v5455 = vmax.f32 %v3488, 0.0
      %v5456 = vmax.f32 %v3490, 0.0
      %v5457 = vmax.f32 %v4501, 0.0
      %v5458 = vmax.f32 %v4503, 0.0
      %v5459 = vmax.f32 %v3494, 0.0
      %v5460 = vmax.f32 %v3496, 0.0
      %v5461 = vmax.f32 %v4507, 0.0
      %v5462 = vmax.f32 %v4509, 0.0
      %v5463 = vmax.f32 %v3498, 0.0
      %v5464 = vmax.f32 %v3500, 0.0
      %v5465 = vmax.f32 %v4511, 0.0
      %v5466 = vmax.f32 %v4513, 0.0
      %v5467 = vmax.f32 %v3504, 0.0
      %v5468 = vmax.f32 %v3506, 0.0
      %v5469 = vmax.f32 %v4517, 0.0
      %v5470 = vmax.f32 %v4519, 0.0
      %v5471 = vmax.f32 %v3508, 0.0
      %v5472 = vmax.f32 %v3510, 0.0
      %v5473 = vmax.f32 %v4521, 0.0
      %v5474 = vmax.f32 %v4523, 0.0
      %v5475 = vmax.f32 %v3514, 0.0
      %v5476 = vmax.f32 %v3516, 0.0
      %v5477 = vmax.f32 %v4527, 0.0
      %v5478 = vmax.f32 %v4529, 0.0
      %v5479 = vmax.f32 %v3518, 0.0
      %v5480 = vmax.f32 %v3520, 0.0
      %v5481 = vmax.f32 %v4531, 0.0
      %v5482 = vmax.f32 %v4533, 0.0
      %v5483 = vmax.f32 %v3524, 0.0
      %v5484 = vmax.f32 %v3526, 0.0
      %v5485 = vmax.f32 %v4537, 0.0
      %v5486 = vmax.f32 %v4539, 0.0
      %v5487 = vmax.f32 %v3528, 0.0
      %v5488 = vmax.f32 %v3530, 0.0
      %v5489 = vmax.f32 %v4541, 0.0
      %v5490 = vmax.f32 %v4543, 0.0
      %v5491 = vmax.f32 %v3534, 0.0
      %v5492 = vmax.f32 %v3536, 0.0
      %v5493 = vmax.f32 %v4547, 0.0
      %v5494 = vmax.f32 %v4549, 0.0
      %v5495 = vmax.f32 %v3538, 0.0
      %v5496 = vmax.f32 %v3540, 0.0
      %v5497 = vmax.f32 %v4551, 0.0
      %v5498 = vmax.f32 %v4553, 0.0
      %v5499 = vmax.f32 %v3544, 0.0
      %v5500 = vmax.f32 %v3546, 0.0
      %v5501 = vmax.f32 %v4557, 0.0
      %v5502 = vmax.f32 %v4559, 0.0
      %v5503 = vmax.f32 %v3548, 0.0
      %v5504 = vmax.f32 %v3550, 0.0
      %v5505 = vmax.f32 %v4561, 0.0
      %v5506 = vmax.f32 %v4563, 0.0
      %v5507 = vmax.f32 %v3554, 0.0
      %v5508 = vmax.f32 %v3556, 0.0
      %v5509 = vmax.f32 %v4567, 0.0
      %v5510 = vmax.f32 %v4569, 0.0
      %v5511 = vmax.f32 %v3558, 0.0
      %v5512 = vmax.f32 %v3560, 0.0
      %v5513 = vmax.f32 %v4571, 0.0
      %v5514 = vmax.f32 %v4573, 0.0
      %v5515 = vmax.f32 %v3564, 0.0
      %v5516 = vmax.f32 %v3566, 0.0
      %v5517 = vmax.f32 %v4577, 0.0
      %v5518 = vmax.f32 %v4579, 0.0
      %v5519 = vmax.f32 %v3568, 0.0
      %v5520 = vmax.f32 %v3570, 0.0
      %v5521 = vmax.f32 %v4581, 0.0
      %v5522 = vmax.f32 %v4583, 0.0
      %v5523 = vmax.f32 %v3574, 0.0
      %v5524 = vmax.f32 %v3576, 0.0
      %v5525 = vmax.f32 %v4587, 0.0
      %v5526 = vmax.f32 %v4589, 0.0
      %v5527 = vmax.f32 %v3578, 0.0
      %v5528 = vmax.f32 %v3580, 0.0
      %v5529 = vmax.f32 %v4591, 0.0
      %v5530 = vmax.f32 %v4593, 0.0
      %v5531 = vmax.f32 %v3584, 0.0
      %v5532 = vmax.f32 %v3586, 0.0
      %v5533 = vmax.f32 %v4597, 0.0
      %v5534 = vmax.f32 %v4599, 0.0
      %v5535 = vmax.f32 %v3588, 0.0
      %v5536 = vmax.f32 %v3590, 0.0
      %v5537 = vmax.f32 %v4601, 0.0
      %v5538 = vmax.f32 %v4603, 0.0
      %v5539 = vmax.f32 %v3594, 0.0
      %v5540 = vmax.f32 %v3596, 0.0
      %v5541 = vmax.f32 %v4607, 0.0
      %v5542 = vmax.f32 %v4609, 0.0
      %v5543 = vmax.f32 %v3598, 0.0
      %v5544 = vmax.f32 %v3600, 0.0
      %v5545 = vmax.f32 %v4611, 0.0
      %v5546 = vmax.f32 %v4613, 0.0
      %v5547 = vmax.f32 %v3604, 0.0
      %v5548 = vmax.f32 %v3606, 0.0
      %v5549 = vmax.f32 %v4617, 0.0
      %v5550 = vmax.f32 %v4619, 0.0
      %v5551 = vmax.f32 %v3608, 0.0
      %v5552 = vmax.f32 %v3610, 0.0
      %v5553 = vmax.f32 %v4621, 0.0
      %v5554 = vmax.f32 %v4623, 0.0
      %v5555 = vmax.f32 %v3614, 0.0
      %v5556 = vmax.f32 %v3616, 0.0
      %v5557 = vmax.f32 %v4627, 0.0
      %v5558 = vmax.f32 %v4629, 0.0
      %v5559 = vmax.f32 %v3618, 0.0
      %v5560 = vmax.f32 %v3620, 0.0
      %v5561 = vmax.f32 %v4631, 0.0
      %v5562 = vmax.f32 %v4633, 0.0
      %v5563 = vmax.f32 %v3624, 0.0
      %v5564 = vmax.f32 %v3626, 0.0
      %v5565 = vmax.f32 %v4637, 0.0
      %v5566 = vmax.f32 %v4639, 0.0
      %v5567 = vmax.f32 %v3628, 0.0
      %v5568 = vmax.f32 %v3630, 0.0
      %v5569 = vmax.f32 %v4641, 0.0
      %v5570 = vmax.f32 %v4643, 0.0
      %v5571 = vmax.f32 %v3634, 0.0
      %v5572 = vmax.f32 %v3636, 0.0
      %v5573 = vmax.f32 %v4647, 0.0
      %v5574 = vmax.f32 %v4649, 0.0
      %v5575 = vmax.f32 %v3638, 0.0
      %v5576 = vmax.f32 %v3640, 0.0
      %v5577 = vmax.f32 %v4651, 0.0
      %v5578 = vmax.f32 %v4653, 0.0
      %v5579 = vmax.f32 %v3644, 0.0
      %v5580 = vmax.f32 %v3646, 0.0
      %v5581 = vmax.f32 %v4657, 0.0
      %v5582 = vmax.f32 %v4659, 0.0
      %v5583 = vmax.f32 %v3648, 0.0
      %v5584 = vmax.f32 %v3650, 0.0
      %v5585 = vmax.f32 %v4661, 0.0
      %v5586 = vmax.f32 %v4663, 0.0
      %v5587 = vmax.f32 %v3654, 0.0
      %v5588 = vmax.f32 %v3656, 0.0
      %v5589 = vmax.f32 %v4667, 0.0
      %v5590 = vmax.f32 %v4669, 0.0
      %v5591 = vmax.f32 %v3658, 0.0
      %v5592 = vmax.f32 %v3660, 0.0
      %v5593 = vmax.f32 %v4671, 0.0
      %v5594 = vmax.f32 %v4673, 0.0
      %v5595 = vmax.f32 %v3664, 0.0
      %v5596 = vmax.f32 %v3666, 0.0
      %v5597 = vmax.f32 %v4677, 0.0
      %v5598 = vmax.f32 %v4679, 0.0
      %v5599 = vmax.f32 %v3668, 0.0
      %v5600 = vmax.f32 %v3670, 0.0
      %v5601 = vmax.f32 %v4681, 0.0
      %v5602 = vmax.f32 %v4683, 0.0
      %v5603 = vmax.f32 %v3674, 0.0
      %v5604 = vmax.f32 %v3676, 0.0
      %v5605 = vmax.f32 %v4687, 0.0
      %v5606 = vmax.f32 %v4689, 0.0
      %v5607 = vmax.f32 %v3678, 0.0
      %v5608 = vmax.f32 %v3680, 0.0
      %v5609 = vmax.f32 %v4691, 0.0
      %v5610 = vmax.f32 %v4693, 0.0
      %v5611 = vmax.f32 %v3684, 0.0
      %v5612 = vmax.f32 %v3686, 0.0
      %v5613 = vmax.f32 %v4697, 0.0
      %v5614 = vmax.f32 %v4699, 0.0
      %v5615 = vmax.f32 %v3688, 0.0
      %v5616 = vmax.f32 %v3690, 0.0
      %v5617 = vmax.f32 %v4701, 0.0
      %v5618 = vmax.f32 %v4703, 0.0
      %v5619 = vmax.f32 %v3694, 0.0
      %v5620 = vmax.f32 %v3696, 0.0
      %v5621 = vmax.f32 %v4707, 0.0
      %v5622 = vmax.f32 %v4709, 0.0
      %v5623 = vmax.f32 %v3698, 0.0
      %v5624 = vmax.f32 %v3700, 0.0
      %v5625 = vmax.f32 %v4711, 0.0
      %v5626 = vmax.f32 %v4713, 0.0
      %v5627 = vmax.f32 %v3704, 0.0
      %v5628 = vmax.f32 %v3706, 0.0
      %v5629 = vmax.f32 %v4717, 0.0
      %v5630 = vmax.f32 %v4719, 0.0
      %v5631 = vmax.f32 %v3708, 0.0
      %v5632 = vmax.f32 %v3710, 0.0
      %v5633 = vmax.f32 %v4721, 0.0
      %v5634 = vmax.f32 %v4723, 0.0
      %v5635 = vmax.f32 %v3714, 0.0
      %v5636 = vmax.f32 %v3716, 0.0
      %v5637 = vmax.f32 %v4727, 0.0
      %v5638 = vmax.f32 %v4729, 0.0
      %v5639 = vmax.f32 %v3718, 0.0
      %v5640 = vmax.f32 %v3720, 0.0
      %v5641 = vmax.f32 %v4731, 0.0
      %v5642 = vmax.f32 %v4733, 0.0
      %v5643 = vmax.f32 %v3724, 0.0
      %v5644 = vmax.f32 %v3726, 0.0
      %v5645 = vmax.f32 %v4737, 0.0
      %v5646 = vmax.f32 %v4739, 0.0
      %v5647 = vmax.f32 %v3728, 0.0
      %v5648 = vmax.f32 %v3730, 0.0
      %v5649 = vmax.f32 %v4741, 0.0
      %v5650 = vmax.f32 %v4743, 0.0
      %v5651 = vmax.f32 %v3734, 0.0
      %v5652 = vmax.f32 %v3736, 0.0
      %v5653 = vmax.f32 %v4747, 0.0
      %v5654 = vmax.f32 %v4749, 0.0
      %v5655 = vmax.f32 %v3738, 0.0
      %v5656 = vmax.f32 %v3740, 0.0
      %v5657 = vmax.f32 %v4751, 0.0
      %v5658 = vmax.f32 %v4753, 0.0
      %v5659 = vmax.f32 %v3744, 0.0
      %v5660 = vmax.f32 %v3746, 0.0
      %v5661 = vmax.f32 %v4757, 0.0
      %v5662 = vmax.f32 %v4759, 0.0
      %v5663 = vmax.f32 %v3748, 0.0
      %v5664 = vmax.f32 %v3750, 0.0
      %v5665 = vmax.f32 %v4761, 0.0
      %v5666 = vmax.f32 %v4763, 0.0
      %v5667 = vmax.f32 %v3754, 0.0
      %v5668 = vmax.f32 %v3756, 0.0
      %v5669 = vmax.f32 %v4767, 0.0
      %v5670 = vmax.f32 %v4769, 0.0
      %v5671 = vmax.f32 %v3758, 0.0
      %v5672 = vmax.f32 %v3760, 0.0
      %v5673 = vmax.f32 %v4771, 0.0
      %v5674 = vmax.f32 %v4773, 0.0
      %v5675 = vmax.f32 %v3764, 0.0
      %v5676 = vmax.f32 %v3766, 0.0
      %v5677 = vmax.f32 %v4777, 0.0
      %v5678 = vmax.f32 %v4779, 0.0
      %v5679 = vmax.f32 %v3768, 0.0
      %v5680 = vmax.f32 %v3770, 0.0
      %v5681 = vmax.f32 %v4781, 0.0
      %v5682 = vmax.f32 %v4783, 0.0
      %v5683 = vmax.f32 %v3774, 0.0
      %v5684 = vmax.f32 %v3776, 0.0
      %v5685 = vmax.f32 %v4787, 0.0
      %v5686 = vmax.f32 %v4789, 0.0
      %v5687 = vmax.f32 %v3778, 0.0
      %v5688 = vmax.f32 %v3780, 0.0
      %v5689 = vmax.f32 %v4791, 0.0
      %v5690 = vmax.f32 %v4793, 0.0
      %v5691 = vmax.f32 %v3784, 0.0
      %v5692 = vmax.f32 %v3786, 0.0
      %v5693 = vmax.f32 %v4797, 0.0
      %v5694 = vmax.f32 %v4799, 0.0
      %v5695 = vmax.f32 %v3788, 0.0
      %v5696 = vmax.f32 %v3790, 0.0
      %v5697 = vmax.f32 %v4801, 0.0
      %v5698 = vmax.f32 %v4803, 0.0
      %v5699 = vmax.f32 %v3794, 0.0
      %v5700 = vmax.f32 %v3796, 0.0
      %v5701 = vmax.f32 %v4807, 0.0
      %v5702 = vmax.f32 %v4809, 0.0
      %v5703 = vmax.f32 %v3798, 0.0
      %v5704 = vmax.f32 %v3800, 0.0
      %v5705 = vmax.f32 %v4811, 0.0
      %v5706 = vmax.f32 %v4813, 0.0
      %v5707 = vmax.f32 %v3804, 0.0
      %v5708 = vmax.f32 %v3806, 0.0
      %v5709 = vmax.f32 %v4817, 0.0
      %v5710 = vmax.f32 %v4819, 0.0
      %v5711 = vmax.f32 %v3808, 0.0
      %v5712 = vmax.f32 %v3810, 0.0
      %v5713 = vmax.f32 %v4821, 0.0
      %v5714 = vmax.f32 %v4823, 0.0
      %v5715 = vmax.f32 %v3814, 0.0
      %v5716 = vmax.f32 %v3816, 0.0
      %v5717 = vmax.f32 %v4827, 0.0
      %v5718 = vmax.f32 %v4829, 0.0
      %v5719 = vmax.f32 %v3818, 0.0
      %v5720 = vmax.f32 %v3820, 0.0
      %v5721 = vmax.f32 %v4831, 0.0
      %v5722 = vmax.f32 %v4833, 0.0
      %v5723 = vmax.f32 %v3824, 0.0
      %v5724 = vmax.f32 %v3826, 0.0
      %v5725 = vmax.f32 %v4837, 0.0
      %v5726 = vmax.f32 %v4839, 0.0
      %v5727 = vmax.f32 %v3828, 0.0
      %v5728 = vmax.f32 %v3830, 0.0
      %v5729 = vmax.f32 %v4841, 0.0
      %v5730 = vmax.f32 %v4843, 0.0
      %v5731 = vmax.f32 %v3834, 0.0
      %v5732 = vmax.f32 %v3836, 0.0
      %v5733 = vmax.f32 %v4847, 0.0
      %v5734 = vmax.f32 %v4849, 0.0
      %v5735 = vmax.f32 %v3838, 0.0
      %v5736 = vmax.f32 %v3840, 0.0
      %v5737 = vmax.f32 %v4851, 0.0
      %v5738 = vmax.f32 %v4853, 0.0
      %v5739 = vmax.f32 %v3844, 0.0
      %v5740 = vmax.f32 %v3846, 0.0
      %v5741 = vmax.f32 %v4857, 0.0
      %v5742 = vmax.f32 %v4859, 0.0
      %v5743 = vmax.f32 %v3848, 0.0
      %v5744 = vmax.f32 %v3850, 0.0
      %v5745 = vmax.f32 %v4861, 0.0
      %v5746 = vmax.f32 %v4863, 0.0
      %v5747 = vmax.f32 %v3854, 0.0
      %v5748 = vmax.f32 %v3856, 0.0
      %v5749 = vmax.f32 %v4867, 0.0
      %v5750 = vmax.f32 %v4869, 0.0
      %v5751 = vmax.f32 %v3858, 0.0
      %v5752 = vmax.f32 %v3860, 0.0
      %v5753 = vmax.f32 %v4871, 0.0
      %v5754 = vmax.f32 %v4873, 0.0
      %v5755 = vmax.f32 %v3864, 0.0
      %v5756 = vmax.f32 %v3866, 0.0
      %v5757 = vmax.f32 %v4877, 0.0
      %v5758 = vmax.f32 %v4879, 0.0
      %v5759 = vmax.f32 %v3868, 0.0
      %v5760 = vmax.f32 %v3870, 0.0
      %v5761 = vmax.f32 %v4881, 0.0
      %v5762 = vmax.f32 %v4883, 0.0
      %v5763 = vmax.f32 %v3874, 0.0
      %v5764 = vmax.f32 %v3876, 0.0
      %v5765 = vmax.f32 %v4887, 0.0
      %v5766 = vmax.f32 %v4889, 0.0
      %v5767 = vmax.f32 %v3878, 0.0
      %v5768 = vmax.f32 %v3880, 0.0
      %v5769 = vmax.f32 %v4891, 0.0
      %v5770 = vmax.f32 %v4893, 0.0
      %v5771 = vmax.f32 %v3884, 0.0
      %v5772 = vmax.f32 %v3886, 0.0
      %v5773 = vmax.f32 %v4897, 0.0
      %v5774 = vmax.f32 %v4899, 0.0
      %v5775 = vmax.f32 %v3888, 0.0
      %v5776 = vmax.f32 %v3890, 0.0
      %v5777 = vmax.f32 %v4901, 0.0
      %v5778 = vmax.f32 %v4903, 0.0
      %v5779 = vmax.f32 %v3894, 0.0
      %v5780 = vmax.f32 %v3896, 0.0
      %v5781 = vmax.f32 %v4907, 0.0
      %v5782 = vmax.f32 %v4909, 0.0
      %v5783 = vmax.f32 %v3898, 0.0
      %v5784 = vmax.f32 %v3900, 0.0
      %v5785 = vmax.f32 %v4911, 0.0
      %v5786 = vmax.f32 %v4913, 0.0
      %v5787 = vmax.f32 %v3904, 0.0
      %v5788 = vmax.f32 %v3906, 0.0
      %v5789 = vmax.f32 %v4917, 0.0
      %v5790 = vmax.f32 %v4919, 0.0
      %v5791 = vmax.f32 %v3908, 0.0
      %v5792 = vmax.f32 %v3910, 0.0
      %v5793 = vmax.f32 %v4921, 0.0
      %v5794 = vmax.f32 %v4923, 0.0
      %v5795 = vmax.f32 %v3914, 0.0
      %v5796 = vmax.f32 %v3916, 0.0
      %v5797 = vmax.f32 %v4927, 0.0
      %v5798 = vmax.f32 %v4929, 0.0
      %v5799 = vmax.f32 %v3918, 0.0
      %v5800 = vmax.f32 %v3920, 0.0
      %v5801 = vmax.f32 %v4931, 0.0
      %v5802 = vmax.f32 %v4933, 0.0
      %v5803 = vmax.f32 %v3924, 0.0
      %v5804 = vmax.f32 %v3926, 0.0
      %v5805 = vmax.f32 %v4937, 0.0
      %v5806 = vmax.f32 %v4939, 0.0
      %v5807 = vmax.f32 %v3928, 0.0
      %v5808 = vmax.f32 %v3930, 0.0
      %v5809 = vmax.f32 %v4941, 0.0
      %v5810 = vmax.f32 %v4943, 0.0
      %v5811 = vmax.f32 %v3934, 0.0
      %v5812 = vmax.f32 %v3936, 0.0
      %v5813 = vmax.f32 %v4947, 0.0
      %v5814 = vmax.f32 %v4949, 0.0
      %v5815 = vmax.f32 %v3938, 0.0
      %v5816 = vmax.f32 %v3940, 0.0
      %v5817 = vmax.f32 %v4951, 0.0
      %v5818 = vmax.f32 %v4953, 0.0
      %v5819 = vmax.f32 %v3944, 0.0
      %v5820 = vmax.f32 %v3946, 0.0
      %v5821 = vmax.f32 %v4957, 0.0
      %v5822 = vmax.f32 %v4959, 0.0
      %v5823 = vmax.f32 %v3948, 0.0
      %v5824 = vmax.f32 %v3950, 0.0
      %v5825 = vmax.f32 %v4961, 0.0
      %v5826 = vmax.f32 %v4963, 0.0
      %v5827 = vmax.f32 %v3954, 0.0
      %v5828 = vmax.f32 %v3956, 0.0
      %v5829 = vmax.f32 %v4967, 0.0
      %v5830 = vmax.f32 %v4969, 0.0
      %v5831 = vmax.f32 %v3958, 0.0
      %v5832 = vmax.f32 %v3960, 0.0
      %v5833 = vmax.f32 %v4971, 0.0
      %v5834 = vmax.f32 %v4973, 0.0
      %v5835 = vmax.f32 %v3964, 0.0
      %v5836 = vmax.f32 %v3966, 0.0
      %v5837 = vmax.f32 %v4977, 0.0
      %v5838 = vmax.f32 %v4979, 0.0
      %v5839 = vmax.f32 %v3968, 0.0
      %v5840 = vmax.f32 %v3970, 0.0
      %v5841 = vmax.f32 %v4981, 0.0
      %v5842 = vmax.f32 %v4983, 0.0
      %v5843 = vmax.f32 %v3974, 0.0
      %v5844 = vmax.f32 %v3976, 0.0
      %v5845 = vmax.f32 %v4987, 0.0
      %v5846 = vmax.f32 %v4989, 0.0
      %v5847 = vmax.f32 %v3978, 0.0
      %v5848 = vmax.f32 %v3980, 0.0
      %v5849 = vmax.f32 %v4991, 0.0
      %v5850 = vmax.f32 %v4993, 0.0
      %v5851 = vmax.f32 %v3984, 0.0
      %v5852 = vmax.f32 %v3986, 0.0
      %v5853 = vmax.f32 %v4997, 0.0
      %v5854 = vmax.f32 %v4999, 0.0
      %v5855 = vmax.f32 %v3988, 0.0
      %v5856 = vmax.f32 %v3990, 0.0
      %v5857 = vmax.f32 %v5001, 0.0
      %v5858 = vmax.f32 %v5003, 0.0
      %v5859 = vmax.f32 %v3994, 0.0
      %v5860 = vmax.f32 %v3996, 0.0
      %v5861 = vmax.f32 %v5007, 0.0
      %v5862 = vmax.f32 %v5009, 0.0
      %v5863 = vmax.f32 %v3998, 0.0
      %v5864 = vmax.f32 %v4000, 0.0
      %v5865 = vmax.f32 %v5011, 0.0
      %v5866 = vmax.f32 %v5013, 0.0
      %v5867 = vmax.f32 %v4004, 0.0
      %v5868 = vmax.f32 %v4006, 0.0
      %v5869 = vmax.f32 %v5017, 0.0
      %v5870 = vmax.f32 %v5019, 0.0
      %v5871 = vmax.f32 %v4008, 0.0
      %v5872 = vmax.f32 %v4010, 0.0
      %v5873 = vmax.f32 %v5021, 0.0
      %v5874 = vmax.f32 %v5023, 0.0
      %v5875 = vmax.f32 %v4014, 0.0
      %v5876 = vmax.f32 %v4016, 0.0
      %v5877 = vmax.f32 %v5027, 0.0
      %v5878 = vmax.f32 %v5029, 0.0
      %v5879 = vmax.f32 %v4018, 0.0
      %v5880 = vmax.f32 %v4020, 0.0
      %v5881 = vmax.f32 %v5031, 0.0
      %v5882 = vmax.f32 %v5033, 0.0
      %v5883 = vmax.f32 %v4024, 0.0
      %v5884 = vmax.f32 %v4026, 0.0
      %v5885 = vmax.f32 %v5037, 0.0
      %v5886 = vmax.f32 %v5039, 0.0
      %v5887 = vmax.f32 %v4028, 0.0
      %v5888 = vmax.f32 %v4030, 0.0
      %v5889 = vmax.f32 %v5041, 0.0
      %v5890 = vmax.f32 %v5043, 0.0
      %v5891 = vmax.f32 %v4034, 0.0
      %v5892 = vmax.f32 %v4036, 0.0
      %v5893 = vmax.f32 %v5047, 0.0
      %v5894 = vmax.f32 %v5049, 0.0
      %v5895 = vmax.f32 %v4038, 0.0
      %v5896 = vmax.f32 %v4040, 0.0
      %v5897 = vmax.f32 %v5051, 0.0
      %v5898 = vmax.f32 %v5053, 0.0
      %v5899 = vmax.f32 %v4044, 0.0
      %v5900 = vmax.f32 %v4046, 0.0
      %v5901 = vmax.f32 %v5057, 0.0
      %v5902 = vmax.f32 %v5059, 0.0
      %v5903 = vmax.f32 %v4048, 0.0
      %v5904 = vmax.f32 %v4050, 0.0
      %v5905 = vmax.f32 %v5061, 0.0
      %v5906 = vmax.f32 %v5063, 0.0
      %v5907 = vmax.f32 %v4054, 0.0
      %v5908 = vmax.f32 %v4056, 0.0
      %v5909 = vmax.f32 %v5067, 0.0
      %v5910 = vmax.f32 %v5069, 0.0
      %v5911 = vmax.f32 %v4058, 0.0
      %v5912 = vmax.f32 %v4060, 0.0
      %v5913 = vmax.f32 %v5071, 0.0
      %v5914 = vmax.f32 %v5073, 0.0
      %v5915 = vmax.f32 %v4064, 0.0
      %v5916 = vmax.f32 %v4066, 0.0
      %v5917 = vmax.f32 %v5077, 0.0
      %v5918 = vmax.f32 %v5079, 0.0
      %v5919 = vmax.f32 %v4068, 0.0
      %v5920 = vmax.f32 %v4070, 0.0
      %v5921 = vmax.f32 %v5081, 0.0
      %v5922 = vmax.f32 %v5083, 0.0
      %v5923 = vmax.f32 %v4074, 0.0
      %v5924 = vmax.f32 %v4076, 0.0
      %v5925 = vmax.f32 %v5087, 0.0
      %v5926 = vmax.f32 %v5089, 0.0
      %v5927 = vmax.f32 %v4078, 0.0
      %v5928 = vmax.f32 %v4080, 0.0
      %v5929 = vmax.f32 %v5091, 0.0
      %v5930 = vmax.f32 %v5093, 0.0
      %v5931 = vmax.f32 %v4084, 0.0
      %v5932 = vmax.f32 %v4086, 0.0
      %v5933 = vmax.f32 %v5097, 0.0
      %v5934 = vmax.f32 %v5099, 0.0
      %v5935 = vmax.f32 %v4088, 0.0
      %v5936 = vmax.f32 %v4090, 0.0
      %v5937 = vmax.f32 %v5101, 0.0
      %v5938 = vmax.f32 %v5103, 0.0
      %v5939 = vmax.f32 %v4094, 0.0
      %v5940 = vmax.f32 %v4096, 0.0
      %v5941 = vmax.f32 %v5107, 0.0
      %v5942 = vmax.f32 %v5109, 0.0
      %v5943 = vmax.f32 %v4098, 0.0
      %v5944 = vmax.f32 %v4100, 0.0
      %v5945 = vmax.f32 %v5111, 0.0
      %v5946 = vmax.f32 %v5113, 0.0
      %v5947 = vmax.f32 %v4104, 0.0
      %v5948 = vmax.f32 %v4106, 0.0
      %v5949 = vmax.f32 %v5117, 0.0
      %v5950 = vmax.f32 %v5119, 0.0
      %v5951 = vmax.f32 %v4108, 0.0
      %v5952 = vmax.f32 %v4110, 0.0
      %v5953 = vmax.f32 %v5121, 0.0
      %v5954 = vmax.f32 %v5123, 0.0
      %v5955 = vmax.f32 %v4114, 0.0
      %v5956 = vmax.f32 %v4116, 0.0
      %v5957 = vmax.f32 %v5127, 0.0
      %v5958 = vmax.f32 %v5129, 0.0
      %v5959 = vmax.f32 %v4118, 0.0
      %v5960 = vmax.f32 %v4120, 0.0
      %v5961 = vmax.f32 %v5131, 0.0
      %v5962 = vmax.f32 %v5133, 0.0
      %v5963 = vmax.f32 %v4124, 0.0
      %v5964 = vmax.f32 %v4126, 0.0
      %v5965 = vmax.f32 %v5137, 0.0
      %v5966 = vmax.f32 %v5139, 0.0
      %v5967 = vmax.f32 %v4128, 0.0
      %v5968 = vmax.f32 %v4130, 0.0
      %v5969 = vmax.f32 %v5141, 0.0
      %v5970 = vmax.f32 %v5143, 0.0
      %v5971 = vmax.f32 %v4134, 0.0
      %v5972 = vmax.f32 %v4136, 0.0
      %v5973 = vmax.f32 %v5147, 0.0
      %v5974 = vmax.f32 %v5149, 0.0
      %v5975 = vmax.f32 %v4138, 0.0
      %v5976 = vmax.f32 %v4140, 0.0
      %v5977 = vmax.f32 %v5151, 0.0
      %v5978 = vmax.f32 %v5153, 0.0
      %v5979 = vmax.f32 %v4144, 0.0
      %v5980 = vmax.f32 %v4146, 0.0
      %v5981 = vmax.f32 %v5157, 0.0
      %v5982 = vmax.f32 %v5159, 0.0
      %v5983 = vmax.f32 %v4148, 0.0
      %v5984 = vmax.f32 %v4150, 0.0
      %v5985 = vmax.f32 %v5161, 0.0
      %v5986 = vmax.f32 %v5163, 0.0
      %v5987 = vmax.f32 %v4154, 0.0
      %v5988 = vmax.f32 %v4156, 0.0
      %v5989 = vmax.f32 %v5167, 0.0
      %v5990 = vmax.f32 %v5169, 0.0
      %v5991 = vmax.f32 %v4158, 0.0
      %v5992 = vmax.f32 %v4160, 0.0
      %v5993 = vmax.f32 %v5171, 0.0
      %v5994 = vmax.f32 %v5173, 0.0
      %v5995 = vmax.f32 %v4164, 0.0
      %v5996 = vmax.f32 %v4166, 0.0
      %v5997 = vmax.f32 %v5177, 0.0
      %v5998 = vmax.f32 %v5179, 0.0
      %v5999 = vmax.f32 %v4168, 0.0
      %v6000 = vmax.f32 %v4170, 0.0
      %v6001 = vmax.f32 %v5181, 0.0
      %v6002 = vmax.f32 %v5183, 0.0
      %v6003 = vmax.f32 %v4174, 0.0
      %v6004 = vmax.f32 %v4176, 0.0
      %v6005 = vmax.f32 %v5187, 0.0
      %v6006 = vmax.f32 %v5189, 0.0
      %v6007 = vmax.f32 %v4178, 0.0
      %v6008 = vmax.f32 %v4180, 0.0
      %v6009 = vmax.f32 %v5191, 0.0
      %v6010 = vmax.f32 %v5193, 0.0
      %v6011 = vmax.f32 %v4184, 0.0
      %v6012 = vmax.f32 %v4186, 0.0
      %v6013 = vmax.f32 %v5197, 0.0
      %v6014 = vmax.f32 %v5199, 0.0
      %v6015 = vmax.f32 %v4188, 0.0
      %v6016 = vmax.f32 %v4190, 0.0
      %v6017 = vmax.f32 %v5201, 0.0
      %v6018 = vmax.f32 %v5203, 0.0
      %v6019 = vmax.f32 %v4194, 0.0
      %v6020 = vmax.f32 %v4196, 0.0
      %v6021 = vmax.f32 %v5207, 0.0
      %v6022 = vmax.f32 %v5209, 0.0
      %v6023 = vmax.f32 %v4198, 0.0
      %v6024 = vmax.f32 %v4200, 0.0
      %v6025 = vmax.f32 %v5211, 0.0
      %v6026 = vmax.f32 %v5213, 0.0
      %v6027 = vmax.f32 %v4204, 0.0
      %v6028 = vmax.f32 %v4206, 0.0
      %v6029 = vmax.f32 %v5217, 0.0
      %v6030 = vmax.f32 %v5219, 0.0
      %v6031 = vmax.f32 %v4208, 0.0
      %v6032 = vmax.f32 %v4210, 0.0
      %v6033 = vmax.f32 %v5221, 0.0
      %v6034 = vmax.f32 %v5223, 0.0
      %v6035 = vmax.f32 %v4214, 0.0
      %v6036 = vmax.f32 %v4216, 0.0
      %v6037 = vmax.f32 %v5227, 0.0
      %v6038 = vmax.f32 %v5229, 0.0
      %v6039 = vmax.f32 %v4218, 0.0
      %v6040 = vmax.f32 %v4220, 0.0
      %v6041 = vmax.f32 %v5231, 0.0
      %v6042 = vmax.f32 %v5233, 0.0
      %v6043 = vmax.f32 %v4224, 0.0
      %v6044 = vmax.f32 %v4226, 0.0
      %v6045 = vmax.f32 %v5237, 0.0
      %v6046 = vmax.f32 %v5239, 0.0
      %v6047 = vmax.f32 %v4228, 0.0
      %v6048 = vmax.f32 %v4230, 0.0
      %v6049 = vmax.f32 %v5241, 0.0
      %v6050 = vmax.f32 %v5243, 0.0
      %v6051 = vmax.f32 %v4234, 0.0
      %v6052 = vmax.f32 %v4236, 0.0
      %v6053 = vmax.f32 %v5247, 0.0
      %v6054 = vmax.f32 %v5249, 0.0
      %v6055 = vmax.f32 %v4238, 0.0
      %v6056 = vmax.f32 %v4240, 0.0
      %v6057 = vmax.f32 %v5251, 0.0
      %v6058 = vmax.f32 %v5253, 0.0
      %v6059 = vmax.f32 %v4244, 0.0
      %v6060 = vmax.f32 %v4246, 0.0
      %v6061 = vmax.f32 %v5257, 0.0
      %v6062 = vmax.f32 %v5259, 0.0
      %v6063 = vmax.f32 %v4248, 0.0
      %v6064 = vmax.f32 %v4250, 0.0
      %v6065 = vmax.f32 %v5261, 0.0
      %v6066 = vmax.f32 %v5263, 0.0
      %v6067 = vmax.f32 %v4254, 0.0
      %v6068 = vmax.f32 %v4256, 0.0
      %v6069 = vmax.f32 %v5267, 0.0
      %v6070 = vmax.f32 %v5269, 0.0
      %v6071 = vmax.f32 %v4258, 0.0
      %v6072 = vmax.f32 %v4260, 0.0
      %v6073 = vmax.f32 %v5271, 0.0
      %v6074 = vmax.f32 %v5273, 0.0
      %v6075 = vmax.f32 %v4264, 0.0
      %v6076 = vmax.f32 %v4266, 0.0
      %v6077 = vmax.f32 %v5277, 0.0
      %v6078 = vmax.f32 %v5279, 0.0
      %v6079 = vmax.f32 %v4268, 0.0
      %v6080 = vmax.f32 %v4270, 0.0
      %v6081 = vmax.f32 %v5281, 0.0
      %v6082 = vmax.f32 %v5283, 0.0
      %v6083 = vmax.f32 %v4274, 0.0
      %v6084 = vmax.f32 %v4276, 0.0
      %v6085 = vmax.f32 %v5287, 0.0
      %v6086 = vmax.f32 %v5289, 0.0
      %v6087 = vmax.f32 %v4278, 0.0
      %v6088 = vmax.f32 %v4280, 0.0
      %v6089 = vmax.f32 %v5291, 0.0
      %v6090 = vmax.f32 %v5293, 0.0
      %v6091 = vmax.f32 %v4284, 0.0
      %v6092 = vmax.f32 %v4286, 0.0
      %v6093 = vmax.f32 %v5297, 0.0
      %v6094 = vmax.f32 %v5299, 0.0
      %v6095 = vmax.f32 %v4288, 0.0
      %v6096 = vmax.f32 %v4290, 0.0
      %v6097 = vmax.f32 %v5301, 0.0
      %v6098 = vmax.f32 %v5303, 0.0
      %v6099 = vmax.f32 %v4294, 0.0
      %v6100 = vmax.f32 %v4296, 0.0
      %v6101 = vmax.f32 %v5307, 0.0
      %v6102 = vmax.f32 %v5309, 0.0
      %v6103 = vmax.f32 %v4298, 0.0
      %v6104 = vmax.f32 %v4300, 0.0
      %v6105 = vmax.f32 %v5311, 0.0
      %v6106 = vmax.f32 %v5313, 0.0
      %v6107 = vmax.f32 %v4304, 0.0
      %v6108 = vmax.f32 %v4306, 0.0
      %v6109 = vmax.f32 %v5317, 0.0
      %v6110 = vmax.f32 %v5319, 0.0
      %v6111 = vmax.f32 %v4308, 0.0
      %v6112 = vmax.f32 %v4310, 0.0
      %v6113 = vmax.f32 %v5321, 0.0
      %v6114 = vmax.f32 %v5323, 0.0
      %v6115 = vmax.f32 %v4314, 0.0
      %v6116 = vmax.f32 %v4316, 0.0
      %v6117 = vmax.f32 %v5327, 0.0
      %v6118 = vmax.f32 %v5329, 0.0
      %v6119 = vmax.f32 %v4318, 0.0
      %v6120 = vmax.f32 %v4320, 0.0
      %v6121 = vmax.f32 %v5331, 0.0
      %v6122 = vmax.f32 %v5333, 0.0
      %v6123 = vmax.f32 %v4324, 0.0
      %v6124 = vmax.f32 %v4326, 0.0
      %v6125 = vmax.f32 %v5337, 0.0
      %v6126 = vmax.f32 %v5339, 0.0
      %v6127 = vmax.f32 %v4328, 0.0
      %v6128 = vmax.f32 %v4330, 0.0
      %v6129 = vmax.f32 %v5341, 0.0
      %v6130 = vmax.f32 %v5343, 0.0
      %v6131 = vmax.f32 %v4334, 0.0
      %v6132 = vmax.f32 %v4336, 0.0
      %v6133 = vmax.f32 %v5347, 0.0
      %v6134 = vmax.f32 %v5349, 0.0
      %v6135 = vmax.f32 %v4338, 0.0
      %v6136 = vmax.f32 %v4340, 0.0
      %v6137 = vmax.f32 %v5351, 0.0
      %v6138 = vmax.f32 %v5353, 0.0
      %v6139 = vld [vmem:[#allocation2] sm:$0xff]
      %v6140 = vld [vmem:[#allocation2 + $0x8] sm:$0xff]
      %v6141 = vadd.f32 %v5355, %v5359
      %v6142 = vadd.f32 %v6141, %v5363
      %v6143 = vadd.f32 %v6142, %v5367
      %v6144 = vadd.f32 %v6143, %v5371
      %v6145 = vadd.f32 %v6144, %v5375
      %v6146 = vadd.f32 %v6145, %v5379
      %v6147 = vadd.f32 %v6146, %v5383
      %v6148 = vadd.f32 %v6147, %v5387
      %v6149 = vadd.f32 %v6148, %v5391
      %v6150 = vadd.f32 %v6149, %v5395
      %v6151 = vadd.f32 %v6150, %v5399
      %v6152 = vadd.f32 %v6151, %v5403
      %v6153 = vadd.f32 %v6152, %v5407
      %v6154 = vadd.f32 %v6153, %v5411
      %v6155 = vadd.f32 %v6154, %v5415
      %v6156 = vadd.f32 %v6155, %v5419
      %v6157 = vadd.f32 %v6156, %v5423
      %v6158 = vadd.f32 %v6157, %v5427
      %v6159 = vadd.f32 %v6158, %v5431
      %v6160 = vadd.f32 %v6159, %v5435
      %v6161 = vadd.f32 %v6160, %v5439
      %v6162 = vadd.f32 %v6161, %v5443
      %v6163 = vadd.f32 %v6162, %v5447
      %v6164 = vadd.f32 %v6163, %v5451
      %v6165 = vadd.f32 %v6164, %v5455
      %v6166 = vadd.f32 %v6165, %v5459
      %v6167 = vadd.f32 %v6166, %v5463
      %v6168 = vadd.f32 %v6167, %v5467
      %v6169 = vadd.f32 %v6168, %v5471
      %v6170 = vadd.f32 %v6169, %v5475
      %v6171 = vadd.f32 %v6170, %v5479
      %v6172 = vadd.f32 %v6171, %v5483
      %v6173 = vadd.f32 %v6172, %v5487
      %v6174 = vadd.f32 %v6173, %v5491
      %v6175 = vadd.f32 %v6174, %v5495
      %v6176 = vadd.f32 %v6175, %v5499
      %v6177 = vadd.f32 %v6176, %v5503
      %v6178 = vadd.f32 %v6177, %v5507
      %v6179 = vadd.f32 %v6178, %v5511
      %v6180 = vadd.f32 %v6179, %v5515
      %v6181 = vadd.f32 %v6180, %v5519
      %v6182 = vadd.f32 %v6181, %v5523
      %v6183 = vadd.f32 %v6182, %v5527
      %v6184 = vadd.f32 %v6183, %v5531
      %v6185 = vadd.f32 %v6184, %v5535
      %v6186 = vadd.f32 %v6185, %v5539
      %v6187 = vadd.f32 %v6186, %v5543
      %v6188 = vadd.f32 %v6187, %v5547
      %v6189 = vrot.slane %v6188, 4
      %v6190 = vadd.f32 %v6188, %v6189
      %v6191 = vrot.slane %v6190, 2
      %v6192 = vadd.f32 %v6190, %v6191
      %v6193 = vrot.slane %v6192, 1
      %v6194 = vadd.f32 %v6192, %v6193
      %v6195 = vadd.f32 %v5356, %v5360
      %v6196 = vadd.f32 %v6195, %v5364
      %v6197 = vadd.f32 %v6196, %v5368
      %v6198 = vadd.f32 %v6197, %v5372
      %v6199 = vadd.f32 %v6198, %v5376
      %v6200 = vadd.f32 %v6199, %v5380
      %v6201 = vadd.f32 %v6200, %v5384
      %v6202 = vadd.f32 %v6201, %v5388
      %v6203 = vadd.f32 %v6202, %v5392
      %v6204 = vadd.f32 %v6203, %v5396
      %v6205 = vadd.f32 %v6204, %v5400
      %v6206 = vadd.f32 %v6205, %v5404
      %v6207 = vadd.f32 %v6206, %v5408
      %v6208 = vadd.f32 %v6207, %v5412
      %v6209 = vadd.f32 %v6208, %v5416
      %v6210 = vadd.f32 %v6209, %v5420
      %v6211 = vadd.f32 %v6210, %v5424
      %v6212 = vadd.f32 %v6211, %v5428
      %v6213 = vadd.f32 %v6212, %v5432
      %v6214 = vadd.f32 %v6213, %v5436
      %v6215 = vadd.f32 %v6214, %v5440
      %v6216 = vadd.f32 %v6215, %v5444
      %v6217 = vadd.f32 %v6216, %v5448
      %v6218 = vadd.f32 %v6217, %v5452
      %v6219 = vadd.f32 %v6218, %v5456
      %v6220 = vadd.f32 %v6219, %v5460
      %v6221 = vadd.f32 %v6220, %v5464
      %v6222 = vadd.f32 %v6221, %v5468
      %v6223 = vadd.f32 %v6222, %v5472
      %v6224 = vadd.f32 %v6223, %v5476
      %v6225 = vadd.f32 %v6224, %v5480
      %v6226 = vadd.f32 %v6225, %v5484
      %v6227 = vadd.f32 %v6226, %v5488
      %v6228 = vadd.f32 %v6227, %v5492
      %v6229 = vadd.f32 %v6228, %v5496
      %v6230 = vadd.f32 %v6229, %v5500
      %v6231 = vadd.f32 %v6230, %v5504
      %v6232 = vadd.f32 %v6231, %v5508
      %v6233 = vadd.f32 %v6232, %v5512
      %v6234 = vadd.f32 %v6233, %v5516
      %v6235 = vadd.f32 %v6234, %v5520
      %v6236 = vadd.f32 %v6235, %v5524
      %v6237 = vadd.f32 %v6236, %v5528
      %v6238 = vadd.f32 %v6237, %v5532
      %v6239 = vadd.f32 %v6238, %v5536
      %v6240 = vadd.f32 %v6239, %v5540
      %v6241 = vadd.f32 %v6240, %v5544
      %v6242 = vadd.f32 %v6241, %v5548
      %v6243 = vrot.slane %v6242, 4
      %v6244 = vadd.f32 %v6242, %v6243
      %v6245 = vrot.slane %v6244, 2
      %v6246 = vadd.f32 %v6244, %v6245
      %v6247 = vrot.slane %v6246, 1
      %v6248 = vadd.f32 %v6246, %v6247
      %v6249 = vadd.f32 %v5357, %v5361
      %v6250 = vadd.f32 %v6249, %v5365
      %v6251 = vadd.f32 %v6250, %v5369
      %v6252 = vadd.f32 %v6251, %v5373
      %v6253 = vadd.f32 %v6252, %v5377
      %v6254 = vadd.f32 %v6253, %v5381
      %v6255 = vadd.f32 %v6254, %v5385
      %v6256 = vadd.f32 %v6255, %v5389
      %v6257 = vadd.f32 %v6256, %v5393
      %v6258 = vadd.f32 %v6257, %v5397
      %v6259 = vadd.f32 %v6258, %v5401
      %v6260 = vadd.f32 %v6259, %v5405
      %v6261 = vadd.f32 %v6260, %v5409
      %v6262 = vadd.f32 %v6261, %v5413
      %v6263 = vadd.f32 %v6262, %v5417
      %v6264 = vadd.f32 %v6263, %v5421
      %v6265 = vadd.f32 %v6264, %v5425
      %v6266 = vadd.f32 %v6265, %v5429
      %v6267 = vadd.f32 %v6266, %v5433
      %v6268 = vadd.f32 %v6267, %v5437
      %v6269 = vadd.f32 %v6268, %v5441
      %v6270 = vadd.f32 %v6269, %v5445
      %v6271 = vadd.f32 %v6270, %v5449
      %v6272 = vadd.f32 %v6271, %v5453
      %v6273 = vadd.f32 %v6272, %v5457
      %v6274 = vadd.f32 %v6273, %v5461
      %v6275 = vadd.f32 %v6274, %v5465
      %v6276 = vadd.f32 %v6275, %v5469
      %v6277 = vadd.f32 %v6276, %v5473
      %v6278 = vadd.f32 %v6277, %v5477
      %v6279 = vadd.f32 %v6278, %v5481
      %v6280 = vadd.f32 %v6279, %v5485
      %v6281 = vadd.f32 %v6280, %v5489
      %v6282 = vadd.f32 %v6281, %v5493
      %v6283 = vadd.f32 %v6282, %v5497
      %v6284 = vadd.f32 %v6283, %v5501
      %v6285 = vadd.f32 %v6284, %v5505
      %v6286 = vadd.f32 %v6285, %v5509
      %v6287 = vadd.f32 %v6286, %v5513
      %v6288 = vadd.f32 %v6287, %v5517
      %v6289 = vadd.f32 %v6288, %v5521
      %v6290 = vadd.f32 %v6289, %v5525
      %v6291 = vadd.f32 %v6290, %v5529
      %v6292 = vadd.f32 %v6291, %v5533
      %v6293 = vadd.f32 %v6292, %v5537
      %v6294 = vadd.f32 %v6293, %v5541
      %v6295 = vadd.f32 %v6294, %v5545
      %v6296 = vadd.f32 %v6295, %v5549
      %v6297 = vrot.slane %v6296, 4
      %v6298 = vadd.f32 %v6296, %v6297
      %v6299 = vrot.slane %v6298, 2
      %v6300 = vadd.f32 %v6298, %v6299
      %v6301 = vrot.slane %v6300, 1
      %v6302 = vadd.f32 %v6300, %v6301
      %v6303 = vadd.f32 %v5358, %v5362
      %v6304 = vadd.f32 %v6303, %v5366
      %v6305 = vadd.f32 %v6304, %v5370
      %v6306 = vadd.f32 %v6305, %v5374
      %v6307 = vadd.f32 %v6306, %v5378
      %v6308 = vadd.f32 %v6307, %v5382
      %v6309 = vadd.f32 %v6308, %v5386
      %v6310 = vadd.f32 %v6309, %v5390
      %v6311 = vadd.f32 %v6310, %v5394
      %v6312 = vadd.f32 %v6311, %v5398
      %v6313 = vadd.f32 %v6312, %v5402
      %v6314 = vadd.f32 %v6313, %v5406
      %v6315 = vadd.f32 %v6314, %v5410
      %v6316 = vadd.f32 %v6315, %v5414
      %v6317 = vadd.f32 %v6316, %v5418
      %v6318 = vadd.f32 %v6317, %v5422
      %v6319 = vadd.f32 %v6318, %v5426
      %v6320 = vadd.f32 %v6319, %v5430
      %v6321 = vadd.f32 %v6320, %v5434
      %v6322 = vadd.f32 %v6321, %v5438
      %v6323 = vadd.f32 %v6322, %v5442
      %v6324 = vadd.f32 %v6323, %v5446
      %v6325 = vadd.f32 %v6324, %v5450
      %v6326 = vadd.f32 %v6325, %v5454
      %v6327 = vadd.f32 %v6326, %v5458
      %v6328 = vadd.f32 %v6327, %v5462
      %v6329 = vadd.f32 %v6328, %v5466
      %v6330 = vadd.f32 %v6329, %v5470
      %v6331 = vadd.f32 %v6330, %v5474
      %v6332 = vadd.f32 %v6331, %v5478
      %v6333 = vadd.f32 %v6332, %v5482
      %v6334 = vadd.f32 %v6333, %v5486
      %v6335 = vadd.f32 %v6334, %v5490
      %v6336 = vadd.f32 %v6335, %v5494
      %v6337 = vadd.f32 %v6336, %v5498
      %v6338 = vadd.f32 %v6337, %v5502
      %v6339 = vadd.f32 %v6338, %v5506
      %v6340 = vadd.f32 %v6339, %v5510
      %v6341 = vadd.f32 %v6340, %v5514
      %v6342 = vadd.f32 %v6341, %v5518
      %v6343 = vadd.f32 %v6342, %v5522
      %v6344 = vadd.f32 %v6343, %v5526
      %v6345 = vadd.f32 %v6344, %v5530
      %v6346 = vadd.f32 %v6345, %v5534
      %v6347 = vadd.f32 %v6346, %v5538
      %v6348 = vadd.f32 %v6347, %v5542
      %v6349 = vadd.f32 %v6348, %v5546
      %v6350 = vadd.f32 %v6349, %v5550
      %v6351 = vrot.slane %v6350, 4
      %v6352 = vadd.f32 %v6350, %v6351
      %v6353 = vrot.slane %v6352, 2
      %v6354 = vadd.f32 %v6352, %v6353
      %v6355 = vrot.slane %v6354, 1
      %v6356 = vadd.f32 %v6354, %v6355
      %v6357 = vadd.f32 %v5551, %v5555
      %v6358 = vadd.f32 %v6357, %v5559
      %v6359 = vadd.f32 %v6358, %v5563
      %v6360 = vadd.f32 %v6359, %v5567
      %v6361 = vadd.f32 %v6360, %v5571
      %v6362 = vadd.f32 %v6361, %v5575
      %v6363 = vadd.f32 %v6362, %v5579
      %v6364 = vadd.f32 %v6363, %v5583
      %v6365 = vadd.f32 %v6364, %v5587
      %v6366 = vadd.f32 %v6365, %v5591
      %v6367 = vadd.f32 %v6366, %v5595
      %v6368 = vadd.f32 %v6367, %v5599
      %v6369 = vadd.f32 %v6368, %v5603
      %v6370 = vadd.f32 %v6369, %v5607
      %v6371 = vadd.f32 %v6370, %v5611
      %v6372 = vadd.f32 %v6371, %v5615
      %v6373 = vadd.f32 %v6372, %v5619
      %v6374 = vadd.f32 %v6373, %v5623
      %v6375 = vadd.f32 %v6374, %v5627
      %v6376 = vadd.f32 %v6375, %v5631
      %v6377 = vadd.f32 %v6376, %v5635
      %v6378 = vadd.f32 %v6377, %v5639
      %v6379 = vadd.f32 %v6378, %v5643
      %v6380 = vadd.f32 %v6379, %v5647
      %v6381 = vadd.f32 %v6380, %v5651
      %v6382 = vadd.f32 %v6381, %v5655
      %v6383 = vadd.f32 %v6382, %v5659
      %v6384 = vadd.f32 %v6383, %v5663
      %v6385 = vadd.f32 %v6384, %v5667
      %v6386 = vadd.f32 %v6385, %v5671
      %v6387 = vadd.f32 %v6386, %v5675
      %v6388 = vadd.f32 %v6387, %v5679
      %v6389 = vadd.f32 %v6388, %v5683
      %v6390 = vadd.f32 %v6389, %v5687
      %v6391 = vadd.f32 %v6390, %v5691
      %v6392 = vadd.f32 %v6391, %v5695
      %v6393 = vadd.f32 %v6392, %v5699
      %v6394 = vadd.f32 %v6393, %v5703
      %v6395 = vadd.f32 %v6394, %v5707
      %v6396 = vadd.f32 %v6395, %v5711
      %v6397 = vadd.f32 %v6396, %v5715
      %v6398 = vadd.f32 %v6397, %v5719
      %v6399 = vadd.f32 %v6398, %v5723
      %v6400 = vadd.f32 %v6399, %v5727
      %v6401 = vadd.f32 %v6400, %v5731
      %v6402 = vadd.f32 %v6401, %v5735
      %v6403 = vadd.f32 %v6402, %v5739
      %v6404 = vadd.f32 %v6403, %v5743
      %v6405 = vrot.slane %v6404, 4
      %v6406 = vadd.f32 %v6404, %v6405
      %v6407 = vrot.slane %v6406, 2
      %v6408 = vadd.f32 %v6406, %v6407
      %v6409 = vrot.slane %v6408, 1
      %v6410 = vadd.f32 %v6408, %v6409
      %v6411 = vadd.f32 %v5552, %v5556
      %v6412 = vadd.f32 %v6411, %v5560
      %v6413 = vadd.f32 %v6412, %v5564
      %v6414 = vadd.f32 %v6413, %v5568
      %v6415 = vadd.f32 %v6414, %v5572
      %v6416 = vadd.f32 %v6415, %v5576
      %v6417 = vadd.f32 %v6416, %v5580
      %v6418 = vadd.f32 %v6417, %v5584
      %v6419 = vadd.f32 %v6418, %v5588
      %v6420 = vadd.f32 %v6419, %v5592
      %v6421 = vadd.f32 %v6420, %v5596
      %v6422 = vadd.f32 %v6421, %v5600
      %v6423 = vadd.f32 %v6422, %v5604
      %v6424 = vadd.f32 %v6423, %v5608
      %v6425 = vadd.f32 %v6424, %v5612
      %v6426 = vadd.f32 %v6425, %v5616
      %v6427 = vadd.f32 %v6426, %v5620
      %v6428 = vadd.f32 %v6427, %v5624
      %v6429 = vadd.f32 %v6428, %v5628
      %v6430 = vadd.f32 %v6429, %v5632
      %v6431 = vadd.f32 %v6430, %v5636
      %v6432 = vadd.f32 %v6431, %v5640
      %v6433 = vadd.f32 %v6432, %v5644
      %v6434 = vadd.f32 %v6433, %v5648
      %v6435 = vadd.f32 %v6434, %v5652
      %v6436 = vadd.f32 %v6435, %v5656
      %v6437 = vadd.f32 %v6436, %v5660
      %v6438 = vadd.f32 %v6437, %v5664
      %v6439 = vadd.f32 %v6438, %v5668
      %v6440 = vadd.f32 %v6439, %v5672
      %v6441 = vadd.f32 %v6440, %v5676
      %v6442 = vadd.f32 %v6441, %v5680
      %v6443 = vadd.f32 %v6442, %v5684
      %v6444 = vadd.f32 %v6443, %v5688
      %v6445 = vadd.f32 %v6444, %v5692
      %v6446 = vadd.f32 %v6445, %v5696
      %v6447 = vadd.f32 %v6446, %v5700
      %v6448 = vadd.f32 %v6447, %v5704
      %v6449 = vadd.f32 %v6448, %v5708
      %v6450 = vadd.f32 %v6449, %v5712
      %v6451 = vadd.f32 %v6450, %v5716
      %v6452 = vadd.f32 %v6451, %v5720
      %v6453 = vadd.f32 %v6452, %v5724
      %v6454 = vadd.f32 %v6453, %v5728
      %v6455 = vadd.f32 %v6454, %v5732
      %v6456 = vadd.f32 %v6455, %v5736
      %v6457 = vadd.f32 %v6456, %v5740
      %v6458 = vadd.f32 %v6457, %v5744
      %v6459 = vrot.slane %v6458, 4
      %v6460 = vadd.f32 %v6458, %v6459
      %v6461 = vrot.slane %v6460, 2
      %v6462 = vadd.f32 %v6460, %v6461
      %v6463 = vrot.slane %v6462, 1
      %v6464 = vadd.f32 %v6462, %v6463
      %v6465 = vadd.f32 %v5553, %v5557
      %v6466 = vadd.f32 %v6465, %v5561
      %v6467 = vadd.f32 %v6466, %v5565
      %v6468 = vadd.f32 %v6467, %v5569
      %v6469 = vadd.f32 %v6468, %v5573
      %v6470 = vadd.f32 %v6469, %v5577
      %v6471 = vadd.f32 %v6470, %v5581
      %v6472 = vadd.f32 %v6471, %v5585
      %v6473 = vadd.f32 %v6472, %v5589
      %v6474 = vadd.f32 %v6473, %v5593
      %v6475 = vadd.f32 %v6474, %v5597
      %v6476 = vadd.f32 %v6475, %v5601
      %v6477 = vadd.f32 %v6476, %v5605
      %v6478 = vadd.f32 %v6477, %v5609
      %v6479 = vadd.f32 %v6478, %v5613
      %v6480 = vadd.f32 %v6479, %v5617
      %v6481 = vadd.f32 %v6480, %v5621
      %v6482 = vadd.f32 %v6481, %v5625
      %v6483 = vadd.f32 %v6482, %v5629
      %v6484 = vadd.f32 %v6483, %v5633
      %v6485 = vadd.f32 %v6484, %v5637
      %v6486 = vadd.f32 %v6485, %v5641
      %v6487 = vadd.f32 %v6486, %v5645
      %v6488 = vadd.f32 %v6487, %v5649
      %v6489 = vadd.f32 %v6488, %v5653
      %v6490 = vadd.f32 %v6489, %v5657
      %v6491 = vadd.f32 %v6490, %v5661
      %v6492 = vadd.f32 %v6491, %v5665
      %v6493 = vadd.f32 %v6492, %v5669
      %v6494 = vadd.f32 %v6493, %v5673
      %v6495 = vadd.f32 %v6494, %v5677
      %v6496 = vadd.f32 %v6495, %v5681
      %v6497 = vadd.f32 %v6496, %v5685
      %v6498 = vadd.f32 %v6497, %v5689
      %v6499 = vadd.f32 %v6498, %v5693
      %v6500 = vadd.f32 %v6499, %v5697
      %v6501 = vadd.f32 %v6500, %v5701
      %v6502 = vadd.f32 %v6501, %v5705
      %v6503 = vadd.f32 %v6502, %v5709
      %v6504 = vadd.f32 %v6503, %v5713
      %v6505 = vadd.f32 %v6504, %v5717
      %v6506 = vadd.f32 %v6505, %v5721
      %v6507 = vadd.f32 %v6506, %v5725
      %v6508 = vadd.f32 %v6507, %v5729
      %v6509 = vadd.f32 %v6508, %v5733
      %v6510 = vadd.f32 %v6509, %v5737
      %v6511 = vadd.f32 %v6510, %v5741
      %v6512 = vadd.f32 %v6511, %v5745
      %v6513 = vrot.slane %v6512, 4
      %v6514 = vadd.f32 %v6512, %v6513
      %v6515 = vrot.slane %v6514, 2
      %v6516 = vadd.f32 %v6514, %v6515
      %v6517 = vrot.slane %v6516, 1
      %v6518 = vadd.f32 %v6516, %v6517
      %v6519 = vadd.f32 %v5554, %v5558
      %v6520 = vadd.f32 %v6519, %v5562
      %v6521 = vadd.f32 %v6520, %v5566
      %v6522 = vadd.f32 %v6521, %v5570
      %v6523 = vadd.f32 %v6522, %v5574
      %v6524 = vadd.f32 %v6523, %v5578
      %v6525 = vadd.f32 %v6524, %v5582
      %v6526 = vadd.f32 %v6525, %v5586
      %v6527 = vadd.f32 %v6526, %v5590
      %v6528 = vadd.f32 %v6527, %v5594
      %v6529 = vadd.f32 %v6528, %v5598
      %v6530 = vadd.f32 %v6529, %v5602
      %v6531 = vadd.f32 %v6530, %v5606
      %v6532 = vadd.f32 %v6531, %v5610
      %v6533 = vadd.f32 %v6532, %v5614
      %v6534 = vadd.f32 %v6533, %v5618
      %v6535 = vadd.f32 %v6534, %v5622
      %v6536 = vadd.f32 %v6535, %v5626
      %v6537 = vadd.f32 %v6536, %v5630
      %v6538 = vadd.f32 %v6537, %v5634
      %v6539 = vadd.f32 %v6538, %v5638
      %v6540 = vadd.f32 %v6539, %v5642
      %v6541 = vadd.f32 %v6540, %v5646
      %v6542 = vadd.f32 %v6541, %v5650
      %v6543 = vadd.f32 %v6542, %v5654
      %v6544 = vadd.f32 %v6543, %v5658
      %v6545 = vadd.f32 %v6544, %v5662
      %v6546 = vadd.f32 %v6545, %v5666
      %v6547 = vadd.f32 %v6546, %v5670
      %v6548 = vadd.f32 %v6547, %v5674
      %v6549 = vadd.f32 %v6548, %v5678
      %v6550 = vadd.f32 %v6549, %v5682
      %v6551 = vadd.f32 %v6550, %v5686
      %v6552 = vadd.f32 %v6551, %v5690
      %v6553 = vadd.f32 %v6552, %v5694
      %v6554 = vadd.f32 %v6553, %v5698
      %v6555 = vadd.f32 %v6554, %v5702
      %v6556 = vadd.f32 %v6555, %v5706
      %v6557 = vadd.f32 %v6556, %v5710
      %v6558 = vadd.f32 %v6557, %v5714
      %v6559 = vadd.f32 %v6558, %v5718
      %v6560 = vadd.f32 %v6559, %v5722
      %v6561 = vadd.f32 %v6560, %v5726
      %v6562 = vadd.f32 %v6561, %v5730
      %v6563 = vadd.f32 %v6562, %v5734
      %v6564 = vadd.f32 %v6563, %v5738
      %v6565 = vadd.f32 %v6564, %v5742
      %v6566 = vadd.f32 %v6565, %v5746
      %v6567 = vrot.slane %v6566, 4
      %v6568 = vadd.f32 %v6566, %v6567
      %v6569 = vrot.slane %v6568, 2
      %v6570 = vadd.f32 %v6568, %v6569
      %v6571 = vrot.slane %v6570, 1
      %v6572 = vadd.f32 %v6570, %v6571
      %v6573 = vadd.f32 %v5747, %v5751
      %v6574 = vadd.f32 %v6573, %v5755
      %v6575 = vadd.f32 %v6574, %v5759
      %v6576 = vadd.f32 %v6575, %v5763
      %v6577 = vadd.f32 %v6576, %v5767
      %v6578 = vadd.f32 %v6577, %v5771
      %v6579 = vadd.f32 %v6578, %v5775
      %v6580 = vadd.f32 %v6579, %v5779
      %v6581 = vadd.f32 %v6580, %v5783
      %v6582 = vadd.f32 %v6581, %v5787
      %v6583 = vadd.f32 %v6582, %v5791
      %v6584 = vadd.f32 %v6583, %v5795
      %v6585 = vadd.f32 %v6584, %v5799
      %v6586 = vadd.f32 %v6585, %v5803
      %v6587 = vadd.f32 %v6586, %v5807
      %v6588 = vadd.f32 %v6587, %v5811
      %v6589 = vadd.f32 %v6588, %v5815
      %v6590 = vadd.f32 %v6589, %v5819
      %v6591 = vadd.f32 %v6590, %v5823
      %v6592 = vadd.f32 %v6591, %v5827
      %v6593 = vadd.f32 %v6592, %v5831
      %v6594 = vadd.f32 %v6593, %v5835
      %v6595 = vadd.f32 %v6594, %v5839
      %v6596 = vadd.f32 %v6595, %v5843
      %v6597 = vadd.f32 %v6596, %v5847
      %v6598 = vadd.f32 %v6597, %v5851
      %v6599 = vadd.f32 %v6598, %v5855
      %v6600 = vadd.f32 %v6599, %v5859
      %v6601 = vadd.f32 %v6600, %v5863
      %v6602 = vadd.f32 %v6601, %v5867
      %v6603 = vadd.f32 %v6602, %v5871
      %v6604 = vadd.f32 %v6603, %v5875
      %v6605 = vadd.f32 %v6604, %v5879
      %v6606 = vadd.f32 %v6605, %v5883
      %v6607 = vadd.f32 %v6606, %v5887
      %v6608 = vadd.f32 %v6607, %v5891
      %v6609 = vadd.f32 %v6608, %v5895
      %v6610 = vadd.f32 %v6609, %v5899
      %v6611 = vadd.f32 %v6610, %v5903
      %v6612 = vadd.f32 %v6611, %v5907
      %v6613 = vadd.f32 %v6612, %v5911
      %v6614 = vadd.f32 %v6613, %v5915
      %v6615 = vadd.f32 %v6614, %v5919
      %v6616 = vadd.f32 %v6615, %v5923
      %v6617 = vadd.f32 %v6616, %v5927
      %v6618 = vadd.f32 %v6617, %v5931
      %v6619 = vadd.f32 %v6618, %v5935
      %v6620 = vadd.f32 %v6619, %v5939
      %v6621 = vrot.slane %v6620, 4
      %v6622 = vadd.f32 %v6620, %v6621
      %v6623 = vrot.slane %v6622, 2
      %v6624 = vadd.f32 %v6622, %v6623
      %v6625 = vrot.slane %v6624, 1
      %v6626 = vadd.f32 %v6624, %v6625
      %v6627 = vadd.f32 %v5748, %v5752
      %v6628 = vadd.f32 %v6627, %v5756
      %v6629 = vadd.f32 %v6628, %v5760
      %v6630 = vadd.f32 %v6629, %v5764
      %v6631 = vadd.f32 %v6630, %v5768
      %v6632 = vadd.f32 %v6631, %v5772
      %v6633 = vadd.f32 %v6632, %v5776
      %v6634 = vadd.f32 %v6633, %v5780
      %v6635 = vadd.f32 %v6634, %v5784
      %v6636 = vadd.f32 %v6635, %v5788
      %v6637 = vadd.f32 %v6636, %v5792
      %v6638 = vadd.f32 %v6637, %v5796
      %v6639 = vadd.f32 %v6638, %v5800
      %v6640 = vadd.f32 %v6639, %v5804
      %v6641 = vadd.f32 %v6640, %v5808
      %v6642 = vadd.f32 %v6641, %v5812
      %v6643 = vadd.f32 %v6642, %v5816
      %v6644 = vadd.f32 %v6643, %v5820
      %v6645 = vadd.f32 %v6644, %v5824
      %v6646 = vadd.f32 %v6645, %v5828
      %v6647 = vadd.f32 %v6646, %v5832
      %v6648 = vadd.f32 %v6647, %v5836
      %v6649 = vadd.f32 %v6648, %v5840
      %v6650 = vadd.f32 %v6649, %v5844
      %v6651 = vadd.f32 %v6650, %v5848
      %v6652 = vadd.f32 %v6651, %v5852
      %v6653 = vadd.f32 %v6652, %v5856
      %v6654 = vadd.f32 %v6653, %v5860
      %v6655 = vadd.f32 %v6654, %v5864
      %v6656 = vadd.f32 %v6655, %v5868
      %v6657 = vadd.f32 %v6656, %v5872
      %v6658 = vadd.f32 %v6657, %v5876
      %v6659 = vadd.f32 %v6658, %v5880
      %v6660 = vadd.f32 %v6659, %v5884
      %v6661 = vadd.f32 %v6660, %v5888
      %v6662 = vadd.f32 %v6661, %v5892
      %v6663 = vadd.f32 %v6662, %v5896
      %v6664 = vadd.f32 %v6663, %v5900
      %v6665 = vadd.f32 %v6664, %v5904
      %v6666 = vadd.f32 %v6665, %v5908
      %v6667 = vadd.f32 %v6666, %v5912
      %v6668 = vadd.f32 %v6667, %v5916
      %v6669 = vadd.f32 %v6668, %v5920
      %v6670 = vadd.f32 %v6669, %v5924
      %v6671 = vadd.f32 %v6670, %v5928
      %v6672 = vadd.f32 %v6671, %v5932
      %v6673 = vadd.f32 %v6672, %v5936
      %v6674 = vadd.f32 %v6673, %v5940
      %v6675 = vrot.slane %v6674, 4
      %v6676 = vadd.f32 %v6674, %v6675
      %v6677 = vrot.slane %v6676, 2
      %v6678 = vadd.f32 %v6676, %v6677
      %v6679 = vrot.slane %v6678, 1
      %v6680 = vadd.f32 %v6678, %v6679
      %v6681 = vadd.f32 %v5749, %v5753
      %v6682 = vadd.f32 %v6681, %v5757
      %v6683 = vadd.f32 %v6682, %v5761
      %v6684 = vadd.f32 %v6683, %v5765
      %v6685 = vadd.f32 %v6684, %v5769
      %v6686 = vadd.f32 %v6685, %v5773
      %v6687 = vadd.f32 %v6686, %v5777
      %v6688 = vadd.f32 %v6687, %v5781
      %v6689 = vadd.f32 %v6688, %v5785
      %v6690 = vadd.f32 %v6689, %v5789
      %v6691 = vadd.f32 %v6690, %v5793
      %v6692 = vadd.f32 %v6691, %v5797
      %v6693 = vadd.f32 %v6692, %v5801
      %v6694 = vadd.f32 %v6693, %v5805
      %v6695 = vadd.f32 %v6694, %v5809
      %v6696 = vadd.f32 %v6695, %v5813
      %v6697 = vadd.f32 %v6696, %v5817
      %v6698 = vadd.f32 %v6697, %v5821
      %v6699 = vadd.f32 %v6698, %v5825
      %v6700 = vadd.f32 %v6699, %v5829
      %v6701 = vadd.f32 %v6700, %v5833
      %v6702 = vadd.f32 %v6701, %v5837
      %v6703 = vadd.f32 %v6702, %v5841
      %v6704 = vadd.f32 %v6703, %v5845
      %v6705 = vadd.f32 %v6704, %v5849
      %v6706 = vadd.f32 %v6705, %v5853
      %v6707 = vadd.f32 %v6706, %v5857
      %v6708 = vadd.f32 %v6707, %v5861
      %v6709 = vadd.f32 %v6708, %v5865
      %v6710 = vadd.f32 %v6709, %v5869
      %v6711 = vadd.f32 %v6710, %v5873
      %v6712 = vadd.f32 %v6711, %v5877
      %v6713 = vadd.f32 %v6712, %v5881
      %v6714 = vadd.f32 %v6713, %v5885
      %v6715 = vadd.f32 %v6714, %v5889
      %v6716 = vadd.f32 %v6715, %v5893
      %v6717 = vadd.f32 %v6716, %v5897
      %v6718 = vadd.f32 %v6717, %v5901
      %v6719 = vadd.f32 %v6718, %v5905
      %v6720 = vadd.f32 %v6719, %v5909
      %v6721 = vadd.f32 %v6720, %v5913
      %v6722 = vadd.f32 %v6721, %v5917
      %v6723 = vadd.f32 %v6722, %v5921
      %v6724 = vadd.f32 %v6723, %v5925
      %v6725 = vadd.f32 %v6724, %v5929
      %v6726 = vadd.f32 %v6725, %v5933
      %v6727 = vadd.f32 %v6726, %v5937
      %v6728 = vadd.f32 %v6727, %v5941
      %v6729 = vrot.slane %v6728, 4
      %v6730 = vadd.f32 %v6728, %v6729
      %v6731 = vrot.slane %v6730, 2
      %v6732 = vadd.f32 %v6730, %v6731
      %v6733 = vrot.slane %v6732, 1
      %v6734 = vadd.f32 %v6732, %v6733
      %v6735 = vadd.f32 %v5750, %v5754
      %v6736 = vadd.f32 %v6735, %v5758
      %v6737 = vadd.f32 %v6736, %v5762
      %v6738 = vadd.f32 %v6737, %v5766
      %v6739 = vadd.f32 %v6738, %v5770
      %v6740 = vadd.f32 %v6739, %v5774
      %v6741 = vadd.f32 %v6740, %v5778
      %v6742 = vadd.f32 %v6741, %v5782
      %v6743 = vadd.f32 %v6742, %v5786
      %v6744 = vadd.f32 %v6743, %v5790
      %v6745 = vadd.f32 %v6744, %v5794
      %v6746 = vadd.f32 %v6745, %v5798
      %v6747 = vadd.f32 %v6746, %v5802
      %v6748 = vadd.f32 %v6747, %v5806
      %v6749 = vadd.f32 %v6748, %v5810
      %v6750 = vadd.f32 %v6749, %v5814
      %v6751 = vadd.f32 %v6750, %v5818
      %v6752 = vadd.f32 %v6751, %v5822
      %v6753 = vadd.f32 %v6752, %v5826
      %v6754 = vadd.f32 %v6753, %v5830
      %v6755 = vadd.f32 %v6754, %v5834
      %v6756 = vadd.f32 %v6755, %v5838
      %v6757 = vadd.f32 %v6756, %v5842
      %v6758 = vadd.f32 %v6757, %v5846
      %v6759 = vadd.f32 %v6758, %v5850
      %v6760 = vadd.f32 %v6759, %v5854
      %v6761 = vadd.f32 %v6760, %v5858
      %v6762 = vadd.f32 %v6761, %v5862
      %v6763 = vadd.f32 %v6762, %v5866
      %v6764 = vadd.f32 %v6763, %v5870
      %v6765 = vadd.f32 %v6764, %v5874
      %v6766 = vadd.f32 %v6765, %v5878
      %v6767 = vadd.f32 %v6766, %v5882
      %v6768 = vadd.f32 %v6767, %v5886
      %v6769 = vadd.f32 %v6768, %v5890
      %v6770 = vadd.f32 %v6769, %v5894
      %v6771 = vadd.f32 %v6770, %v5898
      %v6772 = vadd.f32 %v6771, %v5902
      %v6773 = vadd.f32 %v6772, %v5906
      %v6774 = vadd.f32 %v6773, %v5910
      %v6775 = vadd.f32 %v6774, %v5914
      %v6776 = vadd.f32 %v6775, %v5918
      %v6777 = vadd.f32 %v6776, %v5922
      %v6778 = vadd.f32 %v6777, %v5926
      %v6779 = vadd.f32 %v6778, %v5930
      %v6780 = vadd.f32 %v6779, %v5934
      %v6781 = vadd.f32 %v6780, %v5938
      %v6782 = vadd.f32 %v6781, %v5942
      %v6783 = vrot.slane %v6782, 4
      %v6784 = vadd.f32 %v6782, %v6783
      %v6785 = vrot.slane %v6784, 2
      %v6786 = vadd.f32 %v6784, %v6785
      %v6787 = vrot.slane %v6786, 1
      %v6788 = vadd.f32 %v6786, %v6787
      %v6789 = vadd.f32 %v5943, %v5947
      %v6790 = vadd.f32 %v6789, %v5951
      %v6791 = vadd.f32 %v6790, %v5955
      %v6792 = vadd.f32 %v6791, %v5959
      %v6793 = vadd.f32 %v6792, %v5963
      %v6794 = vadd.f32 %v6793, %v5967
      %v6795 = vadd.f32 %v6794, %v5971
      %v6796 = vadd.f32 %v6795, %v5975
      %v6797 = vadd.f32 %v6796, %v5979
      %v6798 = vadd.f32 %v6797, %v5983
      %v6799 = vadd.f32 %v6798, %v5987
      %v6800 = vadd.f32 %v6799, %v5991
      %v6801 = vadd.f32 %v6800, %v5995
      %v6802 = vadd.f32 %v6801, %v5999
      %v6803 = vadd.f32 %v6802, %v6003
      %v6804 = vadd.f32 %v6803, %v6007
      %v6805 = vadd.f32 %v6804, %v6011
      %v6806 = vadd.f32 %v6805, %v6015
      %v6807 = vadd.f32 %v6806, %v6019
      %v6808 = vadd.f32 %v6807, %v6023
      %v6809 = vadd.f32 %v6808, %v6027
      %v6810 = vadd.f32 %v6809, %v6031
      %v6811 = vadd.f32 %v6810, %v6035
      %v6812 = vadd.f32 %v6811, %v6039
      %v6813 = vadd.f32 %v6812, %v6043
      %v6814 = vadd.f32 %v6813, %v6047
      %v6815 = vadd.f32 %v6814, %v6051
      %v6816 = vadd.f32 %v6815, %v6055
      %v6817 = vadd.f32 %v6816, %v6059
      %v6818 = vadd.f32 %v6817, %v6063
      %v6819 = vadd.f32 %v6818, %v6067
      %v6820 = vadd.f32 %v6819, %v6071
      %v6821 = vadd.f32 %v6820, %v6075
      %v6822 = vadd.f32 %v6821, %v6079
      %v6823 = vadd.f32 %v6822, %v6083
      %v6824 = vadd.f32 %v6823, %v6087
      %v6825 = vadd.f32 %v6824, %v6091
      %v6826 = vadd.f32 %v6825, %v6095
      %v6827 = vadd.f32 %v6826, %v6099
      %v6828 = vadd.f32 %v6827, %v6103
      %v6829 = vadd.f32 %v6828, %v6107
      %v6830 = vadd.f32 %v6829, %v6111
      %v6831 = vadd.f32 %v6830, %v6115
      %v6832 = vadd.f32 %v6831, %v6119
      %v6833 = vadd.f32 %v6832, %v6123
      %v6834 = vadd.f32 %v6833, %v6127
      %v6835 = vadd.f32 %v6834, %v6131
      %v6836 = vadd.f32 %v6835, %v6135
      %v6837 = vrot.slane %v6836, 4
      %v6838 = vadd.f32 %v6836, %v6837
      %v6839 = vrot.slane %v6838, 2
      %v6840 = vadd.f32 %v6838, %v6839
      %v6841 = vrot.slane %v6840, 1
      %v6842 = vadd.f32 %v6840, %v6841
      %v6843 = vadd.f32 %v5944, %v5948
      %v6844 = vadd.f32 %v6843, %v5952
      %v6845 = vadd.f32 %v6844, %v5956
      %v6846 = vadd.f32 %v6845, %v5960
      %v6847 = vadd.f32 %v6846, %v5964
      %v6848 = vadd.f32 %v6847, %v5968
      %v6849 = vadd.f32 %v6848, %v5972
      %v6850 = vadd.f32 %v6849, %v5976
      %v6851 = vadd.f32 %v6850, %v5980
      %v6852 = vadd.f32 %v6851, %v5984
      %v6853 = vadd.f32 %v6852, %v5988
      %v6854 = vadd.f32 %v6853, %v5992
      %v6855 = vadd.f32 %v6854, %v5996
      %v6856 = vadd.f32 %v6855, %v6000
      %v6857 = vadd.f32 %v6856, %v6004
      %v6858 = vadd.f32 %v6857, %v6008
      %v6859 = vadd.f32 %v6858, %v6012
      %v6860 = vadd.f32 %v6859, %v6016
      %v6861 = vadd.f32 %v6860, %v6020
      %v6862 = vadd.f32 %v6861, %v6024
      %v6863 = vadd.f32 %v6862, %v6028
      %v6864 = vadd.f32 %v6863, %v6032
      %v6865 = vadd.f32 %v6864, %v6036
      %v6866 = vadd.f32 %v6865, %v6040
      %v6867 = vadd.f32 %v6866, %v6044
      %v6868 = vadd.f32 %v6867, %v6048
      %v6869 = vadd.f32 %v6868, %v6052
      %v6870 = vadd.f32 %v6869, %v6056
      %v6871 = vadd.f32 %v6870, %v6060
      %v6872 = vadd.f32 %v6871, %v6064
      %v6873 = vadd.f32 %v6872, %v6068
      %v6874 = vadd.f32 %v6873, %v6072
      %v6875 = vadd.f32 %v6874, %v6076
      %v6876 = vadd.f32 %v6875, %v6080
      %v6877 = vadd.f32 %v6876, %v6084
      %v6878 = vadd.f32 %v6877, %v6088
      %v6879 = vadd.f32 %v6878, %v6092
      %v6880 = vadd.f32 %v6879, %v6096
      %v6881 = vadd.f32 %v6880, %v6100
      %v6882 = vadd.f32 %v6881, %v6104
      %v6883 = vadd.f32 %v6882, %v6108
      %v6884 = vadd.f32 %v6883, %v6112
      %v6885 = vadd.f32 %v6884, %v6116
      %v6886 = vadd.f32 %v6885, %v6120
      %v6887 = vadd.f32 %v6886, %v6124
      %v6888 = vadd.f32 %v6887, %v6128
      %v6889 = vadd.f32 %v6888, %v6132
      %v6890 = vadd.f32 %v6889, %v6136
      %v6891 = vrot.slane %v6890, 4
      %v6892 = vadd.f32 %v6890, %v6891
      %v6893 = vrot.slane %v6892, 2
      %v6894 = vadd.f32 %v6892, %v6893
      %v6895 = vrot.slane %v6894, 1
      %v6896 = vadd.f32 %v6894, %v6895
      %v6897 = vadd.f32 %v5945, %v5949
      %v6898 = vadd.f32 %v6897, %v5953
      %v6899 = vadd.f32 %v6898, %v5957
      %v6900 = vadd.f32 %v6899, %v5961
      %v6901 = vadd.f32 %v6900, %v5965
      %v6902 = vadd.f32 %v6901, %v5969
      %v6903 = vadd.f32 %v6902, %v5973
      %v6904 = vadd.f32 %v6903, %v5977
      %v6905 = vadd.f32 %v6904, %v5981
      %v6906 = vadd.f32 %v6905, %v5985
      %v6907 = vadd.f32 %v6906, %v5989
      %v6908 = vadd.f32 %v6907, %v5993
      %v6909 = vadd.f32 %v6908, %v5997
      %v6910 = vadd.f32 %v6909, %v6001
      %v6911 = vadd.f32 %v6910, %v6005
      %v6912 = vadd.f32 %v6911, %v6009
      %v6913 = vadd.f32 %v6912, %v6013
      %v6914 = vadd.f32 %v6913, %v6017
      %v6915 = vadd.f32 %v6914, %v6021
      %v6916 = vadd.f32 %v6915, %v6025
      %v6917 = vadd.f32 %v6916, %v6029
      %v6918 = vadd.f32 %v6917, %v6033
      %v6919 = vadd.f32 %v6918, %v6037
      %v6920 = vadd.f32 %v6919, %v6041
      %v6921 = vadd.f32 %v6920, %v6045
      %v6922 = vadd.f32 %v6921, %v6049
      %v6923 = vadd.f32 %v6922, %v6053
      %v6924 = vadd.f32 %v6923, %v6057
      %v6925 = vadd.f32 %v6924, %v6061
      %v6926 = vadd.f32 %v6925, %v6065
      %v6927 = vadd.f32 %v6926, %v6069
      %v6928 = vadd.f32 %v6927, %v6073
      %v6929 = vadd.f32 %v6928, %v6077
      %v6930 = vadd.f32 %v6929, %v6081
      %v6931 = vadd.f32 %v6930, %v6085
      %v6932 = vadd.f32 %v6931, %v6089
      %v6933 = vadd.f32 %v6932, %v6093
      %v6934 = vadd.f32 %v6933, %v6097
      %v6935 = vadd.f32 %v6934, %v6101
      %v6936 = vadd.f32 %v6935, %v6105
      %v6937 = vadd.f32 %v6936, %v6109
      %v6938 = vadd.f32 %v6937, %v6113
      %v6939 = vadd.f32 %v6938, %v6117
      %v6940 = vadd.f32 %v6939, %v6121
      %v6941 = vadd.f32 %v6940, %v6125
      %v6942 = vadd.f32 %v6941, %v6129
      %v6943 = vadd.f32 %v6942, %v6133
      %v6944 = vadd.f32 %v6943, %v6137
      %v6945 = vrot.slane %v6944, 4
      %v6946 = vadd.f32 %v6944, %v6945
      %v6947 = vrot.slane %v6946, 2
      %v6948 = vadd.f32 %v6946, %v6947
      %v6949 = vrot.slane %v6948, 1
      %v6950 = vadd.f32 %v6948, %v6949
      %v6951 = vadd.f32 %v5946, %v5950
      %v6952 = vadd.f32 %v6951, %v5954
      %v6953 = vadd.f32 %v6952, %v5958
      %v6954 = vadd.f32 %v6953, %v5962
      %v6955 = vadd.f32 %v6954, %v5966
      %v6956 = vadd.f32 %v6955, %v5970
      %v6957 = vadd.f32 %v6956, %v5974
      %v6958 = vadd.f32 %v6957, %v5978
      %v6959 = vadd.f32 %v6958, %v5982
      %v6960 = vadd.f32 %v6959, %v5986
      %v6961 = vadd.f32 %v6960, %v5990
      %v6962 = vadd.f32 %v6961, %v5994
      %v6963 = vadd.f32 %v6962, %v5998
      %v6964 = vadd.f32 %v6963, %v6002
      %v6965 = vadd.f32 %v6964, %v6006
      %v6966 = vadd.f32 %v6965, %v6010
      %v6967 = vadd.f32 %v6966, %v6014
      %v6968 = vadd.f32 %v6967, %v6018
      %v6969 = vadd.f32 %v6968, %v6022
      %v6970 = vadd.f32 %v6969, %v6026
      %v6971 = vadd.f32 %v6970, %v6030
      %v6972 = vadd.f32 %v6971, %v6034
      %v6973 = vadd.f32 %v6972, %v6038
      %v6974 = vadd.f32 %v6973, %v6042
      %v6975 = vadd.f32 %v6974, %v6046
      %v6976 = vadd.f32 %v6975, %v6050
      %v6977 = vadd.f32 %v6976, %v6054
      %v6978 = vadd.f32 %v6977, %v6058
      %v6979 = vadd.f32 %v6978, %v6062
      %v6980 = vadd.f32 %v6979, %v6066
      %v6981 = vadd.f32 %v6980, %v6070
      %v6982 = vadd.f32 %v6981, %v6074
      %v6983 = vadd.f32 %v6982, %v6078
      %v6984 = vadd.f32 %v6983, %v6082
      %v6985 = vadd.f32 %v6984, %v6086
      %v6986 = vadd.f32 %v6985, %v6090
      %v6987 = vadd.f32 %v6986, %v6094
      %v6988 = vadd.f32 %v6987, %v6098
      %v6989 = vadd.f32 %v6988, %v6102
      %v6990 = vadd.f32 %v6989, %v6106
      %v6991 = vadd.f32 %v6990, %v6110
      %v6992 = vadd.f32 %v6991, %v6114
      %v6993 = vadd.f32 %v6992, %v6118
      %v6994 = vadd.f32 %v6993, %v6122
      %v6995 = vadd.f32 %v6994, %v6126
      %v6996 = vadd.f32 %v6995, %v6130
      %v6997 = vadd.f32 %v6996, %v6134
      %v6998 = vadd.f32 %v6997, %v6138
      %v6999 = vrot.slane %v6998, 4
      %v7000 = vadd.f32 %v6998, %v6999
      %v7001 = vrot.slane %v7000, 2
      %v7002 = vadd.f32 %v7000, %v7001
      %v7003 = vrot.slane %v7002, 1
      %v7004 = vadd.f32 %v7002, %v7003
      %v7021 = vcombine.low %v6194, %v6248
      %v7022 = vcombine.low %v6302, %v6356
      %v7023 = vcombine.low %v6410, %v6464
      %v7024 = vcombine.low %v6518, %v6572
      %v7025 = vcombine.low %v6626, %v6680
      %v7026 = vcombine.low %v6734, %v6788
      %v7027 = vcombine.low %v6842, %v6896
      %v7028 = vcombine.low %v6950, %v7004
      %v7029 = vrot.slane %v7023, 7
      %vm7030 = vcmask 1041409
      %v7031 = vsel %vm7030, %v7029, %v7021
      %vm7032 = vcmask 1045509
      %v7033 = vsel %vm7032, %v7029, %v7031
      %v7034 = vrot.slane %v7025, 6
      %vm7035 = vcmask 1042434
      %v7036 = vsel %vm7035, %v7034, %v7033
      %vm7037 = vcmask 1046534
      %v7038 = vsel %vm7037, %v7034, %v7036
      %v7039 = vrot.slane %v7027, 5
      %vm7040 = vcmask 1043459
      %v7041 = vsel %vm7040, %v7039, %v7038
      %vm7042 = vcmask 1047559
      %v7043 = vsel %vm7042, %v7039, %v7041
      %v7044 = vrot.slane %v7024, 7
      %v7045 = vsel %vm7030, %v7044, %v7022
      %v7046 = vsel %vm7032, %v7044, %v7045
      %v7047 = vrot.slane %v7026, 6
      %v7048 = vsel %vm7035, %v7047, %v7046
      %v7049 = vsel %vm7037, %v7047, %v7048
      %v7050 = vrot.slane %v7028, 5
      %v7051 = vsel %vm7040, %v7050, %v7049
      %v7052 = vsel %vm7042, %v7050, %v7051
      %v7055 = vadd.f32 %v6139, %v7043
      %v7056 = vadd.f32 %v6140, %v7052
      %7057 = vst [vmem:[#allocation2] sm:$0xff] %v7055
      %7058 = vst [vmem:[#allocation2 + $0x8] sm:$0xff] %v7056
      // Predicated region
      $region53: #{act_net_forward.1} parent=47 // pred_check
        %p7059 = pneg %p311
      $region54: #{act_net_forward.1} parent=47 // pred_check_branch
        %7061 = sbr.rel (%p7059) target = $region56
      $region55: #{act_net_forward.1} parent=47 // pred_region
        %v7062 = vld [vmem:[#allocation2] sm:$0xff]
        %v7063 = vld [vmem:[#allocation2 + $0x8] sm:$0xff]
        %v7064 = vmul.f32 %v7062, 0.0025510204
        %v7065 = vmul.f32 %v7063, 0.0025510204
        %v7066 = vld [vmem:[%s5] sm:$0xff]
        %v7067 = vld [vmem:[%s5 + $0x8] sm:$0xff]
        %v7068 = vld [vmem:[%s5 + $0x10] sm:$0xff]
        %v7069 = vld [vmem:[%s5 + $0x18] sm:$0xff]
        %v7070 = vld [vmem:[%s5 + $0x20] sm:$0xff]
        %v7071 = vld [vmem:[%s5 + $0x28] sm:$0xff]
        %v7072 = vld [vmem:[%s5 + $0x30] sm:$0xff]
        %v7073 = vld [vmem:[%s5 + $0x38] sm:$0xff]
        %v7074 = vld [vmem:[%s5 + $0x40] sm:$0xff]
        %v7075 = vld [vmem:[%s5 + $0x48] sm:$0xff]
        %v7076 = vld [vmem:[%s5 + $0x50] sm:$0xff]
        %v7077 = vld [vmem:[%s5 + $0x58] sm:$0xff]
        %v7078 = vld [vmem:[%s5 + $0x60] sm:$0xff]
        %v7079 = vld [vmem:[%s5 + $0x68] sm:$0xff]
        %v7080 = vld [vmem:[%s5 + $0x70] sm:$0xff]
        %v7081 = vld [vmem:[%s5 + $0x78] sm:$0xff]
        %v7082 = vld [vmem:[%s5 + $0x80] sm:$0xff]
        %v7083 = vld [vmem:[%s5 + $0x88] sm:$0xff]
        %v7084 = vld [vmem:[%s5 + $0x90] sm:$0xff]
        %v7085 = vld [vmem:[%s5 + $0x98] sm:$0xff]
        %v7086 = vld [vmem:[%s5 + $0xa0] sm:$0xff]
        %v7087 = vld [vmem:[%s5 + $0xa8] sm:$0xff]
        %v7088 = vld [vmem:[%s5 + $0xb0] sm:$0xff]
        %v7089 = vld [vmem:[%s5 + $0xb8] sm:$0xff]
        %v7090 = vld [vmem:[%s5 + $0xc0] sm:$0xff]
        %v7091 = vld [vmem:[%s5 + $0xc8] sm:$0xff]
        %v7092 = vld [vmem:[%s5 + $0xd0] sm:$0xff]
        %v7093 = vld [vmem:[%s5 + $0xd8] sm:$0xff]
        %v7094 = vld [vmem:[%s5 + $0xe0] sm:$0xff]
        %v7095 = vld [vmem:[%s5 + $0xe8] sm:$0xff]
        %v7096 = vld [vmem:[%s5 + $0xf0] sm:$0xff]
        %v7097 = vld [vmem:[%s5 + $0xf8] sm:$0xff]
        %v7098 = vld [vmem:[%s5 + $0x100] sm:$0xff]
        %v7099 = vld [vmem:[%s5 + $0x108] sm:$0xff]
        %v7100 = vld [vmem:[%s5 + $0x110] sm:$0xff]
        %v7101 = vld [vmem:[%s5 + $0x118] sm:$0xff]
        %v7102 = vld [vmem:[%s5 + $0x120] sm:$0xff]
        %v7103 = vld [vmem:[%s5 + $0x128] sm:$0xff]
        %v7104 = vld [vmem:[%s5 + $0x130] sm:$0xff]
        %v7105 = vld [vmem:[%s5 + $0x138] sm:$0xff]
        %v7106 = vld [vmem:[%s5 + $0x140] sm:$0xff]
        %v7107 = vld [vmem:[%s5 + $0x148] sm:$0xff]
        %v7108 = vld [vmem:[%s5 + $0x150] sm:$0xff]
        %v7109 = vld [vmem:[%s5 + $0x158] sm:$0xff]
        %v7110 = vld [vmem:[%s5 + $0x160] sm:$0xff]
        %v7111 = vld [vmem:[%s5 + $0x168] sm:$0xff]
        %v7112 = vld [vmem:[%s5 + $0x170] sm:$0xff]
        %v7113 = vld [vmem:[%s5 + $0x178] sm:$0xff]
        %v7114 = vld [vmem:[%s5 + $0x180] sm:$0xff]
        %v7115 = vld [vmem:[%s5 + $0x188] sm:$0xff]
        %v7116 = vld [vmem:[%s5 + $0x190] sm:$0xff]
        %v7117 = vld [vmem:[%s5 + $0x198] sm:$0xff]
        %v7118 = vld [vmem:[%s5 + $0x1a0] sm:$0xff]
        %v7119 = vld [vmem:[%s5 + $0x1a8] sm:$0xff]
        %v7120 = vld [vmem:[%s5 + $0x1b0] sm:$0xff]
        %v7121 = vld [vmem:[%s5 + $0x1b8] sm:$0xff]
        %v7122 = vld [vmem:[%s5 + $0x1c0] sm:$0xff]
        %v7123 = vld [vmem:[%s5 + $0x1c8] sm:$0xff]
        %v7124 = vld [vmem:[%s5 + $0x1d0] sm:$0xff]
        %v7125 = vld [vmem:[%s5 + $0x1d8] sm:$0xff]
        %v7126 = vld [vmem:[%s5 + $0x1e0] sm:$0xff]
        %v7127 = vld [vmem:[%s5 + $0x1e8] sm:$0xff]
        %v7128 = vld [vmem:[%s5 + $0x1f0] sm:$0xff]
        %v7129 = vld [vmem:[%s5 + $0x1f8] sm:$0xff]
        %v7130 = vld [vmem:[%s6] sm:$0x1]
        %v7132 = vlaneseq
        %v7133 = vshrl.u32 %v7132, 7
        %v7134 = vsub.s32 0, %v7133
        %v7135 = vrot.slane %v7130, %v7134
        %v7139 = vcombine.high %v7064, %v7064
        %v7140 = vcombine.high %v7065, %v7065
        %7143 = vmatprep.subr.mxu0 0.0
        %7144 = vmatpush1.msra.mxu0 %v7066
        %7145 = vmatprep.subr.mxu0 0.0
        %7146 = vmatpush1.msra.mxu0 %v7067
        %7147 = vmatprep.subr.mxu0 0.0
        %7148 = vmatpush1.msra.mxu0 %v7068
        %7149 = vmatprep.subr.mxu0 0.0
        %7150 = vmatpush1.msra.mxu0 %v7069
        %7151 = vmatprep.subr.mxu0 0.0
        %7152 = vmatpush1.msra.mxu0 %v7070
        %7153 = vmatprep.subr.mxu0 0.0
        %7154 = vmatpush1.msra.mxu0 %v7071
        %7155 = vmatprep.subr.mxu0 0.0
        %7156 = vmatpush1.msra.mxu0 %v7072
        %7157 = vmatprep.subr.mxu0 0.0
        %7158 = vmatpush1.msra.mxu0 %v7073
        %7159 = vmatprep.subr.mxu0 0.0
        %7160 = vmatpush1.msra.mxu0 %v7074
        %7161 = vmatprep.subr.mxu0 0.0
        %7162 = vmatpush1.msra.mxu0 %v7075
        %7163 = vmatprep.subr.mxu0 0.0
        %7164 = vmatpush1.msra.mxu0 %v7076
        %7165 = vmatprep.subr.mxu0 0.0
        %7166 = vmatpush1.msra.mxu0 %v7077
        %7167 = vmatprep.subr.mxu0 0.0
        %7168 = vmatpush1.msra.mxu0 %v7078
        %7169 = vmatprep.subr.mxu0 0.0
        %7170 = vmatpush1.msra.mxu0 %v7079
        %7171 = vmatprep.subr.mxu0 0.0
        %7172 = vmatpush1.msra.mxu0 %v7080
        %7173 = vmatprep.subr.mxu0 0.0
        %7174 = vmatpush1.msra.mxu0 %v7081
        %7175 = vmatprep.subr.mxu0 0.0
        %7176 = vmatpush1.msra.mxu0 %v7082
        %7177 = vmatprep.subr.mxu0 0.0
        %7178 = vmatpush1.msra.mxu0 %v7083
        %7179 = vmatprep.subr.mxu0 0.0
        %7180 = vmatpush1.msra.mxu0 %v7084
        %7181 = vmatprep.subr.mxu0 0.0
        %7182 = vmatpush1.msra.mxu0 %v7085
        %7183 = vmatprep.subr.mxu0 0.0
        %7184 = vmatpush1.msra.mxu0 %v7086
        %7185 = vmatprep.subr.mxu0 0.0
        %7186 = vmatpush1.msra.mxu0 %v7087
        %7187 = vmatprep.subr.mxu0 0.0
        %7188 = vmatpush1.msra.mxu0 %v7088
        %7189 = vmatprep.subr.mxu0 0.0
        %7190 = vmatpush1.msra.mxu0 %v7089
        %7191 = vmatprep.subr.mxu0 0.0
        %7192 = vmatpush1.msra.mxu0 %v7090
        %7193 = vmatprep.subr.mxu0 0.0
        %7194 = vmatpush1.msra.mxu0 %v7091
        %7195 = vmatprep.subr.mxu0 0.0
        %7196 = vmatpush1.msra.mxu0 %v7092
        %7197 = vmatprep.subr.mxu0 0.0
        %7198 = vmatpush1.msra.mxu0 %v7093
        %7199 = vmatprep.subr.mxu0 0.0
        %7200 = vmatpush1.msra.mxu0 %v7094
        %7201 = vmatprep.subr.mxu0 0.0
        %7202 = vmatpush1.msra.mxu0 %v7095
        %7203 = vmatprep.subr.mxu0 0.0
        %7204 = vmatpush1.msra.mxu0 %v7096
        %7205 = vmatprep.subr.mxu0 0.0
        %7206 = vmatpush1.msra.mxu0 %v7097
        %7207 = vmatprep.mubr.f32.mxu0 %v7139
        %7208 = vmatmul.mubr.f32.gmra.mrb[0].mxu0 %v7064
        %v7209 = vpop.f32.mrb[0].mxu0
        %v7210 = vadd.f32 %v7135, %v7209
        %v7211 = vpop.f32.mrb[0].mxu0
        %7212 = vdwg.mxu0
        %7213 = vmatprep.subr.mxu0 0.0
        %7214 = vmatpush1.msra.mxu0 %v7098
        %7215 = vmatprep.subr.mxu0 0.0
        %7216 = vmatpush1.msra.mxu0 %v7099
        %7217 = vmatprep.subr.mxu0 0.0
        %7218 = vmatpush1.msra.mxu0 %v7100
        %7219 = vmatprep.subr.mxu0 0.0
        %7220 = vmatpush1.msra.mxu0 %v7101
        %7221 = vmatprep.subr.mxu0 0.0
        %7222 = vmatpush1.msra.mxu0 %v7102
        %7223 = vmatprep.subr.mxu0 0.0
        %7224 = vmatpush1.msra.mxu0 %v7103
        %7225 = vmatprep.subr.mxu0 0.0
        %7226 = vmatpush1.msra.mxu0 %v7104
        %7227 = vmatprep.subr.mxu0 0.0
        %7228 = vmatpush1.msra.mxu0 %v7105
        %7229 = vmatprep.subr.mxu0 0.0
        %7230 = vmatpush1.msra.mxu0 %v7106
        %7231 = vmatprep.subr.mxu0 0.0
        %7232 = vmatpush1.msra.mxu0 %v7107
        %7233 = vmatprep.subr.mxu0 0.0
        %7234 = vmatpush1.msra.mxu0 %v7108
        %7235 = vmatprep.subr.mxu0 0.0
        %7236 = vmatpush1.msra.mxu0 %v7109
        %7237 = vmatprep.subr.mxu0 0.0
        %7238 = vmatpush1.msra.mxu0 %v7110
        %7239 = vmatprep.subr.mxu0 0.0
        %7240 = vmatpush1.msra.mxu0 %v7111
        %7241 = vmatprep.subr.mxu0 0.0
        %7242 = vmatpush1.msra.mxu0 %v7112
        %7243 = vmatprep.subr.mxu0 0.0
        %7244 = vmatpush1.msra.mxu0 %v7113
        %7245 = vmatprep.subr.mxu0 0.0
        %7246 = vmatpush1.msra.mxu0 %v7114
        %7247 = vmatprep.subr.mxu0 0.0
        %7248 = vmatpush1.msra.mxu0 %v7115
        %7249 = vmatprep.subr.mxu0 0.0
        %7250 = vmatpush1.msra.mxu0 %v7116
        %7251 = vmatprep.subr.mxu0 0.0
        %7252 = vmatpush1.msra.mxu0 %v7117
        %7253 = vmatprep.subr.mxu0 0.0
        %7254 = vmatpush1.msra.mxu0 %v7118
        %7255 = vmatprep.subr.mxu0 0.0
        %7256 = vmatpush1.msra.mxu0 %v7119
        %7257 = vmatprep.subr.mxu0 0.0
        %7258 = vmatpush1.msra.mxu0 %v7120
        %7259 = vmatprep.subr.mxu0 0.0
        %7260 = vmatpush1.msra.mxu0 %v7121
        %7261 = vmatprep.subr.mxu0 0.0
        %7262 = vmatpush1.msra.mxu0 %v7122
        %7263 = vmatprep.subr.mxu0 0.0
        %7264 = vmatpush1.msra.mxu0 %v7123
        %7265 = vmatprep.subr.mxu0 0.0
        %7266 = vmatpush1.msra.mxu0 %v7124
        %7267 = vmatprep.subr.mxu0 0.0
        %7268 = vmatpush1.msra.mxu0 %v7125
        %7269 = vmatprep.subr.mxu0 0.0
        %7270 = vmatpush1.msra.mxu0 %v7126
        %7271 = vmatprep.subr.mxu0 0.0
        %7272 = vmatpush1.msra.mxu0 %v7127
        %7273 = vmatprep.subr.mxu0 0.0
        %7274 = vmatpush1.msra.mxu0 %v7128
        %7275 = vmatprep.subr.mxu0 0.0
        %7276 = vmatpush1.msra.mxu0 %v7129
        %7277 = vmatprep.mubr.f32.mxu0 %v7140
        %7278 = vmatmul.mubr.f32.gmra.mrb[0].mxu0 %v7065
        %v7279 = vpop.f32.mrb[0].mxu0
        %v7280 = vadd.f32 %v7210, %v7279
        %v7281 = vpop.f32.mrb[0].mxu0
        %7282 = vdwg.mxu0
        %v7283 = vlaneseq
        %v7284 = vand.u32 %v7283, 127
        %vm7285 = vcmp.ge.s32.totalorder %v7284, 16
        %vm7286 = vcmp.lt.s32.totalorder %v7284, 20
        %vm7287 = vmand %vm7285, %vm7286
        %v7288 = vsel %vm7287, %v7280, -1e+30
        %vm7289 = vcmask 1043456
        %v7290 = vsel %vm7289, %v7288, -inf
        %7291 = vmax.xlane.f32.xlu0 %v7290
        %v7292 = vpop.xlane.xlu0 %7291
        %v7293 = vsub.f32 %v7288, %v7292
        %v7294 = vmul.f32 %v7293, 1.442695
        %v7295 = vpow.pop %v7294
        %v7296 = vsel %vm7287, %v7295, 0.0
        %v7297 = vsel %vm7289, %v7296, 0.0
        %7298 = vadd.xlane.f32.xlu0 %v7297
        %v7299 = vpop.xlane.xlu0 %7298
        %v7300 = vrcp.pop %v7299
        %v7301 = vmul.f32 %v7296, %v7300
        %v7302 = vsel %vm7287, %v7301, %v7280
        %7303 = vst [vmem:[%s309] sm:$0xf] %v7302
      $region56: #{act_net_forward.1} parent=47 // pred_fallthru
        _
      %p7304 = scmp.lt.s32.totalorder %s22, 1
      %s7305 = scalar_select %p7304, %s22, 1
      %s7306 = smul.addr %s7305, 4
      %s7307 = scalar_lea.vmem %s7, %s7306
      // Predicated region
      $region57: #{act_net_forward.1} parent=47 // pred_check
        %p7308 = pneg %p202
      $region58: #{act_net_forward.1} parent=47 // pred_check_branch
        %7310 = sbr.rel (%p7308) target = $region60
      $region59: #{act_net_forward.1} parent=47 // pred_region
        _
      $region60: #{act_net_forward.1} parent=47 // pred_fallthru
        _
    $region48: #{act_net_forward.1} parent=5 // pred_fallthru
      _
    %p7311 = scmp.le.s32.totalorder 2, %s13
    // Predicated region
    $region61: #{act_net_forward.1} parent=5 // pred_check
      %p7312 = pneg %p7311
    $region62: #{act_net_forward.1} parent=5 // pred_check_branch
      %7314 = sbr.rel (%p7312) target = $region64
    $region63: #{act_net_forward.1} parent=5 // pred_region
      %s7315 = ssub.s32 %s13, 2
      // Predicated region
      $region65: #{act_net_forward.1} parent=63 // pred_check
        %p7316 = pneg %p208
      $region66: #{act_net_forward.1} parent=63 // pred_check_branch
        %7318 = sbr.rel (%p7316) target = $region68
      $region67: #{act_net_forward.1} parent=63 // pred_region
        %p7319 = scmp.lt.s32.totalorder %s24, 1
        %s7320 = scalar_select %p7319, %s24, 1
        %s7321 = smul.addr %s7320, 4
        %s7322 = scalar_lea.vmem %s7, %s7321
      $region68: #{act_net_forward.1} parent=63 // pred_fallthru
        _
    $region64: #{act_net_forward.1} parent=5 // pred_fallthru
      _
  $region6: #{act_net_forward.1} parent=0 // loop_footer
    %s17 = sadd.s32 1, %s13
  $region7: #{act_net_forward.1} parent=0 // loop_footer_branch
    %12 = sbr.rel target = $region3
  $region8: #{act_net_forward.1} parent=0 // loop_exit
    _

</llo_original>
